<compile_context>
chip_gen: v5e
topology: v5e:2x2
jax: 0.10.0
libtpu: 0.0.40
codegen_flags: <defaults>
</compile_context>

<pallas_src>
import jax
import jax.numpy as jnp
from jax import lax
from jax.experimental import pallas as pl
from jax.experimental.pallas import tpu as pltpu

START_TOKEN = 0

H = 512                 # LSTM hidden size (nn.LSTM(hidden_size=512))
G = 4 * H               # gate width, PyTorch order (i, f, g, o)
ATT = 32                # attention projection size (nn.Linear(512, 32))
ATT_PAD = 128           # attention block of the fused weight padded to one 128-lane tile
FUSED = G + ATT_PAD     # 2176 columns = 17 lane tiles
IN_DIM = 2              # (x, y) coordinates

_VMEM_LIMIT = 32 * 1024 * 1024   # resident set here is only ~5 MiB (safe on v5e/v6e/v7x)


# ---------------------------------------------------------------------------
# small in-kernel helpers
# ---------------------------------------------------------------------------
def _in_proj(x2, wih_ref):
    # K=2 input projection as a 2-term VPU scaled-add (avoids a zero-padded MXU pass).
    return x2[:, 0:1] * wih_ref[0:1, :] + x2[:, 1:2] * wih_ref[1:2, :]          # (B, 4H)


def _lstm_gates(gx, hh, b, c):
    gates = gx + hh + b                                                         # (B, 4H)
    i = jax.nn.sigmoid(gates[:, 0 * H:1 * H])
    f = jax.nn.sigmoid(gates[:, 1 * H:2 * H])
    g = jnp.tanh(gates[:, 2 * H:3 * H])
    o = jax.nn.sigmoid(gates[:, 3 * H:4 * H])
    c_new = f * c + i * g
    h_new = o * jnp.tanh(c_new)
    return h_new, c_new


def _fused_dot(h, wf_ref):
    # One MXU pass: [h @ W_hh | h @ Wproj]  (bf16 weights, f32 accumulation).
    out = jnp.dot(h.astype(jnp.bfloat16), wf_ref[...],
                  preferred_element_type=jnp.float32)                           # (B, 4H+128)
    return out[:, :G], out[:, G:G + ATT]


def _store_step_row(ref, b, t, row):
    # row: (1, width) -> ref[b, t, :].  Static batch index, dynamic second-minor (row) index;
    # lanes stay fully static.  Purely a VMEM store (output/scratch are resident).
    ref[pl.ds(b, 1), pl.ds(t, 1), :] = row[:, None, :]


# ---------------------------------------------------------------------------
# One fused kernel: encoder recurrence -> decoder recurrence + attention + pointer
# ---------------------------------------------------------------------------
def _pointer_net_kernel(x_tm_ref, x_bm_ref,
                        enc_wih_ref, enc_wf_ref, enc_b_ref, b1_ref,
                        dec_wih_ref, dec_wf_ref, dec_b_ref, b2_ref,
                        v_ref, vb_ref,
                        out_ref, proj_ref):
    n_steps, batch, _ = x_tm_ref.shape

    # ---------------- encoder: full LSTM recurrence ----------------
    def enc_step(t, carry):
        hh, c, _h_prev = carry                       # hh = h_{t-1} @ W_hh (carried), c state
        x_t = x_tm_ref[t]                            # (B, 2) from the resident coords
        h_new, c_new = _lstm_gates(_in_proj(x_t, enc_wih_ref), hh, enc_b_ref[...], c)
        hh_new, proj_t = _fused_dot(h_new, enc_wf_ref)      # next-step hh + W1 @ h_t in one pass
        proj_t = proj_t + b1_ref[...]                # hoisted, decoder-step-invariant projection
        for b in range(batch):                       # batch is small & static -> unrolled
            _store_step_row(proj_ref, b, t, proj_t[b:b + 1, :])
        return hh_new, c_new, h_new

    zeros_g = jnp.zeros((batch, G), jnp.float32)
    zeros_h = jnp.zeros((batch, H), jnp.float32)
    _, c_fin, h_fin = lax.fori_loop(0, n_steps, enc_step, (zeros_g, zeros_h, zeros_h))

    # ---------------- decoder: LSTM + batched additive attention + pointer ----------------
    proj_all = proj_ref[...]                         # (B, N, 32) VMEM-resident
    coords = x_bm_ref[...]                           # (B, N, 2)  VMEM-resident
    v_row = v_ref[...]                               # (1, 32)
    v_bias = vb_ref[0, 0]

    hh0, _ = _fused_dot(h_fin, dec_wf_ref)           # prologue: encoder-final h @ W_hh_dec
    x_start = jnp.full((batch, IN_DIM), float(START_TOKEN), jnp.float32)

    def dec_step(t, carry):
        hh, c, x_in = carry
        h_new, c_new = _lstm_gates(_in_proj(x_in, dec_wih_ref), hh, dec_b_ref[...], c)
        hh_new, d = _fused_dot(h_new, dec_wf_ref)    # next-step hh + W2 @ h_t in one pass
        d = d + b2_ref[...]                          # (B, 32)

        th = jnp.tanh(proj_all + d[:, None, :])                                  # (B, N, 32)
        logits = jnp.sum(th * v_row[None, :, :], axis=-1) + v_bias               # (B, N)
        for b in range(batch):
            _store_step_row(out_ref, b, t, logits[b:b + 1, :])

        # pointer = first argmax over cities (softmax skipped: monotonic, unused)
        ids = lax.broadcasted_iota(jnp.int32, logits.shape, 1)                   # (B, N)
        maxv = jnp.max(logits, axis=1, keepdims=True)                            # (B, 1)
        first = jnp.min(jnp.where(logits == maxv, ids, n_steps),
                        axis=1, keepdims=True)                                   # (B, 1)
        onehot = (ids == first).astype(jnp.float32)                              # (B, N)
        # next input coordinates via one-hot weighted reduce (no dynamic gather)
        x_next = jnp.sum(onehot[:, :, None] * coords, axis=1)                    # (B, 2)
        return hh_new, c_new, x_next

    lax.fori_loop(0, n_steps, dec_step, (hh0, c_fin, x_start))


def _pointer_net_call(x_tm, x_bm, p):
    n, b, _ = x_tm.shape
    flops = (2 * n * (2 * b * H * FUSED)           # fused recurrent + attention-proj matmuls
             + n * (4 * b * n * ATT)               # additive attention / V reduce
             + 2 * n * (12 * b * G))               # gate elementwise work
    trans = 2 * n * (5 * b * H) + n * (b * n * ATT)
    bytes_acc = (2 * H * FUSED * 2 + 2 * IN_DIM * G * 4 + 2 * G * 4 + 4 * ATT * 4
                 + 2 * b * n * IN_DIM * 4 + b * n * n * 4)
    return pl.pallas_call(
        _pointer_net_kernel,
        out_shape=jax.ShapeDtypeStruct((b, n, n), jnp.float32),   # (B, n_steps, n_cities)
        scratch_shapes=[pltpu.VMEM((b, n, ATT), jnp.float32)],    # hoisted W1(enc_outputs)
        compiler_params=pltpu.CompilerParams(vmem_limit_bytes=_VMEM_LIMIT),
        cost_estimate=pl.CostEstimate(flops=flops, transcendentals=trans,
                                      bytes_accessed=bytes_acc),
    )(x_tm, x_bm,
      p['enc_wih_t'], p['enc_wf_t'], p['enc_b'], p['att_b1'],
      p['dec_wih_t'], p['dec_wf_t'], p['dec_b'], p['att_b2'],
      p['att_v'], p['att_v_b'])


# ---------------------------------------------------------------------------
# Parameter init (deterministic, mirrors the PyTorch __init__ shapes & scales)
# ---------------------------------------------------------------------------
def init_params(key):
    ks = jax.random.split(key, 14)
    u = lambda k, shape, lim: jax.random.uniform(k, shape, jnp.float32, -lim, lim)
    w_lim = 0.08                    # nn.init.uniform_(weight, -0.08, 0.08)
    b_lim = 1.0 / (H ** 0.5)        # PyTorch default LSTM bias init
    lin_lim1 = 1.0 / (H ** 0.5)     # Linear(512, 32) default init
    lin_limv = 1.0 / (ATT ** 0.5)   # Linear(32, 1) default init

    def fuse(whh_t, wproj_t):
        # [W_hh^T | Wproj^T | 0-pad]  -> (H, 4H + 128) bf16, 128-lane aligned for the MXU.
        pad = jnp.zeros((H, ATT_PAD - ATT), jnp.float32)
        return jnp.concatenate([whh_t, wproj_t, pad], axis=1).astype(jnp.bfloat16)

    enc_whh_t = u(ks[1], (G, H), w_lim).T                                # (H, 4H)
    dec_whh_t = u(ks[5], (G, H), w_lim).T
    w1_t = u(ks[8], (ATT, H), lin_lim1).T                                # (H, 32)
    w2_t = u(ks[10], (ATT, H), lin_lim1).T

    p = {}
    p['enc_wih_t'] = u(ks[0], (G, IN_DIM), w_lim).T                      # (2, 4H) f32
    p['enc_wf_t'] = fuse(enc_whh_t, w1_t)                                # (H, 4H+128) bf16
    p['enc_b'] = (u(ks[2], (G,), b_lim) + u(ks[3], (G,), b_lim))[None, :]
    p['dec_wih_t'] = u(ks[4], (G, IN_DIM), w_lim).T
    p['dec_wf_t'] = fuse(dec_whh_t, w2_t)
    p['dec_b'] = (u(ks[6], (G,), b_lim) + u(ks[7], (G,), b_lim))[None, :]
    p['att_b1'] = u(ks[9], (ATT,), lin_lim1)[None, :]                    # (1, 32)
    p['att_b2'] = u(ks[11], (ATT,), lin_lim1)[None, :]                   # (1, 32)
    p['att_v'] = u(ks[12], (1, ATT), lin_limv)                           # V weight row (1, 32)
    p['att_v_b'] = u(ks[13], (1, 1), lin_limv)                           # V bias
    return p


# ---------------------------------------------------------------------------
# Forward pass
# ---------------------------------------------------------------------------
def pointer_network_forward(x, p):
    B, N, _ = x.shape
    # Tiny (8*B*N bytes) layout helper for the encoder's per-step reads; the coords themselves
    # stay fully VMEM-resident inside the kernel (no per-step streaming).
    x_tm = jnp.transpose(x, (1, 0, 2))                          # (N, B, 2)
    out_btn = _pointer_net_call(x_tm, x, p)                     # (B, n_steps, n_cities)
    # PyTorch stacks logits on axis=1 then permutes (0, 2, 1) -> (B, n_cities, n_steps).
    return jnp.transpose(out_btn, (0, 2, 1))


if __name__ == "__main__":
    key = jax.random.PRNGKey(0)
    pkey, xkey = jax.random.split(key)
    params = init_params(pkey)

    B, N = 2, 8
    x = jax.random.uniform(xkey, (B, N, IN_DIM), jnp.float32)   # (batch, cities, xy)

    out = jax.jit(pointer_network_forward)(x, params)
    out = jax.block_until_ready(out)
    assert out.shape == (B, N, N) and out.dtype == jnp.float32
    assert bool(jnp.all(jnp.isfinite(out)))
    print("KERNEL_OK")
</pallas_src>

<mosaic_0001>
module attributes {stable_mosaic.version = 11 : i64} {
  func.func @_pointer_net_kernel(%arg0: memref<8x2x2xf32, #tpu.memory_space<vmem>>, %arg1: memref<2x8x2xf32, #tpu.memory_space<vmem>>, %arg2: memref<2x2048xf32, #tpu.memory_space<vmem>>, %arg3: memref<512x2176xbf16, #tpu.memory_space<vmem>>, %arg4: memref<1x2048xf32, #tpu.memory_space<vmem>>, %arg5: memref<1x32xf32, #tpu.memory_space<vmem>>, %arg6: memref<2x2048xf32, #tpu.memory_space<vmem>>, %arg7: memref<512x2176xbf16, #tpu.memory_space<vmem>>, %arg8: memref<1x2048xf32, #tpu.memory_space<vmem>>, %arg9: memref<1x32xf32, #tpu.memory_space<vmem>>, %arg10: memref<1x32xf32, #tpu.memory_space<vmem>>, %arg11: memref<1x1xf32, #tpu.memory_space<vmem>>, %arg12: memref<2x8x8xf32, #tpu.memory_space<vmem>>, %arg13: memref<2x8x32xf32, #tpu.memory_space<vmem>>) attributes {dimension_semantics = [], scalar_prefetch = 0 : i64, scratch_operands = 1 : i64, tpu.core_type = #tpu.core_type<tc>} {
    %cst = arith.constant 0.000000e+00 : f32
    %0 = vector.broadcast %cst : f32 to vector<2x2048xf32>
    %cst_0 = arith.constant 0.000000e+00 : f32
    %1 = vector.broadcast %cst_0 : f32 to vector<2x512xf32>
    %c0_i32 = arith.constant 0 : i32
    %c8_i32 = arith.constant 8 : i32
    %2 = arith.addi %c0_i32, %c8_i32 : i32
    %c1_i32 = arith.constant 1 : i32
    %3:3 = scf.for %arg14 = %c0_i32 to %2 step %c1_i32 iter_args(%arg15 = %0, %arg16 = %1, %arg17 = %1) -> (vector<2x2048xf32>, vector<2x512xf32>, vector<2x512xf32>)  : i32 {
      %16 = arith.index_cast %arg14 : i32 to index
      %c0_19 = arith.constant 0 : index
      %c0_20 = arith.constant 0 : index
      %17 = vector.load %arg0[%16, %c0_19, %c0_20] : memref<8x2x2xf32, #tpu.memory_space<vmem>>, vector<1x2x2xf32>
      %18 = vector.shape_cast %17 : vector<1x2x2xf32> to vector<2x2xf32>
      %19 = vector.extract_strided_slice %18 {offsets = [0, 0], sizes = [2, 1], strides = [1, 1]} : vector<2x2xf32> to vector<2x1xf32>
      %c0_21 = arith.constant 0 : index
      %c0_22 = arith.constant 0 : index
      %20 = vector.load %arg2[%c0_21, %c0_22] : memref<2x2048xf32, #tpu.memory_space<vmem>>, vector<1x2048xf32>
      %21 = vector.broadcast %19 : vector<2x1xf32> to vector<2x2048xf32>
      %22 = vector.broadcast %20 : vector<1x2048xf32> to vector<2x2048xf32>
      %23 = arith.mulf %21, %22 : vector<2x2048xf32>
      %24 = vector.extract_strided_slice %18 {offsets = [0, 1], sizes = [2, 1], strides = [1, 1]} : vector<2x2xf32> to vector<2x1xf32>
      %c1 = arith.constant 1 : index
      %c0_23 = arith.constant 0 : index
      %25 = vector.load %arg2[%c1, %c0_23] : memref<2x2048xf32, #tpu.memory_space<vmem>>, vector<1x2048xf32>
      %26 = vector.broadcast %24 : vector<2x1xf32> to vector<2x2048xf32>
      %27 = vector.broadcast %25 : vector<1x2048xf32> to vector<2x2048xf32>
      %28 = arith.mulf %26, %27 : vector<2x2048xf32>
      %29 = arith.addf %23, %28 : vector<2x2048xf32>
      %c0_24 = arith.constant 0 : index
      %c0_25 = arith.constant 0 : index
      %30 = vector.load %arg4[%c0_24, %c0_25] : memref<1x2048xf32, #tpu.memory_space<vmem>>, vector<1x2048xf32>
      %31 = arith.addf %29, %arg15 : vector<2x2048xf32>
      %32 = vector.broadcast %30 : vector<1x2048xf32> to vector<2x2048xf32>
      %33 = arith.addf %31, %32 : vector<2x2048xf32>
      %34 = vector.extract_strided_slice %33 {offsets = [0, 0], sizes = [2, 512], strides = [1, 1]} : vector<2x2048xf32> to vector<2x512xf32>
      %35 = arith.negf %34 : vector<2x512xf32>
      %36 = math.exp %35 : vector<2x512xf32>
      %cst_26 = arith.constant 1.000000e+00 : f32
      %37 = vector.broadcast %cst_26 : f32 to vector<2x512xf32>
      %38 = arith.addf %37, %36 : vector<2x512xf32>
      %39 = arith.divf %37, %38 : vector<2x512xf32>
      %40 = vector.extract_strided_slice %33 {offsets = [0, 512], sizes = [2, 512], strides = [1, 1]} : vector<2x2048xf32> to vector<2x512xf32>
      %41 = arith.negf %40 : vector<2x512xf32>
      %42 = math.exp %41 : vector<2x512xf32>
      %cst_27 = arith.constant 1.000000e+00 : f32
      %43 = vector.broadcast %cst_27 : f32 to vector<2x512xf32>
      %44 = arith.addf %43, %42 : vector<2x512xf32>
      %45 = arith.divf %43, %44 : vector<2x512xf32>
      %46 = vector.extract_strided_slice %33 {offsets = [0, 1024], sizes = [2, 512], strides = [1, 1]} : vector<2x2048xf32> to vector<2x512xf32>
      %47 = math.tanh %46 : vector<2x512xf32>
      %48 = vector.extract_strided_slice %33 {offsets = [0, 1536], sizes = [2, 512], strides = [1, 1]} : vector<2x2048xf32> to vector<2x512xf32>
      %49 = arith.negf %48 : vector<2x512xf32>
      %50 = math.exp %49 : vector<2x512xf32>
      %cst_28 = arith.constant 1.000000e+00 : f32
      %51 = vector.broadcast %cst_28 : f32 to vector<2x512xf32>
      %52 = arith.addf %51, %50 : vector<2x512xf32>
      %53 = arith.divf %51, %52 : vector<2x512xf32>
      %54 = arith.mulf %45, %arg16 : vector<2x512xf32>
      %55 = arith.mulf %39, %47 : vector<2x512xf32>
      %56 = arith.addf %54, %55 : vector<2x512xf32>
      %57 = math.tanh %56 : vector<2x512xf32>
      %58 = arith.mulf %53, %57 : vector<2x512xf32>
      %59 = arith.truncf %58 : vector<2x512xf32> to vector<2x512xbf16>
      %c0_29 = arith.constant 0 : index
      %c0_30 = arith.constant 0 : index
      %60 = vector.load %arg3[%c0_29, %c0_30] : memref<512x2176xbf16, #tpu.memory_space<vmem>>, vector<512x2176xbf16>
      %cst_31 = arith.constant dense<0.000000e+00> : vector<2x2176xf32>
      %61 = tpu.matmul %59, %60, %cst_31 {dimension_numbers = #tpu.dot_dimension_numbers<[1], [0], [0], [1], [0, 0, 1, 1], [], []>} : vector<2x512xbf16>, vector<512x2176xbf16>, vector<2x2176xf32> -> vector<2x2176xf32>
      %62 = vector.extract_strided_slice %61 {offsets = [0, 0], sizes = [2, 2048], strides = [1, 1]} : vector<2x2176xf32> to vector<2x2048xf32>
      %63 = vector.extract_strided_slice %61 {offsets = [0, 2048], sizes = [2, 32], strides = [1, 1]} : vector<2x2176xf32> to vector<2x32xf32>
      %c0_32 = arith.constant 0 : index
      %c0_33 = arith.constant 0 : index
      %64 = vector.load %arg5[%c0_32, %c0_33] : memref<1x32xf32, #tpu.memory_space<vmem>>, vector<1x32xf32>
      %65 = vector.broadcast %64 : vector<1x32xf32> to vector<2x32xf32>
      %66 = arith.addf %63, %65 : vector<2x32xf32>
      %67 = vector.extract_strided_slice %66 {offsets = [0, 0], sizes = [1, 32], strides = [1, 1]} : vector<2x32xf32> to vector<1x32xf32>
      %68 = vector.shape_cast %67 : vector<1x32xf32> to vector<1x1x32xf32>
      %c0_34 = arith.constant 0 : index
      %69 = arith.index_cast %arg14 : i32 to index
      %c0_35 = arith.constant 0 : index
      %70 = vector.load %arg13[%c0_34, %69, %c0_35] : memref<2x8x32xf32, #tpu.memory_space<vmem>>, vector<1x1x32xf32>
      tpu.vector_store %arg13[%c0_34, %69, %c0_35], %68 {strides = array<i32>} : memref<2x8x32xf32, #tpu.memory_space<vmem>>, vector<1x1x32xf32>,
      %71 = vector.extract_strided_slice %66 {offsets = [1, 0], sizes = [1, 32], strides = [1, 1]} : vector<2x32xf32> to vector<1x32xf32>
      %72 = vector.shape_cast %71 : vector<1x32xf32> to vector<1x1x32xf32>
      %c1_36 = arith.constant 1 : index
      %73 = arith.index_cast %arg14 : i32 to index
      %c0_37 = arith.constant 0 : index
      %74 = vector.load %arg13[%c1_36, %73, %c0_37] : memref<2x8x32xf32, #tpu.memory_space<vmem>>, vector<1x1x32xf32>
      tpu.vector_store %arg13[%c1_36, %73, %c0_37], %72 {strides = array<i32>} : memref<2x8x32xf32, #tpu.memory_space<vmem>>, vector<1x1x32xf32>,
      scf.yield %62, %56, %58 : vector<2x2048xf32>, vector<2x512xf32>, vector<2x512xf32>
    }
    %c8_i32_1 = arith.constant 8 : i32
    %c0 = arith.constant 0 : index
    %c0_2 = arith.constant 0 : index
    %c0_3 = arith.constant 0 : index
    %4 = vector.load %arg13[%c0, %c0_2, %c0_3] : memref<2x8x32xf32, #tpu.memory_space<vmem>>, vector<2x8x32xf32>
    %c0_4 = arith.constant 0 : index
    %c0_5 = arith.constant 0 : index
    %c0_6 = arith.constant 0 : index
    %5 = vector.load %arg1[%c0_4, %c0_5, %c0_6] : memref<2x8x2xf32, #tpu.memory_space<vmem>>, vector<2x8x2xf32>
    %c0_7 = arith.constant 0 : index
    %c0_8 = arith.constant 0 : index
    %6 = vector.load %arg10[%c0_7, %c0_8] : memref<1x32xf32, #tpu.memory_space<vmem>>, vector<1x32xf32>
    %c0_9 = arith.constant 0 : index
    %c0_10 = arith.constant 0 : index
    %7 = vector.load %arg11[%c0_9, %c0_10] : memref<1x1xf32, #tpu.memory_space<vmem>>, vector<1x1xf32>
    %8 = vector.extract %7[0, 0] : f32 from vector<1x1xf32>
    %9 = arith.truncf %3#2 : vector<2x512xf32> to vector<2x512xbf16>
    %c0_11 = arith.constant 0 : index
    %c0_12 = arith.constant 0 : index
    %10 = vector.load %arg7[%c0_11, %c0_12] : memref<512x2176xbf16, #tpu.memory_space<vmem>>, vector<512x2176xbf16>
    %cst_13 = arith.constant dense<0.000000e+00> : vector<2x2176xf32>
    %11 = tpu.matmul %9, %10, %cst_13 {dimension_numbers = #tpu.dot_dimension_numbers<[1], [0], [0], [1], [0, 0, 1, 1], [], []>} : vector<2x512xbf16>, vector<512x2176xbf16>, vector<2x2176xf32> -> vector<2x2176xf32>
    %12 = vector.extract_strided_slice %11 {offsets = [0, 0], sizes = [2, 2048], strides = [1, 1]} : vector<2x2176xf32> to vector<2x2048xf32>
    %cst_14 = arith.constant 0.000000e+00 : f32
    %13 = vector.broadcast %cst_14 : f32 to vector<2x2xf32>
    %c0_i32_15 = arith.constant 0 : i32
    %c8_i32_16 = arith.constant 8 : i32
    %14 = arith.addi %c0_i32_15, %c8_i32_16 : i32
    %c1_i32_17 = arith.constant 1 : i32
    %15:3 = scf.for %arg14 = %c0_i32_15 to %14 step %c1_i32_17 iter_args(%arg15 = %12, %arg16 = %3#1, %arg17 = %13) -> (vector<2x2048xf32>, vector<2x512xf32>, vector<2x2xf32>)  : i32 {
      %16 = vector.extract_strided_slice %arg17 {offsets = [0, 0], sizes = [2, 1], strides = [1, 1]} : vector<2x2xf32> to vector<2x1xf32>
      %c0_19 = arith.constant 0 : index
      %c0_20 = arith.constant 0 : index
      %17 = vector.load %arg6[%c0_19, %c0_20] : memref<2x2048xf32, #tpu.memory_space<vmem>>, vector<1x2048xf32>
      %18 = vector.broadcast %16 : vector<2x1xf32> to vector<2x2048xf32>
      %19 = vector.broadcast %17 : vector<1x2048xf32> to vector<2x2048xf32>
      %20 = arith.mulf %18, %19 : vector<2x2048xf32>
      %21 = vector.extract_strided_slice %arg17 {offsets = [0, 1], sizes = [2, 1], strides = [1, 1]} : vector<2x2xf32> to vector<2x1xf32>
      %c1 = arith.constant 1 : index
      %c0_21 = arith.constant 0 : index
      %22 = vector.load %arg6[%c1, %c0_21] : memref<2x2048xf32, #tpu.memory_space<vmem>>, vector<1x2048xf32>
      %23 = vector.broadcast %21 : vector<2x1xf32> to vector<2x2048xf32>
      %24 = vector.broadcast %22 : vector<1x2048xf32> to vector<2x2048xf32>
      %25 = arith.mulf %23, %24 : vector<2x2048xf32>
      %26 = arith.addf %20, %25 : vector<2x2048xf32>
      %c0_22 = arith.constant 0 : index
      %c0_23 = arith.constant 0 : index
      %27 = vector.load %arg8[%c0_22, %c0_23] : memref<1x2048xf32, #tpu.memory_space<vmem>>, vector<1x2048xf32>
      %28 = arith.addf %26, %arg15 : vector<2x2048xf32>
      %29 = vector.broadcast %27 : vector<1x2048xf32> to vector<2x2048xf32>
      %30 = arith.addf %28, %29 : vector<2x2048xf32>
      %31 = vector.extract_strided_slice %30 {offsets = [0, 0], sizes = [2, 512], strides = [1, 1]} : vector<2x2048xf32> to vector<2x512xf32>
      %32 = arith.negf %31 : vector<2x512xf32>
      %33 = math.exp %32 : vector<2x512xf32>
      %cst_24 = arith.constant 1.000000e+00 : f32
      %34 = vector.broadcast %cst_24 : f32 to vector<2x512xf32>
      %35 = arith.addf %34, %33 : vector<2x512xf32>
      %36 = arith.divf %34, %35 : vector<2x512xf32>
      %37 = vector.extract_strided_slice %30 {offsets = [0, 512], sizes = [2, 512], strides = [1, 1]} : vector<2x2048xf32> to vector<2x512xf32>
      %38 = arith.negf %37 : vector<2x512xf32>
      %39 = math.exp %38 : vector<2x512xf32>
      %cst_25 = arith.constant 1.000000e+00 : f32
      %40 = vector.broadcast %cst_25 : f32 to vector<2x512xf32>
      %41 = arith.addf %40, %39 : vector<2x512xf32>
      %42 = arith.divf %40, %41 : vector<2x512xf32>
      %43 = vector.extract_strided_slice %30 {offsets = [0, 1024], sizes = [2, 512], strides = [1, 1]} : vector<2x2048xf32> to vector<2x512xf32>
      %44 = math.tanh %43 : vector<2x512xf32>
      %45 = vector.extract_strided_slice %30 {offsets = [0, 1536], sizes = [2, 512], strides = [1, 1]} : vector<2x2048xf32> to vector<2x512xf32>
      %46 = arith.negf %45 : vector<2x512xf32>
      %47 = math.exp %46 : vector<2x512xf32>
      %cst_26 = arith.constant 1.000000e+00 : f32
      %48 = vector.broadcast %cst_26 : f32 to vector<2x512xf32>
      %49 = arith.addf %48, %47 : vector<2x512xf32>
      %50 = arith.divf %48, %49 : vector<2x512xf32>
      %51 = arith.mulf %42, %arg16 : vector<2x512xf32>
      %52 = arith.mulf %36, %44 : vector<2x512xf32>
      %53 = arith.addf %51, %52 : vector<2x512xf32>
      %54 = math.tanh %53 : vector<2x512xf32>
      %55 = arith.mulf %50, %54 : vector<2x512xf32>
      %56 = arith.truncf %55 : vector<2x512xf32> to vector<2x512xbf16>
      %c0_27 = arith.constant 0 : index
      %c0_28 = arith.constant 0 : index
      %57 = vector.load %arg7[%c0_27, %c0_28] : memref<512x2176xbf16, #tpu.memory_space<vmem>>, vector<512x2176xbf16>
      %cst_29 = arith.constant dense<0.000000e+00> : vector<2x2176xf32>
      %58 = tpu.matmul %56, %57, %cst_29 {dimension_numbers = #tpu.dot_dimension_numbers<[1], [0], [0], [1], [0, 0, 1, 1], [], []>} : vector<2x512xbf16>, vector<512x2176xbf16>, vector<2x2176xf32> -> vector<2x2176xf32>
      %59 = vector.extract_strided_slice %58 {offsets = [0, 0], sizes = [2, 2048], strides = [1, 1]} : vector<2x2176xf32> to vector<2x2048xf32>
      %60 = vector.extract_strided_slice %58 {offsets = [0, 2048], sizes = [2, 32], strides = [1, 1]} : vector<2x2176xf32> to vector<2x32xf32>
      %c0_30 = arith.constant 0 : index
      %c0_31 = arith.constant 0 : index
      %61 = vector.load %arg9[%c0_30, %c0_31] : memref<1x32xf32, #tpu.memory_space<vmem>>, vector<1x32xf32>
      %62 = vector.broadcast %61 : vector<1x32xf32> to vector<2x32xf32>
      %63 = arith.addf %60, %62 : vector<2x32xf32>
      %64 = vector.shape_cast %63 : vector<2x32xf32> to vector<2x1x32xf32>
      %65 = vector.broadcast %64 : vector<2x1x32xf32> to vector<2x8x32xf32>
      %66 = arith.addf %4, %65 : vector<2x8x32xf32>
      %67 = math.tanh %66 : vector<2x8x32xf32>
      %68 = vector.shape_cast %6 : vector<1x32xf32> to vector<1x1x32xf32>
      %69 = vector.broadcast %68 : vector<1x1x32xf32> to vector<2x8x32xf32>
      %70 = arith.mulf %67, %69 : vector<2x8x32xf32>
      %cst_32 = arith.constant dense<0.000000e+00> : vector<2x8xf32>
      %71 = vector.multi_reduction <add>, %70, %cst_32 [2] : vector<2x8x32xf32> to vector<2x8xf32>
      %72 = vector.broadcast %8 : f32 to vector<2x8xf32>
      %73 = arith.addf %71, %72 : vector<2x8xf32>
      %74 = vector.extract_strided_slice %73 {offsets = [0, 0], sizes = [1, 8], strides = [1, 1]} : vector<2x8xf32> to vector<1x8xf32>
      %75 = vector.shape_cast %74 : vector<1x8xf32> to vector<1x1x8xf32>
      %c0_33 = arith.constant 0 : index
      %76 = arith.index_cast %arg14 : i32 to index
      %c0_34 = arith.constant 0 : index
      %77 = vector.load %arg12[%c0_33, %76, %c0_34] : memref<2x8x8xf32, #tpu.memory_space<vmem>>, vector<1x1x8xf32>
      tpu.vector_store %arg12[%c0_33, %76, %c0_34], %75 {strides = array<i32>} : memref<2x8x8xf32, #tpu.memory_space<vmem>>, vector<1x1x8xf32>,
      %78 = vector.extract_strided_slice %73 {offsets = [1, 0], sizes = [1, 8], strides = [1, 1]} : vector<2x8xf32> to vector<1x8xf32>
      %79 = vector.shape_cast %78 : vector<1x8xf32> to vector<1x1x8xf32>
      %c1_35 = arith.constant 1 : index
      %80 = arith.index_cast %arg14 : i32 to index
      %c0_36 = arith.constant 0 : index
      %81 = vector.load %arg12[%c1_35, %80, %c0_36] : memref<2x8x8xf32, #tpu.memory_space<vmem>>, vector<1x1x8xf32>
      tpu.vector_store %arg12[%c1_35, %80, %c0_36], %79 {strides = array<i32>} : memref<2x8x8xf32, #tpu.memory_space<vmem>>, vector<1x1x8xf32>,
      %82 = tpu.iota {dimensions = array<i32: 1>} : vector<2x8xi32>
      %cst_37 = arith.constant dense<0xFF800000> : vector<2xf32>
      %83 = vector.multi_reduction <maximumf>, %73, %cst_37 [1] : vector<2x8xf32> to vector<2xf32>
      %84 = vector.shape_cast %83 : vector<2xf32> to vector<2x1xf32>
      %85 = vector.broadcast %84 : vector<2x1xf32> to vector<2x8xf32>
      %86 = arith.cmpf oeq, %73, %85 : vector<2x8xf32>
      %c8_i32_38 = arith.constant 8 : i32
      %87 = vector.broadcast %c8_i32_38 : i32 to vector<2x8xi32>
      %88 = arith.select %86, %82, %87 : vector<2x8xi1>, vector<2x8xi32>
      %cst_39 = arith.constant dense<2147483647> : vector<2xi32>
      %89 = vector.multi_reduction <minsi>, %88, %cst_39 [1] : vector<2x8xi32> to vector<2xi32>
      %90 = vector.shape_cast %89 : vector<2xi32> to vector<2x1xi32>
      %91 = vector.broadcast %90 : vector<2x1xi32> to vector<2x8xi32>
      %92 = arith.cmpi eq, %82, %91 : vector<2x8xi32>
      %93 = arith.extui %92 : vector<2x8xi1> to vector<2x8xi32>
      %94 = arith.sitofp %93 : vector<2x8xi32> to vector<2x8xf32>
      %95 = vector.shape_cast %94 : vector<2x8xf32> to vector<2x8x1xf32>
      %96 = vector.broadcast %95 : vector<2x8x1xf32> to vector<2x8x2xf32>
      %97 = arith.mulf %96, %5 : vector<2x8x2xf32>
      %cst_40 = arith.constant dense<0.000000e+00> : vector<2x2xf32>
      %98 = vector.multi_reduction <add>, %97, %cst_40 [1] : vector<2x8x2xf32> to vector<2x2xf32>
      scf.yield %59, %53, %98 : vector<2x2048xf32>, vector<2x512xf32>, vector<2x2xf32>
    }
    %c8_i32_18 = arith.constant 8 : i32
    return
  }
}

</mosaic_0001>

<llo_original>
// kernel: pointer_network_forward.1
$region0: #{pointer_network_forward.1}
  #allocation0 [shape = 'u32[]', space=smem, size = 0x4, offset = 0x4, fixed_abs, tag = 'smem constant byte address 0x4 - core index']
  #allocation1 [shape = 'u32[72,128]{1,0:T(1,128)}', space=vmem, size = 0x9000, scoped, tag = 'internal scratch']
  #allocation2 [shape = 'f32[2,8,32]{2,1,0:T(8,128)}', space=vmem, size = 0x2000, scoped, tag = 'scratch operand']
  #allocation3 [shape = 'f32[1,1]{1,0:T(1,128)S(1)}', space=vmem, size = 0x200, scoped, tag = 'scoped memory for pointer_network_forward.1']
  %s0 = inlined_call_operand.vmem [shape: f32[8,2,2], index: 0, kind: input, shape index: {}]
  %s1 = inlined_call_operand.vmem [shape: f32[2,8,2], index: 1, kind: input, shape index: {}]
  %s2 = inlined_call_operand.hbm [shape: f32[2,2048], index: 2, kind: input, shape index: {}]
  %s3 = inlined_call_operand.hbm [shape: bf16[512,2176], index: 3, kind: input, shape index: {}]
  %s4 = inlined_call_operand.hbm [shape: f32[1,2048], index: 4, kind: input, shape index: {}]
  %s5 = inlined_call_operand.hbm [shape: f32[1,32], index: 5, kind: input, shape index: {}]
  %s6 = inlined_call_operand.hbm [shape: f32[2,2048], index: 6, kind: input, shape index: {}]
  %s7 = inlined_call_operand.hbm [shape: bf16[512,2176], index: 7, kind: input, shape index: {}]
  %s8 = inlined_call_operand.hbm [shape: f32[1,2048], index: 8, kind: input, shape index: {}]
  %s9 = inlined_call_operand.hbm [shape: f32[1,32], index: 9, kind: input, shape index: {}]
  %s10 = inlined_call_operand.hbm [shape: f32[1,32], index: 10, kind: input, shape index: {}]
  %s11 = inlined_call_operand.<no memory space> [shape: f32[1,1], index: 11, kind: input, shape index: {}]
  %s12 = inlined_call_operand.vmem [shape: f32[2,8,8], index: 12, kind: output, shape index: {}]
  %s13 = sld [smem:[#allocation0]]
  $region108: #{pointer_network_forward.1} parent=0
    _
  %s15 = ssub.s32 1, %s13
  %s16 = scalar_select 0, %s15, %s13
  %v17 = vstv %s11
  %18 = vst [vmem:[#allocation3] sm:$0x1] %v17
  $region1: #{pointer_network_forward.1} parent=0
    #allocation4 [shape = 'u8[16384]{0}', space=vmem, size = 0x4000, scoped, tag = 'input window, operand 2, single buffered']
    #allocation5 [shape = 's32[1]{0}', space=sflag, size = 0x4, scoped, tag = 'scoped memory for pointer_network_forward.1']
    #allocation6 [shape = 'u8[2228224]{0}', space=vmem, size = 0x220000, scoped, tag = 'input window, operand 3, single buffered']
    #allocation7 [shape = 's32[1]{0}', space=sflag, size = 0x4, scoped, tag = 'scoped memory for pointer_network_forward.1']
    #allocation8 [shape = 'u8[8192]{0}', space=vmem, size = 0x2000, scoped, tag = 'input window, operand 4, single buffered']
    #allocation9 [shape = 'u8[512]{0}', space=vmem, size = 0x400, scoped, tag = 'input window, operand 5, single buffered']
    #allocation10 [shape = 's32[1]{0}', space=sflag, size = 0x4, scoped, tag = 'scoped memory for pointer_network_forward.1']
    #allocation11 [shape = 'u8[16384]{0}', space=vmem, size = 0x4000, scoped, tag = 'input window, operand 6, single buffered']
    #allocation12 [shape = 'u8[2228224]{0}', space=vmem, size = 0x220000, scoped, tag = 'input window, operand 7, single buffered']
    #allocation13 [shape = 's32[1]{0}', space=sflag, size = 0x4, scoped, tag = 'scoped memory for pointer_network_forward.1']
    #allocation14 [shape = 'u8[8192]{0}', space=vmem, size = 0x2000, scoped, tag = 'input window, operand 8, single buffered']
    #allocation15 [shape = 'u8[512]{0}', space=vmem, size = 0x400, scoped, tag = 'input window, operand 9, single buffered']
    #allocation16 [shape = 's32[1]{0}', space=sflag, size = 0x4, scoped, tag = 'scoped memory for pointer_network_forward.1']
    #allocation17 [shape = 'u8[512]{0}', space=vmem, size = 0x400, scoped, tag = 'input window, operand 10, single buffered']
    %19 = vsyncpa [#allocation5], 0
    %20 = vsyncpa [#allocation7], 0
    %21 = vsyncpa [#allocation10], 0
    %22 = vsyncpa [#allocation13], 0
    %23 = vsyncpa [#allocation16], 0
    // Predicated region
    $region2: #{pointer_network_forward.1} parent=1 // pred_check
      _
    $region3: #{pointer_network_forward.1} parent=1 // pred_check_branch
      %25 = sbr.rel (0) target = $region5
    $region4: #{pointer_network_forward.1} parent=1 // pred_region
      _
    $region5: #{pointer_network_forward.1} parent=1 // pred_fallthru
      _
    // Predicated region
    $region6: #{pointer_network_forward.1} parent=1 // pred_check
      _
    $region7: #{pointer_network_forward.1} parent=1 // pred_check_branch
      %27 = sbr.rel (0) target = $region9
    $region8: #{pointer_network_forward.1} parent=1 // pred_region
      _
    $region9: #{pointer_network_forward.1} parent=1 // pred_fallthru
      _
    // Predicated region
    $region10: #{pointer_network_forward.1} parent=1 // pred_check
      _
    $region11: #{pointer_network_forward.1} parent=1 // pred_check_branch
      %29 = sbr.rel (0) target = $region13
    $region12: #{pointer_network_forward.1} parent=1 // pred_region
      %31 = vsyncadd [#allocation5], 0
      %s33 = sshll.u32 %s2, 4
      %s34 = int_to_ptr.hbm [resolvable:$true] %s33
      %s35 = sshll.u32 [#allocation4], 4
      %s36 = int_to_ptr.vmem [resolvable:$true] %s35
      %38 = dma.hbm_to_vmem [thread:$0]  %s34, 512, %s36, [#allocation5]
    $region13: #{pointer_network_forward.1} parent=1 // pred_fallthru
      _
    // Predicated region
    $region14: #{pointer_network_forward.1} parent=1 // pred_check
      _
    $region15: #{pointer_network_forward.1} parent=1 // pred_check_branch
      %40 = sbr.rel (0) target = $region17
    $region16: #{pointer_network_forward.1} parent=1 // pred_region
      %42 = vsyncadd [#allocation7], 0
      %s43 = sshll.u32 %s3, 4
      %s44 = int_to_ptr.hbm [resolvable:$true] %s43
      %s45 = sshll.u32 [#allocation6], 4
      %s46 = int_to_ptr.vmem [resolvable:$true] %s45
      %51 = dma.hbm_to_vmem [thread:$0]  %s44, 69632, %s46, [#allocation7], 1088, 1088, 68
    $region17: #{pointer_network_forward.1} parent=1 // pred_fallthru
      _
    // Predicated region
    $region18: #{pointer_network_forward.1} parent=1 // pred_check
      _
    $region19: #{pointer_network_forward.1} parent=1 // pred_check_branch
      %53 = sbr.rel (0) target = $region21
    $region20: #{pointer_network_forward.1} parent=1 // pred_region
      %55 = vsyncadd [#allocation7], 0
      %s57 = sshll.u32 %s4, 4
      %s58 = int_to_ptr.hbm [resolvable:$true] %s57
      %s59 = sshll.u32 [#allocation8], 4
      %s60 = int_to_ptr.vmem [resolvable:$true] %s59
      %62 = dma.hbm_to_vmem [thread:$0]  %s58, 256, %s60, [#allocation7]
    $region21: #{pointer_network_forward.1} parent=1 // pred_fallthru
      _
    // Predicated region
    $region22: #{pointer_network_forward.1} parent=1 // pred_check
      _
    $region23: #{pointer_network_forward.1} parent=1 // pred_check_branch
      %64 = sbr.rel (0) target = $region25
    $region24: #{pointer_network_forward.1} parent=1 // pred_region
      %66 = vsyncadd [#allocation10], 0
      %s68 = sshll.u32 %s5, 4
      %s69 = int_to_ptr.hbm [resolvable:$true] %s68
      %s70 = sshll.u32 [#allocation9], 4
      %s71 = int_to_ptr.vmem [resolvable:$true] %s70
      %73 = dma.hbm_to_vmem [thread:$0]  %s69, 16, %s71, [#allocation10]
    $region25: #{pointer_network_forward.1} parent=1 // pred_fallthru
      _
    // Predicated region
    $region26: #{pointer_network_forward.1} parent=1 // pred_check
      _
    $region27: #{pointer_network_forward.1} parent=1 // pred_check_branch
      %75 = sbr.rel (0) target = $region29
    $region28: #{pointer_network_forward.1} parent=1 // pred_region
      %77 = vsyncadd [#allocation10], 0
      %s79 = sshll.u32 %s6, 4
      %s80 = int_to_ptr.hbm [resolvable:$true] %s79
      %s81 = sshll.u32 [#allocation11], 4
      %s82 = int_to_ptr.vmem [resolvable:$true] %s81
      %84 = dma.hbm_to_vmem [thread:$0]  %s80, 512, %s82, [#allocation10]
    $region29: #{pointer_network_forward.1} parent=1 // pred_fallthru
      _
    // Predicated region
    $region30: #{pointer_network_forward.1} parent=1 // pred_check
      _
    $region31: #{pointer_network_forward.1} parent=1 // pred_check_branch
      %86 = sbr.rel (0) target = $region33
    $region32: #{pointer_network_forward.1} parent=1 // pred_region
      %88 = vsyncadd [#allocation13], 0
      %s89 = sshll.u32 %s7, 4
      %s90 = int_to_ptr.hbm [resolvable:$true] %s89
      %s91 = sshll.u32 [#allocation12], 4
      %s92 = int_to_ptr.vmem [resolvable:$true] %s91
      %97 = dma.hbm_to_vmem [thread:$0]  %s90, 69632, %s92, [#allocation13], 1088, 1088, 68
    $region33: #{pointer_network_forward.1} parent=1 // pred_fallthru
      _
    // Predicated region
    $region34: #{pointer_network_forward.1} parent=1 // pred_check
      _
    $region35: #{pointer_network_forward.1} parent=1 // pred_check_branch
      %99 = sbr.rel (0) target = $region37
    $region36: #{pointer_network_forward.1} parent=1 // pred_region
      %101 = vsyncadd [#allocation13], 0
      %s103 = sshll.u32 %s8, 4
      %s104 = int_to_ptr.hbm [resolvable:$true] %s103
      %s105 = sshll.u32 [#allocation14], 4
      %s106 = int_to_ptr.vmem [resolvable:$true] %s105
      %108 = dma.hbm_to_vmem [thread:$0]  %s104, 256, %s106, [#allocation13]
    $region37: #{pointer_network_forward.1} parent=1 // pred_fallthru
      _
    // Predicated region
    $region38: #{pointer_network_forward.1} parent=1 // pred_check
      _
    $region39: #{pointer_network_forward.1} parent=1 // pred_check_branch
      %110 = sbr.rel (0) target = $region41
    $region40: #{pointer_network_forward.1} parent=1 // pred_region
      %112 = vsyncadd [#allocation16], 0
      %s114 = sshll.u32 %s9, 4
      %s115 = int_to_ptr.hbm [resolvable:$true] %s114
      %s116 = sshll.u32 [#allocation15], 4
      %s117 = int_to_ptr.vmem [resolvable:$true] %s116
      %119 = dma.hbm_to_vmem [thread:$0]  %s115, 16, %s117, [#allocation16]
    $region41: #{pointer_network_forward.1} parent=1 // pred_fallthru
      _
    // Predicated region
    $region42: #{pointer_network_forward.1} parent=1 // pred_check
      _
    $region43: #{pointer_network_forward.1} parent=1 // pred_check_branch
      %121 = sbr.rel (0) target = $region45
    $region44: #{pointer_network_forward.1} parent=1 // pred_region
      %123 = vsyncadd [#allocation16], 0
      %s125 = sshll.u32 %s10, 4
      %s126 = int_to_ptr.hbm [resolvable:$true] %s125
      %s127 = sshll.u32 [#allocation17], 4
      %s128 = int_to_ptr.vmem [resolvable:$true] %s127
      %130 = dma.hbm_to_vmem [thread:$0]  %s126, 16, %s128, [#allocation16]
    $region45: #{pointer_network_forward.1} parent=1 // pred_fallthru
      _
    // Predicated region
    $region46: #{pointer_network_forward.1} parent=1 // pred_check
      _
    $region47: #{pointer_network_forward.1} parent=1 // pred_check_branch
      %132 = sbr.rel (0) target = $region49
    $region48: #{pointer_network_forward.1} parent=1 // pred_region
      _
    $region49: #{pointer_network_forward.1} parent=1 // pred_fallthru
      _
    // Predicated region
    $region50: #{pointer_network_forward.1} parent=1 // pred_check
      _
    $region51: #{pointer_network_forward.1} parent=1 // pred_check_branch
      %134 = sbr.rel (0) target = $region53
    $region52: #{pointer_network_forward.1} parent=1 // pred_region
      %136 = dma.done [#allocation5], 512
    $region53: #{pointer_network_forward.1} parent=1 // pred_fallthru
      _
    // Predicated region
    $region54: #{pointer_network_forward.1} parent=1 // pred_check
      _
    $region55: #{pointer_network_forward.1} parent=1 // pred_check_branch
      %138 = sbr.rel (0) target = $region57
    $region56: #{pointer_network_forward.1} parent=1 // pred_region
      %140 = dma.done [#allocation7], 69632
    $region57: #{pointer_network_forward.1} parent=1 // pred_fallthru
      _
    // Predicated region
    $region58: #{pointer_network_forward.1} parent=1 // pred_check
      _
    $region59: #{pointer_network_forward.1} parent=1 // pred_check_branch
      %142 = sbr.rel (0) target = $region61
    $region60: #{pointer_network_forward.1} parent=1 // pred_region
      %144 = dma.done [#allocation7], 256
    $region61: #{pointer_network_forward.1} parent=1 // pred_fallthru
      _
    // Predicated region
    $region62: #{pointer_network_forward.1} parent=1 // pred_check
      _
    $region63: #{pointer_network_forward.1} parent=1 // pred_check_branch
      %146 = sbr.rel (0) target = $region65
    $region64: #{pointer_network_forward.1} parent=1 // pred_region
      %148 = dma.done [#allocation10], 16
    $region65: #{pointer_network_forward.1} parent=1 // pred_fallthru
      _
    // Predicated region
    $region66: #{pointer_network_forward.1} parent=1 // pred_check
      _
    $region67: #{pointer_network_forward.1} parent=1 // pred_check_branch
      %150 = sbr.rel (0) target = $region69
    $region68: #{pointer_network_forward.1} parent=1 // pred_region
      %152 = dma.done [#allocation10], 512
    $region69: #{pointer_network_forward.1} parent=1 // pred_fallthru
      _
    // Predicated region
    $region70: #{pointer_network_forward.1} parent=1 // pred_check
      _
    $region71: #{pointer_network_forward.1} parent=1 // pred_check_branch
      %154 = sbr.rel (0) target = $region73
    $region72: #{pointer_network_forward.1} parent=1 // pred_region
      %156 = dma.done [#allocation13], 69632
    $region73: #{pointer_network_forward.1} parent=1 // pred_fallthru
      _
    // Predicated region
    $region74: #{pointer_network_forward.1} parent=1 // pred_check
      _
    $region75: #{pointer_network_forward.1} parent=1 // pred_check_branch
      %158 = sbr.rel (0) target = $region77
    $region76: #{pointer_network_forward.1} parent=1 // pred_region
      %160 = dma.done [#allocation13], 256
    $region77: #{pointer_network_forward.1} parent=1 // pred_fallthru
      _
    // Predicated region
    $region78: #{pointer_network_forward.1} parent=1 // pred_check
      _
    $region79: #{pointer_network_forward.1} parent=1 // pred_check_branch
      %162 = sbr.rel (0) target = $region81
    $region80: #{pointer_network_forward.1} parent=1 // pred_region
      %164 = dma.done [#allocation16], 16
    $region81: #{pointer_network_forward.1} parent=1 // pred_fallthru
      _
    // Predicated region
    $region82: #{pointer_network_forward.1} parent=1 // pred_check
      _
    $region83: #{pointer_network_forward.1} parent=1 // pred_check_branch
      %166 = sbr.rel (0) target = $region85
    $region84: #{pointer_network_forward.1} parent=1 // pred_region
      %168 = dma.done [#allocation16], 16
    $region85: #{pointer_network_forward.1} parent=1 // pred_fallthru
      _
    loop: start=0, step=1, limit=8
    $region86: #{pointer_network_forward.1} parent=1 // loop_pre_header
      _
    $region87: #{pointer_network_forward.1} parent=1 // loop_header
      %s170 = sphi 0, %s174
      %p171 = scmp.ge.s32.totalorder %s170, 8
      %v175 = vphi 0.0, %v4035
      %v176 = vphi 0.0, %v4087
      %v177 = vphi 0.0, %v4139
      %v178 = vphi 0.0, %v4191
      %v179 = vphi 0.0, %v4243
      %v180 = vphi 0.0, %v4295
      %v181 = vphi 0.0, %v4347
      %v182 = vphi 0.0, %v4399
      %v183 = vphi 0.0, %v4451
      %v184 = vphi 0.0, %v4503
      %v185 = vphi 0.0, %v4555
      %v186 = vphi 0.0, %v4607
      %v187 = vphi 0.0, %v4659
      %v188 = vphi 0.0, %v4711
      %v189 = vphi 0.0, %v4763
      %v190 = vphi 0.0, %v4815
      %v191 = vphi 0.0, %v642
      %v192 = vphi 0.0, %v643
      %v193 = vphi 0.0, %v644
      %v194 = vphi 0.0, %v645
      %v195 = vphi 0.0, %v650
      %v196 = vphi 0.0, %v651
      %v197 = vphi 0.0, %v652
      %v198 = vphi 0.0, %v653
    $region88: #{pointer_network_forward.1} parent=1 // loop_header_branch
      %173 = sbr.rel (%p171) target = $region92
    $region89: #{pointer_network_forward.1} parent=1 // loop_body
      %s199 = smul.u32 %s170, 2
      %s200 = scalar_lea.vmem %s0, %s199
      %v201 = vld [vmem:[%s200] sm:$0x3]
      %v202 = vld [vmem:[#allocation4] ss:$2 sm:$0xff]
      %s203 = scalar_lea.vmem [#allocation4], 16
      %v204 = vld [vmem:[%s203] ss:$2 sm:$0xff]
      %206 = vset.pattern.permute.xlu0 0
      %207 = vperm.xlu0 %206, %v201
      %v208 = vpop.permute.xlu0 %207
      %v212 = vperm.slane %v202, 0
      %v213 = vperm.slane %v202, 1
      %v214 = vperm.slane %v202, 2
      %v215 = vperm.slane %v202, 3
      %v216 = vperm.slane %v202, 4
      %v217 = vperm.slane %v202, 5
      %v218 = vperm.slane %v202, 6
      %v219 = vperm.slane %v202, 7
      %v220 = vperm.slane %v204, 0
      %v221 = vperm.slane %v204, 1
      %v222 = vperm.slane %v204, 2
      %v223 = vperm.slane %v204, 3
      %v224 = vperm.slane %v204, 4
      %v225 = vperm.slane %v204, 5
      %v226 = vperm.slane %v204, 6
      %v227 = vperm.slane %v204, 7
      %v244 = vmul.f32 %v208, %v212
      %v245 = vmul.f32 %v208, %v213
      %v246 = vmul.f32 %v208, %v214
      %v247 = vmul.f32 %v208, %v215
      %v248 = vmul.f32 %v208, %v216
      %v249 = vmul.f32 %v208, %v217
      %v250 = vmul.f32 %v208, %v218
      %v251 = vmul.f32 %v208, %v219
      %v252 = vmul.f32 %v208, %v220
      %v253 = vmul.f32 %v208, %v221
      %v254 = vmul.f32 %v208, %v222
      %v255 = vmul.f32 %v208, %v223
      %v256 = vmul.f32 %v208, %v224
      %v257 = vmul.f32 %v208, %v225
      %v258 = vmul.f32 %v208, %v226
      %v259 = vmul.f32 %v208, %v227
      %s260 = scalar_lea.vmem [#allocation4], 1
      %v261 = vld [vmem:[%s260] ss:$2 sm:$0xff]
      %s262 = scalar_lea.vmem [#allocation4], 17
      %v263 = vld [vmem:[%s262] ss:$2 sm:$0xff]
      %264 = vset.pattern.permute.xlu0 1
      %265 = vperm.xlu0 %264, %v201
      %v266 = vpop.permute.xlu0 %265
      %v270 = vperm.slane %v261, 0
      %v271 = vperm.slane %v261, 1
      %v272 = vperm.slane %v261, 2
      %v273 = vperm.slane %v261, 3
      %v274 = vperm.slane %v261, 4
      %v275 = vperm.slane %v261, 5
      %v276 = vperm.slane %v261, 6
      %v277 = vperm.slane %v261, 7
      %v278 = vperm.slane %v263, 0
      %v279 = vperm.slane %v263, 1
      %v280 = vperm.slane %v263, 2
      %v281 = vperm.slane %v263, 3
      %v282 = vperm.slane %v263, 4
      %v283 = vperm.slane %v263, 5
      %v284 = vperm.slane %v263, 6
      %v285 = vperm.slane %v263, 7
      %v302 = vmul.f32 %v266, %v270
      %v303 = vmul.f32 %v266, %v271
      %v304 = vmul.f32 %v266, %v272
      %v305 = vmul.f32 %v266, %v273
      %v306 = vmul.f32 %v266, %v274
      %v307 = vmul.f32 %v266, %v275
      %v308 = vmul.f32 %v266, %v276
      %v309 = vmul.f32 %v266, %v277
      %v310 = vmul.f32 %v266, %v278
      %v311 = vmul.f32 %v266, %v279
      %v312 = vmul.f32 %v266, %v280
      %v313 = vmul.f32 %v266, %v281
      %v314 = vmul.f32 %v266, %v282
      %v315 = vmul.f32 %v266, %v283
      %v316 = vmul.f32 %v266, %v284
      %v317 = vmul.f32 %v266, %v285
      %v318 = vadd.f32 %v244, %v302
      %v319 = vadd.f32 %v245, %v303
      %v320 = vadd.f32 %v246, %v304
      %v321 = vadd.f32 %v247, %v305
      %v322 = vadd.f32 %v248, %v306
      %v323 = vadd.f32 %v249, %v307
      %v324 = vadd.f32 %v250, %v308
      %v325 = vadd.f32 %v251, %v309
      %v326 = vadd.f32 %v252, %v310
      %v327 = vadd.f32 %v253, %v311
      %v328 = vadd.f32 %v254, %v312
      %v329 = vadd.f32 %v255, %v313
      %v330 = vadd.f32 %v256, %v314
      %v331 = vadd.f32 %v257, %v315
      %v332 = vadd.f32 %v258, %v316
      %v333 = vadd.f32 %v259, %v317
      %v334 = vld [vmem:[#allocation8] sm:$0xff]
      %v335 = vld [vmem:[#allocation8 + $0x8] sm:$0xff]
      %v336 = vadd.f32 %v318, %v175
      %v337 = vadd.f32 %v319, %v176
      %v338 = vadd.f32 %v320, %v177
      %v339 = vadd.f32 %v321, %v178
      %v340 = vadd.f32 %v322, %v179
      %v341 = vadd.f32 %v323, %v180
      %v342 = vadd.f32 %v324, %v181
      %v343 = vadd.f32 %v325, %v182
      %v344 = vadd.f32 %v326, %v183
      %v345 = vadd.f32 %v327, %v184
      %v346 = vadd.f32 %v328, %v185
      %v347 = vadd.f32 %v329, %v186
      %v348 = vadd.f32 %v330, %v187
      %v349 = vadd.f32 %v331, %v188
      %v350 = vadd.f32 %v332, %v189
      %v351 = vadd.f32 %v333, %v190
      %v354 = vperm.slane %v334, 0
      %v355 = vperm.slane %v334, 1
      %v356 = vperm.slane %v334, 2
      %v357 = vperm.slane %v334, 3
      %v358 = vperm.slane %v334, 4
      %v359 = vperm.slane %v334, 5
      %v360 = vperm.slane %v334, 6
      %v361 = vperm.slane %v334, 7
      %v362 = vperm.slane %v335, 0
      %v363 = vperm.slane %v335, 1
      %v364 = vperm.slane %v335, 2
      %v365 = vperm.slane %v335, 3
      %v366 = vperm.slane %v335, 4
      %v367 = vperm.slane %v335, 5
      %v368 = vperm.slane %v335, 6
      %v369 = vperm.slane %v335, 7
      %v386 = vadd.f32 %v336, %v354
      %v387 = vadd.f32 %v337, %v355
      %v388 = vadd.f32 %v338, %v356
      %v389 = vadd.f32 %v339, %v357
      %v390 = vadd.f32 %v340, %v358
      %v391 = vadd.f32 %v341, %v359
      %v392 = vadd.f32 %v342, %v360
      %v393 = vadd.f32 %v343, %v361
      %v394 = vadd.f32 %v344, %v362
      %v395 = vadd.f32 %v345, %v363
      %v396 = vadd.f32 %v346, %v364
      %v397 = vadd.f32 %v347, %v365
      %v398 = vadd.f32 %v348, %v366
      %v399 = vadd.f32 %v349, %v367
      %v400 = vadd.f32 %v350, %v368
      %v401 = vadd.f32 %v351, %v369
      %v402 = vxor.u32 %v386, 2147483648
      %v403 = vxor.u32 %v387, 2147483648
      %v404 = vxor.u32 %v388, 2147483648
      %v405 = vxor.u32 %v389, 2147483648
      %v406 = vmul.f32 %v402, 1.442695
      %v407 = vpow.pop %v406
      %v408 = vmul.f32 %v403, 1.442695
      %v409 = vpow.pop %v408
      %v410 = vmul.f32 %v404, 1.442695
      %v411 = vpow.pop %v410
      %v412 = vmul.f32 %v405, 1.442695
      %v413 = vpow.pop %v412
      %v414 = vadd.f32 %v407, 1.0
      %v415 = vadd.f32 %v409, 1.0
      %v416 = vadd.f32 %v411, 1.0
      %v417 = vadd.f32 %v413, 1.0
      %v418 = vrcp.pop %v414
      %v419 = vmul.f32 %v414, %v418
      %v420 = vsub.f32 1.0, %v419
      %v421 = vmul.f32 %v418, %v420
      %v422 = vadd.f32 %v418, %v421
      %vm423 = vweird.f32 %v414
      %vm424 = vweird.f32 %v418
      %vm425 = vmor %vm423, %vm424
      %v426 = vsel %vm425, %v418, %v422
      %v427 = vand.u32 2147483647, %v414
      %vm428 = vcmp.eq.f32.partialorder %v427, 8.507059e+37
      %v429 = vand.u32 %v414, 2147483648
      %v430 = vor.u32 1.1754944e-38, %v429
      %v431 = vsel %vm428, %v430, %v426
      %v432 = vmul.f32 1.0, %v431
      %v433 = vrcp.pop %v415
      %v434 = vmul.f32 %v415, %v433
      %v435 = vsub.f32 1.0, %v434
      %v436 = vmul.f32 %v433, %v435
      %v437 = vadd.f32 %v433, %v436
      %vm438 = vweird.f32 %v415
      %vm439 = vweird.f32 %v433
      %vm440 = vmor %vm438, %vm439
      %v441 = vsel %vm440, %v433, %v437
      %v442 = vand.u32 2147483647, %v415
      %vm443 = vcmp.eq.f32.partialorder %v442, 8.507059e+37
      %v444 = vand.u32 %v415, 2147483648
      %v445 = vor.u32 1.1754944e-38, %v444
      %v446 = vsel %vm443, %v445, %v441
      %v447 = vmul.f32 1.0, %v446
      %v448 = vrcp.pop %v416
      %v449 = vmul.f32 %v416, %v448
      %v450 = vsub.f32 1.0, %v449
      %v451 = vmul.f32 %v448, %v450
      %v452 = vadd.f32 %v448, %v451
      %vm453 = vweird.f32 %v416
      %vm454 = vweird.f32 %v448
      %vm455 = vmor %vm453, %vm454
      %v456 = vsel %vm455, %v448, %v452
      %v457 = vand.u32 2147483647, %v416
      %vm458 = vcmp.eq.f32.partialorder %v457, 8.507059e+37
      %v459 = vand.u32 %v416, 2147483648
      %v460 = vor.u32 1.1754944e-38, %v459
      %v461 = vsel %vm458, %v460, %v456
      %v462 = vmul.f32 1.0, %v461
      %v463 = vrcp.pop %v417
      %v464 = vmul.f32 %v417, %v463
      %v465 = vsub.f32 1.0, %v464
      %v466 = vmul.f32 %v463, %v465
      %v467 = vadd.f32 %v463, %v466
      %vm468 = vweird.f32 %v417
      %vm469 = vweird.f32 %v463
      %vm470 = vmor %vm468, %vm469
      %v471 = vsel %vm470, %v463, %v467
      %v472 = vand.u32 2147483647, %v417
      %vm473 = vcmp.eq.f32.partialorder %v472, 8.507059e+37
      %v474 = vand.u32 %v417, 2147483648
      %v475 = vor.u32 1.1754944e-38, %v474
      %v476 = vsel %vm473, %v475, %v471
      %v477 = vmul.f32 1.0, %v476
      %v478 = vxor.u32 %v390, 2147483648
      %v479 = vxor.u32 %v391, 2147483648
      %v480 = vxor.u32 %v392, 2147483648
      %v481 = vxor.u32 %v393, 2147483648
      %v482 = vmul.f32 %v478, 1.442695
      %v483 = vpow.pop %v482
      %v484 = vmul.f32 %v479, 1.442695
      %v485 = vpow.pop %v484
      %v486 = vmul.f32 %v480, 1.442695
      %v487 = vpow.pop %v486
      %v488 = vmul.f32 %v481, 1.442695
      %v489 = vpow.pop %v488
      %v490 = vadd.f32 %v483, 1.0
      %v491 = vadd.f32 %v485, 1.0
      %v492 = vadd.f32 %v487, 1.0
      %v493 = vadd.f32 %v489, 1.0
      %v494 = vrcp.pop %v490
      %v495 = vmul.f32 %v490, %v494
      %v496 = vsub.f32 1.0, %v495
      %v497 = vmul.f32 %v494, %v496
      %v498 = vadd.f32 %v494, %v497
      %vm499 = vweird.f32 %v490
      %vm500 = vweird.f32 %v494
      %vm501 = vmor %vm499, %vm500
      %v502 = vsel %vm501, %v494, %v498
      %v503 = vand.u32 2147483647, %v490
      %vm504 = vcmp.eq.f32.partialorder %v503, 8.507059e+37
      %v505 = vand.u32 %v490, 2147483648
      %v506 = vor.u32 1.1754944e-38, %v505
      %v507 = vsel %vm504, %v506, %v502
      %v508 = vmul.f32 1.0, %v507
      %v509 = vrcp.pop %v491
      %v510 = vmul.f32 %v491, %v509
      %v511 = vsub.f32 1.0, %v510
      %v512 = vmul.f32 %v509, %v511
      %v513 = vadd.f32 %v509, %v512
      %vm514 = vweird.f32 %v491
      %vm515 = vweird.f32 %v509
      %vm516 = vmor %vm514, %vm515
      %v517 = vsel %vm516, %v509, %v513
      %v518 = vand.u32 2147483647, %v491
      %vm519 = vcmp.eq.f32.partialorder %v518, 8.507059e+37
      %v520 = vand.u32 %v491, 2147483648
      %v521 = vor.u32 1.1754944e-38, %v520
      %v522 = vsel %vm519, %v521, %v517
      %v523 = vmul.f32 1.0, %v522
      %v524 = vrcp.pop %v492
      %v525 = vmul.f32 %v492, %v524
      %v526 = vsub.f32 1.0, %v525
      %v527 = vmul.f32 %v524, %v526
      %v528 = vadd.f32 %v524, %v527
      %vm529 = vweird.f32 %v492
      %vm530 = vweird.f32 %v524
      %vm531 = vmor %vm529, %vm530
      %v532 = vsel %vm531, %v524, %v528
      %v533 = vand.u32 2147483647, %v492
      %vm534 = vcmp.eq.f32.partialorder %v533, 8.507059e+37
      %v535 = vand.u32 %v492, 2147483648
      %v536 = vor.u32 1.1754944e-38, %v535
      %v537 = vsel %vm534, %v536, %v532
      %v538 = vmul.f32 1.0, %v537
      %v539 = vrcp.pop %v493
      %v540 = vmul.f32 %v493, %v539
      %v541 = vsub.f32 1.0, %v540
      %v542 = vmul.f32 %v539, %v541
      %v543 = vadd.f32 %v539, %v542
      %vm544 = vweird.f32 %v493
      %vm545 = vweird.f32 %v539
      %vm546 = vmor %vm544, %vm545
      %v547 = vsel %vm546, %v539, %v543
      %v548 = vand.u32 2147483647, %v493
      %vm549 = vcmp.eq.f32.partialorder %v548, 8.507059e+37
      %v550 = vand.u32 %v493, 2147483648
      %v551 = vor.u32 1.1754944e-38, %v550
      %v552 = vsel %vm549, %v551, %v547
      %v553 = vmul.f32 1.0, %v552
      %v554 = vtanh.pop %v394
      %v555 = vtanh.pop %v395
      %v556 = vtanh.pop %v396
      %v557 = vtanh.pop %v397
      %v558 = vxor.u32 %v398, 2147483648
      %v559 = vxor.u32 %v399, 2147483648
      %v560 = vxor.u32 %v400, 2147483648
      %v561 = vxor.u32 %v401, 2147483648
      %v562 = vmul.f32 %v558, 1.442695
      %v563 = vpow.pop %v562
      %v564 = vmul.f32 %v559, 1.442695
      %v565 = vpow.pop %v564
      %v566 = vmul.f32 %v560, 1.442695
      %v567 = vpow.pop %v566
      %v568 = vmul.f32 %v561, 1.442695
      %v569 = vpow.pop %v568
      %v570 = vadd.f32 %v563, 1.0
      %v571 = vadd.f32 %v565, 1.0
      %v572 = vadd.f32 %v567, 1.0
      %v573 = vadd.f32 %v569, 1.0
      %v574 = vrcp.pop %v570
      %v575 = vmul.f32 %v570, %v574
      %v576 = vsub.f32 1.0, %v575
      %v577 = vmul.f32 %v574, %v576
      %v578 = vadd.f32 %v574, %v577
      %vm579 = vweird.f32 %v570
      %vm580 = vweird.f32 %v574
      %vm581 = vmor %vm579, %vm580
      %v582 = vsel %vm581, %v574, %v578
      %v583 = vand.u32 2147483647, %v570
      %vm584 = vcmp.eq.f32.partialorder %v583, 8.507059e+37
      %v585 = vand.u32 %v570, 2147483648
      %v586 = vor.u32 1.1754944e-38, %v585
      %v587 = vsel %vm584, %v586, %v582
      %v588 = vmul.f32 1.0, %v587
      %v589 = vrcp.pop %v571
      %v590 = vmul.f32 %v571, %v589
      %v591 = vsub.f32 1.0, %v590
      %v592 = vmul.f32 %v589, %v591
      %v593 = vadd.f32 %v589, %v592
      %vm594 = vweird.f32 %v571
      %vm595 = vweird.f32 %v589
      %vm596 = vmor %vm594, %vm595
      %v597 = vsel %vm596, %v589, %v593
      %v598 = vand.u32 2147483647, %v571
      %vm599 = vcmp.eq.f32.partialorder %v598, 8.507059e+37
      %v600 = vand.u32 %v571, 2147483648
      %v601 = vor.u32 1.1754944e-38, %v600
      %v602 = vsel %vm599, %v601, %v597
      %v603 = vmul.f32 1.0, %v602
      %v604 = vrcp.pop %v572
      %v605 = vmul.f32 %v572, %v604
      %v606 = vsub.f32 1.0, %v605
      %v607 = vmul.f32 %v604, %v606
      %v608 = vadd.f32 %v604, %v607
      %vm609 = vweird.f32 %v572
      %vm610 = vweird.f32 %v604
      %vm611 = vmor %vm609, %vm610
      %v612 = vsel %vm611, %v604, %v608
      %v613 = vand.u32 2147483647, %v572
      %vm614 = vcmp.eq.f32.partialorder %v613, 8.507059e+37
      %v615 = vand.u32 %v572, 2147483648
      %v616 = vor.u32 1.1754944e-38, %v615
      %v617 = vsel %vm614, %v616, %v612
      %v618 = vmul.f32 1.0, %v617
      %v619 = vrcp.pop %v573
      %v620 = vmul.f32 %v573, %v619
      %v621 = vsub.f32 1.0, %v620
      %v622 = vmul.f32 %v619, %v621
      %v623 = vadd.f32 %v619, %v622
      %vm624 = vweird.f32 %v573
      %vm625 = vweird.f32 %v619
      %vm626 = vmor %vm624, %vm625
      %v627 = vsel %vm626, %v619, %v623
      %v628 = vand.u32 2147483647, %v573
      %vm629 = vcmp.eq.f32.partialorder %v628, 8.507059e+37
      %v630 = vand.u32 %v573, 2147483648
      %v631 = vor.u32 1.1754944e-38, %v630
      %v632 = vsel %vm629, %v631, %v627
      %v633 = vmul.f32 1.0, %v632
      %v634 = vmul.f32 %v508, %v191
      %v635 = vmul.f32 %v523, %v192
      %v636 = vmul.f32 %v538, %v193
      %v637 = vmul.f32 %v553, %v194
      %v638 = vmul.f32 %v432, %v554
      %v639 = vmul.f32 %v447, %v555
      %v640 = vmul.f32 %v462, %v556
      %v641 = vmul.f32 %v477, %v557
      %v642 = vadd.f32 %v634, %v638
      %v643 = vadd.f32 %v635, %v639
      %v644 = vadd.f32 %v636, %v640
      %v645 = vadd.f32 %v637, %v641
      %v646 = vtanh.pop %v642
      %v647 = vtanh.pop %v643
      %v648 = vtanh.pop %v644
      %v649 = vtanh.pop %v645
      %v650 = vmul.f32 %v588, %v646
      %v651 = vmul.f32 %v603, %v647
      %v652 = vmul.f32 %v618, %v648
      %v653 = vmul.f32 %v633, %v649
      %v654 = vpack.c.bf16 %v650, %v650
      %v655 = vpack.c.bf16 %v651, %v651
      %v656 = vpack.c.bf16 %v652, %v652
      %v657 = vpack.c.bf16 %v653, %v653
      %v658 = vld [vmem:[#allocation6] sm:$0xff]
      %v659 = vld [vmem:[#allocation6 + $0x8] sm:$0xff]
      %v660 = vld [vmem:[#allocation6 + $0x10] sm:$0xff]
      %v661 = vld [vmem:[#allocation6 + $0x18] sm:$0xff]
      %v662 = vld [vmem:[#allocation6 + $0x20] sm:$0xff]
      %v663 = vld [vmem:[#allocation6 + $0x28] sm:$0xff]
      %v664 = vld [vmem:[#allocation6 + $0x30] sm:$0xff]
      %v665 = vld [vmem:[#allocation6 + $0x38] sm:$0xff]
      %v666 = vld [vmem:[#allocation6 + $0x40] sm:$0xf]
      %v667 = vld [vmem:[#allocation6 + $0x44] sm:$0xff]
      %v668 = vld [vmem:[#allocation6 + $0x4c] sm:$0xff]
      %v669 = vld [vmem:[#allocation6 + $0x54] sm:$0xff]
      %v670 = vld [vmem:[#allocation6 + $0x5c] sm:$0xff]
      %v671 = vld [vmem:[#allocation6 + $0x64] sm:$0xff]
      %v672 = vld [vmem:[#allocation6 + $0x6c] sm:$0xff]
      %v673 = vld [vmem:[#allocation6 + $0x74] sm:$0xff]
      %v674 = vld [vmem:[#allocation6 + $0x7c] sm:$0xff]
      %v675 = vld [vmem:[#allocation6 + $0x84] sm:$0xf]
      %v676 = vld [vmem:[#allocation6 + $0x88] sm:$0xff]
      %v677 = vld [vmem:[#allocation6 + $0x90] sm:$0xff]
      %v678 = vld [vmem:[#allocation6 + $0x98] sm:$0xff]
      %v679 = vld [vmem:[#allocation6 + $0xa0] sm:$0xff]
      %v680 = vld [vmem:[#allocation6 + $0xa8] sm:$0xff]
      %v681 = vld [vmem:[#allocation6 + $0xb0] sm:$0xff]
      %v682 = vld [vmem:[#allocation6 + $0xb8] sm:$0xff]
      %v683 = vld [vmem:[#allocation6 + $0xc0] sm:$0xff]
      %v684 = vld [vmem:[#allocation6 + $0xc8] sm:$0xf]
      %v685 = vld [vmem:[#allocation6 + $0xcc] sm:$0xff]
      %v686 = vld [vmem:[#allocation6 + $0xd4] sm:$0xff]
      %v687 = vld [vmem:[#allocation6 + $0xdc] sm:$0xff]
      %v688 = vld [vmem:[#allocation6 + $0xe4] sm:$0xff]
      %v689 = vld [vmem:[#allocation6 + $0xec] sm:$0xff]
      %v690 = vld [vmem:[#allocation6 + $0xf4] sm:$0xff]
      %v691 = vld [vmem:[#allocation6 + $0xfc] sm:$0xff]
      %v692 = vld [vmem:[#allocation6 + $0x104] sm:$0xff]
      %v693 = vld [vmem:[#allocation6 + $0x10c] sm:$0xf]
      %v694 = vld [vmem:[#allocation6 + $0x110] sm:$0xff]
      %v695 = vld [vmem:[#allocation6 + $0x118] sm:$0xff]
      %v696 = vld [vmem:[#allocation6 + $0x120] sm:$0xff]
      %v697 = vld [vmem:[#allocation6 + $0x128] sm:$0xff]
      %v698 = vld [vmem:[#allocation6 + $0x130] sm:$0xff]
      %v699 = vld [vmem:[#allocation6 + $0x138] sm:$0xff]
      %v700 = vld [vmem:[#allocation6 + $0x140] sm:$0xff]
      %v701 = vld [vmem:[#allocation6 + $0x148] sm:$0xff]
      %v702 = vld [vmem:[#allocation6 + $0x150] sm:$0xf]
      %v703 = vld [vmem:[#allocation6 + $0x154] sm:$0xff]
      %v704 = vld [vmem:[#allocation6 + $0x15c] sm:$0xff]
      %v705 = vld [vmem:[#allocation6 + $0x164] sm:$0xff]
      %v706 = vld [vmem:[#allocation6 + $0x16c] sm:$0xff]
      %v707 = vld [vmem:[#allocation6 + $0x174] sm:$0xff]
      %v708 = vld [vmem:[#allocation6 + $0x17c] sm:$0xff]
      %v709 = vld [vmem:[#allocation6 + $0x184] sm:$0xff]
      %v710 = vld [vmem:[#allocation6 + $0x18c] sm:$0xff]
      %v711 = vld [vmem:[#allocation6 + $0x194] sm:$0xf]
      %v712 = vld [vmem:[#allocation6 + $0x198] sm:$0xff]
      %v713 = vld [vmem:[#allocation6 + $0x1a0] sm:$0xff]
      %v714 = vld [vmem:[#allocation6 + $0x1a8] sm:$0xff]
      %v715 = vld [vmem:[#allocation6 + $0x1b0] sm:$0xff]
      %v716 = vld [vmem:[#allocation6 + $0x1b8] sm:$0xff]
      %v717 = vld [vmem:[#allocation6 + $0x1c0] sm:$0xff]
      %v718 = vld [vmem:[#allocation6 + $0x1c8] sm:$0xff]
      %v719 = vld [vmem:[#allocation6 + $0x1d0] sm:$0xff]
      %v720 = vld [vmem:[#allocation6 + $0x1d8] sm:$0xf]
      %v721 = vld [vmem:[#allocation6 + $0x1dc] sm:$0xff]
      %v722 = vld [vmem:[#allocation6 + $0x1e4] sm:$0xff]
      %v723 = vld [vmem:[#allocation6 + $0x1ec] sm:$0xff]
      %v724 = vld [vmem:[#allocation6 + $0x1f4] sm:$0xff]
      %v725 = vld [vmem:[#allocation6 + $0x1fc] sm:$0xff]
      %v726 = vld [vmem:[#allocation6 + $0x204] sm:$0xff]
      %v727 = vld [vmem:[#allocation6 + $0x20c] sm:$0xff]
      %v728 = vld [vmem:[#allocation6 + $0x214] sm:$0xff]
      %v729 = vld [vmem:[#allocation6 + $0x21c] sm:$0xf]
      %v730 = vld [vmem:[#allocation6 + $0x220] sm:$0xff]
      %v731 = vld [vmem:[#allocation6 + $0x228] sm:$0xff]
      %v732 = vld [vmem:[#allocation6 + $0x230] sm:$0xff]
      %v733 = vld [vmem:[#allocation6 + $0x238] sm:$0xff]
      %v734 = vld [vmem:[#allocation6 + $0x240] sm:$0xff]
      %v735 = vld [vmem:[#allocation6 + $0x248] sm:$0xff]
      %v736 = vld [vmem:[#allocation6 + $0x250] sm:$0xff]
      %v737 = vld [vmem:[#allocation6 + $0x258] sm:$0xff]
      %v738 = vld [vmem:[#allocation6 + $0x260] sm:$0xf]
      %v739 = vld [vmem:[#allocation6 + $0x264] sm:$0xff]
      %v740 = vld [vmem:[#allocation6 + $0x26c] sm:$0xff]
      %v741 = vld [vmem:[#allocation6 + $0x274] sm:$0xff]
      %v742 = vld [vmem:[#allocation6 + $0x27c] sm:$0xff]
      %v743 = vld [vmem:[#allocation6 + $0x284] sm:$0xff]
      %v744 = vld [vmem:[#allocation6 + $0x28c] sm:$0xff]
      %v745 = vld [vmem:[#allocation6 + $0x294] sm:$0xff]
      %v746 = vld [vmem:[#allocation6 + $0x29c] sm:$0xff]
      %v747 = vld [vmem:[#allocation6 + $0x2a4] sm:$0xf]
      %v748 = vld [vmem:[#allocation6 + $0x2a8] sm:$0xff]
      %v749 = vld [vmem:[#allocation6 + $0x2b0] sm:$0xff]
      %v750 = vld [vmem:[#allocation6 + $0x2b8] sm:$0xff]
      %v751 = vld [vmem:[#allocation6 + $0x2c0] sm:$0xff]
      %v752 = vld [vmem:[#allocation6 + $0x2c8] sm:$0xff]
      %v753 = vld [vmem:[#allocation6 + $0x2d0] sm:$0xff]
      %v754 = vld [vmem:[#allocation6 + $0x2d8] sm:$0xff]
      %v755 = vld [vmem:[#allocation6 + $0x2e0] sm:$0xff]
      %v756 = vld [vmem:[#allocation6 + $0x2e8] sm:$0xf]
      %v757 = vld [vmem:[#allocation6 + $0x2ec] sm:$0xff]
      %v758 = vld [vmem:[#allocation6 + $0x2f4] sm:$0xff]
      %v759 = vld [vmem:[#allocation6 + $0x2fc] sm:$0xff]
      %v760 = vld [vmem:[#allocation6 + $0x304] sm:$0xff]
      %v761 = vld [vmem:[#allocation6 + $0x30c] sm:$0xff]
      %v762 = vld [vmem:[#allocation6 + $0x314] sm:$0xff]
      %v763 = vld [vmem:[#allocation6 + $0x31c] sm:$0xff]
      %v764 = vld [vmem:[#allocation6 + $0x324] sm:$0xff]
      %v765 = vld [vmem:[#allocation6 + $0x32c] sm:$0xf]
      %v766 = vld [vmem:[#allocation6 + $0x330] sm:$0xff]
      %v767 = vld [vmem:[#allocation6 + $0x338] sm:$0xff]
      %v768 = vld [vmem:[#allocation6 + $0x340] sm:$0xff]
      %v769 = vld [vmem:[#allocation6 + $0x348] sm:$0xff]
      %v770 = vld [vmem:[#allocation6 + $0x350] sm:$0xff]
      %v771 = vld [vmem:[#allocation6 + $0x358] sm:$0xff]
      %v772 = vld [vmem:[#allocation6 + $0x360] sm:$0xff]
      %v773 = vld [vmem:[#allocation6 + $0x368] sm:$0xff]
      %v774 = vld [vmem:[#allocation6 + $0x370] sm:$0xf]
      %v775 = vld [vmem:[#allocation6 + $0x374] sm:$0xff]
      %v776 = vld [vmem:[#allocation6 + $0x37c] sm:$0xff]
      %v777 = vld [vmem:[#allocation6 + $0x384] sm:$0xff]
      %v778 = vld [vmem:[#allocation6 + $0x38c] sm:$0xff]
      %v779 = vld [vmem:[#allocation6 + $0x394] sm:$0xff]
      %v780 = vld [vmem:[#allocation6 + $0x39c] sm:$0xff]
      %v781 = vld [vmem:[#allocation6 + $0x3a4] sm:$0xff]
      %v782 = vld [vmem:[#allocation6 + $0x3ac] sm:$0xff]
      %v783 = vld [vmem:[#allocation6 + $0x3b4] sm:$0xf]
      %v784 = vld [vmem:[#allocation6 + $0x3b8] sm:$0xff]
      %v785 = vld [vmem:[#allocation6 + $0x3c0] sm:$0xff]
      %v786 = vld [vmem:[#allocation6 + $0x3c8] sm:$0xff]
      %v787 = vld [vmem:[#allocation6 + $0x3d0] sm:$0xff]
      %v788 = vld [vmem:[#allocation6 + $0x3d8] sm:$0xff]
      %v789 = vld [vmem:[#allocation6 + $0x3e0] sm:$0xff]
      %v790 = vld [vmem:[#allocation6 + $0x3e8] sm:$0xff]
      %v791 = vld [vmem:[#allocation6 + $0x3f0] sm:$0xff]
      %v792 = vld [vmem:[#allocation6 + $0x3f8] sm:$0xf]
      %v793 = vld [vmem:[#allocation6 + $0x3fc] sm:$0xff]
      %v794 = vld [vmem:[#allocation6 + $0x404] sm:$0xff]
      %v795 = vld [vmem:[#allocation6 + $0x40c] sm:$0xff]
      %v796 = vld [vmem:[#allocation6 + $0x414] sm:$0xff]
      %v797 = vld [vmem:[#allocation6 + $0x41c] sm:$0xff]
      %v798 = vld [vmem:[#allocation6 + $0x424] sm:$0xff]
      %v799 = vld [vmem:[#allocation6 + $0x42c] sm:$0xff]
      %v800 = vld [vmem:[#allocation6 + $0x434] sm:$0xff]
      %v801 = vld [vmem:[#allocation6 + $0x43c] sm:$0xf]
      %v802 = vld [vmem:[#allocation6 + $0x440] sm:$0xff]
      %v803 = vld [vmem:[#allocation6 + $0x448] sm:$0xff]
      %v804 = vld [vmem:[#allocation6 + $0x450] sm:$0xff]
      %v805 = vld [vmem:[#allocation6 + $0x458] sm:$0xff]
      %v806 = vld [vmem:[#allocation6 + $0x460] sm:$0xff]
      %v807 = vld [vmem:[#allocation6 + $0x468] sm:$0xff]
      %v808 = vld [vmem:[#allocation6 + $0x470] sm:$0xff]
      %v809 = vld [vmem:[#allocation6 + $0x478] sm:$0xff]
      %v810 = vld [vmem:[#allocation6 + $0x480] sm:$0xf]
      %v811 = vld [vmem:[#allocation6 + $0x484] sm:$0xff]
      %v812 = vld [vmem:[#allocation6 + $0x48c] sm:$0xff]
      %v813 = vld [vmem:[#allocation6 + $0x494] sm:$0xff]
      %v814 = vld [vmem:[#allocation6 + $0x49c] sm:$0xff]
      %v815 = vld [vmem:[#allocation6 + $0x4a4] sm:$0xff]
      %v816 = vld [vmem:[#allocation6 + $0x4ac] sm:$0xff]
      %v817 = vld [vmem:[#allocation6 + $0x4b4] sm:$0xff]
      %v818 = vld [vmem:[#allocation6 + $0x4bc] sm:$0xff]
      %v819 = vld [vmem:[#allocation6 + $0x4c4] sm:$0xf]
      %v820 = vld [vmem:[#allocation6 + $0x4c8] sm:$0xff]
      %v821 = vld [vmem:[#allocation6 + $0x4d0] sm:$0xff]
      %v822 = vld [vmem:[#allocation6 + $0x4d8] sm:$0xff]
      %v823 = vld [vmem:[#allocation6 + $0x4e0] sm:$0xff]
      %v824 = vld [vmem:[#allocation6 + $0x4e8] sm:$0xff]
      %v825 = vld [vmem:[#allocation6 + $0x4f0] sm:$0xff]
      %v826 = vld [vmem:[#allocation6 + $0x4f8] sm:$0xff]
      %v827 = vld [vmem:[#allocation6 + $0x500] sm:$0xff]
      %v828 = vld [vmem:[#allocation6 + $0x508] sm:$0xf]
      %v829 = vld [vmem:[#allocation6 + $0x50c] sm:$0xff]
      %v830 = vld [vmem:[#allocation6 + $0x514] sm:$0xff]
      %v831 = vld [vmem:[#allocation6 + $0x51c] sm:$0xff]
      %v832 = vld [vmem:[#allocation6 + $0x524] sm:$0xff]
      %v833 = vld [vmem:[#allocation6 + $0x52c] sm:$0xff]
      %v834 = vld [vmem:[#allocation6 + $0x534] sm:$0xff]
      %v835 = vld [vmem:[#allocation6 + $0x53c] sm:$0xff]
      %v836 = vld [vmem:[#allocation6 + $0x544] sm:$0xff]
      %v837 = vld [vmem:[#allocation6 + $0x54c] sm:$0xf]
      %v838 = vld [vmem:[#allocation6 + $0x550] sm:$0xff]
      %v839 = vld [vmem:[#allocation6 + $0x558] sm:$0xff]
      %v840 = vld [vmem:[#allocation6 + $0x560] sm:$0xff]
      %v841 = vld [vmem:[#allocation6 + $0x568] sm:$0xff]
      %v842 = vld [vmem:[#allocation6 + $0x570] sm:$0xff]
      %v843 = vld [vmem:[#allocation6 + $0x578] sm:$0xff]
      %v844 = vld [vmem:[#allocation6 + $0x580] sm:$0xff]
      %v845 = vld [vmem:[#allocation6 + $0x588] sm:$0xff]
      %v846 = vld [vmem:[#allocation6 + $0x590] sm:$0xf]
      %v847 = vld [vmem:[#allocation6 + $0x594] sm:$0xff]
      %v848 = vld [vmem:[#allocation6 + $0x59c] sm:$0xff]
      %v849 = vld [vmem:[#allocation6 + $0x5a4] sm:$0xff]
      %v850 = vld [vmem:[#allocation6 + $0x5ac] sm:$0xff]
      %v851 = vld [vmem:[#allocation6 + $0x5b4] sm:$0xff]
      %v852 = vld [vmem:[#allocation6 + $0x5bc] sm:$0xff]
      %v853 = vld [vmem:[#allocation6 + $0x5c4] sm:$0xff]
      %v854 = vld [vmem:[#allocation6 + $0x5cc] sm:$0xff]
      %v855 = vld [vmem:[#allocation6 + $0x5d4] sm:$0xf]
      %v856 = vld [vmem:[#allocation6 + $0x5d8] sm:$0xff]
      %v857 = vld [vmem:[#allocation6 + $0x5e0] sm:$0xff]
      %v858 = vld [vmem:[#allocation6 + $0x5e8] sm:$0xff]
      %v859 = vld [vmem:[#allocation6 + $0x5f0] sm:$0xff]
      %v860 = vld [vmem:[#allocation6 + $0x5f8] sm:$0xff]
      %v861 = vld [vmem:[#allocation6 + $0x600] sm:$0xff]
      %v862 = vld [vmem:[#allocation6 + $0x608] sm:$0xff]
      %v863 = vld [vmem:[#allocation6 + $0x610] sm:$0xff]
      %v864 = vld [vmem:[#allocation6 + $0x618] sm:$0xf]
      %v865 = vld [vmem:[#allocation6 + $0x61c] sm:$0xff]
      %v866 = vld [vmem:[#allocation6 + $0x624] sm:$0xff]
      %v867 = vld [vmem:[#allocation6 + $0x62c] sm:$0xff]
      %v868 = vld [vmem:[#allocation6 + $0x634] sm:$0xff]
      %v869 = vld [vmem:[#allocation6 + $0x63c] sm:$0xff]
      %v870 = vld [vmem:[#allocation6 + $0x644] sm:$0xff]
      %v871 = vld [vmem:[#allocation6 + $0x64c] sm:$0xff]
      %v872 = vld [vmem:[#allocation6 + $0x654] sm:$0xff]
      %v873 = vld [vmem:[#allocation6 + $0x65c] sm:$0xf]
      %v874 = vld [vmem:[#allocation6 + $0x660] sm:$0xff]
      %v875 = vld [vmem:[#allocation6 + $0x668] sm:$0xff]
      %v876 = vld [vmem:[#allocation6 + $0x670] sm:$0xff]
      %v877 = vld [vmem:[#allocation6 + $0x678] sm:$0xff]
      %v878 = vld [vmem:[#allocation6 + $0x680] sm:$0xff]
      %v879 = vld [vmem:[#allocation6 + $0x688] sm:$0xff]
      %v880 = vld [vmem:[#allocation6 + $0x690] sm:$0xff]
      %v881 = vld [vmem:[#allocation6 + $0x698] sm:$0xff]
      %v882 = vld [vmem:[#allocation6 + $0x6a0] sm:$0xf]
      %v883 = vld [vmem:[#allocation6 + $0x6a4] sm:$0xff]
      %v884 = vld [vmem:[#allocation6 + $0x6ac] sm:$0xff]
      %v885 = vld [vmem:[#allocation6 + $0x6b4] sm:$0xff]
      %v886 = vld [vmem:[#allocation6 + $0x6bc] sm:$0xff]
      %v887 = vld [vmem:[#allocation6 + $0x6c4] sm:$0xff]
      %v888 = vld [vmem:[#allocation6 + $0x6cc] sm:$0xff]
      %v889 = vld [vmem:[#allocation6 + $0x6d4] sm:$0xff]
      %v890 = vld [vmem:[#allocation6 + $0x6dc] sm:$0xff]
      %v891 = vld [vmem:[#allocation6 + $0x6e4] sm:$0xf]
      %v892 = vld [vmem:[#allocation6 + $0x6e8] sm:$0xff]
      %v893 = vld [vmem:[#allocation6 + $0x6f0] sm:$0xff]
      %v894 = vld [vmem:[#allocation6 + $0x6f8] sm:$0xff]
      %v895 = vld [vmem:[#allocation6 + $0x700] sm:$0xff]
      %v896 = vld [vmem:[#allocation6 + $0x708] sm:$0xff]
      %v897 = vld [vmem:[#allocation6 + $0x710] sm:$0xff]
      %v898 = vld [vmem:[#allocation6 + $0x718] sm:$0xff]
      %v899 = vld [vmem:[#allocation6 + $0x720] sm:$0xff]
      %v900 = vld [vmem:[#allocation6 + $0x728] sm:$0xf]
      %v901 = vld [vmem:[#allocation6 + $0x72c] sm:$0xff]
      %v902 = vld [vmem:[#allocation6 + $0x734] sm:$0xff]
      %v903 = vld [vmem:[#allocation6 + $0x73c] sm:$0xff]
      %v904 = vld [vmem:[#allocation6 + $0x744] sm:$0xff]
      %v905 = vld [vmem:[#allocation6 + $0x74c] sm:$0xff]
      %v906 = vld [vmem:[#allocation6 + $0x754] sm:$0xff]
      %v907 = vld [vmem:[#allocation6 + $0x75c] sm:$0xff]
      %v908 = vld [vmem:[#allocation6 + $0x764] sm:$0xff]
      %v909 = vld [vmem:[#allocation6 + $0x76c] sm:$0xf]
      %v910 = vld [vmem:[#allocation6 + $0x770] sm:$0xff]
      %v911 = vld [vmem:[#allocation6 + $0x778] sm:$0xff]
      %v912 = vld [vmem:[#allocation6 + $0x780] sm:$0xff]
      %v913 = vld [vmem:[#allocation6 + $0x788] sm:$0xff]
      %v914 = vld [vmem:[#allocation6 + $0x790] sm:$0xff]
      %v915 = vld [vmem:[#allocation6 + $0x798] sm:$0xff]
      %v916 = vld [vmem:[#allocation6 + $0x7a0] sm:$0xff]
      %v917 = vld [vmem:[#allocation6 + $0x7a8] sm:$0xff]
      %v918 = vld [vmem:[#allocation6 + $0x7b0] sm:$0xf]
      %v919 = vld [vmem:[#allocation6 + $0x7b4] sm:$0xff]
      %v920 = vld [vmem:[#allocation6 + $0x7bc] sm:$0xff]
      %v921 = vld [vmem:[#allocation6 + $0x7c4] sm:$0xff]
      %v922 = vld [vmem:[#allocation6 + $0x7cc] sm:$0xff]
      %v923 = vld [vmem:[#allocation6 + $0x7d4] sm:$0xff]
      %v924 = vld [vmem:[#allocation6 + $0x7dc] sm:$0xff]
      %v925 = vld [vmem:[#allocation6 + $0x7e4] sm:$0xff]
      %v926 = vld [vmem:[#allocation6 + $0x7ec] sm:$0xff]
      %v927 = vld [vmem:[#allocation6 + $0x7f4] sm:$0xf]
      %v928 = vld [vmem:[#allocation6 + $0x7f8] sm:$0xff]
      %v929 = vld [vmem:[#allocation6 + $0x800] sm:$0xff]
      %v930 = vld [vmem:[#allocation6 + $0x808] sm:$0xff]
      %v931 = vld [vmem:[#allocation6 + $0x810] sm:$0xff]
      %v932 = vld [vmem:[#allocation6 + $0x818] sm:$0xff]
      %v933 = vld [vmem:[#allocation6 + $0x820] sm:$0xff]
      %v934 = vld [vmem:[#allocation6 + $0x828] sm:$0xff]
      %v935 = vld [vmem:[#allocation6 + $0x830] sm:$0xff]
      %v936 = vld [vmem:[#allocation6 + $0x838] sm:$0xf]
      %v937 = vld [vmem:[#allocation6 + $0x83c] sm:$0xff]
      %v938 = vld [vmem:[#allocation6 + $0x844] sm:$0xff]
      %v939 = vld [vmem:[#allocation6 + $0x84c] sm:$0xff]
      %v940 = vld [vmem:[#allocation6 + $0x854] sm:$0xff]
      %v941 = vld [vmem:[#allocation6 + $0x85c] sm:$0xff]
      %v942 = vld [vmem:[#allocation6 + $0x864] sm:$0xff]
      %v943 = vld [vmem:[#allocation6 + $0x86c] sm:$0xff]
      %v944 = vld [vmem:[#allocation6 + $0x874] sm:$0xff]
      %v945 = vld [vmem:[#allocation6 + $0x87c] sm:$0xf]
      %v946 = vld [vmem:[#allocation6 + $0x880] sm:$0xff]
      %v947 = vld [vmem:[#allocation6 + $0x888] sm:$0xff]
      %v948 = vld [vmem:[#allocation6 + $0x890] sm:$0xff]
      %v949 = vld [vmem:[#allocation6 + $0x898] sm:$0xff]
      %v950 = vld [vmem:[#allocation6 + $0x8a0] sm:$0xff]
      %v951 = vld [vmem:[#allocation6 + $0x8a8] sm:$0xff]
      %v952 = vld [vmem:[#allocation6 + $0x8b0] sm:$0xff]
      %v953 = vld [vmem:[#allocation6 + $0x8b8] sm:$0xff]
      %v954 = vld [vmem:[#allocation6 + $0x8c0] sm:$0xf]
      %v955 = vld [vmem:[#allocation6 + $0x8c4] sm:$0xff]
      %v956 = vld [vmem:[#allocation6 + $0x8cc] sm:$0xff]
      %v957 = vld [vmem:[#allocation6 + $0x8d4] sm:$0xff]
      %v958 = vld [vmem:[#allocation6 + $0x8dc] sm:$0xff]
      %v959 = vld [vmem:[#allocation6 + $0x8e4] sm:$0xff]
      %v960 = vld [vmem:[#allocation6 + $0x8ec] sm:$0xff]
      %v961 = vld [vmem:[#allocation6 + $0x8f4] sm:$0xff]
      %v962 = vld [vmem:[#allocation6 + $0x8fc] sm:$0xff]
      %v963 = vld [vmem:[#allocation6 + $0x904] sm:$0xf]
      %v964 = vld [vmem:[#allocation6 + $0x908] sm:$0xff]
      %v965 = vld [vmem:[#allocation6 + $0x910] sm:$0xff]
      %v966 = vld [vmem:[#allocation6 + $0x918] sm:$0xff]
      %v967 = vld [vmem:[#allocation6 + $0x920] sm:$0xff]
      %v968 = vld [vmem:[#allocation6 + $0x928] sm:$0xff]
      %v969 = vld [vmem:[#allocation6 + $0x930] sm:$0xff]
      %v970 = vld [vmem:[#allocation6 + $0x938] sm:$0xff]
      %v971 = vld [vmem:[#allocation6 + $0x940] sm:$0xff]
      %v972 = vld [vmem:[#allocation6 + $0x948] sm:$0xf]
      %v973 = vld [vmem:[#allocation6 + $0x94c] sm:$0xff]
      %v974 = vld [vmem:[#allocation6 + $0x954] sm:$0xff]
      %v975 = vld [vmem:[#allocation6 + $0x95c] sm:$0xff]
      %v976 = vld [vmem:[#allocation6 + $0x964] sm:$0xff]
      %v977 = vld [vmem:[#allocation6 + $0x96c] sm:$0xff]
      %v978 = vld [vmem:[#allocation6 + $0x974] sm:$0xff]
      %v979 = vld [vmem:[#allocation6 + $0x97c] sm:$0xff]
      %v980 = vld [vmem:[#allocation6 + $0x984] sm:$0xff]
      %v981 = vld [vmem:[#allocation6 + $0x98c] sm:$0xf]
      %v982 = vld [vmem:[#allocation6 + $0x990] sm:$0xff]
      %v983 = vld [vmem:[#allocation6 + $0x998] sm:$0xff]
      %v984 = vld [vmem:[#allocation6 + $0x9a0] sm:$0xff]
      %v985 = vld [vmem:[#allocation6 + $0x9a8] sm:$0xff]
      %v986 = vld [vmem:[#allocation6 + $0x9b0] sm:$0xff]
      %v987 = vld [vmem:[#allocation6 + $0x9b8] sm:$0xff]
      %v988 = vld [vmem:[#allocation6 + $0x9c0] sm:$0xff]
      %v989 = vld [vmem:[#allocation6 + $0x9c8] sm:$0xff]
      %v990 = vld [vmem:[#allocation6 + $0x9d0] sm:$0xf]
      %v991 = vld [vmem:[#allocation6 + $0x9d4] sm:$0xff]
      %v992 = vld [vmem:[#allocation6 + $0x9dc] sm:$0xff]
      %v993 = vld [vmem:[#allocation6 + $0x9e4] sm:$0xff]
      %v994 = vld [vmem:[#allocation6 + $0x9ec] sm:$0xff]
      %v995 = vld [vmem:[#allocation6 + $0x9f4] sm:$0xff]
      %v996 = vld [vmem:[#allocation6 + $0x9fc] sm:$0xff]
      %v997 = vld [vmem:[#allocation6 + $0xa04] sm:$0xff]
      %v998 = vld [vmem:[#allocation6 + $0xa0c] sm:$0xff]
      %v999 = vld [vmem:[#allocation6 + $0xa14] sm:$0xf]
      %v1000 = vld [vmem:[#allocation6 + $0xa18] sm:$0xff]
      %v1001 = vld [vmem:[#allocation6 + $0xa20] sm:$0xff]
      %v1002 = vld [vmem:[#allocation6 + $0xa28] sm:$0xff]
      %v1003 = vld [vmem:[#allocation6 + $0xa30] sm:$0xff]
      %v1004 = vld [vmem:[#allocation6 + $0xa38] sm:$0xff]
      %v1005 = vld [vmem:[#allocation6 + $0xa40] sm:$0xff]
      %v1006 = vld [vmem:[#allocation6 + $0xa48] sm:$0xff]
      %v1007 = vld [vmem:[#allocation6 + $0xa50] sm:$0xff]
      %v1008 = vld [vmem:[#allocation6 + $0xa58] sm:$0xf]
      %v1009 = vld [vmem:[#allocation6 + $0xa5c] sm:$0xff]
      %v1010 = vld [vmem:[#allocation6 + $0xa64] sm:$0xff]
      %v1011 = vld [vmem:[#allocation6 + $0xa6c] sm:$0xff]
      %v1012 = vld [vmem:[#allocation6 + $0xa74] sm:$0xff]
      %v1013 = vld [vmem:[#allocation6 + $0xa7c] sm:$0xff]
      %v1014 = vld [vmem:[#allocation6 + $0xa84] sm:$0xff]
      %v1015 = vld [vmem:[#allocation6 + $0xa8c] sm:$0xff]
      %v1016 = vld [vmem:[#allocation6 + $0xa94] sm:$0xff]
      %v1017 = vld [vmem:[#allocation6 + $0xa9c] sm:$0xf]
      %v1018 = vld [vmem:[#allocation6 + $0xaa0] sm:$0xff]
      %v1019 = vld [vmem:[#allocation6 + $0xaa8] sm:$0xff]
      %v1020 = vld [vmem:[#allocation6 + $0xab0] sm:$0xff]
      %v1021 = vld [vmem:[#allocation6 + $0xab8] sm:$0xff]
      %v1022 = vld [vmem:[#allocation6 + $0xac0] sm:$0xff]
      %v1023 = vld [vmem:[#allocation6 + $0xac8] sm:$0xff]
      %v1024 = vld [vmem:[#allocation6 + $0xad0] sm:$0xff]
      %v1025 = vld [vmem:[#allocation6 + $0xad8] sm:$0xff]
      %v1026 = vld [vmem:[#allocation6 + $0xae0] sm:$0xf]
      %v1027 = vld [vmem:[#allocation6 + $0xae4] sm:$0xff]
      %v1028 = vld [vmem:[#allocation6 + $0xaec] sm:$0xff]
      %v1029 = vld [vmem:[#allocation6 + $0xaf4] sm:$0xff]
      %v1030 = vld [vmem:[#allocation6 + $0xafc] sm:$0xff]
      %v1031 = vld [vmem:[#allocation6 + $0xb04] sm:$0xff]
      %v1032 = vld [vmem:[#allocation6 + $0xb0c] sm:$0xff]
      %v1033 = vld [vmem:[#allocation6 + $0xb14] sm:$0xff]
      %v1034 = vld [vmem:[#allocation6 + $0xb1c] sm:$0xff]
      %v1035 = vld [vmem:[#allocation6 + $0xb24] sm:$0xf]
      %v1036 = vld [vmem:[#allocation6 + $0xb28] sm:$0xff]
      %v1037 = vld [vmem:[#allocation6 + $0xb30] sm:$0xff]
      %v1038 = vld [vmem:[#allocation6 + $0xb38] sm:$0xff]
      %v1039 = vld [vmem:[#allocation6 + $0xb40] sm:$0xff]
      %v1040 = vld [vmem:[#allocation6 + $0xb48] sm:$0xff]
      %v1041 = vld [vmem:[#allocation6 + $0xb50] sm:$0xff]
      %v1042 = vld [vmem:[#allocation6 + $0xb58] sm:$0xff]
      %v1043 = vld [vmem:[#allocation6 + $0xb60] sm:$0xff]
      %v1044 = vld [vmem:[#allocation6 + $0xb68] sm:$0xf]
      %v1045 = vld [vmem:[#allocation6 + $0xb6c] sm:$0xff]
      %v1046 = vld [vmem:[#allocation6 + $0xb74] sm:$0xff]
      %v1047 = vld [vmem:[#allocation6 + $0xb7c] sm:$0xff]
      %v1048 = vld [vmem:[#allocation6 + $0xb84] sm:$0xff]
      %v1049 = vld [vmem:[#allocation6 + $0xb8c] sm:$0xff]
      %v1050 = vld [vmem:[#allocation6 + $0xb94] sm:$0xff]
      %v1051 = vld [vmem:[#allocation6 + $0xb9c] sm:$0xff]
      %v1052 = vld [vmem:[#allocation6 + $0xba4] sm:$0xff]
      %v1053 = vld [vmem:[#allocation6 + $0xbac] sm:$0xf]
      %v1054 = vld [vmem:[#allocation6 + $0xbb0] sm:$0xff]
      %v1055 = vld [vmem:[#allocation6 + $0xbb8] sm:$0xff]
      %v1056 = vld [vmem:[#allocation6 + $0xbc0] sm:$0xff]
      %v1057 = vld [vmem:[#allocation6 + $0xbc8] sm:$0xff]
      %v1058 = vld [vmem:[#allocation6 + $0xbd0] sm:$0xff]
      %v1059 = vld [vmem:[#allocation6 + $0xbd8] sm:$0xff]
      %v1060 = vld [vmem:[#allocation6 + $0xbe0] sm:$0xff]
      %v1061 = vld [vmem:[#allocation6 + $0xbe8] sm:$0xff]
      %v1062 = vld [vmem:[#allocation6 + $0xbf0] sm:$0xf]
      %v1063 = vld [vmem:[#allocation6 + $0xbf4] sm:$0xff]
      %v1064 = vld [vmem:[#allocation6 + $0xbfc] sm:$0xff]
      %v1065 = vld [vmem:[#allocation6 + $0xc04] sm:$0xff]
      %v1066 = vld [vmem:[#allocation6 + $0xc0c] sm:$0xff]
      %v1067 = vld [vmem:[#allocation6 + $0xc14] sm:$0xff]
      %v1068 = vld [vmem:[#allocation6 + $0xc1c] sm:$0xff]
      %v1069 = vld [vmem:[#allocation6 + $0xc24] sm:$0xff]
      %v1070 = vld [vmem:[#allocation6 + $0xc2c] sm:$0xff]
      %v1071 = vld [vmem:[#allocation6 + $0xc34] sm:$0xf]
      %v1072 = vld [vmem:[#allocation6 + $0xc38] sm:$0xff]
      %v1073 = vld [vmem:[#allocation6 + $0xc40] sm:$0xff]
      %v1074 = vld [vmem:[#allocation6 + $0xc48] sm:$0xff]
      %v1075 = vld [vmem:[#allocation6 + $0xc50] sm:$0xff]
      %v1076 = vld [vmem:[#allocation6 + $0xc58] sm:$0xff]
      %v1077 = vld [vmem:[#allocation6 + $0xc60] sm:$0xff]
      %v1078 = vld [vmem:[#allocation6 + $0xc68] sm:$0xff]
      %v1079 = vld [vmem:[#allocation6 + $0xc70] sm:$0xff]
      %v1080 = vld [vmem:[#allocation6 + $0xc78] sm:$0xf]
      %v1081 = vld [vmem:[#allocation6 + $0xc7c] sm:$0xff]
      %v1082 = vld [vmem:[#allocation6 + $0xc84] sm:$0xff]
      %v1083 = vld [vmem:[#allocation6 + $0xc8c] sm:$0xff]
      %v1084 = vld [vmem:[#allocation6 + $0xc94] sm:$0xff]
      %v1085 = vld [vmem:[#allocation6 + $0xc9c] sm:$0xff]
      %v1086 = vld [vmem:[#allocation6 + $0xca4] sm:$0xff]
      %v1087 = vld [vmem:[#allocation6 + $0xcac] sm:$0xff]
      %v1088 = vld [vmem:[#allocation6 + $0xcb4] sm:$0xff]
      %v1089 = vld [vmem:[#allocation6 + $0xcbc] sm:$0xf]
      %v1090 = vld [vmem:[#allocation6 + $0xcc0] sm:$0xff]
      %v1091 = vld [vmem:[#allocation6 + $0xcc8] sm:$0xff]
      %v1092 = vld [vmem:[#allocation6 + $0xcd0] sm:$0xff]
      %v1093 = vld [vmem:[#allocation6 + $0xcd8] sm:$0xff]
      %v1094 = vld [vmem:[#allocation6 + $0xce0] sm:$0xff]
      %v1095 = vld [vmem:[#allocation6 + $0xce8] sm:$0xff]
      %v1096 = vld [vmem:[#allocation6 + $0xcf0] sm:$0xff]
      %v1097 = vld [vmem:[#allocation6 + $0xcf8] sm:$0xff]
      %v1098 = vld [vmem:[#allocation6 + $0xd00] sm:$0xf]
      %v1099 = vld [vmem:[#allocation6 + $0xd04] sm:$0xff]
      %v1100 = vld [vmem:[#allocation6 + $0xd0c] sm:$0xff]
      %v1101 = vld [vmem:[#allocation6 + $0xd14] sm:$0xff]
      %v1102 = vld [vmem:[#allocation6 + $0xd1c] sm:$0xff]
      %v1103 = vld [vmem:[#allocation6 + $0xd24] sm:$0xff]
      %v1104 = vld [vmem:[#allocation6 + $0xd2c] sm:$0xff]
      %v1105 = vld [vmem:[#allocation6 + $0xd34] sm:$0xff]
      %v1106 = vld [vmem:[#allocation6 + $0xd3c] sm:$0xff]
      %v1107 = vld [vmem:[#allocation6 + $0xd44] sm:$0xf]
      %v1108 = vld [vmem:[#allocation6 + $0xd48] sm:$0xff]
      %v1109 = vld [vmem:[#allocation6 + $0xd50] sm:$0xff]
      %v1110 = vld [vmem:[#allocation6 + $0xd58] sm:$0xff]
      %v1111 = vld [vmem:[#allocation6 + $0xd60] sm:$0xff]
      %v1112 = vld [vmem:[#allocation6 + $0xd68] sm:$0xff]
      %v1113 = vld [vmem:[#allocation6 + $0xd70] sm:$0xff]
      %v1114 = vld [vmem:[#allocation6 + $0xd78] sm:$0xff]
      %v1115 = vld [vmem:[#allocation6 + $0xd80] sm:$0xff]
      %v1116 = vld [vmem:[#allocation6 + $0xd88] sm:$0xf]
      %v1117 = vld [vmem:[#allocation6 + $0xd8c] sm:$0xff]
      %v1118 = vld [vmem:[#allocation6 + $0xd94] sm:$0xff]
      %v1119 = vld [vmem:[#allocation6 + $0xd9c] sm:$0xff]
      %v1120 = vld [vmem:[#allocation6 + $0xda4] sm:$0xff]
      %v1121 = vld [vmem:[#allocation6 + $0xdac] sm:$0xff]
      %v1122 = vld [vmem:[#allocation6 + $0xdb4] sm:$0xff]
      %v1123 = vld [vmem:[#allocation6 + $0xdbc] sm:$0xff]
      %v1124 = vld [vmem:[#allocation6 + $0xdc4] sm:$0xff]
      %v1125 = vld [vmem:[#allocation6 + $0xdcc] sm:$0xf]
      %v1126 = vld [vmem:[#allocation6 + $0xdd0] sm:$0xff]
      %v1127 = vld [vmem:[#allocation6 + $0xdd8] sm:$0xff]
      %v1128 = vld [vmem:[#allocation6 + $0xde0] sm:$0xff]
      %v1129 = vld [vmem:[#allocation6 + $0xde8] sm:$0xff]
      %v1130 = vld [vmem:[#allocation6 + $0xdf0] sm:$0xff]
      %v1131 = vld [vmem:[#allocation6 + $0xdf8] sm:$0xff]
      %v1132 = vld [vmem:[#allocation6 + $0xe00] sm:$0xff]
      %v1133 = vld [vmem:[#allocation6 + $0xe08] sm:$0xff]
      %v1134 = vld [vmem:[#allocation6 + $0xe10] sm:$0xf]
      %v1135 = vld [vmem:[#allocation6 + $0xe14] sm:$0xff]
      %v1136 = vld [vmem:[#allocation6 + $0xe1c] sm:$0xff]
      %v1137 = vld [vmem:[#allocation6 + $0xe24] sm:$0xff]
      %v1138 = vld [vmem:[#allocation6 + $0xe2c] sm:$0xff]
      %v1139 = vld [vmem:[#allocation6 + $0xe34] sm:$0xff]
      %v1140 = vld [vmem:[#allocation6 + $0xe3c] sm:$0xff]
      %v1141 = vld [vmem:[#allocation6 + $0xe44] sm:$0xff]
      %v1142 = vld [vmem:[#allocation6 + $0xe4c] sm:$0xff]
      %v1143 = vld [vmem:[#allocation6 + $0xe54] sm:$0xf]
      %v1144 = vld [vmem:[#allocation6 + $0xe58] sm:$0xff]
      %v1145 = vld [vmem:[#allocation6 + $0xe60] sm:$0xff]
      %v1146 = vld [vmem:[#allocation6 + $0xe68] sm:$0xff]
      %v1147 = vld [vmem:[#allocation6 + $0xe70] sm:$0xff]
      %v1148 = vld [vmem:[#allocation6 + $0xe78] sm:$0xff]
      %v1149 = vld [vmem:[#allocation6 + $0xe80] sm:$0xff]
      %v1150 = vld [vmem:[#allocation6 + $0xe88] sm:$0xff]
      %v1151 = vld [vmem:[#allocation6 + $0xe90] sm:$0xff]
      %v1152 = vld [vmem:[#allocation6 + $0xe98] sm:$0xf]
      %v1153 = vld [vmem:[#allocation6 + $0xe9c] sm:$0xff]
      %v1154 = vld [vmem:[#allocation6 + $0xea4] sm:$0xff]
      %v1155 = vld [vmem:[#allocation6 + $0xeac] sm:$0xff]
      %v1156 = vld [vmem:[#allocation6 + $0xeb4] sm:$0xff]
      %v1157 = vld [vmem:[#allocation6 + $0xebc] sm:$0xff]
      %v1158 = vld [vmem:[#allocation6 + $0xec4] sm:$0xff]
      %v1159 = vld [vmem:[#allocation6 + $0xecc] sm:$0xff]
      %v1160 = vld [vmem:[#allocation6 + $0xed4] sm:$0xff]
      %v1161 = vld [vmem:[#allocation6 + $0xedc] sm:$0xf]
      %v1162 = vld [vmem:[#allocation6 + $0xee0] sm:$0xff]
      %v1163 = vld [vmem:[#allocation6 + $0xee8] sm:$0xff]
      %v1164 = vld [vmem:[#allocation6 + $0xef0] sm:$0xff]
      %v1165 = vld [vmem:[#allocation6 + $0xef8] sm:$0xff]
      %v1166 = vld [vmem:[#allocation6 + $0xf00] sm:$0xff]
      %v1167 = vld [vmem:[#allocation6 + $0xf08] sm:$0xff]
      %v1168 = vld [vmem:[#allocation6 + $0xf10] sm:$0xff]
      %v1169 = vld [vmem:[#allocation6 + $0xf18] sm:$0xff]
      %v1170 = vld [vmem:[#allocation6 + $0xf20] sm:$0xf]
      %v1171 = vld [vmem:[#allocation6 + $0xf24] sm:$0xff]
      %v1172 = vld [vmem:[#allocation6 + $0xf2c] sm:$0xff]
      %v1173 = vld [vmem:[#allocation6 + $0xf34] sm:$0xff]
      %v1174 = vld [vmem:[#allocation6 + $0xf3c] sm:$0xff]
      %v1175 = vld [vmem:[#allocation6 + $0xf44] sm:$0xff]
      %v1176 = vld [vmem:[#allocation6 + $0xf4c] sm:$0xff]
      %v1177 = vld [vmem:[#allocation6 + $0xf54] sm:$0xff]
      %v1178 = vld [vmem:[#allocation6 + $0xf5c] sm:$0xff]
      %v1179 = vld [vmem:[#allocation6 + $0xf64] sm:$0xf]
      %v1180 = vld [vmem:[#allocation6 + $0xf68] sm:$0xff]
      %v1181 = vld [vmem:[#allocation6 + $0xf70] sm:$0xff]
      %v1182 = vld [vmem:[#allocation6 + $0xf78] sm:$0xff]
      %v1183 = vld [vmem:[#allocation6 + $0xf80] sm:$0xff]
      %v1184 = vld [vmem:[#allocation6 + $0xf88] sm:$0xff]
      %v1185 = vld [vmem:[#allocation6 + $0xf90] sm:$0xff]
      %v1186 = vld [vmem:[#allocation6 + $0xf98] sm:$0xff]
      %v1187 = vld [vmem:[#allocation6 + $0xfa0] sm:$0xff]
      %v1188 = vld [vmem:[#allocation6 + $0xfa8] sm:$0xf]
      %v1189 = vld [vmem:[#allocation6 + $0xfac] sm:$0xff]
      %v1190 = vld [vmem:[#allocation6 + $0xfb4] sm:$0xff]
      %v1191 = vld [vmem:[#allocation6 + $0xfbc] sm:$0xff]
      %v1192 = vld [vmem:[#allocation6 + $0xfc4] sm:$0xff]
      %v1193 = vld [vmem:[#allocation6 + $0xfcc] sm:$0xff]
      %v1194 = vld [vmem:[#allocation6 + $0xfd4] sm:$0xff]
      %v1195 = vld [vmem:[#allocation6 + $0xfdc] sm:$0xff]
      %v1196 = vld [vmem:[#allocation6 + $0xfe4] sm:$0xff]
      %v1197 = vld [vmem:[#allocation6 + $0xfec] sm:$0xf]
      %v1198 = vld [vmem:[#allocation6 + $0xff0] sm:$0xff]
      %v1199 = vld [vmem:[#allocation6 + $0xff8] sm:$0xff]
      %v1200 = vld [vmem:[#allocation6 + $0x1000] sm:$0xff]
      %v1201 = vld [vmem:[#allocation6 + $0x1008] sm:$0xff]
      %v1202 = vld [vmem:[#allocation6 + $0x1010] sm:$0xff]
      %v1203 = vld [vmem:[#allocation6 + $0x1018] sm:$0xff]
      %v1204 = vld [vmem:[#allocation6 + $0x1020] sm:$0xff]
      %v1205 = vld [vmem:[#allocation6 + $0x1028] sm:$0xff]
      %v1206 = vld [vmem:[#allocation6 + $0x1030] sm:$0xf]
      %v1207 = vld [vmem:[#allocation6 + $0x1034] sm:$0xff]
      %v1208 = vld [vmem:[#allocation6 + $0x103c] sm:$0xff]
      %v1209 = vld [vmem:[#allocation6 + $0x1044] sm:$0xff]
      %v1210 = vld [vmem:[#allocation6 + $0x104c] sm:$0xff]
      %v1211 = vld [vmem:[#allocation6 + $0x1054] sm:$0xff]
      %v1212 = vld [vmem:[#allocation6 + $0x105c] sm:$0xff]
      %v1213 = vld [vmem:[#allocation6 + $0x1064] sm:$0xff]
      %v1214 = vld [vmem:[#allocation6 + $0x106c] sm:$0xff]
      %v1215 = vld [vmem:[#allocation6 + $0x1074] sm:$0xf]
      %v1216 = vld [vmem:[#allocation6 + $0x1078] sm:$0xff]
      %v1217 = vld [vmem:[#allocation6 + $0x1080] sm:$0xff]
      %v1218 = vld [vmem:[#allocation6 + $0x1088] sm:$0xff]
      %v1219 = vld [vmem:[#allocation6 + $0x1090] sm:$0xff]
      %v1220 = vld [vmem:[#allocation6 + $0x1098] sm:$0xff]
      %v1221 = vld [vmem:[#allocation6 + $0x10a0] sm:$0xff]
      %v1222 = vld [vmem:[#allocation6 + $0x10a8] sm:$0xff]
      %v1223 = vld [vmem:[#allocation6 + $0x10b0] sm:$0xff]
      %v1224 = vld [vmem:[#allocation6 + $0x10b8] sm:$0xf]
      %v1225 = vld [vmem:[#allocation6 + $0x10bc] sm:$0xff]
      %v1226 = vld [vmem:[#allocation6 + $0x10c4] sm:$0xff]
      %v1227 = vld [vmem:[#allocation6 + $0x10cc] sm:$0xff]
      %v1228 = vld [vmem:[#allocation6 + $0x10d4] sm:$0xff]
      %v1229 = vld [vmem:[#allocation6 + $0x10dc] sm:$0xff]
      %v1230 = vld [vmem:[#allocation6 + $0x10e4] sm:$0xff]
      %v1231 = vld [vmem:[#allocation6 + $0x10ec] sm:$0xff]
      %v1232 = vld [vmem:[#allocation6 + $0x10f4] sm:$0xff]
      %v1233 = vld [vmem:[#allocation6 + $0x10fc] sm:$0xf]
      %v1810 = vunpack.c.l.b16 %v658
      %v1811 = vunpack.c.h.b16 %v658
      %v1812 = vunpack.c.l.b16 %v659
      %v1813 = vunpack.c.h.b16 %v659
      %v1814 = vunpack.c.l.b16 %v660
      %v1815 = vunpack.c.h.b16 %v660
      %v1816 = vunpack.c.l.b16 %v661
      %v1817 = vunpack.c.h.b16 %v661
      %v1818 = vunpack.c.l.b16 %v662
      %v1819 = vunpack.c.h.b16 %v662
      %v1820 = vunpack.c.l.b16 %v663
      %v1821 = vunpack.c.h.b16 %v663
      %v1822 = vunpack.c.l.b16 %v664
      %v1823 = vunpack.c.h.b16 %v664
      %v1824 = vunpack.c.l.b16 %v665
      %v1825 = vunpack.c.h.b16 %v665
      %v1826 = vunpack.c.l.b16 %v666
      %v1827 = vunpack.c.l.b16 %v667
      %v1828 = vunpack.c.h.b16 %v667
      %v1829 = vunpack.c.l.b16 %v668
      %v1830 = vunpack.c.h.b16 %v668
      %v1831 = vunpack.c.l.b16 %v669
      %v1832 = vunpack.c.h.b16 %v669
      %v1833 = vunpack.c.l.b16 %v670
      %v1834 = vunpack.c.h.b16 %v670
      %v1835 = vunpack.c.l.b16 %v671
      %v1836 = vunpack.c.h.b16 %v671
      %v1837 = vunpack.c.l.b16 %v672
      %v1838 = vunpack.c.h.b16 %v672
      %v1839 = vunpack.c.l.b16 %v673
      %v1840 = vunpack.c.h.b16 %v673
      %v1841 = vunpack.c.l.b16 %v674
      %v1842 = vunpack.c.h.b16 %v674
      %v1843 = vunpack.c.l.b16 %v675
      %v1844 = vunpack.c.l.b16 %v676
      %v1845 = vunpack.c.h.b16 %v676
      %v1846 = vunpack.c.l.b16 %v677
      %v1847 = vunpack.c.h.b16 %v677
      %v1848 = vunpack.c.l.b16 %v678
      %v1849 = vunpack.c.h.b16 %v678
      %v1850 = vunpack.c.l.b16 %v679
      %v1851 = vunpack.c.h.b16 %v679
      %v1852 = vunpack.c.l.b16 %v680
      %v1853 = vunpack.c.h.b16 %v680
      %v1854 = vunpack.c.l.b16 %v681
      %v1855 = vunpack.c.h.b16 %v681
      %v1856 = vunpack.c.l.b16 %v682
      %v1857 = vunpack.c.h.b16 %v682
      %v1858 = vunpack.c.l.b16 %v683
      %v1859 = vunpack.c.h.b16 %v683
      %v1860 = vunpack.c.l.b16 %v684
      %v1861 = vunpack.c.l.b16 %v685
      %v1862 = vunpack.c.h.b16 %v685
      %v1863 = vunpack.c.l.b16 %v686
      %v1864 = vunpack.c.h.b16 %v686
      %v1865 = vunpack.c.l.b16 %v687
      %v1866 = vunpack.c.h.b16 %v687
      %v1867 = vunpack.c.l.b16 %v688
      %v1868 = vunpack.c.h.b16 %v688
      %v1869 = vunpack.c.l.b16 %v689
      %v1870 = vunpack.c.h.b16 %v689
      %v1871 = vunpack.c.l.b16 %v690
      %v1872 = vunpack.c.h.b16 %v690
      %v1873 = vunpack.c.l.b16 %v691
      %v1874 = vunpack.c.h.b16 %v691
      %v1875 = vunpack.c.l.b16 %v692
      %v1876 = vunpack.c.h.b16 %v692
      %v1877 = vunpack.c.l.b16 %v693
      %v1878 = vunpack.c.l.b16 %v694
      %v1879 = vunpack.c.h.b16 %v694
      %v1880 = vunpack.c.l.b16 %v695
      %v1881 = vunpack.c.h.b16 %v695
      %v1882 = vunpack.c.l.b16 %v696
      %v1883 = vunpack.c.h.b16 %v696
      %v1884 = vunpack.c.l.b16 %v697
      %v1885 = vunpack.c.h.b16 %v697
      %v1886 = vunpack.c.l.b16 %v698
      %v1887 = vunpack.c.h.b16 %v698
      %v1888 = vunpack.c.l.b16 %v699
      %v1889 = vunpack.c.h.b16 %v699
      %v1890 = vunpack.c.l.b16 %v700
      %v1891 = vunpack.c.h.b16 %v700
      %v1892 = vunpack.c.l.b16 %v701
      %v1893 = vunpack.c.h.b16 %v701
      %v1894 = vunpack.c.l.b16 %v702
      %v1895 = vunpack.c.l.b16 %v703
      %v1896 = vunpack.c.h.b16 %v703
      %v1897 = vunpack.c.l.b16 %v704
      %v1898 = vunpack.c.h.b16 %v704
      %v1899 = vunpack.c.l.b16 %v705
      %v1900 = vunpack.c.h.b16 %v705
      %v1901 = vunpack.c.l.b16 %v706
      %v1902 = vunpack.c.h.b16 %v706
      %v1903 = vunpack.c.l.b16 %v707
      %v1904 = vunpack.c.h.b16 %v707
      %v1905 = vunpack.c.l.b16 %v708
      %v1906 = vunpack.c.h.b16 %v708
      %v1907 = vunpack.c.l.b16 %v709
      %v1908 = vunpack.c.h.b16 %v709
      %v1909 = vunpack.c.l.b16 %v710
      %v1910 = vunpack.c.h.b16 %v710
      %v1911 = vunpack.c.l.b16 %v711
      %v1912 = vunpack.c.l.b16 %v712
      %v1913 = vunpack.c.h.b16 %v712
      %v1914 = vunpack.c.l.b16 %v713
      %v1915 = vunpack.c.h.b16 %v713
      %v1916 = vunpack.c.l.b16 %v714
      %v1917 = vunpack.c.h.b16 %v714
      %v1918 = vunpack.c.l.b16 %v715
      %v1919 = vunpack.c.h.b16 %v715
      %v1920 = vunpack.c.l.b16 %v716
      %v1921 = vunpack.c.h.b16 %v716
      %v1922 = vunpack.c.l.b16 %v717
      %v1923 = vunpack.c.h.b16 %v717
      %v1924 = vunpack.c.l.b16 %v718
      %v1925 = vunpack.c.h.b16 %v718
      %v1926 = vunpack.c.l.b16 %v719
      %v1927 = vunpack.c.h.b16 %v719
      %v1928 = vunpack.c.l.b16 %v720
      %v1929 = vunpack.c.l.b16 %v721
      %v1930 = vunpack.c.h.b16 %v721
      %v1931 = vunpack.c.l.b16 %v722
      %v1932 = vunpack.c.h.b16 %v722
      %v1933 = vunpack.c.l.b16 %v723
      %v1934 = vunpack.c.h.b16 %v723
      %v1935 = vunpack.c.l.b16 %v724
      %v1936 = vunpack.c.h.b16 %v724
      %v1937 = vunpack.c.l.b16 %v725
      %v1938 = vunpack.c.h.b16 %v725
      %v1939 = vunpack.c.l.b16 %v726
      %v1940 = vunpack.c.h.b16 %v726
      %v1941 = vunpack.c.l.b16 %v727
      %v1942 = vunpack.c.h.b16 %v727
      %v1943 = vunpack.c.l.b16 %v728
      %v1944 = vunpack.c.h.b16 %v728
      %v1945 = vunpack.c.l.b16 %v729
      %v1946 = vunpack.c.l.b16 %v730
      %v1947 = vunpack.c.h.b16 %v730
      %v1948 = vunpack.c.l.b16 %v731
      %v1949 = vunpack.c.h.b16 %v731
      %v1950 = vunpack.c.l.b16 %v732
      %v1951 = vunpack.c.h.b16 %v732
      %v1952 = vunpack.c.l.b16 %v733
      %v1953 = vunpack.c.h.b16 %v733
      %v1954 = vunpack.c.l.b16 %v734
      %v1955 = vunpack.c.h.b16 %v734
      %v1956 = vunpack.c.l.b16 %v735
      %v1957 = vunpack.c.h.b16 %v735
      %v1958 = vunpack.c.l.b16 %v736
      %v1959 = vunpack.c.h.b16 %v736
      %v1960 = vunpack.c.l.b16 %v737
      %v1961 = vunpack.c.h.b16 %v737
      %v1962 = vunpack.c.l.b16 %v738
      %v1963 = vunpack.c.l.b16 %v739
      %v1964 = vunpack.c.h.b16 %v739
      %v1965 = vunpack.c.l.b16 %v740
      %v1966 = vunpack.c.h.b16 %v740
      %v1967 = vunpack.c.l.b16 %v741
      %v1968 = vunpack.c.h.b16 %v741
      %v1969 = vunpack.c.l.b16 %v742
      %v1970 = vunpack.c.h.b16 %v742
      %v1971 = vunpack.c.l.b16 %v743
      %v1972 = vunpack.c.h.b16 %v743
      %v1973 = vunpack.c.l.b16 %v744
      %v1974 = vunpack.c.h.b16 %v744
      %v1975 = vunpack.c.l.b16 %v745
      %v1976 = vunpack.c.h.b16 %v745
      %v1977 = vunpack.c.l.b16 %v746
      %v1978 = vunpack.c.h.b16 %v746
      %v1979 = vunpack.c.l.b16 %v747
      %v1980 = vunpack.c.l.b16 %v748
      %v1981 = vunpack.c.h.b16 %v748
      %v1982 = vunpack.c.l.b16 %v749
      %v1983 = vunpack.c.h.b16 %v749
      %v1984 = vunpack.c.l.b16 %v750
      %v1985 = vunpack.c.h.b16 %v750
      %v1986 = vunpack.c.l.b16 %v751
      %v1987 = vunpack.c.h.b16 %v751
      %v1988 = vunpack.c.l.b16 %v752
      %v1989 = vunpack.c.h.b16 %v752
      %v1990 = vunpack.c.l.b16 %v753
      %v1991 = vunpack.c.h.b16 %v753
      %v1992 = vunpack.c.l.b16 %v754
      %v1993 = vunpack.c.h.b16 %v754
      %v1994 = vunpack.c.l.b16 %v755
      %v1995 = vunpack.c.h.b16 %v755
      %v1996 = vunpack.c.l.b16 %v756
      %v1997 = vunpack.c.l.b16 %v757
      %v1998 = vunpack.c.h.b16 %v757
      %v1999 = vunpack.c.l.b16 %v758
      %v2000 = vunpack.c.h.b16 %v758
      %v2001 = vunpack.c.l.b16 %v759
      %v2002 = vunpack.c.h.b16 %v759
      %v2003 = vunpack.c.l.b16 %v760
      %v2004 = vunpack.c.h.b16 %v760
      %v2005 = vunpack.c.l.b16 %v761
      %v2006 = vunpack.c.h.b16 %v761
      %v2007 = vunpack.c.l.b16 %v762
      %v2008 = vunpack.c.h.b16 %v762
      %v2009 = vunpack.c.l.b16 %v763
      %v2010 = vunpack.c.h.b16 %v763
      %v2011 = vunpack.c.l.b16 %v764
      %v2012 = vunpack.c.h.b16 %v764
      %v2013 = vunpack.c.l.b16 %v765
      %v2014 = vunpack.c.l.b16 %v766
      %v2015 = vunpack.c.h.b16 %v766
      %v2016 = vunpack.c.l.b16 %v767
      %v2017 = vunpack.c.h.b16 %v767
      %v2018 = vunpack.c.l.b16 %v768
      %v2019 = vunpack.c.h.b16 %v768
      %v2020 = vunpack.c.l.b16 %v769
      %v2021 = vunpack.c.h.b16 %v769
      %v2022 = vunpack.c.l.b16 %v770
      %v2023 = vunpack.c.h.b16 %v770
      %v2024 = vunpack.c.l.b16 %v771
      %v2025 = vunpack.c.h.b16 %v771
      %v2026 = vunpack.c.l.b16 %v772
      %v2027 = vunpack.c.h.b16 %v772
      %v2028 = vunpack.c.l.b16 %v773
      %v2029 = vunpack.c.h.b16 %v773
      %v2030 = vunpack.c.l.b16 %v774
      %v2031 = vunpack.c.l.b16 %v775
      %v2032 = vunpack.c.h.b16 %v775
      %v2033 = vunpack.c.l.b16 %v776
      %v2034 = vunpack.c.h.b16 %v776
      %v2035 = vunpack.c.l.b16 %v777
      %v2036 = vunpack.c.h.b16 %v777
      %v2037 = vunpack.c.l.b16 %v778
      %v2038 = vunpack.c.h.b16 %v778
      %v2039 = vunpack.c.l.b16 %v779
      %v2040 = vunpack.c.h.b16 %v779
      %v2041 = vunpack.c.l.b16 %v780
      %v2042 = vunpack.c.h.b16 %v780
      %v2043 = vunpack.c.l.b16 %v781
      %v2044 = vunpack.c.h.b16 %v781
      %v2045 = vunpack.c.l.b16 %v782
      %v2046 = vunpack.c.h.b16 %v782
      %v2047 = vunpack.c.l.b16 %v783
      %v2048 = vunpack.c.l.b16 %v784
      %v2049 = vunpack.c.h.b16 %v784
      %v2050 = vunpack.c.l.b16 %v785
      %v2051 = vunpack.c.h.b16 %v785
      %v2052 = vunpack.c.l.b16 %v786
      %v2053 = vunpack.c.h.b16 %v786
      %v2054 = vunpack.c.l.b16 %v787
      %v2055 = vunpack.c.h.b16 %v787
      %v2056 = vunpack.c.l.b16 %v788
      %v2057 = vunpack.c.h.b16 %v788
      %v2058 = vunpack.c.l.b16 %v789
      %v2059 = vunpack.c.h.b16 %v789
      %v2060 = vunpack.c.l.b16 %v790
      %v2061 = vunpack.c.h.b16 %v790
      %v2062 = vunpack.c.l.b16 %v791
      %v2063 = vunpack.c.h.b16 %v791
      %v2064 = vunpack.c.l.b16 %v792
      %v2065 = vunpack.c.l.b16 %v793
      %v2066 = vunpack.c.h.b16 %v793
      %v2067 = vunpack.c.l.b16 %v794
      %v2068 = vunpack.c.h.b16 %v794
      %v2069 = vunpack.c.l.b16 %v795
      %v2070 = vunpack.c.h.b16 %v795
      %v2071 = vunpack.c.l.b16 %v796
      %v2072 = vunpack.c.h.b16 %v796
      %v2073 = vunpack.c.l.b16 %v797
      %v2074 = vunpack.c.h.b16 %v797
      %v2075 = vunpack.c.l.b16 %v798
      %v2076 = vunpack.c.h.b16 %v798
      %v2077 = vunpack.c.l.b16 %v799
      %v2078 = vunpack.c.h.b16 %v799
      %v2079 = vunpack.c.l.b16 %v800
      %v2080 = vunpack.c.h.b16 %v800
      %v2081 = vunpack.c.l.b16 %v801
      %v2082 = vunpack.c.l.b16 %v802
      %v2083 = vunpack.c.h.b16 %v802
      %v2084 = vunpack.c.l.b16 %v803
      %v2085 = vunpack.c.h.b16 %v803
      %v2086 = vunpack.c.l.b16 %v804
      %v2087 = vunpack.c.h.b16 %v804
      %v2088 = vunpack.c.l.b16 %v805
      %v2089 = vunpack.c.h.b16 %v805
      %v2090 = vunpack.c.l.b16 %v806
      %v2091 = vunpack.c.h.b16 %v806
      %v2092 = vunpack.c.l.b16 %v807
      %v2093 = vunpack.c.h.b16 %v807
      %v2094 = vunpack.c.l.b16 %v808
      %v2095 = vunpack.c.h.b16 %v808
      %v2096 = vunpack.c.l.b16 %v809
      %v2097 = vunpack.c.h.b16 %v809
      %v2098 = vunpack.c.l.b16 %v810
      %v2099 = vunpack.c.l.b16 %v811
      %v2100 = vunpack.c.h.b16 %v811
      %v2101 = vunpack.c.l.b16 %v812
      %v2102 = vunpack.c.h.b16 %v812
      %v2103 = vunpack.c.l.b16 %v813
      %v2104 = vunpack.c.h.b16 %v813
      %v2105 = vunpack.c.l.b16 %v814
      %v2106 = vunpack.c.h.b16 %v814
      %v2107 = vunpack.c.l.b16 %v815
      %v2108 = vunpack.c.h.b16 %v815
      %v2109 = vunpack.c.l.b16 %v816
      %v2110 = vunpack.c.h.b16 %v816
      %v2111 = vunpack.c.l.b16 %v817
      %v2112 = vunpack.c.h.b16 %v817
      %v2113 = vunpack.c.l.b16 %v818
      %v2114 = vunpack.c.h.b16 %v818
      %v2115 = vunpack.c.l.b16 %v819
      %v2116 = vunpack.c.l.b16 %v820
      %v2117 = vunpack.c.h.b16 %v820
      %v2118 = vunpack.c.l.b16 %v821
      %v2119 = vunpack.c.h.b16 %v821
      %v2120 = vunpack.c.l.b16 %v822
      %v2121 = vunpack.c.h.b16 %v822
      %v2122 = vunpack.c.l.b16 %v823
      %v2123 = vunpack.c.h.b16 %v823
      %v2124 = vunpack.c.l.b16 %v824
      %v2125 = vunpack.c.h.b16 %v824
      %v2126 = vunpack.c.l.b16 %v825
      %v2127 = vunpack.c.h.b16 %v825
      %v2128 = vunpack.c.l.b16 %v826
      %v2129 = vunpack.c.h.b16 %v826
      %v2130 = vunpack.c.l.b16 %v827
      %v2131 = vunpack.c.h.b16 %v827
      %v2132 = vunpack.c.l.b16 %v828
      %v2133 = vunpack.c.l.b16 %v829
      %v2134 = vunpack.c.h.b16 %v829
      %v2135 = vunpack.c.l.b16 %v830
      %v2136 = vunpack.c.h.b16 %v830
      %v2137 = vunpack.c.l.b16 %v831
      %v2138 = vunpack.c.h.b16 %v831
      %v2139 = vunpack.c.l.b16 %v832
      %v2140 = vunpack.c.h.b16 %v832
      %v2141 = vunpack.c.l.b16 %v833
      %v2142 = vunpack.c.h.b16 %v833
      %v2143 = vunpack.c.l.b16 %v834
      %v2144 = vunpack.c.h.b16 %v834
      %v2145 = vunpack.c.l.b16 %v835
      %v2146 = vunpack.c.h.b16 %v835
      %v2147 = vunpack.c.l.b16 %v836
      %v2148 = vunpack.c.h.b16 %v836
      %v2149 = vunpack.c.l.b16 %v837
      %v2150 = vunpack.c.l.b16 %v838
      %v2151 = vunpack.c.h.b16 %v838
      %v2152 = vunpack.c.l.b16 %v839
      %v2153 = vunpack.c.h.b16 %v839
      %v2154 = vunpack.c.l.b16 %v840
      %v2155 = vunpack.c.h.b16 %v840
      %v2156 = vunpack.c.l.b16 %v841
      %v2157 = vunpack.c.h.b16 %v841
      %v2158 = vunpack.c.l.b16 %v842
      %v2159 = vunpack.c.h.b16 %v842
      %v2160 = vunpack.c.l.b16 %v843
      %v2161 = vunpack.c.h.b16 %v843
      %v2162 = vunpack.c.l.b16 %v844
      %v2163 = vunpack.c.h.b16 %v844
      %v2164 = vunpack.c.l.b16 %v845
      %v2165 = vunpack.c.h.b16 %v845
      %v2166 = vunpack.c.l.b16 %v846
      %v2167 = vunpack.c.l.b16 %v847
      %v2168 = vunpack.c.h.b16 %v847
      %v2169 = vunpack.c.l.b16 %v848
      %v2170 = vunpack.c.h.b16 %v848
      %v2171 = vunpack.c.l.b16 %v849
      %v2172 = vunpack.c.h.b16 %v849
      %v2173 = vunpack.c.l.b16 %v850
      %v2174 = vunpack.c.h.b16 %v850
      %v2175 = vunpack.c.l.b16 %v851
      %v2176 = vunpack.c.h.b16 %v851
      %v2177 = vunpack.c.l.b16 %v852
      %v2178 = vunpack.c.h.b16 %v852
      %v2179 = vunpack.c.l.b16 %v853
      %v2180 = vunpack.c.h.b16 %v853
      %v2181 = vunpack.c.l.b16 %v854
      %v2182 = vunpack.c.h.b16 %v854
      %v2183 = vunpack.c.l.b16 %v855
      %v2184 = vunpack.c.l.b16 %v856
      %v2185 = vunpack.c.h.b16 %v856
      %v2186 = vunpack.c.l.b16 %v857
      %v2187 = vunpack.c.h.b16 %v857
      %v2188 = vunpack.c.l.b16 %v858
      %v2189 = vunpack.c.h.b16 %v858
      %v2190 = vunpack.c.l.b16 %v859
      %v2191 = vunpack.c.h.b16 %v859
      %v2192 = vunpack.c.l.b16 %v860
      %v2193 = vunpack.c.h.b16 %v860
      %v2194 = vunpack.c.l.b16 %v861
      %v2195 = vunpack.c.h.b16 %v861
      %v2196 = vunpack.c.l.b16 %v862
      %v2197 = vunpack.c.h.b16 %v862
      %v2198 = vunpack.c.l.b16 %v863
      %v2199 = vunpack.c.h.b16 %v863
      %v2200 = vunpack.c.l.b16 %v864
      %v2201 = vunpack.c.l.b16 %v865
      %v2202 = vunpack.c.h.b16 %v865
      %v2203 = vunpack.c.l.b16 %v866
      %v2204 = vunpack.c.h.b16 %v866
      %v2205 = vunpack.c.l.b16 %v867
      %v2206 = vunpack.c.h.b16 %v867
      %v2207 = vunpack.c.l.b16 %v868
      %v2208 = vunpack.c.h.b16 %v868
      %v2209 = vunpack.c.l.b16 %v869
      %v2210 = vunpack.c.h.b16 %v869
      %v2211 = vunpack.c.l.b16 %v870
      %v2212 = vunpack.c.h.b16 %v870
      %v2213 = vunpack.c.l.b16 %v871
      %v2214 = vunpack.c.h.b16 %v871
      %v2215 = vunpack.c.l.b16 %v872
      %v2216 = vunpack.c.h.b16 %v872
      %v2217 = vunpack.c.l.b16 %v873
      %v2218 = vunpack.c.l.b16 %v874
      %v2219 = vunpack.c.h.b16 %v874
      %v2220 = vunpack.c.l.b16 %v875
      %v2221 = vunpack.c.h.b16 %v875
      %v2222 = vunpack.c.l.b16 %v876
      %v2223 = vunpack.c.h.b16 %v876
      %v2224 = vunpack.c.l.b16 %v877
      %v2225 = vunpack.c.h.b16 %v877
      %v2226 = vunpack.c.l.b16 %v878
      %v2227 = vunpack.c.h.b16 %v878
      %v2228 = vunpack.c.l.b16 %v879
      %v2229 = vunpack.c.h.b16 %v879
      %v2230 = vunpack.c.l.b16 %v880
      %v2231 = vunpack.c.h.b16 %v880
      %v2232 = vunpack.c.l.b16 %v881
      %v2233 = vunpack.c.h.b16 %v881
      %v2234 = vunpack.c.l.b16 %v882
      %v2235 = vunpack.c.l.b16 %v883
      %v2236 = vunpack.c.h.b16 %v883
      %v2237 = vunpack.c.l.b16 %v884
      %v2238 = vunpack.c.h.b16 %v884
      %v2239 = vunpack.c.l.b16 %v885
      %v2240 = vunpack.c.h.b16 %v885
      %v2241 = vunpack.c.l.b16 %v886
      %v2242 = vunpack.c.h.b16 %v886
      %v2243 = vunpack.c.l.b16 %v887
      %v2244 = vunpack.c.h.b16 %v887
      %v2245 = vunpack.c.l.b16 %v888
      %v2246 = vunpack.c.h.b16 %v888
      %v2247 = vunpack.c.l.b16 %v889
      %v2248 = vunpack.c.h.b16 %v889
      %v2249 = vunpack.c.l.b16 %v890
      %v2250 = vunpack.c.h.b16 %v890
      %v2251 = vunpack.c.l.b16 %v891
      %v2252 = vunpack.c.l.b16 %v892
      %v2253 = vunpack.c.h.b16 %v892
      %v2254 = vunpack.c.l.b16 %v893
      %v2255 = vunpack.c.h.b16 %v893
      %v2256 = vunpack.c.l.b16 %v894
      %v2257 = vunpack.c.h.b16 %v894
      %v2258 = vunpack.c.l.b16 %v895
      %v2259 = vunpack.c.h.b16 %v895
      %v2260 = vunpack.c.l.b16 %v896
      %v2261 = vunpack.c.h.b16 %v896
      %v2262 = vunpack.c.l.b16 %v897
      %v2263 = vunpack.c.h.b16 %v897
      %v2264 = vunpack.c.l.b16 %v898
      %v2265 = vunpack.c.h.b16 %v898
      %v2266 = vunpack.c.l.b16 %v899
      %v2267 = vunpack.c.h.b16 %v899
      %v2268 = vunpack.c.l.b16 %v900
      %v2269 = vunpack.c.l.b16 %v901
      %v2270 = vunpack.c.h.b16 %v901
      %v2271 = vunpack.c.l.b16 %v902
      %v2272 = vunpack.c.h.b16 %v902
      %v2273 = vunpack.c.l.b16 %v903
      %v2274 = vunpack.c.h.b16 %v903
      %v2275 = vunpack.c.l.b16 %v904
      %v2276 = vunpack.c.h.b16 %v904
      %v2277 = vunpack.c.l.b16 %v905
      %v2278 = vunpack.c.h.b16 %v905
      %v2279 = vunpack.c.l.b16 %v906
      %v2280 = vunpack.c.h.b16 %v906
      %v2281 = vunpack.c.l.b16 %v907
      %v2282 = vunpack.c.h.b16 %v907
      %v2283 = vunpack.c.l.b16 %v908
      %v2284 = vunpack.c.h.b16 %v908
      %v2285 = vunpack.c.l.b16 %v909
      %v2286 = vunpack.c.l.b16 %v910
      %v2287 = vunpack.c.h.b16 %v910
      %v2288 = vunpack.c.l.b16 %v911
      %v2289 = vunpack.c.h.b16 %v911
      %v2290 = vunpack.c.l.b16 %v912
      %v2291 = vunpack.c.h.b16 %v912
      %v2292 = vunpack.c.l.b16 %v913
      %v2293 = vunpack.c.h.b16 %v913
      %v2294 = vunpack.c.l.b16 %v914
      %v2295 = vunpack.c.h.b16 %v914
      %v2296 = vunpack.c.l.b16 %v915
      %v2297 = vunpack.c.h.b16 %v915
      %v2298 = vunpack.c.l.b16 %v916
      %v2299 = vunpack.c.h.b16 %v916
      %v2300 = vunpack.c.l.b16 %v917
      %v2301 = vunpack.c.h.b16 %v917
      %v2302 = vunpack.c.l.b16 %v918
      %v2303 = vunpack.c.l.b16 %v919
      %v2304 = vunpack.c.h.b16 %v919
      %v2305 = vunpack.c.l.b16 %v920
      %v2306 = vunpack.c.h.b16 %v920
      %v2307 = vunpack.c.l.b16 %v921
      %v2308 = vunpack.c.h.b16 %v921
      %v2309 = vunpack.c.l.b16 %v922
      %v2310 = vunpack.c.h.b16 %v922
      %v2311 = vunpack.c.l.b16 %v923
      %v2312 = vunpack.c.h.b16 %v923
      %v2313 = vunpack.c.l.b16 %v924
      %v2314 = vunpack.c.h.b16 %v924
      %v2315 = vunpack.c.l.b16 %v925
      %v2316 = vunpack.c.h.b16 %v925
      %v2317 = vunpack.c.l.b16 %v926
      %v2318 = vunpack.c.h.b16 %v926
      %v2319 = vunpack.c.l.b16 %v927
      %v2320 = vunpack.c.l.b16 %v928
      %v2321 = vunpack.c.h.b16 %v928
      %v2322 = vunpack.c.l.b16 %v929
      %v2323 = vunpack.c.h.b16 %v929
      %v2324 = vunpack.c.l.b16 %v930
      %v2325 = vunpack.c.h.b16 %v930
      %v2326 = vunpack.c.l.b16 %v931
      %v2327 = vunpack.c.h.b16 %v931
      %v2328 = vunpack.c.l.b16 %v932
      %v2329 = vunpack.c.h.b16 %v932
      %v2330 = vunpack.c.l.b16 %v933
      %v2331 = vunpack.c.h.b16 %v933
      %v2332 = vunpack.c.l.b16 %v934
      %v2333 = vunpack.c.h.b16 %v934
      %v2334 = vunpack.c.l.b16 %v935
      %v2335 = vunpack.c.h.b16 %v935
      %v2336 = vunpack.c.l.b16 %v936
      %v2337 = vunpack.c.l.b16 %v937
      %v2338 = vunpack.c.h.b16 %v937
      %v2339 = vunpack.c.l.b16 %v938
      %v2340 = vunpack.c.h.b16 %v938
      %v2341 = vunpack.c.l.b16 %v939
      %v2342 = vunpack.c.h.b16 %v939
      %v2343 = vunpack.c.l.b16 %v940
      %v2344 = vunpack.c.h.b16 %v940
      %v2345 = vunpack.c.l.b16 %v941
      %v2346 = vunpack.c.h.b16 %v941
      %v2347 = vunpack.c.l.b16 %v942
      %v2348 = vunpack.c.h.b16 %v942
      %v2349 = vunpack.c.l.b16 %v943
      %v2350 = vunpack.c.h.b16 %v943
      %v2351 = vunpack.c.l.b16 %v944
      %v2352 = vunpack.c.h.b16 %v944
      %v2353 = vunpack.c.l.b16 %v945
      %v2354 = vunpack.c.l.b16 %v946
      %v2355 = vunpack.c.h.b16 %v946
      %v2356 = vunpack.c.l.b16 %v947
      %v2357 = vunpack.c.h.b16 %v947
      %v2358 = vunpack.c.l.b16 %v948
      %v2359 = vunpack.c.h.b16 %v948
      %v2360 = vunpack.c.l.b16 %v949
      %v2361 = vunpack.c.h.b16 %v949
      %v2362 = vunpack.c.l.b16 %v950
      %v2363 = vunpack.c.h.b16 %v950
      %v2364 = vunpack.c.l.b16 %v951
      %v2365 = vunpack.c.h.b16 %v951
      %v2366 = vunpack.c.l.b16 %v952
      %v2367 = vunpack.c.h.b16 %v952
      %v2368 = vunpack.c.l.b16 %v953
      %v2369 = vunpack.c.h.b16 %v953
      %v2370 = vunpack.c.l.b16 %v954
      %v2371 = vunpack.c.l.b16 %v955
      %v2372 = vunpack.c.h.b16 %v955
      %v2373 = vunpack.c.l.b16 %v956
      %v2374 = vunpack.c.h.b16 %v956
      %v2375 = vunpack.c.l.b16 %v957
      %v2376 = vunpack.c.h.b16 %v957
      %v2377 = vunpack.c.l.b16 %v958
      %v2378 = vunpack.c.h.b16 %v958
      %v2379 = vunpack.c.l.b16 %v959
      %v2380 = vunpack.c.h.b16 %v959
      %v2381 = vunpack.c.l.b16 %v960
      %v2382 = vunpack.c.h.b16 %v960
      %v2383 = vunpack.c.l.b16 %v961
      %v2384 = vunpack.c.h.b16 %v961
      %v2385 = vunpack.c.l.b16 %v962
      %v2386 = vunpack.c.h.b16 %v962
      %v2387 = vunpack.c.l.b16 %v963
      %v2388 = vunpack.c.l.b16 %v964
      %v2389 = vunpack.c.h.b16 %v964
      %v2390 = vunpack.c.l.b16 %v965
      %v2391 = vunpack.c.h.b16 %v965
      %v2392 = vunpack.c.l.b16 %v966
      %v2393 = vunpack.c.h.b16 %v966
      %v2394 = vunpack.c.l.b16 %v967
      %v2395 = vunpack.c.h.b16 %v967
      %v2396 = vunpack.c.l.b16 %v968
      %v2397 = vunpack.c.h.b16 %v968
      %v2398 = vunpack.c.l.b16 %v969
      %v2399 = vunpack.c.h.b16 %v969
      %v2400 = vunpack.c.l.b16 %v970
      %v2401 = vunpack.c.h.b16 %v970
      %v2402 = vunpack.c.l.b16 %v971
      %v2403 = vunpack.c.h.b16 %v971
      %v2404 = vunpack.c.l.b16 %v972
      %v2405 = vunpack.c.l.b16 %v973
      %v2406 = vunpack.c.h.b16 %v973
      %v2407 = vunpack.c.l.b16 %v974
      %v2408 = vunpack.c.h.b16 %v974
      %v2409 = vunpack.c.l.b16 %v975
      %v2410 = vunpack.c.h.b16 %v975
      %v2411 = vunpack.c.l.b16 %v976
      %v2412 = vunpack.c.h.b16 %v976
      %v2413 = vunpack.c.l.b16 %v977
      %v2414 = vunpack.c.h.b16 %v977
      %v2415 = vunpack.c.l.b16 %v978
      %v2416 = vunpack.c.h.b16 %v978
      %v2417 = vunpack.c.l.b16 %v979
      %v2418 = vunpack.c.h.b16 %v979
      %v2419 = vunpack.c.l.b16 %v980
      %v2420 = vunpack.c.h.b16 %v980
      %v2421 = vunpack.c.l.b16 %v981
      %v2422 = vunpack.c.l.b16 %v982
      %v2423 = vunpack.c.h.b16 %v982
      %v2424 = vunpack.c.l.b16 %v983
      %v2425 = vunpack.c.h.b16 %v983
      %v2426 = vunpack.c.l.b16 %v984
      %v2427 = vunpack.c.h.b16 %v984
      %v2428 = vunpack.c.l.b16 %v985
      %v2429 = vunpack.c.h.b16 %v985
      %v2430 = vunpack.c.l.b16 %v986
      %v2431 = vunpack.c.h.b16 %v986
      %v2432 = vunpack.c.l.b16 %v987
      %v2433 = vunpack.c.h.b16 %v987
      %v2434 = vunpack.c.l.b16 %v988
      %v2435 = vunpack.c.h.b16 %v988
      %v2436 = vunpack.c.l.b16 %v989
      %v2437 = vunpack.c.h.b16 %v989
      %v2438 = vunpack.c.l.b16 %v990
      %v2439 = vunpack.c.l.b16 %v991
      %v2440 = vunpack.c.h.b16 %v991
      %v2441 = vunpack.c.l.b16 %v992
      %v2442 = vunpack.c.h.b16 %v992
      %v2443 = vunpack.c.l.b16 %v993
      %v2444 = vunpack.c.h.b16 %v993
      %v2445 = vunpack.c.l.b16 %v994
      %v2446 = vunpack.c.h.b16 %v994
      %v2447 = vunpack.c.l.b16 %v995
      %v2448 = vunpack.c.h.b16 %v995
      %v2449 = vunpack.c.l.b16 %v996
      %v2450 = vunpack.c.h.b16 %v996
      %v2451 = vunpack.c.l.b16 %v997
      %v2452 = vunpack.c.h.b16 %v997
      %v2453 = vunpack.c.l.b16 %v998
      %v2454 = vunpack.c.h.b16 %v998
      %v2455 = vunpack.c.l.b16 %v999
      %v2456 = vunpack.c.l.b16 %v1000
      %v2457 = vunpack.c.h.b16 %v1000
      %v2458 = vunpack.c.l.b16 %v1001
      %v2459 = vunpack.c.h.b16 %v1001
      %v2460 = vunpack.c.l.b16 %v1002
      %v2461 = vunpack.c.h.b16 %v1002
      %v2462 = vunpack.c.l.b16 %v1003
      %v2463 = vunpack.c.h.b16 %v1003
      %v2464 = vunpack.c.l.b16 %v1004
      %v2465 = vunpack.c.h.b16 %v1004
      %v2466 = vunpack.c.l.b16 %v1005
      %v2467 = vunpack.c.h.b16 %v1005
      %v2468 = vunpack.c.l.b16 %v1006
      %v2469 = vunpack.c.h.b16 %v1006
      %v2470 = vunpack.c.l.b16 %v1007
      %v2471 = vunpack.c.h.b16 %v1007
      %v2472 = vunpack.c.l.b16 %v1008
      %v2473 = vunpack.c.l.b16 %v1009
      %v2474 = vunpack.c.h.b16 %v1009
      %v2475 = vunpack.c.l.b16 %v1010
      %v2476 = vunpack.c.h.b16 %v1010
      %v2477 = vunpack.c.l.b16 %v1011
      %v2478 = vunpack.c.h.b16 %v1011
      %v2479 = vunpack.c.l.b16 %v1012
      %v2480 = vunpack.c.h.b16 %v1012
      %v2481 = vunpack.c.l.b16 %v1013
      %v2482 = vunpack.c.h.b16 %v1013
      %v2483 = vunpack.c.l.b16 %v1014
      %v2484 = vunpack.c.h.b16 %v1014
      %v2485 = vunpack.c.l.b16 %v1015
      %v2486 = vunpack.c.h.b16 %v1015
      %v2487 = vunpack.c.l.b16 %v1016
      %v2488 = vunpack.c.h.b16 %v1016
      %v2489 = vunpack.c.l.b16 %v1017
      %v2490 = vunpack.c.l.b16 %v1018
      %v2491 = vunpack.c.h.b16 %v1018
      %v2492 = vunpack.c.l.b16 %v1019
      %v2493 = vunpack.c.h.b16 %v1019
      %v2494 = vunpack.c.l.b16 %v1020
      %v2495 = vunpack.c.h.b16 %v1020
      %v2496 = vunpack.c.l.b16 %v1021
      %v2497 = vunpack.c.h.b16 %v1021
      %v2498 = vunpack.c.l.b16 %v1022
      %v2499 = vunpack.c.h.b16 %v1022
      %v2500 = vunpack.c.l.b16 %v1023
      %v2501 = vunpack.c.h.b16 %v1023
      %v2502 = vunpack.c.l.b16 %v1024
      %v2503 = vunpack.c.h.b16 %v1024
      %v2504 = vunpack.c.l.b16 %v1025
      %v2505 = vunpack.c.h.b16 %v1025
      %v2506 = vunpack.c.l.b16 %v1026
      %v2507 = vunpack.c.l.b16 %v1027
      %v2508 = vunpack.c.h.b16 %v1027
      %v2509 = vunpack.c.l.b16 %v1028
      %v2510 = vunpack.c.h.b16 %v1028
      %v2511 = vunpack.c.l.b16 %v1029
      %v2512 = vunpack.c.h.b16 %v1029
      %v2513 = vunpack.c.l.b16 %v1030
      %v2514 = vunpack.c.h.b16 %v1030
      %v2515 = vunpack.c.l.b16 %v1031
      %v2516 = vunpack.c.h.b16 %v1031
      %v2517 = vunpack.c.l.b16 %v1032
      %v2518 = vunpack.c.h.b16 %v1032
      %v2519 = vunpack.c.l.b16 %v1033
      %v2520 = vunpack.c.h.b16 %v1033
      %v2521 = vunpack.c.l.b16 %v1034
      %v2522 = vunpack.c.h.b16 %v1034
      %v2523 = vunpack.c.l.b16 %v1035
      %v2524 = vunpack.c.l.b16 %v1036
      %v2525 = vunpack.c.h.b16 %v1036
      %v2526 = vunpack.c.l.b16 %v1037
      %v2527 = vunpack.c.h.b16 %v1037
      %v2528 = vunpack.c.l.b16 %v1038
      %v2529 = vunpack.c.h.b16 %v1038
      %v2530 = vunpack.c.l.b16 %v1039
      %v2531 = vunpack.c.h.b16 %v1039
      %v2532 = vunpack.c.l.b16 %v1040
      %v2533 = vunpack.c.h.b16 %v1040
      %v2534 = vunpack.c.l.b16 %v1041
      %v2535 = vunpack.c.h.b16 %v1041
      %v2536 = vunpack.c.l.b16 %v1042
      %v2537 = vunpack.c.h.b16 %v1042
      %v2538 = vunpack.c.l.b16 %v1043
      %v2539 = vunpack.c.h.b16 %v1043
      %v2540 = vunpack.c.l.b16 %v1044
      %v2541 = vunpack.c.l.b16 %v1045
      %v2542 = vunpack.c.h.b16 %v1045
      %v2543 = vunpack.c.l.b16 %v1046
      %v2544 = vunpack.c.h.b16 %v1046
      %v2545 = vunpack.c.l.b16 %v1047
      %v2546 = vunpack.c.h.b16 %v1047
      %v2547 = vunpack.c.l.b16 %v1048
      %v2548 = vunpack.c.h.b16 %v1048
      %v2549 = vunpack.c.l.b16 %v1049
      %v2550 = vunpack.c.h.b16 %v1049
      %v2551 = vunpack.c.l.b16 %v1050
      %v2552 = vunpack.c.h.b16 %v1050
      %v2553 = vunpack.c.l.b16 %v1051
      %v2554 = vunpack.c.h.b16 %v1051
      %v2555 = vunpack.c.l.b16 %v1052
      %v2556 = vunpack.c.h.b16 %v1052
      %v2557 = vunpack.c.l.b16 %v1053
      %v2558 = vunpack.c.l.b16 %v1054
      %v2559 = vunpack.c.h.b16 %v1054
      %v2560 = vunpack.c.l.b16 %v1055
      %v2561 = vunpack.c.h.b16 %v1055
      %v2562 = vunpack.c.l.b16 %v1056
      %v2563 = vunpack.c.h.b16 %v1056
      %v2564 = vunpack.c.l.b16 %v1057
      %v2565 = vunpack.c.h.b16 %v1057
      %v2566 = vunpack.c.l.b16 %v1058
      %v2567 = vunpack.c.h.b16 %v1058
      %v2568 = vunpack.c.l.b16 %v1059
      %v2569 = vunpack.c.h.b16 %v1059
      %v2570 = vunpack.c.l.b16 %v1060
      %v2571 = vunpack.c.h.b16 %v1060
      %v2572 = vunpack.c.l.b16 %v1061
      %v2573 = vunpack.c.h.b16 %v1061
      %v2574 = vunpack.c.l.b16 %v1062
      %v2575 = vunpack.c.l.b16 %v1063
      %v2576 = vunpack.c.h.b16 %v1063
      %v2577 = vunpack.c.l.b16 %v1064
      %v2578 = vunpack.c.h.b16 %v1064
      %v2579 = vunpack.c.l.b16 %v1065
      %v2580 = vunpack.c.h.b16 %v1065
      %v2581 = vunpack.c.l.b16 %v1066
      %v2582 = vunpack.c.h.b16 %v1066
      %v2583 = vunpack.c.l.b16 %v1067
      %v2584 = vunpack.c.h.b16 %v1067
      %v2585 = vunpack.c.l.b16 %v1068
      %v2586 = vunpack.c.h.b16 %v1068
      %v2587 = vunpack.c.l.b16 %v1069
      %v2588 = vunpack.c.h.b16 %v1069
      %v2589 = vunpack.c.l.b16 %v1070
      %v2590 = vunpack.c.h.b16 %v1070
      %v2591 = vunpack.c.l.b16 %v1071
      %v2592 = vunpack.c.l.b16 %v1072
      %v2593 = vunpack.c.h.b16 %v1072
      %v2594 = vunpack.c.l.b16 %v1073
      %v2595 = vunpack.c.h.b16 %v1073
      %v2596 = vunpack.c.l.b16 %v1074
      %v2597 = vunpack.c.h.b16 %v1074
      %v2598 = vunpack.c.l.b16 %v1075
      %v2599 = vunpack.c.h.b16 %v1075
      %v2600 = vunpack.c.l.b16 %v1076
      %v2601 = vunpack.c.h.b16 %v1076
      %v2602 = vunpack.c.l.b16 %v1077
      %v2603 = vunpack.c.h.b16 %v1077
      %v2604 = vunpack.c.l.b16 %v1078
      %v2605 = vunpack.c.h.b16 %v1078
      %v2606 = vunpack.c.l.b16 %v1079
      %v2607 = vunpack.c.h.b16 %v1079
      %v2608 = vunpack.c.l.b16 %v1080
      %v2609 = vunpack.c.l.b16 %v1081
      %v2610 = vunpack.c.h.b16 %v1081
      %v2611 = vunpack.c.l.b16 %v1082
      %v2612 = vunpack.c.h.b16 %v1082
      %v2613 = vunpack.c.l.b16 %v1083
      %v2614 = vunpack.c.h.b16 %v1083
      %v2615 = vunpack.c.l.b16 %v1084
      %v2616 = vunpack.c.h.b16 %v1084
      %v2617 = vunpack.c.l.b16 %v1085
      %v2618 = vunpack.c.h.b16 %v1085
      %v2619 = vunpack.c.l.b16 %v1086
      %v2620 = vunpack.c.h.b16 %v1086
      %v2621 = vunpack.c.l.b16 %v1087
      %v2622 = vunpack.c.h.b16 %v1087
      %v2623 = vunpack.c.l.b16 %v1088
      %v2624 = vunpack.c.h.b16 %v1088
      %v2625 = vunpack.c.l.b16 %v1089
      %v2626 = vunpack.c.l.b16 %v1090
      %v2627 = vunpack.c.h.b16 %v1090
      %v2628 = vunpack.c.l.b16 %v1091
      %v2629 = vunpack.c.h.b16 %v1091
      %v2630 = vunpack.c.l.b16 %v1092
      %v2631 = vunpack.c.h.b16 %v1092
      %v2632 = vunpack.c.l.b16 %v1093
      %v2633 = vunpack.c.h.b16 %v1093
      %v2634 = vunpack.c.l.b16 %v1094
      %v2635 = vunpack.c.h.b16 %v1094
      %v2636 = vunpack.c.l.b16 %v1095
      %v2637 = vunpack.c.h.b16 %v1095
      %v2638 = vunpack.c.l.b16 %v1096
      %v2639 = vunpack.c.h.b16 %v1096
      %v2640 = vunpack.c.l.b16 %v1097
      %v2641 = vunpack.c.h.b16 %v1097
      %v2642 = vunpack.c.l.b16 %v1098
      %v2643 = vunpack.c.l.b16 %v1099
      %v2644 = vunpack.c.h.b16 %v1099
      %v2645 = vunpack.c.l.b16 %v1100
      %v2646 = vunpack.c.h.b16 %v1100
      %v2647 = vunpack.c.l.b16 %v1101
      %v2648 = vunpack.c.h.b16 %v1101
      %v2649 = vunpack.c.l.b16 %v1102
      %v2650 = vunpack.c.h.b16 %v1102
      %v2651 = vunpack.c.l.b16 %v1103
      %v2652 = vunpack.c.h.b16 %v1103
      %v2653 = vunpack.c.l.b16 %v1104
      %v2654 = vunpack.c.h.b16 %v1104
      %v2655 = vunpack.c.l.b16 %v1105
      %v2656 = vunpack.c.h.b16 %v1105
      %v2657 = vunpack.c.l.b16 %v1106
      %v2658 = vunpack.c.h.b16 %v1106
      %v2659 = vunpack.c.l.b16 %v1107
      %v2660 = vunpack.c.l.b16 %v1108
      %v2661 = vunpack.c.h.b16 %v1108
      %v2662 = vunpack.c.l.b16 %v1109
      %v2663 = vunpack.c.h.b16 %v1109
      %v2664 = vunpack.c.l.b16 %v1110
      %v2665 = vunpack.c.h.b16 %v1110
      %v2666 = vunpack.c.l.b16 %v1111
      %v2667 = vunpack.c.h.b16 %v1111
      %v2668 = vunpack.c.l.b16 %v1112
      %v2669 = vunpack.c.h.b16 %v1112
      %v2670 = vunpack.c.l.b16 %v1113
      %v2671 = vunpack.c.h.b16 %v1113
      %v2672 = vunpack.c.l.b16 %v1114
      %v2673 = vunpack.c.h.b16 %v1114
      %v2674 = vunpack.c.l.b16 %v1115
      %v2675 = vunpack.c.h.b16 %v1115
      %v2676 = vunpack.c.l.b16 %v1116
      %v2677 = vunpack.c.l.b16 %v1117
      %v2678 = vunpack.c.h.b16 %v1117
      %v2679 = vunpack.c.l.b16 %v1118
      %v2680 = vunpack.c.h.b16 %v1118
      %v2681 = vunpack.c.l.b16 %v1119
      %v2682 = vunpack.c.h.b16 %v1119
      %v2683 = vunpack.c.l.b16 %v1120
      %v2684 = vunpack.c.h.b16 %v1120
      %v2685 = vunpack.c.l.b16 %v1121
      %v2686 = vunpack.c.h.b16 %v1121
      %v2687 = vunpack.c.l.b16 %v1122
      %v2688 = vunpack.c.h.b16 %v1122
      %v2689 = vunpack.c.l.b16 %v1123
      %v2690 = vunpack.c.h.b16 %v1123
      %v2691 = vunpack.c.l.b16 %v1124
      %v2692 = vunpack.c.h.b16 %v1124
      %v2693 = vunpack.c.l.b16 %v1125
      %v2694 = vunpack.c.l.b16 %v1126
      %v2695 = vunpack.c.h.b16 %v1126
      %v2696 = vunpack.c.l.b16 %v1127
      %v2697 = vunpack.c.h.b16 %v1127
      %v2698 = vunpack.c.l.b16 %v1128
      %v2699 = vunpack.c.h.b16 %v1128
      %v2700 = vunpack.c.l.b16 %v1129
      %v2701 = vunpack.c.h.b16 %v1129
      %v2702 = vunpack.c.l.b16 %v1130
      %v2703 = vunpack.c.h.b16 %v1130
      %v2704 = vunpack.c.l.b16 %v1131
      %v2705 = vunpack.c.h.b16 %v1131
      %v2706 = vunpack.c.l.b16 %v1132
      %v2707 = vunpack.c.h.b16 %v1132
      %v2708 = vunpack.c.l.b16 %v1133
      %v2709 = vunpack.c.h.b16 %v1133
      %v2710 = vunpack.c.l.b16 %v1134
      %v2711 = vunpack.c.l.b16 %v1135
      %v2712 = vunpack.c.h.b16 %v1135
      %v2713 = vunpack.c.l.b16 %v1136
      %v2714 = vunpack.c.h.b16 %v1136
      %v2715 = vunpack.c.l.b16 %v1137
      %v2716 = vunpack.c.h.b16 %v1137
      %v2717 = vunpack.c.l.b16 %v1138
      %v2718 = vunpack.c.h.b16 %v1138
      %v2719 = vunpack.c.l.b16 %v1139
      %v2720 = vunpack.c.h.b16 %v1139
      %v2721 = vunpack.c.l.b16 %v1140
      %v2722 = vunpack.c.h.b16 %v1140
      %v2723 = vunpack.c.l.b16 %v1141
      %v2724 = vunpack.c.h.b16 %v1141
      %v2725 = vunpack.c.l.b16 %v1142
      %v2726 = vunpack.c.h.b16 %v1142
      %v2727 = vunpack.c.l.b16 %v1143
      %v2728 = vunpack.c.l.b16 %v1144
      %v2729 = vunpack.c.h.b16 %v1144
      %v2730 = vunpack.c.l.b16 %v1145
      %v2731 = vunpack.c.h.b16 %v1145
      %v2732 = vunpack.c.l.b16 %v1146
      %v2733 = vunpack.c.h.b16 %v1146
      %v2734 = vunpack.c.l.b16 %v1147
      %v2735 = vunpack.c.h.b16 %v1147
      %v2736 = vunpack.c.l.b16 %v1148
      %v2737 = vunpack.c.h.b16 %v1148
      %v2738 = vunpack.c.l.b16 %v1149
      %v2739 = vunpack.c.h.b16 %v1149
      %v2740 = vunpack.c.l.b16 %v1150
      %v2741 = vunpack.c.h.b16 %v1150
      %v2742 = vunpack.c.l.b16 %v1151
      %v2743 = vunpack.c.h.b16 %v1151
      %v2744 = vunpack.c.l.b16 %v1152
      %v2745 = vunpack.c.l.b16 %v1153
      %v2746 = vunpack.c.h.b16 %v1153
      %v2747 = vunpack.c.l.b16 %v1154
      %v2748 = vunpack.c.h.b16 %v1154
      %v2749 = vunpack.c.l.b16 %v1155
      %v2750 = vunpack.c.h.b16 %v1155
      %v2751 = vunpack.c.l.b16 %v1156
      %v2752 = vunpack.c.h.b16 %v1156
      %v2753 = vunpack.c.l.b16 %v1157
      %v2754 = vunpack.c.h.b16 %v1157
      %v2755 = vunpack.c.l.b16 %v1158
      %v2756 = vunpack.c.h.b16 %v1158
      %v2757 = vunpack.c.l.b16 %v1159
      %v2758 = vunpack.c.h.b16 %v1159
      %v2759 = vunpack.c.l.b16 %v1160
      %v2760 = vunpack.c.h.b16 %v1160
      %v2761 = vunpack.c.l.b16 %v1161
      %v2762 = vunpack.c.l.b16 %v1162
      %v2763 = vunpack.c.h.b16 %v1162
      %v2764 = vunpack.c.l.b16 %v1163
      %v2765 = vunpack.c.h.b16 %v1163
      %v2766 = vunpack.c.l.b16 %v1164
      %v2767 = vunpack.c.h.b16 %v1164
      %v2768 = vunpack.c.l.b16 %v1165
      %v2769 = vunpack.c.h.b16 %v1165
      %v2770 = vunpack.c.l.b16 %v1166
      %v2771 = vunpack.c.h.b16 %v1166
      %v2772 = vunpack.c.l.b16 %v1167
      %v2773 = vunpack.c.h.b16 %v1167
      %v2774 = vunpack.c.l.b16 %v1168
      %v2775 = vunpack.c.h.b16 %v1168
      %v2776 = vunpack.c.l.b16 %v1169
      %v2777 = vunpack.c.h.b16 %v1169
      %v2778 = vunpack.c.l.b16 %v1170
      %v2779 = vunpack.c.l.b16 %v1171
      %v2780 = vunpack.c.h.b16 %v1171
      %v2781 = vunpack.c.l.b16 %v1172
      %v2782 = vunpack.c.h.b16 %v1172
      %v2783 = vunpack.c.l.b16 %v1173
      %v2784 = vunpack.c.h.b16 %v1173
      %v2785 = vunpack.c.l.b16 %v1174
      %v2786 = vunpack.c.h.b16 %v1174
      %v2787 = vunpack.c.l.b16 %v1175
      %v2788 = vunpack.c.h.b16 %v1175
      %v2789 = vunpack.c.l.b16 %v1176
      %v2790 = vunpack.c.h.b16 %v1176
      %v2791 = vunpack.c.l.b16 %v1177
      %v2792 = vunpack.c.h.b16 %v1177
      %v2793 = vunpack.c.l.b16 %v1178
      %v2794 = vunpack.c.h.b16 %v1178
      %v2795 = vunpack.c.l.b16 %v1179
      %v2796 = vunpack.c.l.b16 %v1180
      %v2797 = vunpack.c.h.b16 %v1180
      %v2798 = vunpack.c.l.b16 %v1181
      %v2799 = vunpack.c.h.b16 %v1181
      %v2800 = vunpack.c.l.b16 %v1182
      %v2801 = vunpack.c.h.b16 %v1182
      %v2802 = vunpack.c.l.b16 %v1183
      %v2803 = vunpack.c.h.b16 %v1183
      %v2804 = vunpack.c.l.b16 %v1184
      %v2805 = vunpack.c.h.b16 %v1184
      %v2806 = vunpack.c.l.b16 %v1185
      %v2807 = vunpack.c.h.b16 %v1185
      %v2808 = vunpack.c.l.b16 %v1186
      %v2809 = vunpack.c.h.b16 %v1186
      %v2810 = vunpack.c.l.b16 %v1187
      %v2811 = vunpack.c.h.b16 %v1187
      %v2812 = vunpack.c.l.b16 %v1188
      %v2813 = vunpack.c.l.b16 %v1189
      %v2814 = vunpack.c.h.b16 %v1189
      %v2815 = vunpack.c.l.b16 %v1190
      %v2816 = vunpack.c.h.b16 %v1190
      %v2817 = vunpack.c.l.b16 %v1191
      %v2818 = vunpack.c.h.b16 %v1191
      %v2819 = vunpack.c.l.b16 %v1192
      %v2820 = vunpack.c.h.b16 %v1192
      %v2821 = vunpack.c.l.b16 %v1193
      %v2822 = vunpack.c.h.b16 %v1193
      %v2823 = vunpack.c.l.b16 %v1194
      %v2824 = vunpack.c.h.b16 %v1194
      %v2825 = vunpack.c.l.b16 %v1195
      %v2826 = vunpack.c.h.b16 %v1195
      %v2827 = vunpack.c.l.b16 %v1196
      %v2828 = vunpack.c.h.b16 %v1196
      %v2829 = vunpack.c.l.b16 %v1197
      %v2830 = vunpack.c.l.b16 %v1198
      %v2831 = vunpack.c.h.b16 %v1198
      %v2832 = vunpack.c.l.b16 %v1199
      %v2833 = vunpack.c.h.b16 %v1199
      %v2834 = vunpack.c.l.b16 %v1200
      %v2835 = vunpack.c.h.b16 %v1200
      %v2836 = vunpack.c.l.b16 %v1201
      %v2837 = vunpack.c.h.b16 %v1201
      %v2838 = vunpack.c.l.b16 %v1202
      %v2839 = vunpack.c.h.b16 %v1202
      %v2840 = vunpack.c.l.b16 %v1203
      %v2841 = vunpack.c.h.b16 %v1203
      %v2842 = vunpack.c.l.b16 %v1204
      %v2843 = vunpack.c.h.b16 %v1204
      %v2844 = vunpack.c.l.b16 %v1205
      %v2845 = vunpack.c.h.b16 %v1205
      %v2846 = vunpack.c.l.b16 %v1206
      %v2847 = vunpack.c.l.b16 %v1207
      %v2848 = vunpack.c.h.b16 %v1207
      %v2849 = vunpack.c.l.b16 %v1208
      %v2850 = vunpack.c.h.b16 %v1208
      %v2851 = vunpack.c.l.b16 %v1209
      %v2852 = vunpack.c.h.b16 %v1209
      %v2853 = vunpack.c.l.b16 %v1210
      %v2854 = vunpack.c.h.b16 %v1210
      %v2855 = vunpack.c.l.b16 %v1211
      %v2856 = vunpack.c.h.b16 %v1211
      %v2857 = vunpack.c.l.b16 %v1212
      %v2858 = vunpack.c.h.b16 %v1212
      %v2859 = vunpack.c.l.b16 %v1213
      %v2860 = vunpack.c.h.b16 %v1213
      %v2861 = vunpack.c.l.b16 %v1214
      %v2862 = vunpack.c.h.b16 %v1214
      %v2863 = vunpack.c.l.b16 %v1215
      %v2864 = vunpack.c.l.b16 %v1216
      %v2865 = vunpack.c.h.b16 %v1216
      %v2866 = vunpack.c.l.b16 %v1217
      %v2867 = vunpack.c.h.b16 %v1217
      %v2868 = vunpack.c.l.b16 %v1218
      %v2869 = vunpack.c.h.b16 %v1218
      %v2870 = vunpack.c.l.b16 %v1219
      %v2871 = vunpack.c.h.b16 %v1219
      %v2872 = vunpack.c.l.b16 %v1220
      %v2873 = vunpack.c.h.b16 %v1220
      %v2874 = vunpack.c.l.b16 %v1221
      %v2875 = vunpack.c.h.b16 %v1221
      %v2876 = vunpack.c.l.b16 %v1222
      %v2877 = vunpack.c.h.b16 %v1222
      %v2878 = vunpack.c.l.b16 %v1223
      %v2879 = vunpack.c.h.b16 %v1223
      %v2880 = vunpack.c.l.b16 %v1224
      %v2881 = vunpack.c.l.b16 %v1225
      %v2882 = vunpack.c.h.b16 %v1225
      %v2883 = vunpack.c.l.b16 %v1226
      %v2884 = vunpack.c.h.b16 %v1226
      %v2885 = vunpack.c.l.b16 %v1227
      %v2886 = vunpack.c.h.b16 %v1227
      %v2887 = vunpack.c.l.b16 %v1228
      %v2888 = vunpack.c.h.b16 %v1228
      %v2889 = vunpack.c.l.b16 %v1229
      %v2890 = vunpack.c.h.b16 %v1229
      %v2891 = vunpack.c.l.b16 %v1230
      %v2892 = vunpack.c.h.b16 %v1230
      %v2893 = vunpack.c.l.b16 %v1231
      %v2894 = vunpack.c.h.b16 %v1231
      %v2895 = vunpack.c.l.b16 %v1232
      %v2896 = vunpack.c.h.b16 %v1232
      %v2897 = vunpack.c.l.b16 %v1233
      %v2898 = vpack.c.b16 %v1827, %v1810
      %v2899 = vpack.c.b16 %v1828, %v1811
      %v2900 = vpack.c.b16 %v1829, %v1812
      %v2901 = vpack.c.b16 %v1830, %v1813
      %v2902 = vpack.c.b16 %v1831, %v1814
      %v2903 = vpack.c.b16 %v1832, %v1815
      %v2904 = vpack.c.b16 %v1833, %v1816
      %v2905 = vpack.c.b16 %v1834, %v1817
      %v2906 = vpack.c.b16 %v1835, %v1818
      %v2907 = vpack.c.b16 %v1836, %v1819
      %v2908 = vpack.c.b16 %v1837, %v1820
      %v2909 = vpack.c.b16 %v1838, %v1821
      %v2910 = vpack.c.b16 %v1839, %v1822
      %v2911 = vpack.c.b16 %v1840, %v1823
      %v2912 = vpack.c.b16 %v1841, %v1824
      %v2913 = vpack.c.b16 %v1842, %v1825
      %v2914 = vpack.c.b16 %v1843, %v1826
      %v2915 = vpack.c.b16 %v1861, %v1844
      %v2916 = vpack.c.b16 %v1862, %v1845
      %v2917 = vpack.c.b16 %v1863, %v1846
      %v2918 = vpack.c.b16 %v1864, %v1847
      %v2919 = vpack.c.b16 %v1865, %v1848
      %v2920 = vpack.c.b16 %v1866, %v1849
      %v2921 = vpack.c.b16 %v1867, %v1850
      %v2922 = vpack.c.b16 %v1868, %v1851
      %v2923 = vpack.c.b16 %v1869, %v1852
      %v2924 = vpack.c.b16 %v1870, %v1853
      %v2925 = vpack.c.b16 %v1871, %v1854
      %v2926 = vpack.c.b16 %v1872, %v1855
      %v2927 = vpack.c.b16 %v1873, %v1856
      %v2928 = vpack.c.b16 %v1874, %v1857
      %v2929 = vpack.c.b16 %v1875, %v1858
      %v2930 = vpack.c.b16 %v1876, %v1859
      %v2931 = vpack.c.b16 %v1877, %v1860
      %v2932 = vpack.c.b16 %v1895, %v1878
      %v2933 = vpack.c.b16 %v1896, %v1879
      %v2934 = vpack.c.b16 %v1897, %v1880
      %v2935 = vpack.c.b16 %v1898, %v1881
      %v2936 = vpack.c.b16 %v1899, %v1882
      %v2937 = vpack.c.b16 %v1900, %v1883
      %v2938 = vpack.c.b16 %v1901, %v1884
      %v2939 = vpack.c.b16 %v1902, %v1885
      %v2940 = vpack.c.b16 %v1903, %v1886
      %v2941 = vpack.c.b16 %v1904, %v1887
      %v2942 = vpack.c.b16 %v1905, %v1888
      %v2943 = vpack.c.b16 %v1906, %v1889
      %v2944 = vpack.c.b16 %v1907, %v1890
      %v2945 = vpack.c.b16 %v1908, %v1891
      %v2946 = vpack.c.b16 %v1909, %v1892
      %v2947 = vpack.c.b16 %v1910, %v1893
      %v2948 = vpack.c.b16 %v1911, %v1894
      %v2949 = vpack.c.b16 %v1929, %v1912
      %v2950 = vpack.c.b16 %v1930, %v1913
      %v2951 = vpack.c.b16 %v1931, %v1914
      %v2952 = vpack.c.b16 %v1932, %v1915
      %v2953 = vpack.c.b16 %v1933, %v1916
      %v2954 = vpack.c.b16 %v1934, %v1917
      %v2955 = vpack.c.b16 %v1935, %v1918
      %v2956 = vpack.c.b16 %v1936, %v1919
      %v2957 = vpack.c.b16 %v1937, %v1920
      %v2958 = vpack.c.b16 %v1938, %v1921
      %v2959 = vpack.c.b16 %v1939, %v1922
      %v2960 = vpack.c.b16 %v1940, %v1923
      %v2961 = vpack.c.b16 %v1941, %v1924
      %v2962 = vpack.c.b16 %v1942, %v1925
      %v2963 = vpack.c.b16 %v1943, %v1926
      %v2964 = vpack.c.b16 %v1944, %v1927
      %v2965 = vpack.c.b16 %v1945, %v1928
      %v2966 = vpack.c.b16 %v1963, %v1946
      %v2967 = vpack.c.b16 %v1964, %v1947
      %v2968 = vpack.c.b16 %v1965, %v1948
      %v2969 = vpack.c.b16 %v1966, %v1949
      %v2970 = vpack.c.b16 %v1967, %v1950
      %v2971 = vpack.c.b16 %v1968, %v1951
      %v2972 = vpack.c.b16 %v1969, %v1952
      %v2973 = vpack.c.b16 %v1970, %v1953
      %v2974 = vpack.c.b16 %v1971, %v1954
      %v2975 = vpack.c.b16 %v1972, %v1955
      %v2976 = vpack.c.b16 %v1973, %v1956
      %v2977 = vpack.c.b16 %v1974, %v1957
      %v2978 = vpack.c.b16 %v1975, %v1958
      %v2979 = vpack.c.b16 %v1976, %v1959
      %v2980 = vpack.c.b16 %v1977, %v1960
      %v2981 = vpack.c.b16 %v1978, %v1961
      %v2982 = vpack.c.b16 %v1979, %v1962
      %v2983 = vpack.c.b16 %v1997, %v1980
      %v2984 = vpack.c.b16 %v1998, %v1981
      %v2985 = vpack.c.b16 %v1999, %v1982
      %v2986 = vpack.c.b16 %v2000, %v1983
      %v2987 = vpack.c.b16 %v2001, %v1984
      %v2988 = vpack.c.b16 %v2002, %v1985
      %v2989 = vpack.c.b16 %v2003, %v1986
      %v2990 = vpack.c.b16 %v2004, %v1987
      %v2991 = vpack.c.b16 %v2005, %v1988
      %v2992 = vpack.c.b16 %v2006, %v1989
      %v2993 = vpack.c.b16 %v2007, %v1990
      %v2994 = vpack.c.b16 %v2008, %v1991
      %v2995 = vpack.c.b16 %v2009, %v1992
      %v2996 = vpack.c.b16 %v2010, %v1993
      %v2997 = vpack.c.b16 %v2011, %v1994
      %v2998 = vpack.c.b16 %v2012, %v1995
      %v2999 = vpack.c.b16 %v2013, %v1996
      %v3000 = vpack.c.b16 %v2031, %v2014
      %v3001 = vpack.c.b16 %v2032, %v2015
      %v3002 = vpack.c.b16 %v2033, %v2016
      %v3003 = vpack.c.b16 %v2034, %v2017
      %v3004 = vpack.c.b16 %v2035, %v2018
      %v3005 = vpack.c.b16 %v2036, %v2019
      %v3006 = vpack.c.b16 %v2037, %v2020
      %v3007 = vpack.c.b16 %v2038, %v2021
      %v3008 = vpack.c.b16 %v2039, %v2022
      %v3009 = vpack.c.b16 %v2040, %v2023
      %v3010 = vpack.c.b16 %v2041, %v2024
      %v3011 = vpack.c.b16 %v2042, %v2025
      %v3012 = vpack.c.b16 %v2043, %v2026
      %v3013 = vpack.c.b16 %v2044, %v2027
      %v3014 = vpack.c.b16 %v2045, %v2028
      %v3015 = vpack.c.b16 %v2046, %v2029
      %v3016 = vpack.c.b16 %v2047, %v2030
      %v3017 = vpack.c.b16 %v2065, %v2048
      %v3018 = vpack.c.b16 %v2066, %v2049
      %v3019 = vpack.c.b16 %v2067, %v2050
      %v3020 = vpack.c.b16 %v2068, %v2051
      %v3021 = vpack.c.b16 %v2069, %v2052
      %v3022 = vpack.c.b16 %v2070, %v2053
      %v3023 = vpack.c.b16 %v2071, %v2054
      %v3024 = vpack.c.b16 %v2072, %v2055
      %v3025 = vpack.c.b16 %v2073, %v2056
      %v3026 = vpack.c.b16 %v2074, %v2057
      %v3027 = vpack.c.b16 %v2075, %v2058
      %v3028 = vpack.c.b16 %v2076, %v2059
      %v3029 = vpack.c.b16 %v2077, %v2060
      %v3030 = vpack.c.b16 %v2078, %v2061
      %v3031 = vpack.c.b16 %v2079, %v2062
      %v3032 = vpack.c.b16 %v2080, %v2063
      %v3033 = vpack.c.b16 %v2081, %v2064
      %v3034 = vpack.c.b16 %v2099, %v2082
      %v3035 = vpack.c.b16 %v2100, %v2083
      %v3036 = vpack.c.b16 %v2101, %v2084
      %v3037 = vpack.c.b16 %v2102, %v2085
      %v3038 = vpack.c.b16 %v2103, %v2086
      %v3039 = vpack.c.b16 %v2104, %v2087
      %v3040 = vpack.c.b16 %v2105, %v2088
      %v3041 = vpack.c.b16 %v2106, %v2089
      %v3042 = vpack.c.b16 %v2107, %v2090
      %v3043 = vpack.c.b16 %v2108, %v2091
      %v3044 = vpack.c.b16 %v2109, %v2092
      %v3045 = vpack.c.b16 %v2110, %v2093
      %v3046 = vpack.c.b16 %v2111, %v2094
      %v3047 = vpack.c.b16 %v2112, %v2095
      %v3048 = vpack.c.b16 %v2113, %v2096
      %v3049 = vpack.c.b16 %v2114, %v2097
      %v3050 = vpack.c.b16 %v2115, %v2098
      %v3051 = vpack.c.b16 %v2133, %v2116
      %v3052 = vpack.c.b16 %v2134, %v2117
      %v3053 = vpack.c.b16 %v2135, %v2118
      %v3054 = vpack.c.b16 %v2136, %v2119
      %v3055 = vpack.c.b16 %v2137, %v2120
      %v3056 = vpack.c.b16 %v2138, %v2121
      %v3057 = vpack.c.b16 %v2139, %v2122
      %v3058 = vpack.c.b16 %v2140, %v2123
      %v3059 = vpack.c.b16 %v2141, %v2124
      %v3060 = vpack.c.b16 %v2142, %v2125
      %v3061 = vpack.c.b16 %v2143, %v2126
      %v3062 = vpack.c.b16 %v2144, %v2127
      %v3063 = vpack.c.b16 %v2145, %v2128
      %v3064 = vpack.c.b16 %v2146, %v2129
      %v3065 = vpack.c.b16 %v2147, %v2130
      %v3066 = vpack.c.b16 %v2148, %v2131
      %v3067 = vpack.c.b16 %v2149, %v2132
      %v3068 = vpack.c.b16 %v2167, %v2150
      %v3069 = vpack.c.b16 %v2168, %v2151
      %v3070 = vpack.c.b16 %v2169, %v2152
      %v3071 = vpack.c.b16 %v2170, %v2153
      %v3072 = vpack.c.b16 %v2171, %v2154
      %v3073 = vpack.c.b16 %v2172, %v2155
      %v3074 = vpack.c.b16 %v2173, %v2156
      %v3075 = vpack.c.b16 %v2174, %v2157
      %v3076 = vpack.c.b16 %v2175, %v2158
      %v3077 = vpack.c.b16 %v2176, %v2159
      %v3078 = vpack.c.b16 %v2177, %v2160
      %v3079 = vpack.c.b16 %v2178, %v2161
      %v3080 = vpack.c.b16 %v2179, %v2162
      %v3081 = vpack.c.b16 %v2180, %v2163
      %v3082 = vpack.c.b16 %v2181, %v2164
      %v3083 = vpack.c.b16 %v2182, %v2165
      %v3084 = vpack.c.b16 %v2183, %v2166
      %v3085 = vpack.c.b16 %v2201, %v2184
      %v3086 = vpack.c.b16 %v2202, %v2185
      %v3087 = vpack.c.b16 %v2203, %v2186
      %v3088 = vpack.c.b16 %v2204, %v2187
      %v3089 = vpack.c.b16 %v2205, %v2188
      %v3090 = vpack.c.b16 %v2206, %v2189
      %v3091 = vpack.c.b16 %v2207, %v2190
      %v3092 = vpack.c.b16 %v2208, %v2191
      %v3093 = vpack.c.b16 %v2209, %v2192
      %v3094 = vpack.c.b16 %v2210, %v2193
      %v3095 = vpack.c.b16 %v2211, %v2194
      %v3096 = vpack.c.b16 %v2212, %v2195
      %v3097 = vpack.c.b16 %v2213, %v2196
      %v3098 = vpack.c.b16 %v2214, %v2197
      %v3099 = vpack.c.b16 %v2215, %v2198
      %v3100 = vpack.c.b16 %v2216, %v2199
      %v3101 = vpack.c.b16 %v2217, %v2200
      %v3102 = vpack.c.b16 %v2235, %v2218
      %v3103 = vpack.c.b16 %v2236, %v2219
      %v3104 = vpack.c.b16 %v2237, %v2220
      %v3105 = vpack.c.b16 %v2238, %v2221
      %v3106 = vpack.c.b16 %v2239, %v2222
      %v3107 = vpack.c.b16 %v2240, %v2223
      %v3108 = vpack.c.b16 %v2241, %v2224
      %v3109 = vpack.c.b16 %v2242, %v2225
      %v3110 = vpack.c.b16 %v2243, %v2226
      %v3111 = vpack.c.b16 %v2244, %v2227
      %v3112 = vpack.c.b16 %v2245, %v2228
      %v3113 = vpack.c.b16 %v2246, %v2229
      %v3114 = vpack.c.b16 %v2247, %v2230
      %v3115 = vpack.c.b16 %v2248, %v2231
      %v3116 = vpack.c.b16 %v2249, %v2232
      %v3117 = vpack.c.b16 %v2250, %v2233
      %v3118 = vpack.c.b16 %v2251, %v2234
      %v3119 = vpack.c.b16 %v2269, %v2252
      %v3120 = vpack.c.b16 %v2270, %v2253
      %v3121 = vpack.c.b16 %v2271, %v2254
      %v3122 = vpack.c.b16 %v2272, %v2255
      %v3123 = vpack.c.b16 %v2273, %v2256
      %v3124 = vpack.c.b16 %v2274, %v2257
      %v3125 = vpack.c.b16 %v2275, %v2258
      %v3126 = vpack.c.b16 %v2276, %v2259
      %v3127 = vpack.c.b16 %v2277, %v2260
      %v3128 = vpack.c.b16 %v2278, %v2261
      %v3129 = vpack.c.b16 %v2279, %v2262
      %v3130 = vpack.c.b16 %v2280, %v2263
      %v3131 = vpack.c.b16 %v2281, %v2264
      %v3132 = vpack.c.b16 %v2282, %v2265
      %v3133 = vpack.c.b16 %v2283, %v2266
      %v3134 = vpack.c.b16 %v2284, %v2267
      %v3135 = vpack.c.b16 %v2285, %v2268
      %v3136 = vpack.c.b16 %v2303, %v2286
      %v3137 = vpack.c.b16 %v2304, %v2287
      %v3138 = vpack.c.b16 %v2305, %v2288
      %v3139 = vpack.c.b16 %v2306, %v2289
      %v3140 = vpack.c.b16 %v2307, %v2290
      %v3141 = vpack.c.b16 %v2308, %v2291
      %v3142 = vpack.c.b16 %v2309, %v2292
      %v3143 = vpack.c.b16 %v2310, %v2293
      %v3144 = vpack.c.b16 %v2311, %v2294
      %v3145 = vpack.c.b16 %v2312, %v2295
      %v3146 = vpack.c.b16 %v2313, %v2296
      %v3147 = vpack.c.b16 %v2314, %v2297
      %v3148 = vpack.c.b16 %v2315, %v2298
      %v3149 = vpack.c.b16 %v2316, %v2299
      %v3150 = vpack.c.b16 %v2317, %v2300
      %v3151 = vpack.c.b16 %v2318, %v2301
      %v3152 = vpack.c.b16 %v2319, %v2302
      %v3153 = vpack.c.b16 %v2337, %v2320
      %v3154 = vpack.c.b16 %v2338, %v2321
      %v3155 = vpack.c.b16 %v2339, %v2322
      %v3156 = vpack.c.b16 %v2340, %v2323
      %v3157 = vpack.c.b16 %v2341, %v2324
      %v3158 = vpack.c.b16 %v2342, %v2325
      %v3159 = vpack.c.b16 %v2343, %v2326
      %v3160 = vpack.c.b16 %v2344, %v2327
      %v3161 = vpack.c.b16 %v2345, %v2328
      %v3162 = vpack.c.b16 %v2346, %v2329
      %v3163 = vpack.c.b16 %v2347, %v2330
      %v3164 = vpack.c.b16 %v2348, %v2331
      %v3165 = vpack.c.b16 %v2349, %v2332
      %v3166 = vpack.c.b16 %v2350, %v2333
      %v3167 = vpack.c.b16 %v2351, %v2334
      %v3168 = vpack.c.b16 %v2352, %v2335
      %v3169 = vpack.c.b16 %v2353, %v2336
      %v3170 = vpack.c.b16 %v2371, %v2354
      %v3171 = vpack.c.b16 %v2372, %v2355
      %v3172 = vpack.c.b16 %v2373, %v2356
      %v3173 = vpack.c.b16 %v2374, %v2357
      %v3174 = vpack.c.b16 %v2375, %v2358
      %v3175 = vpack.c.b16 %v2376, %v2359
      %v3176 = vpack.c.b16 %v2377, %v2360
      %v3177 = vpack.c.b16 %v2378, %v2361
      %v3178 = vpack.c.b16 %v2379, %v2362
      %v3179 = vpack.c.b16 %v2380, %v2363
      %v3180 = vpack.c.b16 %v2381, %v2364
      %v3181 = vpack.c.b16 %v2382, %v2365
      %v3182 = vpack.c.b16 %v2383, %v2366
      %v3183 = vpack.c.b16 %v2384, %v2367
      %v3184 = vpack.c.b16 %v2385, %v2368
      %v3185 = vpack.c.b16 %v2386, %v2369
      %v3186 = vpack.c.b16 %v2387, %v2370
      %v3187 = vpack.c.b16 %v2405, %v2388
      %v3188 = vpack.c.b16 %v2406, %v2389
      %v3189 = vpack.c.b16 %v2407, %v2390
      %v3190 = vpack.c.b16 %v2408, %v2391
      %v3191 = vpack.c.b16 %v2409, %v2392
      %v3192 = vpack.c.b16 %v2410, %v2393
      %v3193 = vpack.c.b16 %v2411, %v2394
      %v3194 = vpack.c.b16 %v2412, %v2395
      %v3195 = vpack.c.b16 %v2413, %v2396
      %v3196 = vpack.c.b16 %v2414, %v2397
      %v3197 = vpack.c.b16 %v2415, %v2398
      %v3198 = vpack.c.b16 %v2416, %v2399
      %v3199 = vpack.c.b16 %v2417, %v2400
      %v3200 = vpack.c.b16 %v2418, %v2401
      %v3201 = vpack.c.b16 %v2419, %v2402
      %v3202 = vpack.c.b16 %v2420, %v2403
      %v3203 = vpack.c.b16 %v2421, %v2404
      %v3204 = vpack.c.b16 %v2439, %v2422
      %v3205 = vpack.c.b16 %v2440, %v2423
      %v3206 = vpack.c.b16 %v2441, %v2424
      %v3207 = vpack.c.b16 %v2442, %v2425
      %v3208 = vpack.c.b16 %v2443, %v2426
      %v3209 = vpack.c.b16 %v2444, %v2427
      %v3210 = vpack.c.b16 %v2445, %v2428
      %v3211 = vpack.c.b16 %v2446, %v2429
      %v3212 = vpack.c.b16 %v2447, %v2430
      %v3213 = vpack.c.b16 %v2448, %v2431
      %v3214 = vpack.c.b16 %v2449, %v2432
      %v3215 = vpack.c.b16 %v2450, %v2433
      %v3216 = vpack.c.b16 %v2451, %v2434
      %v3217 = vpack.c.b16 %v2452, %v2435
      %v3218 = vpack.c.b16 %v2453, %v2436
      %v3219 = vpack.c.b16 %v2454, %v2437
      %v3220 = vpack.c.b16 %v2455, %v2438
      %v3221 = vpack.c.b16 %v2473, %v2456
      %v3222 = vpack.c.b16 %v2474, %v2457
      %v3223 = vpack.c.b16 %v2475, %v2458
      %v3224 = vpack.c.b16 %v2476, %v2459
      %v3225 = vpack.c.b16 %v2477, %v2460
      %v3226 = vpack.c.b16 %v2478, %v2461
      %v3227 = vpack.c.b16 %v2479, %v2462
      %v3228 = vpack.c.b16 %v2480, %v2463
      %v3229 = vpack.c.b16 %v2481, %v2464
      %v3230 = vpack.c.b16 %v2482, %v2465
      %v3231 = vpack.c.b16 %v2483, %v2466
      %v3232 = vpack.c.b16 %v2484, %v2467
      %v3233 = vpack.c.b16 %v2485, %v2468
      %v3234 = vpack.c.b16 %v2486, %v2469
      %v3235 = vpack.c.b16 %v2487, %v2470
      %v3236 = vpack.c.b16 %v2488, %v2471
      %v3237 = vpack.c.b16 %v2489, %v2472
      %v3238 = vpack.c.b16 %v2507, %v2490
      %v3239 = vpack.c.b16 %v2508, %v2491
      %v3240 = vpack.c.b16 %v2509, %v2492
      %v3241 = vpack.c.b16 %v2510, %v2493
      %v3242 = vpack.c.b16 %v2511, %v2494
      %v3243 = vpack.c.b16 %v2512, %v2495
      %v3244 = vpack.c.b16 %v2513, %v2496
      %v3245 = vpack.c.b16 %v2514, %v2497
      %v3246 = vpack.c.b16 %v2515, %v2498
      %v3247 = vpack.c.b16 %v2516, %v2499
      %v3248 = vpack.c.b16 %v2517, %v2500
      %v3249 = vpack.c.b16 %v2518, %v2501
      %v3250 = vpack.c.b16 %v2519, %v2502
      %v3251 = vpack.c.b16 %v2520, %v2503
      %v3252 = vpack.c.b16 %v2521, %v2504
      %v3253 = vpack.c.b16 %v2522, %v2505
      %v3254 = vpack.c.b16 %v2523, %v2506
      %v3255 = vpack.c.b16 %v2541, %v2524
      %v3256 = vpack.c.b16 %v2542, %v2525
      %v3257 = vpack.c.b16 %v2543, %v2526
      %v3258 = vpack.c.b16 %v2544, %v2527
      %v3259 = vpack.c.b16 %v2545, %v2528
      %v3260 = vpack.c.b16 %v2546, %v2529
      %v3261 = vpack.c.b16 %v2547, %v2530
      %v3262 = vpack.c.b16 %v2548, %v2531
      %v3263 = vpack.c.b16 %v2549, %v2532
      %v3264 = vpack.c.b16 %v2550, %v2533
      %v3265 = vpack.c.b16 %v2551, %v2534
      %v3266 = vpack.c.b16 %v2552, %v2535
      %v3267 = vpack.c.b16 %v2553, %v2536
      %v3268 = vpack.c.b16 %v2554, %v2537
      %v3269 = vpack.c.b16 %v2555, %v2538
      %v3270 = vpack.c.b16 %v2556, %v2539
      %v3271 = vpack.c.b16 %v2557, %v2540
      %v3272 = vpack.c.b16 %v2575, %v2558
      %v3273 = vpack.c.b16 %v2576, %v2559
      %v3274 = vpack.c.b16 %v2577, %v2560
      %v3275 = vpack.c.b16 %v2578, %v2561
      %v3276 = vpack.c.b16 %v2579, %v2562
      %v3277 = vpack.c.b16 %v2580, %v2563
      %v3278 = vpack.c.b16 %v2581, %v2564
      %v3279 = vpack.c.b16 %v2582, %v2565
      %v3280 = vpack.c.b16 %v2583, %v2566
      %v3281 = vpack.c.b16 %v2584, %v2567
      %v3282 = vpack.c.b16 %v2585, %v2568
      %v3283 = vpack.c.b16 %v2586, %v2569
      %v3284 = vpack.c.b16 %v2587, %v2570
      %v3285 = vpack.c.b16 %v2588, %v2571
      %v3286 = vpack.c.b16 %v2589, %v2572
      %v3287 = vpack.c.b16 %v2590, %v2573
      %v3288 = vpack.c.b16 %v2591, %v2574
      %v3289 = vpack.c.b16 %v2609, %v2592
      %v3290 = vpack.c.b16 %v2610, %v2593
      %v3291 = vpack.c.b16 %v2611, %v2594
      %v3292 = vpack.c.b16 %v2612, %v2595
      %v3293 = vpack.c.b16 %v2613, %v2596
      %v3294 = vpack.c.b16 %v2614, %v2597
      %v3295 = vpack.c.b16 %v2615, %v2598
      %v3296 = vpack.c.b16 %v2616, %v2599
      %v3297 = vpack.c.b16 %v2617, %v2600
      %v3298 = vpack.c.b16 %v2618, %v2601
      %v3299 = vpack.c.b16 %v2619, %v2602
      %v3300 = vpack.c.b16 %v2620, %v2603
      %v3301 = vpack.c.b16 %v2621, %v2604
      %v3302 = vpack.c.b16 %v2622, %v2605
      %v3303 = vpack.c.b16 %v2623, %v2606
      %v3304 = vpack.c.b16 %v2624, %v2607
      %v3305 = vpack.c.b16 %v2625, %v2608
      %v3306 = vpack.c.b16 %v2643, %v2626
      %v3307 = vpack.c.b16 %v2644, %v2627
      %v3308 = vpack.c.b16 %v2645, %v2628
      %v3309 = vpack.c.b16 %v2646, %v2629
      %v3310 = vpack.c.b16 %v2647, %v2630
      %v3311 = vpack.c.b16 %v2648, %v2631
      %v3312 = vpack.c.b16 %v2649, %v2632
      %v3313 = vpack.c.b16 %v2650, %v2633
      %v3314 = vpack.c.b16 %v2651, %v2634
      %v3315 = vpack.c.b16 %v2652, %v2635
      %v3316 = vpack.c.b16 %v2653, %v2636
      %v3317 = vpack.c.b16 %v2654, %v2637
      %v3318 = vpack.c.b16 %v2655, %v2638
      %v3319 = vpack.c.b16 %v2656, %v2639
      %v3320 = vpack.c.b16 %v2657, %v2640
      %v3321 = vpack.c.b16 %v2658, %v2641
      %v3322 = vpack.c.b16 %v2659, %v2642
      %v3323 = vpack.c.b16 %v2677, %v2660
      %v3324 = vpack.c.b16 %v2678, %v2661
      %v3325 = vpack.c.b16 %v2679, %v2662
      %v3326 = vpack.c.b16 %v2680, %v2663
      %v3327 = vpack.c.b16 %v2681, %v2664
      %v3328 = vpack.c.b16 %v2682, %v2665
      %v3329 = vpack.c.b16 %v2683, %v2666
      %v3330 = vpack.c.b16 %v2684, %v2667
      %v3331 = vpack.c.b16 %v2685, %v2668
      %v3332 = vpack.c.b16 %v2686, %v2669
      %v3333 = vpack.c.b16 %v2687, %v2670
      %v3334 = vpack.c.b16 %v2688, %v2671
      %v3335 = vpack.c.b16 %v2689, %v2672
      %v3336 = vpack.c.b16 %v2690, %v2673
      %v3337 = vpack.c.b16 %v2691, %v2674
      %v3338 = vpack.c.b16 %v2692, %v2675
      %v3339 = vpack.c.b16 %v2693, %v2676
      %v3340 = vpack.c.b16 %v2711, %v2694
      %v3341 = vpack.c.b16 %v2712, %v2695
      %v3342 = vpack.c.b16 %v2713, %v2696
      %v3343 = vpack.c.b16 %v2714, %v2697
      %v3344 = vpack.c.b16 %v2715, %v2698
      %v3345 = vpack.c.b16 %v2716, %v2699
      %v3346 = vpack.c.b16 %v2717, %v2700
      %v3347 = vpack.c.b16 %v2718, %v2701
      %v3348 = vpack.c.b16 %v2719, %v2702
      %v3349 = vpack.c.b16 %v2720, %v2703
      %v3350 = vpack.c.b16 %v2721, %v2704
      %v3351 = vpack.c.b16 %v2722, %v2705
      %v3352 = vpack.c.b16 %v2723, %v2706
      %v3353 = vpack.c.b16 %v2724, %v2707
      %v3354 = vpack.c.b16 %v2725, %v2708
      %v3355 = vpack.c.b16 %v2726, %v2709
      %v3356 = vpack.c.b16 %v2727, %v2710
      %v3357 = vpack.c.b16 %v2745, %v2728
      %v3358 = vpack.c.b16 %v2746, %v2729
      %v3359 = vpack.c.b16 %v2747, %v2730
      %v3360 = vpack.c.b16 %v2748, %v2731
      %v3361 = vpack.c.b16 %v2749, %v2732
      %v3362 = vpack.c.b16 %v2750, %v2733
      %v3363 = vpack.c.b16 %v2751, %v2734
      %v3364 = vpack.c.b16 %v2752, %v2735
      %v3365 = vpack.c.b16 %v2753, %v2736
      %v3366 = vpack.c.b16 %v2754, %v2737
      %v3367 = vpack.c.b16 %v2755, %v2738
      %v3368 = vpack.c.b16 %v2756, %v2739
      %v3369 = vpack.c.b16 %v2757, %v2740
      %v3370 = vpack.c.b16 %v2758, %v2741
      %v3371 = vpack.c.b16 %v2759, %v2742
      %v3372 = vpack.c.b16 %v2760, %v2743
      %v3373 = vpack.c.b16 %v2761, %v2744
      %v3374 = vpack.c.b16 %v2779, %v2762
      %v3375 = vpack.c.b16 %v2780, %v2763
      %v3376 = vpack.c.b16 %v2781, %v2764
      %v3377 = vpack.c.b16 %v2782, %v2765
      %v3378 = vpack.c.b16 %v2783, %v2766
      %v3379 = vpack.c.b16 %v2784, %v2767
      %v3380 = vpack.c.b16 %v2785, %v2768
      %v3381 = vpack.c.b16 %v2786, %v2769
      %v3382 = vpack.c.b16 %v2787, %v2770
      %v3383 = vpack.c.b16 %v2788, %v2771
      %v3384 = vpack.c.b16 %v2789, %v2772
      %v3385 = vpack.c.b16 %v2790, %v2773
      %v3386 = vpack.c.b16 %v2791, %v2774
      %v3387 = vpack.c.b16 %v2792, %v2775
      %v3388 = vpack.c.b16 %v2793, %v2776
      %v3389 = vpack.c.b16 %v2794, %v2777
      %v3390 = vpack.c.b16 %v2795, %v2778
      %v3391 = vpack.c.b16 %v2813, %v2796
      %v3392 = vpack.c.b16 %v2814, %v2797
      %v3393 = vpack.c.b16 %v2815, %v2798
      %v3394 = vpack.c.b16 %v2816, %v2799
      %v3395 = vpack.c.b16 %v2817, %v2800
      %v3396 = vpack.c.b16 %v2818, %v2801
      %v3397 = vpack.c.b16 %v2819, %v2802
      %v3398 = vpack.c.b16 %v2820, %v2803
      %v3399 = vpack.c.b16 %v2821, %v2804
      %v3400 = vpack.c.b16 %v2822, %v2805
      %v3401 = vpack.c.b16 %v2823, %v2806
      %v3402 = vpack.c.b16 %v2824, %v2807
      %v3403 = vpack.c.b16 %v2825, %v2808
      %v3404 = vpack.c.b16 %v2826, %v2809
      %v3405 = vpack.c.b16 %v2827, %v2810
      %v3406 = vpack.c.b16 %v2828, %v2811
      %v3407 = vpack.c.b16 %v2829, %v2812
      %v3408 = vpack.c.b16 %v2847, %v2830
      %v3409 = vpack.c.b16 %v2848, %v2831
      %v3410 = vpack.c.b16 %v2849, %v2832
      %v3411 = vpack.c.b16 %v2850, %v2833
      %v3412 = vpack.c.b16 %v2851, %v2834
      %v3413 = vpack.c.b16 %v2852, %v2835
      %v3414 = vpack.c.b16 %v2853, %v2836
      %v3415 = vpack.c.b16 %v2854, %v2837
      %v3416 = vpack.c.b16 %v2855, %v2838
      %v3417 = vpack.c.b16 %v2856, %v2839
      %v3418 = vpack.c.b16 %v2857, %v2840
      %v3419 = vpack.c.b16 %v2858, %v2841
      %v3420 = vpack.c.b16 %v2859, %v2842
      %v3421 = vpack.c.b16 %v2860, %v2843
      %v3422 = vpack.c.b16 %v2861, %v2844
      %v3423 = vpack.c.b16 %v2862, %v2845
      %v3424 = vpack.c.b16 %v2863, %v2846
      %v3425 = vpack.c.b16 %v2881, %v2864
      %v3426 = vpack.c.b16 %v2882, %v2865
      %v3427 = vpack.c.b16 %v2883, %v2866
      %v3428 = vpack.c.b16 %v2884, %v2867
      %v3429 = vpack.c.b16 %v2885, %v2868
      %v3430 = vpack.c.b16 %v2886, %v2869
      %v3431 = vpack.c.b16 %v2887, %v2870
      %v3432 = vpack.c.b16 %v2888, %v2871
      %v3433 = vpack.c.b16 %v2889, %v2872
      %v3434 = vpack.c.b16 %v2890, %v2873
      %v3435 = vpack.c.b16 %v2891, %v2874
      %v3436 = vpack.c.b16 %v2892, %v2875
      %v3437 = vpack.c.b16 %v2893, %v2876
      %v3438 = vpack.c.b16 %v2894, %v2877
      %v3439 = vpack.c.b16 %v2895, %v2878
      %v3440 = vpack.c.b16 %v2896, %v2879
      %v3441 = vpack.c.b16 %v2897, %v2880
      %3986 = vmatpush.bf16.msra.mxu0 %v3017
      %3987 = vmatpush.bf16.msra.mxu0 %v3000
      %3988 = vmatpush.bf16.msra.mxu0 %v2983
      %3989 = vmatpush.bf16.msra.mxu0 %v2966
      %3990 = vmatpush.bf16.msra.mxu0 %v2949
      %3991 = vmatpush.bf16.msra.mxu0 %v2932
      %3992 = vmatpush.bf16.msra.mxu0 %v2915
      %3993 = vmatpush.bf16.msra.mxu0 %v2898
      %3994 = vmatmul.bf16.gmra.mxu0 %v654
      %v3995 = vpop.f32.mrf.mxu0
      %v3996 = vadd.f32 0.0, %v3995
      %v3997 = vpop.f32.mrf.mxu0
      %3998 = vdwg.mxu0
      %3999 = vmatpush.bf16.msra.mxu0 %v3153
      %4000 = vmatpush.bf16.msra.mxu0 %v3136
      %4001 = vmatpush.bf16.msra.mxu0 %v3119
      %4002 = vmatpush.bf16.msra.mxu0 %v3102
      %4003 = vmatpush.bf16.msra.mxu0 %v3085
      %4004 = vmatpush.bf16.msra.mxu0 %v3068
      %4005 = vmatpush.bf16.msra.mxu0 %v3051
      %4006 = vmatpush.bf16.msra.mxu0 %v3034
      %4007 = vmatmul.bf16.gmra.mxu0 %v655
      %v4008 = vpop.f32.mrf.mxu0
      %v4009 = vadd.f32 %v3996, %v4008
      %v4010 = vpop.f32.mrf.mxu0
      %4011 = vdwg.mxu0
      %4012 = vmatpush.bf16.msra.mxu0 %v3289
      %4013 = vmatpush.bf16.msra.mxu0 %v3272
      %4014 = vmatpush.bf16.msra.mxu0 %v3255
      %4015 = vmatpush.bf16.msra.mxu0 %v3238
      %4016 = vmatpush.bf16.msra.mxu0 %v3221
      %4017 = vmatpush.bf16.msra.mxu0 %v3204
      %4018 = vmatpush.bf16.msra.mxu0 %v3187
      %4019 = vmatpush.bf16.msra.mxu0 %v3170
      %4020 = vmatmul.bf16.gmra.mxu0 %v656
      %v4021 = vpop.f32.mrf.mxu0
      %v4022 = vadd.f32 %v4009, %v4021
      %v4023 = vpop.f32.mrf.mxu0
      %4024 = vdwg.mxu0
      %4025 = vmatpush.bf16.msra.mxu0 %v3425
      %4026 = vmatpush.bf16.msra.mxu0 %v3408
      %4027 = vmatpush.bf16.msra.mxu0 %v3391
      %4028 = vmatpush.bf16.msra.mxu0 %v3374
      %4029 = vmatpush.bf16.msra.mxu0 %v3357
      %4030 = vmatpush.bf16.msra.mxu0 %v3340
      %4031 = vmatpush.bf16.msra.mxu0 %v3323
      %4032 = vmatpush.bf16.msra.mxu0 %v3306
      %4033 = vmatmul.bf16.gmra.mxu0 %v657
      %v4034 = vpop.f32.mrf.mxu0
      %v4035 = vadd.f32 %v4022, %v4034
      %v4036 = vpop.f32.mrf.mxu0
      %4037 = vdwg.mxu0
      %4038 = vmatpush.bf16.msra.mxu0 %v3018
      %4039 = vmatpush.bf16.msra.mxu0 %v3001
      %4040 = vmatpush.bf16.msra.mxu0 %v2984
      %4041 = vmatpush.bf16.msra.mxu0 %v2967
      %4042 = vmatpush.bf16.msra.mxu0 %v2950
      %4043 = vmatpush.bf16.msra.mxu0 %v2933
      %4044 = vmatpush.bf16.msra.mxu0 %v2916
      %4045 = vmatpush.bf16.msra.mxu0 %v2899
      %4046 = vmatmul.bf16.gmra.mxu0 %v654
      %v4047 = vpop.f32.mrf.mxu0
      %v4048 = vadd.f32 0.0, %v4047
      %v4049 = vpop.f32.mrf.mxu0
      %4050 = vdwg.mxu0
      %4051 = vmatpush.bf16.msra.mxu0 %v3154
      %4052 = vmatpush.bf16.msra.mxu0 %v3137
      %4053 = vmatpush.bf16.msra.mxu0 %v3120
      %4054 = vmatpush.bf16.msra.mxu0 %v3103
      %4055 = vmatpush.bf16.msra.mxu0 %v3086
      %4056 = vmatpush.bf16.msra.mxu0 %v3069
      %4057 = vmatpush.bf16.msra.mxu0 %v3052
      %4058 = vmatpush.bf16.msra.mxu0 %v3035
      %4059 = vmatmul.bf16.gmra.mxu0 %v655
      %v4060 = vpop.f32.mrf.mxu0
      %v4061 = vadd.f32 %v4048, %v4060
      %v4062 = vpop.f32.mrf.mxu0
      %4063 = vdwg.mxu0
      %4064 = vmatpush.bf16.msra.mxu0 %v3290
      %4065 = vmatpush.bf16.msra.mxu0 %v3273
      %4066 = vmatpush.bf16.msra.mxu0 %v3256
      %4067 = vmatpush.bf16.msra.mxu0 %v3239
      %4068 = vmatpush.bf16.msra.mxu0 %v3222
      %4069 = vmatpush.bf16.msra.mxu0 %v3205
      %4070 = vmatpush.bf16.msra.mxu0 %v3188
      %4071 = vmatpush.bf16.msra.mxu0 %v3171
      %4072 = vmatmul.bf16.gmra.mxu0 %v656
      %v4073 = vpop.f32.mrf.mxu0
      %v4074 = vadd.f32 %v4061, %v4073
      %v4075 = vpop.f32.mrf.mxu0
      %4076 = vdwg.mxu0
      %4077 = vmatpush.bf16.msra.mxu0 %v3426
      %4078 = vmatpush.bf16.msra.mxu0 %v3409
      %4079 = vmatpush.bf16.msra.mxu0 %v3392
      %4080 = vmatpush.bf16.msra.mxu0 %v3375
      %4081 = vmatpush.bf16.msra.mxu0 %v3358
      %4082 = vmatpush.bf16.msra.mxu0 %v3341
      %4083 = vmatpush.bf16.msra.mxu0 %v3324
      %4084 = vmatpush.bf16.msra.mxu0 %v3307
      %4085 = vmatmul.bf16.gmra.mxu0 %v657
      %v4086 = vpop.f32.mrf.mxu0
      %v4087 = vadd.f32 %v4074, %v4086
      %v4088 = vpop.f32.mrf.mxu0
      %4089 = vdwg.mxu0
      %4090 = vmatpush.bf16.msra.mxu0 %v3019
      %4091 = vmatpush.bf16.msra.mxu0 %v3002
      %4092 = vmatpush.bf16.msra.mxu0 %v2985
      %4093 = vmatpush.bf16.msra.mxu0 %v2968
      %4094 = vmatpush.bf16.msra.mxu0 %v2951
      %4095 = vmatpush.bf16.msra.mxu0 %v2934
      %4096 = vmatpush.bf16.msra.mxu0 %v2917
      %4097 = vmatpush.bf16.msra.mxu0 %v2900
      %4098 = vmatmul.bf16.gmra.mxu0 %v654
      %v4099 = vpop.f32.mrf.mxu0
      %v4100 = vadd.f32 0.0, %v4099
      %v4101 = vpop.f32.mrf.mxu0
      %4102 = vdwg.mxu0
      %4103 = vmatpush.bf16.msra.mxu0 %v3155
      %4104 = vmatpush.bf16.msra.mxu0 %v3138
      %4105 = vmatpush.bf16.msra.mxu0 %v3121
      %4106 = vmatpush.bf16.msra.mxu0 %v3104
      %4107 = vmatpush.bf16.msra.mxu0 %v3087
      %4108 = vmatpush.bf16.msra.mxu0 %v3070
      %4109 = vmatpush.bf16.msra.mxu0 %v3053
      %4110 = vmatpush.bf16.msra.mxu0 %v3036
      %4111 = vmatmul.bf16.gmra.mxu0 %v655
      %v4112 = vpop.f32.mrf.mxu0
      %v4113 = vadd.f32 %v4100, %v4112
      %v4114 = vpop.f32.mrf.mxu0
      %4115 = vdwg.mxu0
      %4116 = vmatpush.bf16.msra.mxu0 %v3291
      %4117 = vmatpush.bf16.msra.mxu0 %v3274
      %4118 = vmatpush.bf16.msra.mxu0 %v3257
      %4119 = vmatpush.bf16.msra.mxu0 %v3240
      %4120 = vmatpush.bf16.msra.mxu0 %v3223
      %4121 = vmatpush.bf16.msra.mxu0 %v3206
      %4122 = vmatpush.bf16.msra.mxu0 %v3189
      %4123 = vmatpush.bf16.msra.mxu0 %v3172
      %4124 = vmatmul.bf16.gmra.mxu0 %v656
      %v4125 = vpop.f32.mrf.mxu0
      %v4126 = vadd.f32 %v4113, %v4125
      %v4127 = vpop.f32.mrf.mxu0
      %4128 = vdwg.mxu0
      %4129 = vmatpush.bf16.msra.mxu0 %v3427
      %4130 = vmatpush.bf16.msra.mxu0 %v3410
      %4131 = vmatpush.bf16.msra.mxu0 %v3393
      %4132 = vmatpush.bf16.msra.mxu0 %v3376
      %4133 = vmatpush.bf16.msra.mxu0 %v3359
      %4134 = vmatpush.bf16.msra.mxu0 %v3342
      %4135 = vmatpush.bf16.msra.mxu0 %v3325
      %4136 = vmatpush.bf16.msra.mxu0 %v3308
      %4137 = vmatmul.bf16.gmra.mxu0 %v657
      %v4138 = vpop.f32.mrf.mxu0
      %v4139 = vadd.f32 %v4126, %v4138
      %v4140 = vpop.f32.mrf.mxu0
      %4141 = vdwg.mxu0
      %4142 = vmatpush.bf16.msra.mxu0 %v3020
      %4143 = vmatpush.bf16.msra.mxu0 %v3003
      %4144 = vmatpush.bf16.msra.mxu0 %v2986
      %4145 = vmatpush.bf16.msra.mxu0 %v2969
      %4146 = vmatpush.bf16.msra.mxu0 %v2952
      %4147 = vmatpush.bf16.msra.mxu0 %v2935
      %4148 = vmatpush.bf16.msra.mxu0 %v2918
      %4149 = vmatpush.bf16.msra.mxu0 %v2901
      %4150 = vmatmul.bf16.gmra.mxu0 %v654
      %v4151 = vpop.f32.mrf.mxu0
      %v4152 = vadd.f32 0.0, %v4151
      %v4153 = vpop.f32.mrf.mxu0
      %4154 = vdwg.mxu0
      %4155 = vmatpush.bf16.msra.mxu0 %v3156
      %4156 = vmatpush.bf16.msra.mxu0 %v3139
      %4157 = vmatpush.bf16.msra.mxu0 %v3122
      %4158 = vmatpush.bf16.msra.mxu0 %v3105
      %4159 = vmatpush.bf16.msra.mxu0 %v3088
      %4160 = vmatpush.bf16.msra.mxu0 %v3071
      %4161 = vmatpush.bf16.msra.mxu0 %v3054
      %4162 = vmatpush.bf16.msra.mxu0 %v3037
      %4163 = vmatmul.bf16.gmra.mxu0 %v655
      %v4164 = vpop.f32.mrf.mxu0
      %v4165 = vadd.f32 %v4152, %v4164
      %v4166 = vpop.f32.mrf.mxu0
      %4167 = vdwg.mxu0
      %4168 = vmatpush.bf16.msra.mxu0 %v3292
      %4169 = vmatpush.bf16.msra.mxu0 %v3275
      %4170 = vmatpush.bf16.msra.mxu0 %v3258
      %4171 = vmatpush.bf16.msra.mxu0 %v3241
      %4172 = vmatpush.bf16.msra.mxu0 %v3224
      %4173 = vmatpush.bf16.msra.mxu0 %v3207
      %4174 = vmatpush.bf16.msra.mxu0 %v3190
      %4175 = vmatpush.bf16.msra.mxu0 %v3173
      %4176 = vmatmul.bf16.gmra.mxu0 %v656
      %v4177 = vpop.f32.mrf.mxu0
      %v4178 = vadd.f32 %v4165, %v4177
      %v4179 = vpop.f32.mrf.mxu0
      %4180 = vdwg.mxu0
      %4181 = vmatpush.bf16.msra.mxu0 %v3428
      %4182 = vmatpush.bf16.msra.mxu0 %v3411
      %4183 = vmatpush.bf16.msra.mxu0 %v3394
      %4184 = vmatpush.bf16.msra.mxu0 %v3377
      %4185 = vmatpush.bf16.msra.mxu0 %v3360
      %4186 = vmatpush.bf16.msra.mxu0 %v3343
      %4187 = vmatpush.bf16.msra.mxu0 %v3326
      %4188 = vmatpush.bf16.msra.mxu0 %v3309
      %4189 = vmatmul.bf16.gmra.mxu0 %v657
      %v4190 = vpop.f32.mrf.mxu0
      %v4191 = vadd.f32 %v4178, %v4190
      %v4192 = vpop.f32.mrf.mxu0
      %4193 = vdwg.mxu0
      %4194 = vmatpush.bf16.msra.mxu0 %v3021
      %4195 = vmatpush.bf16.msra.mxu0 %v3004
      %4196 = vmatpush.bf16.msra.mxu0 %v2987
      %4197 = vmatpush.bf16.msra.mxu0 %v2970
      %4198 = vmatpush.bf16.msra.mxu0 %v2953
      %4199 = vmatpush.bf16.msra.mxu0 %v2936
      %4200 = vmatpush.bf16.msra.mxu0 %v2919
      %4201 = vmatpush.bf16.msra.mxu0 %v2902
      %4202 = vmatmul.bf16.gmra.mxu0 %v654
      %v4203 = vpop.f32.mrf.mxu0
      %v4204 = vadd.f32 0.0, %v4203
      %v4205 = vpop.f32.mrf.mxu0
      %4206 = vdwg.mxu0
      %4207 = vmatpush.bf16.msra.mxu0 %v3157
      %4208 = vmatpush.bf16.msra.mxu0 %v3140
      %4209 = vmatpush.bf16.msra.mxu0 %v3123
      %4210 = vmatpush.bf16.msra.mxu0 %v3106
      %4211 = vmatpush.bf16.msra.mxu0 %v3089
      %4212 = vmatpush.bf16.msra.mxu0 %v3072
      %4213 = vmatpush.bf16.msra.mxu0 %v3055
      %4214 = vmatpush.bf16.msra.mxu0 %v3038
      %4215 = vmatmul.bf16.gmra.mxu0 %v655
      %v4216 = vpop.f32.mrf.mxu0
      %v4217 = vadd.f32 %v4204, %v4216
      %v4218 = vpop.f32.mrf.mxu0
      %4219 = vdwg.mxu0
      %4220 = vmatpush.bf16.msra.mxu0 %v3293
      %4221 = vmatpush.bf16.msra.mxu0 %v3276
      %4222 = vmatpush.bf16.msra.mxu0 %v3259
      %4223 = vmatpush.bf16.msra.mxu0 %v3242
      %4224 = vmatpush.bf16.msra.mxu0 %v3225
      %4225 = vmatpush.bf16.msra.mxu0 %v3208
      %4226 = vmatpush.bf16.msra.mxu0 %v3191
      %4227 = vmatpush.bf16.msra.mxu0 %v3174
      %4228 = vmatmul.bf16.gmra.mxu0 %v656
      %v4229 = vpop.f32.mrf.mxu0
      %v4230 = vadd.f32 %v4217, %v4229
      %v4231 = vpop.f32.mrf.mxu0
      %4232 = vdwg.mxu0
      %4233 = vmatpush.bf16.msra.mxu0 %v3429
      %4234 = vmatpush.bf16.msra.mxu0 %v3412
      %4235 = vmatpush.bf16.msra.mxu0 %v3395
      %4236 = vmatpush.bf16.msra.mxu0 %v3378
      %4237 = vmatpush.bf16.msra.mxu0 %v3361
      %4238 = vmatpush.bf16.msra.mxu0 %v3344
      %4239 = vmatpush.bf16.msra.mxu0 %v3327
      %4240 = vmatpush.bf16.msra.mxu0 %v3310
      %4241 = vmatmul.bf16.gmra.mxu0 %v657
      %v4242 = vpop.f32.mrf.mxu0
      %v4243 = vadd.f32 %v4230, %v4242
      %v4244 = vpop.f32.mrf.mxu0
      %4245 = vdwg.mxu0
      %4246 = vmatpush.bf16.msra.mxu0 %v3022
      %4247 = vmatpush.bf16.msra.mxu0 %v3005
      %4248 = vmatpush.bf16.msra.mxu0 %v2988
      %4249 = vmatpush.bf16.msra.mxu0 %v2971
      %4250 = vmatpush.bf16.msra.mxu0 %v2954
      %4251 = vmatpush.bf16.msra.mxu0 %v2937
      %4252 = vmatpush.bf16.msra.mxu0 %v2920
      %4253 = vmatpush.bf16.msra.mxu0 %v2903
      %4254 = vmatmul.bf16.gmra.mxu0 %v654
      %v4255 = vpop.f32.mrf.mxu0
      %v4256 = vadd.f32 0.0, %v4255
      %v4257 = vpop.f32.mrf.mxu0
      %4258 = vdwg.mxu0
      %4259 = vmatpush.bf16.msra.mxu0 %v3158
      %4260 = vmatpush.bf16.msra.mxu0 %v3141
      %4261 = vmatpush.bf16.msra.mxu0 %v3124
      %4262 = vmatpush.bf16.msra.mxu0 %v3107
      %4263 = vmatpush.bf16.msra.mxu0 %v3090
      %4264 = vmatpush.bf16.msra.mxu0 %v3073
      %4265 = vmatpush.bf16.msra.mxu0 %v3056
      %4266 = vmatpush.bf16.msra.mxu0 %v3039
      %4267 = vmatmul.bf16.gmra.mxu0 %v655
      %v4268 = vpop.f32.mrf.mxu0
      %v4269 = vadd.f32 %v4256, %v4268
      %v4270 = vpop.f32.mrf.mxu0
      %4271 = vdwg.mxu0
      %4272 = vmatpush.bf16.msra.mxu0 %v3294
      %4273 = vmatpush.bf16.msra.mxu0 %v3277
      %4274 = vmatpush.bf16.msra.mxu0 %v3260
      %4275 = vmatpush.bf16.msra.mxu0 %v3243
      %4276 = vmatpush.bf16.msra.mxu0 %v3226
      %4277 = vmatpush.bf16.msra.mxu0 %v3209
      %4278 = vmatpush.bf16.msra.mxu0 %v3192
      %4279 = vmatpush.bf16.msra.mxu0 %v3175
      %4280 = vmatmul.bf16.gmra.mxu0 %v656
      %v4281 = vpop.f32.mrf.mxu0
      %v4282 = vadd.f32 %v4269, %v4281
      %v4283 = vpop.f32.mrf.mxu0
      %4284 = vdwg.mxu0
      %4285 = vmatpush.bf16.msra.mxu0 %v3430
      %4286 = vmatpush.bf16.msra.mxu0 %v3413
      %4287 = vmatpush.bf16.msra.mxu0 %v3396
      %4288 = vmatpush.bf16.msra.mxu0 %v3379
      %4289 = vmatpush.bf16.msra.mxu0 %v3362
      %4290 = vmatpush.bf16.msra.mxu0 %v3345
      %4291 = vmatpush.bf16.msra.mxu0 %v3328
      %4292 = vmatpush.bf16.msra.mxu0 %v3311
      %4293 = vmatmul.bf16.gmra.mxu0 %v657
      %v4294 = vpop.f32.mrf.mxu0
      %v4295 = vadd.f32 %v4282, %v4294
      %v4296 = vpop.f32.mrf.mxu0
      %4297 = vdwg.mxu0
      %4298 = vmatpush.bf16.msra.mxu0 %v3023
      %4299 = vmatpush.bf16.msra.mxu0 %v3006
      %4300 = vmatpush.bf16.msra.mxu0 %v2989
      %4301 = vmatpush.bf16.msra.mxu0 %v2972
      %4302 = vmatpush.bf16.msra.mxu0 %v2955
      %4303 = vmatpush.bf16.msra.mxu0 %v2938
      %4304 = vmatpush.bf16.msra.mxu0 %v2921
      %4305 = vmatpush.bf16.msra.mxu0 %v2904
      %4306 = vmatmul.bf16.gmra.mxu0 %v654
      %v4307 = vpop.f32.mrf.mxu0
      %v4308 = vadd.f32 0.0, %v4307
      %v4309 = vpop.f32.mrf.mxu0
      %4310 = vdwg.mxu0
      %4311 = vmatpush.bf16.msra.mxu0 %v3159
      %4312 = vmatpush.bf16.msra.mxu0 %v3142
      %4313 = vmatpush.bf16.msra.mxu0 %v3125
      %4314 = vmatpush.bf16.msra.mxu0 %v3108
      %4315 = vmatpush.bf16.msra.mxu0 %v3091
      %4316 = vmatpush.bf16.msra.mxu0 %v3074
      %4317 = vmatpush.bf16.msra.mxu0 %v3057
      %4318 = vmatpush.bf16.msra.mxu0 %v3040
      %4319 = vmatmul.bf16.gmra.mxu0 %v655
      %v4320 = vpop.f32.mrf.mxu0
      %v4321 = vadd.f32 %v4308, %v4320
      %v4322 = vpop.f32.mrf.mxu0
      %4323 = vdwg.mxu0
      %4324 = vmatpush.bf16.msra.mxu0 %v3295
      %4325 = vmatpush.bf16.msra.mxu0 %v3278
      %4326 = vmatpush.bf16.msra.mxu0 %v3261
      %4327 = vmatpush.bf16.msra.mxu0 %v3244
      %4328 = vmatpush.bf16.msra.mxu0 %v3227
      %4329 = vmatpush.bf16.msra.mxu0 %v3210
      %4330 = vmatpush.bf16.msra.mxu0 %v3193
      %4331 = vmatpush.bf16.msra.mxu0 %v3176
      %4332 = vmatmul.bf16.gmra.mxu0 %v656
      %v4333 = vpop.f32.mrf.mxu0
      %v4334 = vadd.f32 %v4321, %v4333
      %v4335 = vpop.f32.mrf.mxu0
      %4336 = vdwg.mxu0
      %4337 = vmatpush.bf16.msra.mxu0 %v3431
      %4338 = vmatpush.bf16.msra.mxu0 %v3414
      %4339 = vmatpush.bf16.msra.mxu0 %v3397
      %4340 = vmatpush.bf16.msra.mxu0 %v3380
      %4341 = vmatpush.bf16.msra.mxu0 %v3363
      %4342 = vmatpush.bf16.msra.mxu0 %v3346
      %4343 = vmatpush.bf16.msra.mxu0 %v3329
      %4344 = vmatpush.bf16.msra.mxu0 %v3312
      %4345 = vmatmul.bf16.gmra.mxu0 %v657
      %v4346 = vpop.f32.mrf.mxu0
      %v4347 = vadd.f32 %v4334, %v4346
      %v4348 = vpop.f32.mrf.mxu0
      %4349 = vdwg.mxu0
      %4350 = vmatpush.bf16.msra.mxu0 %v3024
      %4351 = vmatpush.bf16.msra.mxu0 %v3007
      %4352 = vmatpush.bf16.msra.mxu0 %v2990
      %4353 = vmatpush.bf16.msra.mxu0 %v2973
      %4354 = vmatpush.bf16.msra.mxu0 %v2956
      %4355 = vmatpush.bf16.msra.mxu0 %v2939
      %4356 = vmatpush.bf16.msra.mxu0 %v2922
      %4357 = vmatpush.bf16.msra.mxu0 %v2905
      %4358 = vmatmul.bf16.gmra.mxu0 %v654
      %v4359 = vpop.f32.mrf.mxu0
      %v4360 = vadd.f32 0.0, %v4359
      %v4361 = vpop.f32.mrf.mxu0
      %4362 = vdwg.mxu0
      %4363 = vmatpush.bf16.msra.mxu0 %v3160
      %4364 = vmatpush.bf16.msra.mxu0 %v3143
      %4365 = vmatpush.bf16.msra.mxu0 %v3126
      %4366 = vmatpush.bf16.msra.mxu0 %v3109
      %4367 = vmatpush.bf16.msra.mxu0 %v3092
      %4368 = vmatpush.bf16.msra.mxu0 %v3075
      %4369 = vmatpush.bf16.msra.mxu0 %v3058
      %4370 = vmatpush.bf16.msra.mxu0 %v3041
      %4371 = vmatmul.bf16.gmra.mxu0 %v655
      %v4372 = vpop.f32.mrf.mxu0
      %v4373 = vadd.f32 %v4360, %v4372
      %v4374 = vpop.f32.mrf.mxu0
      %4375 = vdwg.mxu0
      %4376 = vmatpush.bf16.msra.mxu0 %v3296
      %4377 = vmatpush.bf16.msra.mxu0 %v3279
      %4378 = vmatpush.bf16.msra.mxu0 %v3262
      %4379 = vmatpush.bf16.msra.mxu0 %v3245
      %4380 = vmatpush.bf16.msra.mxu0 %v3228
      %4381 = vmatpush.bf16.msra.mxu0 %v3211
      %4382 = vmatpush.bf16.msra.mxu0 %v3194
      %4383 = vmatpush.bf16.msra.mxu0 %v3177
      %4384 = vmatmul.bf16.gmra.mxu0 %v656
      %v4385 = vpop.f32.mrf.mxu0
      %v4386 = vadd.f32 %v4373, %v4385
      %v4387 = vpop.f32.mrf.mxu0
      %4388 = vdwg.mxu0
      %4389 = vmatpush.bf16.msra.mxu0 %v3432
      %4390 = vmatpush.bf16.msra.mxu0 %v3415
      %4391 = vmatpush.bf16.msra.mxu0 %v3398
      %4392 = vmatpush.bf16.msra.mxu0 %v3381
      %4393 = vmatpush.bf16.msra.mxu0 %v3364
      %4394 = vmatpush.bf16.msra.mxu0 %v3347
      %4395 = vmatpush.bf16.msra.mxu0 %v3330
      %4396 = vmatpush.bf16.msra.mxu0 %v3313
      %4397 = vmatmul.bf16.gmra.mxu0 %v657
      %v4398 = vpop.f32.mrf.mxu0
      %v4399 = vadd.f32 %v4386, %v4398
      %v4400 = vpop.f32.mrf.mxu0
      %4401 = vdwg.mxu0
      %4402 = vmatpush.bf16.msra.mxu0 %v3025
      %4403 = vmatpush.bf16.msra.mxu0 %v3008
      %4404 = vmatpush.bf16.msra.mxu0 %v2991
      %4405 = vmatpush.bf16.msra.mxu0 %v2974
      %4406 = vmatpush.bf16.msra.mxu0 %v2957
      %4407 = vmatpush.bf16.msra.mxu0 %v2940
      %4408 = vmatpush.bf16.msra.mxu0 %v2923
      %4409 = vmatpush.bf16.msra.mxu0 %v2906
      %4410 = vmatmul.bf16.gmra.mxu0 %v654
      %v4411 = vpop.f32.mrf.mxu0
      %v4412 = vadd.f32 0.0, %v4411
      %v4413 = vpop.f32.mrf.mxu0
      %4414 = vdwg.mxu0
      %4415 = vmatpush.bf16.msra.mxu0 %v3161
      %4416 = vmatpush.bf16.msra.mxu0 %v3144
      %4417 = vmatpush.bf16.msra.mxu0 %v3127
      %4418 = vmatpush.bf16.msra.mxu0 %v3110
      %4419 = vmatpush.bf16.msra.mxu0 %v3093
      %4420 = vmatpush.bf16.msra.mxu0 %v3076
      %4421 = vmatpush.bf16.msra.mxu0 %v3059
      %4422 = vmatpush.bf16.msra.mxu0 %v3042
      %4423 = vmatmul.bf16.gmra.mxu0 %v655
      %v4424 = vpop.f32.mrf.mxu0
      %v4425 = vadd.f32 %v4412, %v4424
      %v4426 = vpop.f32.mrf.mxu0
      %4427 = vdwg.mxu0
      %4428 = vmatpush.bf16.msra.mxu0 %v3297
      %4429 = vmatpush.bf16.msra.mxu0 %v3280
      %4430 = vmatpush.bf16.msra.mxu0 %v3263
      %4431 = vmatpush.bf16.msra.mxu0 %v3246
      %4432 = vmatpush.bf16.msra.mxu0 %v3229
      %4433 = vmatpush.bf16.msra.mxu0 %v3212
      %4434 = vmatpush.bf16.msra.mxu0 %v3195
      %4435 = vmatpush.bf16.msra.mxu0 %v3178
      %4436 = vmatmul.bf16.gmra.mxu0 %v656
      %v4437 = vpop.f32.mrf.mxu0
      %v4438 = vadd.f32 %v4425, %v4437
      %v4439 = vpop.f32.mrf.mxu0
      %4440 = vdwg.mxu0
      %4441 = vmatpush.bf16.msra.mxu0 %v3433
      %4442 = vmatpush.bf16.msra.mxu0 %v3416
      %4443 = vmatpush.bf16.msra.mxu0 %v3399
      %4444 = vmatpush.bf16.msra.mxu0 %v3382
      %4445 = vmatpush.bf16.msra.mxu0 %v3365
      %4446 = vmatpush.bf16.msra.mxu0 %v3348
      %4447 = vmatpush.bf16.msra.mxu0 %v3331
      %4448 = vmatpush.bf16.msra.mxu0 %v3314
      %4449 = vmatmul.bf16.gmra.mxu0 %v657
      %v4450 = vpop.f32.mrf.mxu0
      %v4451 = vadd.f32 %v4438, %v4450
      %v4452 = vpop.f32.mrf.mxu0
      %4453 = vdwg.mxu0
      %4454 = vmatpush.bf16.msra.mxu0 %v3026
      %4455 = vmatpush.bf16.msra.mxu0 %v3009
      %4456 = vmatpush.bf16.msra.mxu0 %v2992
      %4457 = vmatpush.bf16.msra.mxu0 %v2975
      %4458 = vmatpush.bf16.msra.mxu0 %v2958
      %4459 = vmatpush.bf16.msra.mxu0 %v2941
      %4460 = vmatpush.bf16.msra.mxu0 %v2924
      %4461 = vmatpush.bf16.msra.mxu0 %v2907
      %4462 = vmatmul.bf16.gmra.mxu0 %v654
      %v4463 = vpop.f32.mrf.mxu0
      %v4464 = vadd.f32 0.0, %v4463
      %v4465 = vpop.f32.mrf.mxu0
      %4466 = vdwg.mxu0
      %4467 = vmatpush.bf16.msra.mxu0 %v3162
      %4468 = vmatpush.bf16.msra.mxu0 %v3145
      %4469 = vmatpush.bf16.msra.mxu0 %v3128
      %4470 = vmatpush.bf16.msra.mxu0 %v3111
      %4471 = vmatpush.bf16.msra.mxu0 %v3094
      %4472 = vmatpush.bf16.msra.mxu0 %v3077
      %4473 = vmatpush.bf16.msra.mxu0 %v3060
      %4474 = vmatpush.bf16.msra.mxu0 %v3043
      %4475 = vmatmul.bf16.gmra.mxu0 %v655
      %v4476 = vpop.f32.mrf.mxu0
      %v4477 = vadd.f32 %v4464, %v4476
      %v4478 = vpop.f32.mrf.mxu0
      %4479 = vdwg.mxu0
      %4480 = vmatpush.bf16.msra.mxu0 %v3298
      %4481 = vmatpush.bf16.msra.mxu0 %v3281
      %4482 = vmatpush.bf16.msra.mxu0 %v3264
      %4483 = vmatpush.bf16.msra.mxu0 %v3247
      %4484 = vmatpush.bf16.msra.mxu0 %v3230
      %4485 = vmatpush.bf16.msra.mxu0 %v3213
      %4486 = vmatpush.bf16.msra.mxu0 %v3196
      %4487 = vmatpush.bf16.msra.mxu0 %v3179
      %4488 = vmatmul.bf16.gmra.mxu0 %v656
      %v4489 = vpop.f32.mrf.mxu0
      %v4490 = vadd.f32 %v4477, %v4489
      %v4491 = vpop.f32.mrf.mxu0
      %4492 = vdwg.mxu0
      %4493 = vmatpush.bf16.msra.mxu0 %v3434
      %4494 = vmatpush.bf16.msra.mxu0 %v3417
      %4495 = vmatpush.bf16.msra.mxu0 %v3400
      %4496 = vmatpush.bf16.msra.mxu0 %v3383
      %4497 = vmatpush.bf16.msra.mxu0 %v3366
      %4498 = vmatpush.bf16.msra.mxu0 %v3349
      %4499 = vmatpush.bf16.msra.mxu0 %v3332
      %4500 = vmatpush.bf16.msra.mxu0 %v3315
      %4501 = vmatmul.bf16.gmra.mxu0 %v657
      %v4502 = vpop.f32.mrf.mxu0
      %v4503 = vadd.f32 %v4490, %v4502
      %v4504 = vpop.f32.mrf.mxu0
      %4505 = vdwg.mxu0
      %4506 = vmatpush.bf16.msra.mxu0 %v3027
      %4507 = vmatpush.bf16.msra.mxu0 %v3010
      %4508 = vmatpush.bf16.msra.mxu0 %v2993
      %4509 = vmatpush.bf16.msra.mxu0 %v2976
      %4510 = vmatpush.bf16.msra.mxu0 %v2959
      %4511 = vmatpush.bf16.msra.mxu0 %v2942
      %4512 = vmatpush.bf16.msra.mxu0 %v2925
      %4513 = vmatpush.bf16.msra.mxu0 %v2908
      %4514 = vmatmul.bf16.gmra.mxu0 %v654
      %v4515 = vpop.f32.mrf.mxu0
      %v4516 = vadd.f32 0.0, %v4515
      %v4517 = vpop.f32.mrf.mxu0
      %4518 = vdwg.mxu0
      %4519 = vmatpush.bf16.msra.mxu0 %v3163
      %4520 = vmatpush.bf16.msra.mxu0 %v3146
      %4521 = vmatpush.bf16.msra.mxu0 %v3129
      %4522 = vmatpush.bf16.msra.mxu0 %v3112
      %4523 = vmatpush.bf16.msra.mxu0 %v3095
      %4524 = vmatpush.bf16.msra.mxu0 %v3078
      %4525 = vmatpush.bf16.msra.mxu0 %v3061
      %4526 = vmatpush.bf16.msra.mxu0 %v3044
      %4527 = vmatmul.bf16.gmra.mxu0 %v655
      %v4528 = vpop.f32.mrf.mxu0
      %v4529 = vadd.f32 %v4516, %v4528
      %v4530 = vpop.f32.mrf.mxu0
      %4531 = vdwg.mxu0
      %4532 = vmatpush.bf16.msra.mxu0 %v3299
      %4533 = vmatpush.bf16.msra.mxu0 %v3282
      %4534 = vmatpush.bf16.msra.mxu0 %v3265
      %4535 = vmatpush.bf16.msra.mxu0 %v3248
      %4536 = vmatpush.bf16.msra.mxu0 %v3231
      %4537 = vmatpush.bf16.msra.mxu0 %v3214
      %4538 = vmatpush.bf16.msra.mxu0 %v3197
      %4539 = vmatpush.bf16.msra.mxu0 %v3180
      %4540 = vmatmul.bf16.gmra.mxu0 %v656
      %v4541 = vpop.f32.mrf.mxu0
      %v4542 = vadd.f32 %v4529, %v4541
      %v4543 = vpop.f32.mrf.mxu0
      %4544 = vdwg.mxu0
      %4545 = vmatpush.bf16.msra.mxu0 %v3435
      %4546 = vmatpush.bf16.msra.mxu0 %v3418
      %4547 = vmatpush.bf16.msra.mxu0 %v3401
      %4548 = vmatpush.bf16.msra.mxu0 %v3384
      %4549 = vmatpush.bf16.msra.mxu0 %v3367
      %4550 = vmatpush.bf16.msra.mxu0 %v3350
      %4551 = vmatpush.bf16.msra.mxu0 %v3333
      %4552 = vmatpush.bf16.msra.mxu0 %v3316
      %4553 = vmatmul.bf16.gmra.mxu0 %v657
      %v4554 = vpop.f32.mrf.mxu0
      %v4555 = vadd.f32 %v4542, %v4554
      %v4556 = vpop.f32.mrf.mxu0
      %4557 = vdwg.mxu0
      %4558 = vmatpush.bf16.msra.mxu0 %v3028
      %4559 = vmatpush.bf16.msra.mxu0 %v3011
      %4560 = vmatpush.bf16.msra.mxu0 %v2994
      %4561 = vmatpush.bf16.msra.mxu0 %v2977
      %4562 = vmatpush.bf16.msra.mxu0 %v2960
      %4563 = vmatpush.bf16.msra.mxu0 %v2943
      %4564 = vmatpush.bf16.msra.mxu0 %v2926
      %4565 = vmatpush.bf16.msra.mxu0 %v2909
      %4566 = vmatmul.bf16.gmra.mxu0 %v654
      %v4567 = vpop.f32.mrf.mxu0
      %v4568 = vadd.f32 0.0, %v4567
      %v4569 = vpop.f32.mrf.mxu0
      %4570 = vdwg.mxu0
      %4571 = vmatpush.bf16.msra.mxu0 %v3164
      %4572 = vmatpush.bf16.msra.mxu0 %v3147
      %4573 = vmatpush.bf16.msra.mxu0 %v3130
      %4574 = vmatpush.bf16.msra.mxu0 %v3113
      %4575 = vmatpush.bf16.msra.mxu0 %v3096
      %4576 = vmatpush.bf16.msra.mxu0 %v3079
      %4577 = vmatpush.bf16.msra.mxu0 %v3062
      %4578 = vmatpush.bf16.msra.mxu0 %v3045
      %4579 = vmatmul.bf16.gmra.mxu0 %v655
      %v4580 = vpop.f32.mrf.mxu0
      %v4581 = vadd.f32 %v4568, %v4580
      %v4582 = vpop.f32.mrf.mxu0
      %4583 = vdwg.mxu0
      %4584 = vmatpush.bf16.msra.mxu0 %v3300
      %4585 = vmatpush.bf16.msra.mxu0 %v3283
      %4586 = vmatpush.bf16.msra.mxu0 %v3266
      %4587 = vmatpush.bf16.msra.mxu0 %v3249
      %4588 = vmatpush.bf16.msra.mxu0 %v3232
      %4589 = vmatpush.bf16.msra.mxu0 %v3215
      %4590 = vmatpush.bf16.msra.mxu0 %v3198
      %4591 = vmatpush.bf16.msra.mxu0 %v3181
      %4592 = vmatmul.bf16.gmra.mxu0 %v656
      %v4593 = vpop.f32.mrf.mxu0
      %v4594 = vadd.f32 %v4581, %v4593
      %v4595 = vpop.f32.mrf.mxu0
      %4596 = vdwg.mxu0
      %4597 = vmatpush.bf16.msra.mxu0 %v3436
      %4598 = vmatpush.bf16.msra.mxu0 %v3419
      %4599 = vmatpush.bf16.msra.mxu0 %v3402
      %4600 = vmatpush.bf16.msra.mxu0 %v3385
      %4601 = vmatpush.bf16.msra.mxu0 %v3368
      %4602 = vmatpush.bf16.msra.mxu0 %v3351
      %4603 = vmatpush.bf16.msra.mxu0 %v3334
      %4604 = vmatpush.bf16.msra.mxu0 %v3317
      %4605 = vmatmul.bf16.gmra.mxu0 %v657
      %v4606 = vpop.f32.mrf.mxu0
      %v4607 = vadd.f32 %v4594, %v4606
      %v4608 = vpop.f32.mrf.mxu0
      %4609 = vdwg.mxu0
      %4610 = vmatpush.bf16.msra.mxu0 %v3029
      %4611 = vmatpush.bf16.msra.mxu0 %v3012
      %4612 = vmatpush.bf16.msra.mxu0 %v2995
      %4613 = vmatpush.bf16.msra.mxu0 %v2978
      %4614 = vmatpush.bf16.msra.mxu0 %v2961
      %4615 = vmatpush.bf16.msra.mxu0 %v2944
      %4616 = vmatpush.bf16.msra.mxu0 %v2927
      %4617 = vmatpush.bf16.msra.mxu0 %v2910
      %4618 = vmatmul.bf16.gmra.mxu0 %v654
      %v4619 = vpop.f32.mrf.mxu0
      %v4620 = vadd.f32 0.0, %v4619
      %v4621 = vpop.f32.mrf.mxu0
      %4622 = vdwg.mxu0
      %4623 = vmatpush.bf16.msra.mxu0 %v3165
      %4624 = vmatpush.bf16.msra.mxu0 %v3148
      %4625 = vmatpush.bf16.msra.mxu0 %v3131
      %4626 = vmatpush.bf16.msra.mxu0 %v3114
      %4627 = vmatpush.bf16.msra.mxu0 %v3097
      %4628 = vmatpush.bf16.msra.mxu0 %v3080
      %4629 = vmatpush.bf16.msra.mxu0 %v3063
      %4630 = vmatpush.bf16.msra.mxu0 %v3046
      %4631 = vmatmul.bf16.gmra.mxu0 %v655
      %v4632 = vpop.f32.mrf.mxu0
      %v4633 = vadd.f32 %v4620, %v4632
      %v4634 = vpop.f32.mrf.mxu0
      %4635 = vdwg.mxu0
      %4636 = vmatpush.bf16.msra.mxu0 %v3301
      %4637 = vmatpush.bf16.msra.mxu0 %v3284
      %4638 = vmatpush.bf16.msra.mxu0 %v3267
      %4639 = vmatpush.bf16.msra.mxu0 %v3250
      %4640 = vmatpush.bf16.msra.mxu0 %v3233
      %4641 = vmatpush.bf16.msra.mxu0 %v3216
      %4642 = vmatpush.bf16.msra.mxu0 %v3199
      %4643 = vmatpush.bf16.msra.mxu0 %v3182
      %4644 = vmatmul.bf16.gmra.mxu0 %v656
      %v4645 = vpop.f32.mrf.mxu0
      %v4646 = vadd.f32 %v4633, %v4645
      %v4647 = vpop.f32.mrf.mxu0
      %4648 = vdwg.mxu0
      %4649 = vmatpush.bf16.msra.mxu0 %v3437
      %4650 = vmatpush.bf16.msra.mxu0 %v3420
      %4651 = vmatpush.bf16.msra.mxu0 %v3403
      %4652 = vmatpush.bf16.msra.mxu0 %v3386
      %4653 = vmatpush.bf16.msra.mxu0 %v3369
      %4654 = vmatpush.bf16.msra.mxu0 %v3352
      %4655 = vmatpush.bf16.msra.mxu0 %v3335
      %4656 = vmatpush.bf16.msra.mxu0 %v3318
      %4657 = vmatmul.bf16.gmra.mxu0 %v657
      %v4658 = vpop.f32.mrf.mxu0
      %v4659 = vadd.f32 %v4646, %v4658
      %v4660 = vpop.f32.mrf.mxu0
      %4661 = vdwg.mxu0
      %4662 = vmatpush.bf16.msra.mxu0 %v3030
      %4663 = vmatpush.bf16.msra.mxu0 %v3013
      %4664 = vmatpush.bf16.msra.mxu0 %v2996
      %4665 = vmatpush.bf16.msra.mxu0 %v2979
      %4666 = vmatpush.bf16.msra.mxu0 %v2962
      %4667 = vmatpush.bf16.msra.mxu0 %v2945
      %4668 = vmatpush.bf16.msra.mxu0 %v2928
      %4669 = vmatpush.bf16.msra.mxu0 %v2911
      %4670 = vmatmul.bf16.gmra.mxu0 %v654
      %v4671 = vpop.f32.mrf.mxu0
      %v4672 = vadd.f32 0.0, %v4671
      %v4673 = vpop.f32.mrf.mxu0
      %4674 = vdwg.mxu0
      %4675 = vmatpush.bf16.msra.mxu0 %v3166
      %4676 = vmatpush.bf16.msra.mxu0 %v3149
      %4677 = vmatpush.bf16.msra.mxu0 %v3132
      %4678 = vmatpush.bf16.msra.mxu0 %v3115
      %4679 = vmatpush.bf16.msra.mxu0 %v3098
      %4680 = vmatpush.bf16.msra.mxu0 %v3081
      %4681 = vmatpush.bf16.msra.mxu0 %v3064
      %4682 = vmatpush.bf16.msra.mxu0 %v3047
      %4683 = vmatmul.bf16.gmra.mxu0 %v655
      %v4684 = vpop.f32.mrf.mxu0
      %v4685 = vadd.f32 %v4672, %v4684
      %v4686 = vpop.f32.mrf.mxu0
      %4687 = vdwg.mxu0
      %4688 = vmatpush.bf16.msra.mxu0 %v3302
      %4689 = vmatpush.bf16.msra.mxu0 %v3285
      %4690 = vmatpush.bf16.msra.mxu0 %v3268
      %4691 = vmatpush.bf16.msra.mxu0 %v3251
      %4692 = vmatpush.bf16.msra.mxu0 %v3234
      %4693 = vmatpush.bf16.msra.mxu0 %v3217
      %4694 = vmatpush.bf16.msra.mxu0 %v3200
      %4695 = vmatpush.bf16.msra.mxu0 %v3183
      %4696 = vmatmul.bf16.gmra.mxu0 %v656
      %v4697 = vpop.f32.mrf.mxu0
      %v4698 = vadd.f32 %v4685, %v4697
      %v4699 = vpop.f32.mrf.mxu0
      %4700 = vdwg.mxu0
      %4701 = vmatpush.bf16.msra.mxu0 %v3438
      %4702 = vmatpush.bf16.msra.mxu0 %v3421
      %4703 = vmatpush.bf16.msra.mxu0 %v3404
      %4704 = vmatpush.bf16.msra.mxu0 %v3387
      %4705 = vmatpush.bf16.msra.mxu0 %v3370
      %4706 = vmatpush.bf16.msra.mxu0 %v3353
      %4707 = vmatpush.bf16.msra.mxu0 %v3336
      %4708 = vmatpush.bf16.msra.mxu0 %v3319
      %4709 = vmatmul.bf16.gmra.mxu0 %v657
      %v4710 = vpop.f32.mrf.mxu0
      %v4711 = vadd.f32 %v4698, %v4710
      %v4712 = vpop.f32.mrf.mxu0
      %4713 = vdwg.mxu0
      %4714 = vmatpush.bf16.msra.mxu0 %v3031
      %4715 = vmatpush.bf16.msra.mxu0 %v3014
      %4716 = vmatpush.bf16.msra.mxu0 %v2997
      %4717 = vmatpush.bf16.msra.mxu0 %v2980
      %4718 = vmatpush.bf16.msra.mxu0 %v2963
      %4719 = vmatpush.bf16.msra.mxu0 %v2946
      %4720 = vmatpush.bf16.msra.mxu0 %v2929
      %4721 = vmatpush.bf16.msra.mxu0 %v2912
      %4722 = vmatmul.bf16.gmra.mxu0 %v654
      %v4723 = vpop.f32.mrf.mxu0
      %v4724 = vadd.f32 0.0, %v4723
      %v4725 = vpop.f32.mrf.mxu0
      %4726 = vdwg.mxu0
      %4727 = vmatpush.bf16.msra.mxu0 %v3167
      %4728 = vmatpush.bf16.msra.mxu0 %v3150
      %4729 = vmatpush.bf16.msra.mxu0 %v3133
      %4730 = vmatpush.bf16.msra.mxu0 %v3116
      %4731 = vmatpush.bf16.msra.mxu0 %v3099
      %4732 = vmatpush.bf16.msra.mxu0 %v3082
      %4733 = vmatpush.bf16.msra.mxu0 %v3065
      %4734 = vmatpush.bf16.msra.mxu0 %v3048
      %4735 = vmatmul.bf16.gmra.mxu0 %v655
      %v4736 = vpop.f32.mrf.mxu0
      %v4737 = vadd.f32 %v4724, %v4736
      %v4738 = vpop.f32.mrf.mxu0
      %4739 = vdwg.mxu0
      %4740 = vmatpush.bf16.msra.mxu0 %v3303
      %4741 = vmatpush.bf16.msra.mxu0 %v3286
      %4742 = vmatpush.bf16.msra.mxu0 %v3269
      %4743 = vmatpush.bf16.msra.mxu0 %v3252
      %4744 = vmatpush.bf16.msra.mxu0 %v3235
      %4745 = vmatpush.bf16.msra.mxu0 %v3218
      %4746 = vmatpush.bf16.msra.mxu0 %v3201
      %4747 = vmatpush.bf16.msra.mxu0 %v3184
      %4748 = vmatmul.bf16.gmra.mxu0 %v656
      %v4749 = vpop.f32.mrf.mxu0
      %v4750 = vadd.f32 %v4737, %v4749
      %v4751 = vpop.f32.mrf.mxu0
      %4752 = vdwg.mxu0
      %4753 = vmatpush.bf16.msra.mxu0 %v3439
      %4754 = vmatpush.bf16.msra.mxu0 %v3422
      %4755 = vmatpush.bf16.msra.mxu0 %v3405
      %4756 = vmatpush.bf16.msra.mxu0 %v3388
      %4757 = vmatpush.bf16.msra.mxu0 %v3371
      %4758 = vmatpush.bf16.msra.mxu0 %v3354
      %4759 = vmatpush.bf16.msra.mxu0 %v3337
      %4760 = vmatpush.bf16.msra.mxu0 %v3320
      %4761 = vmatmul.bf16.gmra.mxu0 %v657
      %v4762 = vpop.f32.mrf.mxu0
      %v4763 = vadd.f32 %v4750, %v4762
      %v4764 = vpop.f32.mrf.mxu0
      %4765 = vdwg.mxu0
      %4766 = vmatpush.bf16.msra.mxu0 %v3032
      %4767 = vmatpush.bf16.msra.mxu0 %v3015
      %4768 = vmatpush.bf16.msra.mxu0 %v2998
      %4769 = vmatpush.bf16.msra.mxu0 %v2981
      %4770 = vmatpush.bf16.msra.mxu0 %v2964
      %4771 = vmatpush.bf16.msra.mxu0 %v2947
      %4772 = vmatpush.bf16.msra.mxu0 %v2930
      %4773 = vmatpush.bf16.msra.mxu0 %v2913
      %4774 = vmatmul.bf16.gmra.mxu0 %v654
      %v4775 = vpop.f32.mrf.mxu0
      %v4776 = vadd.f32 0.0, %v4775
      %v4777 = vpop.f32.mrf.mxu0
      %4778 = vdwg.mxu0
      %4779 = vmatpush.bf16.msra.mxu0 %v3168
      %4780 = vmatpush.bf16.msra.mxu0 %v3151
      %4781 = vmatpush.bf16.msra.mxu0 %v3134
      %4782 = vmatpush.bf16.msra.mxu0 %v3117
      %4783 = vmatpush.bf16.msra.mxu0 %v3100
      %4784 = vmatpush.bf16.msra.mxu0 %v3083
      %4785 = vmatpush.bf16.msra.mxu0 %v3066
      %4786 = vmatpush.bf16.msra.mxu0 %v3049
      %4787 = vmatmul.bf16.gmra.mxu0 %v655
      %v4788 = vpop.f32.mrf.mxu0
      %v4789 = vadd.f32 %v4776, %v4788
      %v4790 = vpop.f32.mrf.mxu0
      %4791 = vdwg.mxu0
      %4792 = vmatpush.bf16.msra.mxu0 %v3304
      %4793 = vmatpush.bf16.msra.mxu0 %v3287
      %4794 = vmatpush.bf16.msra.mxu0 %v3270
      %4795 = vmatpush.bf16.msra.mxu0 %v3253
      %4796 = vmatpush.bf16.msra.mxu0 %v3236
      %4797 = vmatpush.bf16.msra.mxu0 %v3219
      %4798 = vmatpush.bf16.msra.mxu0 %v3202
      %4799 = vmatpush.bf16.msra.mxu0 %v3185
      %4800 = vmatmul.bf16.gmra.mxu0 %v656
      %v4801 = vpop.f32.mrf.mxu0
      %v4802 = vadd.f32 %v4789, %v4801
      %v4803 = vpop.f32.mrf.mxu0
      %4804 = vdwg.mxu0
      %4805 = vmatpush.bf16.msra.mxu0 %v3440
      %4806 = vmatpush.bf16.msra.mxu0 %v3423
      %4807 = vmatpush.bf16.msra.mxu0 %v3406
      %4808 = vmatpush.bf16.msra.mxu0 %v3389
      %4809 = vmatpush.bf16.msra.mxu0 %v3372
      %4810 = vmatpush.bf16.msra.mxu0 %v3355
      %4811 = vmatpush.bf16.msra.mxu0 %v3338
      %4812 = vmatpush.bf16.msra.mxu0 %v3321
      %4813 = vmatmul.bf16.gmra.mxu0 %v657
      %v4814 = vpop.f32.mrf.mxu0
      %v4815 = vadd.f32 %v4802, %v4814
      %v4816 = vpop.f32.mrf.mxu0
      %4817 = vdwg.mxu0
      %4818 = vmatpush.bf16.msra.mxu0 %v3033
      %4819 = vmatpush.bf16.msra.mxu0 %v3016
      %4820 = vmatpush.bf16.msra.mxu0 %v2999
      %4821 = vmatpush.bf16.msra.mxu0 %v2982
      %4822 = vmatpush.bf16.msra.mxu0 %v2965
      %4823 = vmatpush.bf16.msra.mxu0 %v2948
      %4824 = vmatpush.bf16.msra.mxu0 %v2931
      %4825 = vmatpush.bf16.msra.mxu0 %v2914
      %4826 = vmatmul.bf16.gmra.mxu0 %v654
      %v4827 = vpop.f32.mrf.mxu0
      %v4828 = vadd.f32 0.0, %v4827
      %v4829 = vpop.f32.mrf.mxu0
      %4830 = vdwg.mxu0
      %4831 = vmatpush.bf16.msra.mxu0 %v3169
      %4832 = vmatpush.bf16.msra.mxu0 %v3152
      %4833 = vmatpush.bf16.msra.mxu0 %v3135
      %4834 = vmatpush.bf16.msra.mxu0 %v3118
      %4835 = vmatpush.bf16.msra.mxu0 %v3101
      %4836 = vmatpush.bf16.msra.mxu0 %v3084
      %4837 = vmatpush.bf16.msra.mxu0 %v3067
      %4838 = vmatpush.bf16.msra.mxu0 %v3050
      %4839 = vmatmul.bf16.gmra.mxu0 %v655
      %v4840 = vpop.f32.mrf.mxu0
      %v4841 = vadd.f32 %v4828, %v4840
      %v4842 = vpop.f32.mrf.mxu0
      %4843 = vdwg.mxu0
      %4844 = vmatpush.bf16.msra.mxu0 %v3305
      %4845 = vmatpush.bf16.msra.mxu0 %v3288
      %4846 = vmatpush.bf16.msra.mxu0 %v3271
      %4847 = vmatpush.bf16.msra.mxu0 %v3254
      %4848 = vmatpush.bf16.msra.mxu0 %v3237
      %4849 = vmatpush.bf16.msra.mxu0 %v3220
      %4850 = vmatpush.bf16.msra.mxu0 %v3203
      %4851 = vmatpush.bf16.msra.mxu0 %v3186
      %4852 = vmatmul.bf16.gmra.mxu0 %v656
      %v4853 = vpop.f32.mrf.mxu0
      %v4854 = vadd.f32 %v4841, %v4853
      %v4855 = vpop.f32.mrf.mxu0
      %4856 = vdwg.mxu0
      %4857 = vmatpush.bf16.msra.mxu0 %v3441
      %4858 = vmatpush.bf16.msra.mxu0 %v3424
      %4859 = vmatpush.bf16.msra.mxu0 %v3407
      %4860 = vmatpush.bf16.msra.mxu0 %v3390
      %4861 = vmatpush.bf16.msra.mxu0 %v3373
      %4862 = vmatpush.bf16.msra.mxu0 %v3356
      %4863 = vmatpush.bf16.msra.mxu0 %v3339
      %4864 = vmatpush.bf16.msra.mxu0 %v3322
      %4865 = vmatmul.bf16.gmra.mxu0 %v657
      %v4866 = vpop.f32.mrf.mxu0
      %v4867 = vadd.f32 %v4854, %v4866
      %v4868 = vpop.f32.mrf.mxu0
      %4869 = vdwg.mxu0
      %v4870 = vld [vmem:[#allocation9] sm:$0x1]
      %v4872 = vperm.slane %v4870, 0
      %v4874 = vadd.f32 %v4867, %v4872
      %s4875 = scalar_lea.vmem [#allocation2], %s170
      %vm4876 = vcmask 253952
      %4877 = vst.msk [vmem:[%s4875] sm:$0x1] %vm4876, %v4874
      %s4878 = sadd.s32 %s170, 8
      %s4879 = scalar_lea.vmem [#allocation2], %s4878
      %vm4880 = vcmask 254977
      %4881 = vst.msk [vmem:[%s4879 - $0x1] sm:$0x2] %vm4880, %v4874
    $region90: #{pointer_network_forward.1} parent=1 // loop_footer
      %s174 = sadd.s32 1, %s170
    $region91: #{pointer_network_forward.1} parent=1 // loop_footer_branch
      %169 = sbr.rel target = $region87
    $region92: #{pointer_network_forward.1} parent=1 // loop_exit
      _
    %v4882 = vld [vmem:[#allocation2] sm:$0xff]
    %v4883 = vld [vmem:[#allocation2 + $0x8] sm:$0xff]
    %v4884 = vld [vmem:[%s1] sm:$0xff]
    %v4885 = vld [vmem:[%s1 + $0x8] sm:$0xff]
    %v4886 = vld [vmem:[#allocation17] sm:$0x1]
    %v4887 = vld [vmem:[#allocation3] sm:$0x1]
    %s4888 = vtos %v4887
    %v4889 = vpack.c.bf16 %v195, %v195
    %v4890 = vpack.c.bf16 %v196, %v196
    %v4891 = vpack.c.bf16 %v197, %v197
    %v4892 = vpack.c.bf16 %v198, %v198
    %v4893 = vld [vmem:[#allocation12] sm:$0xff]
    %v4894 = vld [vmem:[#allocation12 + $0x8] sm:$0xff]
    %v4895 = vld [vmem:[#allocation12 + $0x10] sm:$0xff]
    %v4896 = vld [vmem:[#allocation12 + $0x18] sm:$0xff]
    %v4897 = vld [vmem:[#allocation12 + $0x20] sm:$0xff]
    %v4898 = vld [vmem:[#allocation12 + $0x28] sm:$0xff]
    %v4899 = vld [vmem:[#allocation12 + $0x30] sm:$0xff]
    %v4900 = vld [vmem:[#allocation12 + $0x38] sm:$0xff]
    %v4901 = vld [vmem:[#allocation12 + $0x44] sm:$0xff]
    %v4902 = vld [vmem:[#allocation12 + $0x4c] sm:$0xff]
    %v4903 = vld [vmem:[#allocation12 + $0x54] sm:$0xff]
    %v4904 = vld [vmem:[#allocation12 + $0x5c] sm:$0xff]
    %v4905 = vld [vmem:[#allocation12 + $0x64] sm:$0xff]
    %v4906 = vld [vmem:[#allocation12 + $0x6c] sm:$0xff]
    %v4907 = vld [vmem:[#allocation12 + $0x74] sm:$0xff]
    %v4908 = vld [vmem:[#allocation12 + $0x7c] sm:$0xff]
    %v4909 = vld [vmem:[#allocation12 + $0x88] sm:$0xff]
    %v4910 = vld [vmem:[#allocation12 + $0x90] sm:$0xff]
    %v4911 = vld [vmem:[#allocation12 + $0x98] sm:$0xff]
    %v4912 = vld [vmem:[#allocation12 + $0xa0] sm:$0xff]
    %v4913 = vld [vmem:[#allocation12 + $0xa8] sm:$0xff]
    %v4914 = vld [vmem:[#allocation12 + $0xb0] sm:$0xff]
    %v4915 = vld [vmem:[#allocation12 + $0xb8] sm:$0xff]
    %v4916 = vld [vmem:[#allocation12 + $0xc0] sm:$0xff]
    %v4917 = vld [vmem:[#allocation12 + $0xcc] sm:$0xff]
    %v4918 = vld [vmem:[#allocation12 + $0xd4] sm:$0xff]
    %v4919 = vld [vmem:[#allocation12 + $0xdc] sm:$0xff]
    %v4920 = vld [vmem:[#allocation12 + $0xe4] sm:$0xff]
    %v4921 = vld [vmem:[#allocation12 + $0xec] sm:$0xff]
    %v4922 = vld [vmem:[#allocation12 + $0xf4] sm:$0xff]
    %v4923 = vld [vmem:[#allocation12 + $0xfc] sm:$0xff]
    %v4924 = vld [vmem:[#allocation12 + $0x104] sm:$0xff]
    %v4925 = vld [vmem:[#allocation12 + $0x110] sm:$0xff]
    %v4926 = vld [vmem:[#allocation12 + $0x118] sm:$0xff]
    %v4927 = vld [vmem:[#allocation12 + $0x120] sm:$0xff]
    %v4928 = vld [vmem:[#allocation12 + $0x128] sm:$0xff]
    %v4929 = vld [vmem:[#allocation12 + $0x130] sm:$0xff]
    %v4930 = vld [vmem:[#allocation12 + $0x138] sm:$0xff]
    %v4931 = vld [vmem:[#allocation12 + $0x140] sm:$0xff]
    %v4932 = vld [vmem:[#allocation12 + $0x148] sm:$0xff]
    %v4933 = vld [vmem:[#allocation12 + $0x154] sm:$0xff]
    %v4934 = vld [vmem:[#allocation12 + $0x15c] sm:$0xff]
    %v4935 = vld [vmem:[#allocation12 + $0x164] sm:$0xff]
    %v4936 = vld [vmem:[#allocation12 + $0x16c] sm:$0xff]
    %v4937 = vld [vmem:[#allocation12 + $0x174] sm:$0xff]
    %v4938 = vld [vmem:[#allocation12 + $0x17c] sm:$0xff]
    %v4939 = vld [vmem:[#allocation12 + $0x184] sm:$0xff]
    %v4940 = vld [vmem:[#allocation12 + $0x18c] sm:$0xff]
    %v4941 = vld [vmem:[#allocation12 + $0x198] sm:$0xff]
    %v4942 = vld [vmem:[#allocation12 + $0x1a0] sm:$0xff]
    %v4943 = vld [vmem:[#allocation12 + $0x1a8] sm:$0xff]
    %v4944 = vld [vmem:[#allocation12 + $0x1b0] sm:$0xff]
    %v4945 = vld [vmem:[#allocation12 + $0x1b8] sm:$0xff]
    %v4946 = vld [vmem:[#allocation12 + $0x1c0] sm:$0xff]
    %v4947 = vld [vmem:[#allocation12 + $0x1c8] sm:$0xff]
    %v4948 = vld [vmem:[#allocation12 + $0x1d0] sm:$0xff]
    %v4949 = vld [vmem:[#allocation12 + $0x1dc] sm:$0xff]
    %v4950 = vld [vmem:[#allocation12 + $0x1e4] sm:$0xff]
    %v4951 = vld [vmem:[#allocation12 + $0x1ec] sm:$0xff]
    %v4952 = vld [vmem:[#allocation12 + $0x1f4] sm:$0xff]
    %v4953 = vld [vmem:[#allocation12 + $0x1fc] sm:$0xff]
    %v4954 = vld [vmem:[#allocation12 + $0x204] sm:$0xff]
    %v4955 = vld [vmem:[#allocation12 + $0x20c] sm:$0xff]
    %v4956 = vld [vmem:[#allocation12 + $0x214] sm:$0xff]
    %v4957 = vld [vmem:[#allocation12 + $0x220] sm:$0xff]
    %v4958 = vld [vmem:[#allocation12 + $0x228] sm:$0xff]
    %v4959 = vld [vmem:[#allocation12 + $0x230] sm:$0xff]
    %v4960 = vld [vmem:[#allocation12 + $0x238] sm:$0xff]
    %v4961 = vld [vmem:[#allocation12 + $0x240] sm:$0xff]
    %v4962 = vld [vmem:[#allocation12 + $0x248] sm:$0xff]
    %v4963 = vld [vmem:[#allocation12 + $0x250] sm:$0xff]
    %v4964 = vld [vmem:[#allocation12 + $0x258] sm:$0xff]
    %v4965 = vld [vmem:[#allocation12 + $0x264] sm:$0xff]
    %v4966 = vld [vmem:[#allocation12 + $0x26c] sm:$0xff]
    %v4967 = vld [vmem:[#allocation12 + $0x274] sm:$0xff]
    %v4968 = vld [vmem:[#allocation12 + $0x27c] sm:$0xff]
    %v4969 = vld [vmem:[#allocation12 + $0x284] sm:$0xff]
    %v4970 = vld [vmem:[#allocation12 + $0x28c] sm:$0xff]
    %v4971 = vld [vmem:[#allocation12 + $0x294] sm:$0xff]
    %v4972 = vld [vmem:[#allocation12 + $0x29c] sm:$0xff]
    %v4973 = vld [vmem:[#allocation12 + $0x2a8] sm:$0xff]
    %v4974 = vld [vmem:[#allocation12 + $0x2b0] sm:$0xff]
    %v4975 = vld [vmem:[#allocation12 + $0x2b8] sm:$0xff]
    %v4976 = vld [vmem:[#allocation12 + $0x2c0] sm:$0xff]
    %v4977 = vld [vmem:[#allocation12 + $0x2c8] sm:$0xff]
    %v4978 = vld [vmem:[#allocation12 + $0x2d0] sm:$0xff]
    %v4979 = vld [vmem:[#allocation12 + $0x2d8] sm:$0xff]
    %v4980 = vld [vmem:[#allocation12 + $0x2e0] sm:$0xff]
    %v4981 = vld [vmem:[#allocation12 + $0x2ec] sm:$0xff]
    %v4982 = vld [vmem:[#allocation12 + $0x2f4] sm:$0xff]
    %v4983 = vld [vmem:[#allocation12 + $0x2fc] sm:$0xff]
    %v4984 = vld [vmem:[#allocation12 + $0x304] sm:$0xff]
    %v4985 = vld [vmem:[#allocation12 + $0x30c] sm:$0xff]
    %v4986 = vld [vmem:[#allocation12 + $0x314] sm:$0xff]
    %v4987 = vld [vmem:[#allocation12 + $0x31c] sm:$0xff]
    %v4988 = vld [vmem:[#allocation12 + $0x324] sm:$0xff]
    %v4989 = vld [vmem:[#allocation12 + $0x330] sm:$0xff]
    %v4990 = vld [vmem:[#allocation12 + $0x338] sm:$0xff]
    %v4991 = vld [vmem:[#allocation12 + $0x340] sm:$0xff]
    %v4992 = vld [vmem:[#allocation12 + $0x348] sm:$0xff]
    %v4993 = vld [vmem:[#allocation12 + $0x350] sm:$0xff]
    %v4994 = vld [vmem:[#allocation12 + $0x358] sm:$0xff]
    %v4995 = vld [vmem:[#allocation12 + $0x360] sm:$0xff]
    %v4996 = vld [vmem:[#allocation12 + $0x368] sm:$0xff]
    %v4997 = vld [vmem:[#allocation12 + $0x374] sm:$0xff]
    %v4998 = vld [vmem:[#allocation12 + $0x37c] sm:$0xff]
    %v4999 = vld [vmem:[#allocation12 + $0x384] sm:$0xff]
    %v5000 = vld [vmem:[#allocation12 + $0x38c] sm:$0xff]
    %v5001 = vld [vmem:[#allocation12 + $0x394] sm:$0xff]
    %v5002 = vld [vmem:[#allocation12 + $0x39c] sm:$0xff]
    %v5003 = vld [vmem:[#allocation12 + $0x3a4] sm:$0xff]
    %v5004 = vld [vmem:[#allocation12 + $0x3ac] sm:$0xff]
    %v5005 = vld [vmem:[#allocation12 + $0x3b8] sm:$0xff]
    %v5006 = vld [vmem:[#allocation12 + $0x3c0] sm:$0xff]
    %v5007 = vld [vmem:[#allocation12 + $0x3c8] sm:$0xff]
    %v5008 = vld [vmem:[#allocation12 + $0x3d0] sm:$0xff]
    %v5009 = vld [vmem:[#allocation12 + $0x3d8] sm:$0xff]
    %v5010 = vld [vmem:[#allocation12 + $0x3e0] sm:$0xff]
    %v5011 = vld [vmem:[#allocation12 + $0x3e8] sm:$0xff]
    %v5012 = vld [vmem:[#allocation12 + $0x3f0] sm:$0xff]
    %v5013 = vld [vmem:[#allocation12 + $0x3fc] sm:$0xff]
    %v5014 = vld [vmem:[#allocation12 + $0x404] sm:$0xff]
    %v5015 = vld [vmem:[#allocation12 + $0x40c] sm:$0xff]
    %v5016 = vld [vmem:[#allocation12 + $0x414] sm:$0xff]
    %v5017 = vld [vmem:[#allocation12 + $0x41c] sm:$0xff]
    %v5018 = vld [vmem:[#allocation12 + $0x424] sm:$0xff]
    %v5019 = vld [vmem:[#allocation12 + $0x42c] sm:$0xff]
    %v5020 = vld [vmem:[#allocation12 + $0x434] sm:$0xff]
    %v5021 = vld [vmem:[#allocation12 + $0x440] sm:$0xff]
    %v5022 = vld [vmem:[#allocation12 + $0x448] sm:$0xff]
    %v5023 = vld [vmem:[#allocation12 + $0x450] sm:$0xff]
    %v5024 = vld [vmem:[#allocation12 + $0x458] sm:$0xff]
    %v5025 = vld [vmem:[#allocation12 + $0x460] sm:$0xff]
    %v5026 = vld [vmem:[#allocation12 + $0x468] sm:$0xff]
    %v5027 = vld [vmem:[#allocation12 + $0x470] sm:$0xff]
    %v5028 = vld [vmem:[#allocation12 + $0x478] sm:$0xff]
    %v5029 = vld [vmem:[#allocation12 + $0x484] sm:$0xff]
    %v5030 = vld [vmem:[#allocation12 + $0x48c] sm:$0xff]
    %v5031 = vld [vmem:[#allocation12 + $0x494] sm:$0xff]
    %v5032 = vld [vmem:[#allocation12 + $0x49c] sm:$0xff]
    %v5033 = vld [vmem:[#allocation12 + $0x4a4] sm:$0xff]
    %v5034 = vld [vmem:[#allocation12 + $0x4ac] sm:$0xff]
    %v5035 = vld [vmem:[#allocation12 + $0x4b4] sm:$0xff]
    %v5036 = vld [vmem:[#allocation12 + $0x4bc] sm:$0xff]
    %v5037 = vld [vmem:[#allocation12 + $0x4c8] sm:$0xff]
    %v5038 = vld [vmem:[#allocation12 + $0x4d0] sm:$0xff]
    %v5039 = vld [vmem:[#allocation12 + $0x4d8] sm:$0xff]
    %v5040 = vld [vmem:[#allocation12 + $0x4e0] sm:$0xff]
    %v5041 = vld [vmem:[#allocation12 + $0x4e8] sm:$0xff]
    %v5042 = vld [vmem:[#allocation12 + $0x4f0] sm:$0xff]
    %v5043 = vld [vmem:[#allocation12 + $0x4f8] sm:$0xff]
    %v5044 = vld [vmem:[#allocation12 + $0x500] sm:$0xff]
    %v5045 = vld [vmem:[#allocation12 + $0x50c] sm:$0xff]
    %v5046 = vld [vmem:[#allocation12 + $0x514] sm:$0xff]
    %v5047 = vld [vmem:[#allocation12 + $0x51c] sm:$0xff]
    %v5048 = vld [vmem:[#allocation12 + $0x524] sm:$0xff]
    %v5049 = vld [vmem:[#allocation12 + $0x52c] sm:$0xff]
    %v5050 = vld [vmem:[#allocation12 + $0x534] sm:$0xff]
    %v5051 = vld [vmem:[#allocation12 + $0x53c] sm:$0xff]
    %v5052 = vld [vmem:[#allocation12 + $0x544] sm:$0xff]
    %v5053 = vld [vmem:[#allocation12 + $0x550] sm:$0xff]
    %v5054 = vld [vmem:[#allocation12 + $0x558] sm:$0xff]
    %v5055 = vld [vmem:[#allocation12 + $0x560] sm:$0xff]
    %v5056 = vld [vmem:[#allocation12 + $0x568] sm:$0xff]
    %v5057 = vld [vmem:[#allocation12 + $0x570] sm:$0xff]
    %v5058 = vld [vmem:[#allocation12 + $0x578] sm:$0xff]
    %v5059 = vld [vmem:[#allocation12 + $0x580] sm:$0xff]
    %v5060 = vld [vmem:[#allocation12 + $0x588] sm:$0xff]
    %v5061 = vld [vmem:[#allocation12 + $0x594] sm:$0xff]
    %v5062 = vld [vmem:[#allocation12 + $0x59c] sm:$0xff]
    %v5063 = vld [vmem:[#allocation12 + $0x5a4] sm:$0xff]
    %v5064 = vld [vmem:[#allocation12 + $0x5ac] sm:$0xff]
    %v5065 = vld [vmem:[#allocation12 + $0x5b4] sm:$0xff]
    %v5066 = vld [vmem:[#allocation12 + $0x5bc] sm:$0xff]
    %v5067 = vld [vmem:[#allocation12 + $0x5c4] sm:$0xff]
    %v5068 = vld [vmem:[#allocation12 + $0x5cc] sm:$0xff]
    %v5069 = vld [vmem:[#allocation12 + $0x5d8] sm:$0xff]
    %v5070 = vld [vmem:[#allocation12 + $0x5e0] sm:$0xff]
    %v5071 = vld [vmem:[#allocation12 + $0x5e8] sm:$0xff]
    %v5072 = vld [vmem:[#allocation12 + $0x5f0] sm:$0xff]
    %v5073 = vld [vmem:[#allocation12 + $0x5f8] sm:$0xff]
    %v5074 = vld [vmem:[#allocation12 + $0x600] sm:$0xff]
    %v5075 = vld [vmem:[#allocation12 + $0x608] sm:$0xff]
    %v5076 = vld [vmem:[#allocation12 + $0x610] sm:$0xff]
    %v5077 = vld [vmem:[#allocation12 + $0x61c] sm:$0xff]
    %v5078 = vld [vmem:[#allocation12 + $0x624] sm:$0xff]
    %v5079 = vld [vmem:[#allocation12 + $0x62c] sm:$0xff]
    %v5080 = vld [vmem:[#allocation12 + $0x634] sm:$0xff]
    %v5081 = vld [vmem:[#allocation12 + $0x63c] sm:$0xff]
    %v5082 = vld [vmem:[#allocation12 + $0x644] sm:$0xff]
    %v5083 = vld [vmem:[#allocation12 + $0x64c] sm:$0xff]
    %v5084 = vld [vmem:[#allocation12 + $0x654] sm:$0xff]
    %v5085 = vld [vmem:[#allocation12 + $0x660] sm:$0xff]
    %v5086 = vld [vmem:[#allocation12 + $0x668] sm:$0xff]
    %v5087 = vld [vmem:[#allocation12 + $0x670] sm:$0xff]
    %v5088 = vld [vmem:[#allocation12 + $0x678] sm:$0xff]
    %v5089 = vld [vmem:[#allocation12 + $0x680] sm:$0xff]
    %v5090 = vld [vmem:[#allocation12 + $0x688] sm:$0xff]
    %v5091 = vld [vmem:[#allocation12 + $0x690] sm:$0xff]
    %v5092 = vld [vmem:[#allocation12 + $0x698] sm:$0xff]
    %v5093 = vld [vmem:[#allocation12 + $0x6a4] sm:$0xff]
    %v5094 = vld [vmem:[#allocation12 + $0x6ac] sm:$0xff]
    %v5095 = vld [vmem:[#allocation12 + $0x6b4] sm:$0xff]
    %v5096 = vld [vmem:[#allocation12 + $0x6bc] sm:$0xff]
    %v5097 = vld [vmem:[#allocation12 + $0x6c4] sm:$0xff]
    %v5098 = vld [vmem:[#allocation12 + $0x6cc] sm:$0xff]
    %v5099 = vld [vmem:[#allocation12 + $0x6d4] sm:$0xff]
    %v5100 = vld [vmem:[#allocation12 + $0x6dc] sm:$0xff]
    %v5101 = vld [vmem:[#allocation12 + $0x6e8] sm:$0xff]
    %v5102 = vld [vmem:[#allocation12 + $0x6f0] sm:$0xff]
    %v5103 = vld [vmem:[#allocation12 + $0x6f8] sm:$0xff]
    %v5104 = vld [vmem:[#allocation12 + $0x700] sm:$0xff]
    %v5105 = vld [vmem:[#allocation12 + $0x708] sm:$0xff]
    %v5106 = vld [vmem:[#allocation12 + $0x710] sm:$0xff]
    %v5107 = vld [vmem:[#allocation12 + $0x718] sm:$0xff]
    %v5108 = vld [vmem:[#allocation12 + $0x720] sm:$0xff]
    %v5109 = vld [vmem:[#allocation12 + $0x72c] sm:$0xff]
    %v5110 = vld [vmem:[#allocation12 + $0x734] sm:$0xff]
    %v5111 = vld [vmem:[#allocation12 + $0x73c] sm:$0xff]
    %v5112 = vld [vmem:[#allocation12 + $0x744] sm:$0xff]
    %v5113 = vld [vmem:[#allocation12 + $0x74c] sm:$0xff]
    %v5114 = vld [vmem:[#allocation12 + $0x754] sm:$0xff]
    %v5115 = vld [vmem:[#allocation12 + $0x75c] sm:$0xff]
    %v5116 = vld [vmem:[#allocation12 + $0x764] sm:$0xff]
    %v5117 = vld [vmem:[#allocation12 + $0x770] sm:$0xff]
    %v5118 = vld [vmem:[#allocation12 + $0x778] sm:$0xff]
    %v5119 = vld [vmem:[#allocation12 + $0x780] sm:$0xff]
    %v5120 = vld [vmem:[#allocation12 + $0x788] sm:$0xff]
    %v5121 = vld [vmem:[#allocation12 + $0x790] sm:$0xff]
    %v5122 = vld [vmem:[#allocation12 + $0x798] sm:$0xff]
    %v5123 = vld [vmem:[#allocation12 + $0x7a0] sm:$0xff]
    %v5124 = vld [vmem:[#allocation12 + $0x7a8] sm:$0xff]
    %v5125 = vld [vmem:[#allocation12 + $0x7b4] sm:$0xff]
    %v5126 = vld [vmem:[#allocation12 + $0x7bc] sm:$0xff]
    %v5127 = vld [vmem:[#allocation12 + $0x7c4] sm:$0xff]
    %v5128 = vld [vmem:[#allocation12 + $0x7cc] sm:$0xff]
    %v5129 = vld [vmem:[#allocation12 + $0x7d4] sm:$0xff]
    %v5130 = vld [vmem:[#allocation12 + $0x7dc] sm:$0xff]
    %v5131 = vld [vmem:[#allocation12 + $0x7e4] sm:$0xff]
    %v5132 = vld [vmem:[#allocation12 + $0x7ec] sm:$0xff]
    %v5133 = vld [vmem:[#allocation12 + $0x7f8] sm:$0xff]
    %v5134 = vld [vmem:[#allocation12 + $0x800] sm:$0xff]
    %v5135 = vld [vmem:[#allocation12 + $0x808] sm:$0xff]
    %v5136 = vld [vmem:[#allocation12 + $0x810] sm:$0xff]
    %v5137 = vld [vmem:[#allocation12 + $0x818] sm:$0xff]
    %v5138 = vld [vmem:[#allocation12 + $0x820] sm:$0xff]
    %v5139 = vld [vmem:[#allocation12 + $0x828] sm:$0xff]
    %v5140 = vld [vmem:[#allocation12 + $0x830] sm:$0xff]
    %v5141 = vld [vmem:[#allocation12 + $0x83c] sm:$0xff]
    %v5142 = vld [vmem:[#allocation12 + $0x844] sm:$0xff]
    %v5143 = vld [vmem:[#allocation12 + $0x84c] sm:$0xff]
    %v5144 = vld [vmem:[#allocation12 + $0x854] sm:$0xff]
    %v5145 = vld [vmem:[#allocation12 + $0x85c] sm:$0xff]
    %v5146 = vld [vmem:[#allocation12 + $0x864] sm:$0xff]
    %v5147 = vld [vmem:[#allocation12 + $0x86c] sm:$0xff]
    %v5148 = vld [vmem:[#allocation12 + $0x874] sm:$0xff]
    %v5149 = vld [vmem:[#allocation12 + $0x880] sm:$0xff]
    %v5150 = vld [vmem:[#allocation12 + $0x888] sm:$0xff]
    %v5151 = vld [vmem:[#allocation12 + $0x890] sm:$0xff]
    %v5152 = vld [vmem:[#allocation12 + $0x898] sm:$0xff]
    %v5153 = vld [vmem:[#allocation12 + $0x8a0] sm:$0xff]
    %v5154 = vld [vmem:[#allocation12 + $0x8a8] sm:$0xff]
    %v5155 = vld [vmem:[#allocation12 + $0x8b0] sm:$0xff]
    %v5156 = vld [vmem:[#allocation12 + $0x8b8] sm:$0xff]
    %v5157 = vld [vmem:[#allocation12 + $0x8c4] sm:$0xff]
    %v5158 = vld [vmem:[#allocation12 + $0x8cc] sm:$0xff]
    %v5159 = vld [vmem:[#allocation12 + $0x8d4] sm:$0xff]
    %v5160 = vld [vmem:[#allocation12 + $0x8dc] sm:$0xff]
    %v5161 = vld [vmem:[#allocation12 + $0x8e4] sm:$0xff]
    %v5162 = vld [vmem:[#allocation12 + $0x8ec] sm:$0xff]
    %v5163 = vld [vmem:[#allocation12 + $0x8f4] sm:$0xff]
    %v5164 = vld [vmem:[#allocation12 + $0x8fc] sm:$0xff]
    %v5165 = vld [vmem:[#allocation12 + $0x908] sm:$0xff]
    %v5166 = vld [vmem:[#allocation12 + $0x910] sm:$0xff]
    %v5167 = vld [vmem:[#allocation12 + $0x918] sm:$0xff]
    %v5168 = vld [vmem:[#allocation12 + $0x920] sm:$0xff]
    %v5169 = vld [vmem:[#allocation12 + $0x928] sm:$0xff]
    %v5170 = vld [vmem:[#allocation12 + $0x930] sm:$0xff]
    %v5171 = vld [vmem:[#allocation12 + $0x938] sm:$0xff]
    %v5172 = vld [vmem:[#allocation12 + $0x940] sm:$0xff]
    %v5173 = vld [vmem:[#allocation12 + $0x94c] sm:$0xff]
    %v5174 = vld [vmem:[#allocation12 + $0x954] sm:$0xff]
    %v5175 = vld [vmem:[#allocation12 + $0x95c] sm:$0xff]
    %v5176 = vld [vmem:[#allocation12 + $0x964] sm:$0xff]
    %v5177 = vld [vmem:[#allocation12 + $0x96c] sm:$0xff]
    %v5178 = vld [vmem:[#allocation12 + $0x974] sm:$0xff]
    %v5179 = vld [vmem:[#allocation12 + $0x97c] sm:$0xff]
    %v5180 = vld [vmem:[#allocation12 + $0x984] sm:$0xff]
    %v5181 = vld [vmem:[#allocation12 + $0x990] sm:$0xff]
    %v5182 = vld [vmem:[#allocation12 + $0x998] sm:$0xff]
    %v5183 = vld [vmem:[#allocation12 + $0x9a0] sm:$0xff]
    %v5184 = vld [vmem:[#allocation12 + $0x9a8] sm:$0xff]
    %v5185 = vld [vmem:[#allocation12 + $0x9b0] sm:$0xff]
    %v5186 = vld [vmem:[#allocation12 + $0x9b8] sm:$0xff]
    %v5187 = vld [vmem:[#allocation12 + $0x9c0] sm:$0xff]
    %v5188 = vld [vmem:[#allocation12 + $0x9c8] sm:$0xff]
    %v5189 = vld [vmem:[#allocation12 + $0x9d4] sm:$0xff]
    %v5190 = vld [vmem:[#allocation12 + $0x9dc] sm:$0xff]
    %v5191 = vld [vmem:[#allocation12 + $0x9e4] sm:$0xff]
    %v5192 = vld [vmem:[#allocation12 + $0x9ec] sm:$0xff]
    %v5193 = vld [vmem:[#allocation12 + $0x9f4] sm:$0xff]
    %v5194 = vld [vmem:[#allocation12 + $0x9fc] sm:$0xff]
    %v5195 = vld [vmem:[#allocation12 + $0xa04] sm:$0xff]
    %v5196 = vld [vmem:[#allocation12 + $0xa0c] sm:$0xff]
    %v5197 = vld [vmem:[#allocation12 + $0xa18] sm:$0xff]
    %v5198 = vld [vmem:[#allocation12 + $0xa20] sm:$0xff]
    %v5199 = vld [vmem:[#allocation12 + $0xa28] sm:$0xff]
    %v5200 = vld [vmem:[#allocation12 + $0xa30] sm:$0xff]
    %v5201 = vld [vmem:[#allocation12 + $0xa38] sm:$0xff]
    %v5202 = vld [vmem:[#allocation12 + $0xa40] sm:$0xff]
    %v5203 = vld [vmem:[#allocation12 + $0xa48] sm:$0xff]
    %v5204 = vld [vmem:[#allocation12 + $0xa50] sm:$0xff]
    %v5205 = vld [vmem:[#allocation12 + $0xa5c] sm:$0xff]
    %v5206 = vld [vmem:[#allocation12 + $0xa64] sm:$0xff]
    %v5207 = vld [vmem:[#allocation12 + $0xa6c] sm:$0xff]
    %v5208 = vld [vmem:[#allocation12 + $0xa74] sm:$0xff]
    %v5209 = vld [vmem:[#allocation12 + $0xa7c] sm:$0xff]
    %v5210 = vld [vmem:[#allocation12 + $0xa84] sm:$0xff]
    %v5211 = vld [vmem:[#allocation12 + $0xa8c] sm:$0xff]
    %v5212 = vld [vmem:[#allocation12 + $0xa94] sm:$0xff]
    %v5213 = vld [vmem:[#allocation12 + $0xaa0] sm:$0xff]
    %v5214 = vld [vmem:[#allocation12 + $0xaa8] sm:$0xff]
    %v5215 = vld [vmem:[#allocation12 + $0xab0] sm:$0xff]
    %v5216 = vld [vmem:[#allocation12 + $0xab8] sm:$0xff]
    %v5217 = vld [vmem:[#allocation12 + $0xac0] sm:$0xff]
    %v5218 = vld [vmem:[#allocation12 + $0xac8] sm:$0xff]
    %v5219 = vld [vmem:[#allocation12 + $0xad0] sm:$0xff]
    %v5220 = vld [vmem:[#allocation12 + $0xad8] sm:$0xff]
    %v5221 = vld [vmem:[#allocation12 + $0xae4] sm:$0xff]
    %v5222 = vld [vmem:[#allocation12 + $0xaec] sm:$0xff]
    %v5223 = vld [vmem:[#allocation12 + $0xaf4] sm:$0xff]
    %v5224 = vld [vmem:[#allocation12 + $0xafc] sm:$0xff]
    %v5225 = vld [vmem:[#allocation12 + $0xb04] sm:$0xff]
    %v5226 = vld [vmem:[#allocation12 + $0xb0c] sm:$0xff]
    %v5227 = vld [vmem:[#allocation12 + $0xb14] sm:$0xff]
    %v5228 = vld [vmem:[#allocation12 + $0xb1c] sm:$0xff]
    %v5229 = vld [vmem:[#allocation12 + $0xb28] sm:$0xff]
    %v5230 = vld [vmem:[#allocation12 + $0xb30] sm:$0xff]
    %v5231 = vld [vmem:[#allocation12 + $0xb38] sm:$0xff]
    %v5232 = vld [vmem:[#allocation12 + $0xb40] sm:$0xff]
    %v5233 = vld [vmem:[#allocation12 + $0xb48] sm:$0xff]
    %v5234 = vld [vmem:[#allocation12 + $0xb50] sm:$0xff]
    %v5235 = vld [vmem:[#allocation12 + $0xb58] sm:$0xff]
    %v5236 = vld [vmem:[#allocation12 + $0xb60] sm:$0xff]
    %v5237 = vld [vmem:[#allocation12 + $0xb6c] sm:$0xff]
    %v5238 = vld [vmem:[#allocation12 + $0xb74] sm:$0xff]
    %v5239 = vld [vmem:[#allocation12 + $0xb7c] sm:$0xff]
    %v5240 = vld [vmem:[#allocation12 + $0xb84] sm:$0xff]
    %v5241 = vld [vmem:[#allocation12 + $0xb8c] sm:$0xff]
    %v5242 = vld [vmem:[#allocation12 + $0xb94] sm:$0xff]
    %v5243 = vld [vmem:[#allocation12 + $0xb9c] sm:$0xff]
    %v5244 = vld [vmem:[#allocation12 + $0xba4] sm:$0xff]
    %v5245 = vld [vmem:[#allocation12 + $0xbb0] sm:$0xff]
    %v5246 = vld [vmem:[#allocation12 + $0xbb8] sm:$0xff]
    %v5247 = vld [vmem:[#allocation12 + $0xbc0] sm:$0xff]
    %v5248 = vld [vmem:[#allocation12 + $0xbc8] sm:$0xff]
    %v5249 = vld [vmem:[#allocation12 + $0xbd0] sm:$0xff]
    %v5250 = vld [vmem:[#allocation12 + $0xbd8] sm:$0xff]
    %v5251 = vld [vmem:[#allocation12 + $0xbe0] sm:$0xff]
    %v5252 = vld [vmem:[#allocation12 + $0xbe8] sm:$0xff]
    %v5253 = vld [vmem:[#allocation12 + $0xbf4] sm:$0xff]
    %v5254 = vld [vmem:[#allocation12 + $0xbfc] sm:$0xff]
    %v5255 = vld [vmem:[#allocation12 + $0xc04] sm:$0xff]
    %v5256 = vld [vmem:[#allocation12 + $0xc0c] sm:$0xff]
    %v5257 = vld [vmem:[#allocation12 + $0xc14] sm:$0xff]
    %v5258 = vld [vmem:[#allocation12 + $0xc1c] sm:$0xff]
    %v5259 = vld [vmem:[#allocation12 + $0xc24] sm:$0xff]
    %v5260 = vld [vmem:[#allocation12 + $0xc2c] sm:$0xff]
    %v5261 = vld [vmem:[#allocation12 + $0xc38] sm:$0xff]
    %v5262 = vld [vmem:[#allocation12 + $0xc40] sm:$0xff]
    %v5263 = vld [vmem:[#allocation12 + $0xc48] sm:$0xff]
    %v5264 = vld [vmem:[#allocation12 + $0xc50] sm:$0xff]
    %v5265 = vld [vmem:[#allocation12 + $0xc58] sm:$0xff]
    %v5266 = vld [vmem:[#allocation12 + $0xc60] sm:$0xff]
    %v5267 = vld [vmem:[#allocation12 + $0xc68] sm:$0xff]
    %v5268 = vld [vmem:[#allocation12 + $0xc70] sm:$0xff]
    %v5269 = vld [vmem:[#allocation12 + $0xc7c] sm:$0xff]
    %v5270 = vld [vmem:[#allocation12 + $0xc84] sm:$0xff]
    %v5271 = vld [vmem:[#allocation12 + $0xc8c] sm:$0xff]
    %v5272 = vld [vmem:[#allocation12 + $0xc94] sm:$0xff]
    %v5273 = vld [vmem:[#allocation12 + $0xc9c] sm:$0xff]
    %v5274 = vld [vmem:[#allocation12 + $0xca4] sm:$0xff]
    %v5275 = vld [vmem:[#allocation12 + $0xcac] sm:$0xff]
    %v5276 = vld [vmem:[#allocation12 + $0xcb4] sm:$0xff]
    %v5277 = vld [vmem:[#allocation12 + $0xcc0] sm:$0xff]
    %v5278 = vld [vmem:[#allocation12 + $0xcc8] sm:$0xff]
    %v5279 = vld [vmem:[#allocation12 + $0xcd0] sm:$0xff]
    %v5280 = vld [vmem:[#allocation12 + $0xcd8] sm:$0xff]
    %v5281 = vld [vmem:[#allocation12 + $0xce0] sm:$0xff]
    %v5282 = vld [vmem:[#allocation12 + $0xce8] sm:$0xff]
    %v5283 = vld [vmem:[#allocation12 + $0xcf0] sm:$0xff]
    %v5284 = vld [vmem:[#allocation12 + $0xcf8] sm:$0xff]
    %v5285 = vld [vmem:[#allocation12 + $0xd04] sm:$0xff]
    %v5286 = vld [vmem:[#allocation12 + $0xd0c] sm:$0xff]
    %v5287 = vld [vmem:[#allocation12 + $0xd14] sm:$0xff]
    %v5288 = vld [vmem:[#allocation12 + $0xd1c] sm:$0xff]
    %v5289 = vld [vmem:[#allocation12 + $0xd24] sm:$0xff]
    %v5290 = vld [vmem:[#allocation12 + $0xd2c] sm:$0xff]
    %v5291 = vld [vmem:[#allocation12 + $0xd34] sm:$0xff]
    %v5292 = vld [vmem:[#allocation12 + $0xd3c] sm:$0xff]
    %v5293 = vld [vmem:[#allocation12 + $0xd48] sm:$0xff]
    %v5294 = vld [vmem:[#allocation12 + $0xd50] sm:$0xff]
    %v5295 = vld [vmem:[#allocation12 + $0xd58] sm:$0xff]
    %v5296 = vld [vmem:[#allocation12 + $0xd60] sm:$0xff]
    %v5297 = vld [vmem:[#allocation12 + $0xd68] sm:$0xff]
    %v5298 = vld [vmem:[#allocation12 + $0xd70] sm:$0xff]
    %v5299 = vld [vmem:[#allocation12 + $0xd78] sm:$0xff]
    %v5300 = vld [vmem:[#allocation12 + $0xd80] sm:$0xff]
    %v5301 = vld [vmem:[#allocation12 + $0xd8c] sm:$0xff]
    %v5302 = vld [vmem:[#allocation12 + $0xd94] sm:$0xff]
    %v5303 = vld [vmem:[#allocation12 + $0xd9c] sm:$0xff]
    %v5304 = vld [vmem:[#allocation12 + $0xda4] sm:$0xff]
    %v5305 = vld [vmem:[#allocation12 + $0xdac] sm:$0xff]
    %v5306 = vld [vmem:[#allocation12 + $0xdb4] sm:$0xff]
    %v5307 = vld [vmem:[#allocation12 + $0xdbc] sm:$0xff]
    %v5308 = vld [vmem:[#allocation12 + $0xdc4] sm:$0xff]
    %v5309 = vld [vmem:[#allocation12 + $0xdd0] sm:$0xff]
    %v5310 = vld [vmem:[#allocation12 + $0xdd8] sm:$0xff]
    %v5311 = vld [vmem:[#allocation12 + $0xde0] sm:$0xff]
    %v5312 = vld [vmem:[#allocation12 + $0xde8] sm:$0xff]
    %v5313 = vld [vmem:[#allocation12 + $0xdf0] sm:$0xff]
    %v5314 = vld [vmem:[#allocation12 + $0xdf8] sm:$0xff]
    %v5315 = vld [vmem:[#allocation12 + $0xe00] sm:$0xff]
    %v5316 = vld [vmem:[#allocation12 + $0xe08] sm:$0xff]
    %v5317 = vld [vmem:[#allocation12 + $0xe14] sm:$0xff]
    %v5318 = vld [vmem:[#allocation12 + $0xe1c] sm:$0xff]
    %v5319 = vld [vmem:[#allocation12 + $0xe24] sm:$0xff]
    %v5320 = vld [vmem:[#allocation12 + $0xe2c] sm:$0xff]
    %v5321 = vld [vmem:[#allocation12 + $0xe34] sm:$0xff]
    %v5322 = vld [vmem:[#allocation12 + $0xe3c] sm:$0xff]
    %v5323 = vld [vmem:[#allocation12 + $0xe44] sm:$0xff]
    %v5324 = vld [vmem:[#allocation12 + $0xe4c] sm:$0xff]
    %v5325 = vld [vmem:[#allocation12 + $0xe58] sm:$0xff]
    %v5326 = vld [vmem:[#allocation12 + $0xe60] sm:$0xff]
    %v5327 = vld [vmem:[#allocation12 + $0xe68] sm:$0xff]
    %v5328 = vld [vmem:[#allocation12 + $0xe70] sm:$0xff]
    %v5329 = vld [vmem:[#allocation12 + $0xe78] sm:$0xff]
    %v5330 = vld [vmem:[#allocation12 + $0xe80] sm:$0xff]
    %v5331 = vld [vmem:[#allocation12 + $0xe88] sm:$0xff]
    %v5332 = vld [vmem:[#allocation12 + $0xe90] sm:$0xff]
    %v5333 = vld [vmem:[#allocation12 + $0xe9c] sm:$0xff]
    %v5334 = vld [vmem:[#allocation12 + $0xea4] sm:$0xff]
    %v5335 = vld [vmem:[#allocation12 + $0xeac] sm:$0xff]
    %v5336 = vld [vmem:[#allocation12 + $0xeb4] sm:$0xff]
    %v5337 = vld [vmem:[#allocation12 + $0xebc] sm:$0xff]
    %v5338 = vld [vmem:[#allocation12 + $0xec4] sm:$0xff]
    %v5339 = vld [vmem:[#allocation12 + $0xecc] sm:$0xff]
    %v5340 = vld [vmem:[#allocation12 + $0xed4] sm:$0xff]
    %v5341 = vld [vmem:[#allocation12 + $0xee0] sm:$0xff]
    %v5342 = vld [vmem:[#allocation12 + $0xee8] sm:$0xff]
    %v5343 = vld [vmem:[#allocation12 + $0xef0] sm:$0xff]
    %v5344 = vld [vmem:[#allocation12 + $0xef8] sm:$0xff]
    %v5345 = vld [vmem:[#allocation12 + $0xf00] sm:$0xff]
    %v5346 = vld [vmem:[#allocation12 + $0xf08] sm:$0xff]
    %v5347 = vld [vmem:[#allocation12 + $0xf10] sm:$0xff]
    %v5348 = vld [vmem:[#allocation12 + $0xf18] sm:$0xff]
    %v5349 = vld [vmem:[#allocation12 + $0xf24] sm:$0xff]
    %v5350 = vld [vmem:[#allocation12 + $0xf2c] sm:$0xff]
    %v5351 = vld [vmem:[#allocation12 + $0xf34] sm:$0xff]
    %v5352 = vld [vmem:[#allocation12 + $0xf3c] sm:$0xff]
    %v5353 = vld [vmem:[#allocation12 + $0xf44] sm:$0xff]
    %v5354 = vld [vmem:[#allocation12 + $0xf4c] sm:$0xff]
    %v5355 = vld [vmem:[#allocation12 + $0xf54] sm:$0xff]
    %v5356 = vld [vmem:[#allocation12 + $0xf5c] sm:$0xff]
    %v5357 = vld [vmem:[#allocation12 + $0xf68] sm:$0xff]
    %v5358 = vld [vmem:[#allocation12 + $0xf70] sm:$0xff]
    %v5359 = vld [vmem:[#allocation12 + $0xf78] sm:$0xff]
    %v5360 = vld [vmem:[#allocation12 + $0xf80] sm:$0xff]
    %v5361 = vld [vmem:[#allocation12 + $0xf88] sm:$0xff]
    %v5362 = vld [vmem:[#allocation12 + $0xf90] sm:$0xff]
    %v5363 = vld [vmem:[#allocation12 + $0xf98] sm:$0xff]
    %v5364 = vld [vmem:[#allocation12 + $0xfa0] sm:$0xff]
    %v5365 = vld [vmem:[#allocation12 + $0xfac] sm:$0xff]
    %v5366 = vld [vmem:[#allocation12 + $0xfb4] sm:$0xff]
    %v5367 = vld [vmem:[#allocation12 + $0xfbc] sm:$0xff]
    %v5368 = vld [vmem:[#allocation12 + $0xfc4] sm:$0xff]
    %v5369 = vld [vmem:[#allocation12 + $0xfcc] sm:$0xff]
    %v5370 = vld [vmem:[#allocation12 + $0xfd4] sm:$0xff]
    %v5371 = vld [vmem:[#allocation12 + $0xfdc] sm:$0xff]
    %v5372 = vld [vmem:[#allocation12 + $0xfe4] sm:$0xff]
    %v5373 = vld [vmem:[#allocation12 + $0xff0] sm:$0xff]
    %v5374 = vld [vmem:[#allocation12 + $0xff8] sm:$0xff]
    %v5375 = vld [vmem:[#allocation12 + $0x1000] sm:$0xff]
    %v5376 = vld [vmem:[#allocation12 + $0x1008] sm:$0xff]
    %v5377 = vld [vmem:[#allocation12 + $0x1010] sm:$0xff]
    %v5378 = vld [vmem:[#allocation12 + $0x1018] sm:$0xff]
    %v5379 = vld [vmem:[#allocation12 + $0x1020] sm:$0xff]
    %v5380 = vld [vmem:[#allocation12 + $0x1028] sm:$0xff]
    %v5381 = vld [vmem:[#allocation12 + $0x1034] sm:$0xff]
    %v5382 = vld [vmem:[#allocation12 + $0x103c] sm:$0xff]
    %v5383 = vld [vmem:[#allocation12 + $0x1044] sm:$0xff]
    %v5384 = vld [vmem:[#allocation12 + $0x104c] sm:$0xff]
    %v5385 = vld [vmem:[#allocation12 + $0x1054] sm:$0xff]
    %v5386 = vld [vmem:[#allocation12 + $0x105c] sm:$0xff]
    %v5387 = vld [vmem:[#allocation12 + $0x1064] sm:$0xff]
    %v5388 = vld [vmem:[#allocation12 + $0x106c] sm:$0xff]
    %v5389 = vld [vmem:[#allocation12 + $0x1078] sm:$0xff]
    %v5390 = vld [vmem:[#allocation12 + $0x1080] sm:$0xff]
    %v5391 = vld [vmem:[#allocation12 + $0x1088] sm:$0xff]
    %v5392 = vld [vmem:[#allocation12 + $0x1090] sm:$0xff]
    %v5393 = vld [vmem:[#allocation12 + $0x1098] sm:$0xff]
    %v5394 = vld [vmem:[#allocation12 + $0x10a0] sm:$0xff]
    %v5395 = vld [vmem:[#allocation12 + $0x10a8] sm:$0xff]
    %v5396 = vld [vmem:[#allocation12 + $0x10b0] sm:$0xff]
    %v5397 = vld [vmem:[#allocation12 + $0x10bc] sm:$0xff]
    %v5398 = vld [vmem:[#allocation12 + $0x10c4] sm:$0xff]
    %v5399 = vld [vmem:[#allocation12 + $0x10cc] sm:$0xff]
    %v5400 = vld [vmem:[#allocation12 + $0x10d4] sm:$0xff]
    %v5401 = vld [vmem:[#allocation12 + $0x10dc] sm:$0xff]
    %v5402 = vld [vmem:[#allocation12 + $0x10e4] sm:$0xff]
    %v5403 = vld [vmem:[#allocation12 + $0x10ec] sm:$0xff]
    %v5404 = vld [vmem:[#allocation12 + $0x10f4] sm:$0xff]
    %v5917 = vunpack.c.l.b16 %v4893
    %v5918 = vunpack.c.h.b16 %v4893
    %v5919 = vunpack.c.l.b16 %v4894
    %v5920 = vunpack.c.h.b16 %v4894
    %v5921 = vunpack.c.l.b16 %v4895
    %v5922 = vunpack.c.h.b16 %v4895
    %v5923 = vunpack.c.l.b16 %v4896
    %v5924 = vunpack.c.h.b16 %v4896
    %v5925 = vunpack.c.l.b16 %v4897
    %v5926 = vunpack.c.h.b16 %v4897
    %v5927 = vunpack.c.l.b16 %v4898
    %v5928 = vunpack.c.h.b16 %v4898
    %v5929 = vunpack.c.l.b16 %v4899
    %v5930 = vunpack.c.h.b16 %v4899
    %v5931 = vunpack.c.l.b16 %v4900
    %v5932 = vunpack.c.h.b16 %v4900
    %v5933 = vunpack.c.l.b16 %v4901
    %v5934 = vunpack.c.h.b16 %v4901
    %v5935 = vunpack.c.l.b16 %v4902
    %v5936 = vunpack.c.h.b16 %v4902
    %v5937 = vunpack.c.l.b16 %v4903
    %v5938 = vunpack.c.h.b16 %v4903
    %v5939 = vunpack.c.l.b16 %v4904
    %v5940 = vunpack.c.h.b16 %v4904
    %v5941 = vunpack.c.l.b16 %v4905
    %v5942 = vunpack.c.h.b16 %v4905
    %v5943 = vunpack.c.l.b16 %v4906
    %v5944 = vunpack.c.h.b16 %v4906
    %v5945 = vunpack.c.l.b16 %v4907
    %v5946 = vunpack.c.h.b16 %v4907
    %v5947 = vunpack.c.l.b16 %v4908
    %v5948 = vunpack.c.h.b16 %v4908
    %v5949 = vunpack.c.l.b16 %v4909
    %v5950 = vunpack.c.h.b16 %v4909
    %v5951 = vunpack.c.l.b16 %v4910
    %v5952 = vunpack.c.h.b16 %v4910
    %v5953 = vunpack.c.l.b16 %v4911
    %v5954 = vunpack.c.h.b16 %v4911
    %v5955 = vunpack.c.l.b16 %v4912
    %v5956 = vunpack.c.h.b16 %v4912
    %v5957 = vunpack.c.l.b16 %v4913
    %v5958 = vunpack.c.h.b16 %v4913
    %v5959 = vunpack.c.l.b16 %v4914
    %v5960 = vunpack.c.h.b16 %v4914
    %v5961 = vunpack.c.l.b16 %v4915
    %v5962 = vunpack.c.h.b16 %v4915
    %v5963 = vunpack.c.l.b16 %v4916
    %v5964 = vunpack.c.h.b16 %v4916
    %v5965 = vunpack.c.l.b16 %v4917
    %v5966 = vunpack.c.h.b16 %v4917
    %v5967 = vunpack.c.l.b16 %v4918
    %v5968 = vunpack.c.h.b16 %v4918
    %v5969 = vunpack.c.l.b16 %v4919
    %v5970 = vunpack.c.h.b16 %v4919
    %v5971 = vunpack.c.l.b16 %v4920
    %v5972 = vunpack.c.h.b16 %v4920
    %v5973 = vunpack.c.l.b16 %v4921
    %v5974 = vunpack.c.h.b16 %v4921
    %v5975 = vunpack.c.l.b16 %v4922
    %v5976 = vunpack.c.h.b16 %v4922
    %v5977 = vunpack.c.l.b16 %v4923
    %v5978 = vunpack.c.h.b16 %v4923
    %v5979 = vunpack.c.l.b16 %v4924
    %v5980 = vunpack.c.h.b16 %v4924
    %v5981 = vunpack.c.l.b16 %v4925
    %v5982 = vunpack.c.h.b16 %v4925
    %v5983 = vunpack.c.l.b16 %v4926
    %v5984 = vunpack.c.h.b16 %v4926
    %v5985 = vunpack.c.l.b16 %v4927
    %v5986 = vunpack.c.h.b16 %v4927
    %v5987 = vunpack.c.l.b16 %v4928
    %v5988 = vunpack.c.h.b16 %v4928
    %v5989 = vunpack.c.l.b16 %v4929
    %v5990 = vunpack.c.h.b16 %v4929
    %v5991 = vunpack.c.l.b16 %v4930
    %v5992 = vunpack.c.h.b16 %v4930
    %v5993 = vunpack.c.l.b16 %v4931
    %v5994 = vunpack.c.h.b16 %v4931
    %v5995 = vunpack.c.l.b16 %v4932
    %v5996 = vunpack.c.h.b16 %v4932
    %v5997 = vunpack.c.l.b16 %v4933
    %v5998 = vunpack.c.h.b16 %v4933
    %v5999 = vunpack.c.l.b16 %v4934
    %v6000 = vunpack.c.h.b16 %v4934
    %v6001 = vunpack.c.l.b16 %v4935
    %v6002 = vunpack.c.h.b16 %v4935
    %v6003 = vunpack.c.l.b16 %v4936
    %v6004 = vunpack.c.h.b16 %v4936
    %v6005 = vunpack.c.l.b16 %v4937
    %v6006 = vunpack.c.h.b16 %v4937
    %v6007 = vunpack.c.l.b16 %v4938
    %v6008 = vunpack.c.h.b16 %v4938
    %v6009 = vunpack.c.l.b16 %v4939
    %v6010 = vunpack.c.h.b16 %v4939
    %v6011 = vunpack.c.l.b16 %v4940
    %v6012 = vunpack.c.h.b16 %v4940
    %v6013 = vunpack.c.l.b16 %v4941
    %v6014 = vunpack.c.h.b16 %v4941
    %v6015 = vunpack.c.l.b16 %v4942
    %v6016 = vunpack.c.h.b16 %v4942
    %v6017 = vunpack.c.l.b16 %v4943
    %v6018 = vunpack.c.h.b16 %v4943
    %v6019 = vunpack.c.l.b16 %v4944
    %v6020 = vunpack.c.h.b16 %v4944
    %v6021 = vunpack.c.l.b16 %v4945
    %v6022 = vunpack.c.h.b16 %v4945
    %v6023 = vunpack.c.l.b16 %v4946
    %v6024 = vunpack.c.h.b16 %v4946
    %v6025 = vunpack.c.l.b16 %v4947
    %v6026 = vunpack.c.h.b16 %v4947
    %v6027 = vunpack.c.l.b16 %v4948
    %v6028 = vunpack.c.h.b16 %v4948
    %v6029 = vunpack.c.l.b16 %v4949
    %v6030 = vunpack.c.h.b16 %v4949
    %v6031 = vunpack.c.l.b16 %v4950
    %v6032 = vunpack.c.h.b16 %v4950
    %v6033 = vunpack.c.l.b16 %v4951
    %v6034 = vunpack.c.h.b16 %v4951
    %v6035 = vunpack.c.l.b16 %v4952
    %v6036 = vunpack.c.h.b16 %v4952
    %v6037 = vunpack.c.l.b16 %v4953
    %v6038 = vunpack.c.h.b16 %v4953
    %v6039 = vunpack.c.l.b16 %v4954
    %v6040 = vunpack.c.h.b16 %v4954
    %v6041 = vunpack.c.l.b16 %v4955
    %v6042 = vunpack.c.h.b16 %v4955
    %v6043 = vunpack.c.l.b16 %v4956
    %v6044 = vunpack.c.h.b16 %v4956
    %v6045 = vunpack.c.l.b16 %v4957
    %v6046 = vunpack.c.h.b16 %v4957
    %v6047 = vunpack.c.l.b16 %v4958
    %v6048 = vunpack.c.h.b16 %v4958
    %v6049 = vunpack.c.l.b16 %v4959
    %v6050 = vunpack.c.h.b16 %v4959
    %v6051 = vunpack.c.l.b16 %v4960
    %v6052 = vunpack.c.h.b16 %v4960
    %v6053 = vunpack.c.l.b16 %v4961
    %v6054 = vunpack.c.h.b16 %v4961
    %v6055 = vunpack.c.l.b16 %v4962
    %v6056 = vunpack.c.h.b16 %v4962
    %v6057 = vunpack.c.l.b16 %v4963
    %v6058 = vunpack.c.h.b16 %v4963
    %v6059 = vunpack.c.l.b16 %v4964
    %v6060 = vunpack.c.h.b16 %v4964
    %v6061 = vunpack.c.l.b16 %v4965
    %v6062 = vunpack.c.h.b16 %v4965
    %v6063 = vunpack.c.l.b16 %v4966
    %v6064 = vunpack.c.h.b16 %v4966
    %v6065 = vunpack.c.l.b16 %v4967
    %v6066 = vunpack.c.h.b16 %v4967
    %v6067 = vunpack.c.l.b16 %v4968
    %v6068 = vunpack.c.h.b16 %v4968
    %v6069 = vunpack.c.l.b16 %v4969
    %v6070 = vunpack.c.h.b16 %v4969
    %v6071 = vunpack.c.l.b16 %v4970
    %v6072 = vunpack.c.h.b16 %v4970
    %v6073 = vunpack.c.l.b16 %v4971
    %v6074 = vunpack.c.h.b16 %v4971
    %v6075 = vunpack.c.l.b16 %v4972
    %v6076 = vunpack.c.h.b16 %v4972
    %v6077 = vunpack.c.l.b16 %v4973
    %v6078 = vunpack.c.h.b16 %v4973
    %v6079 = vunpack.c.l.b16 %v4974
    %v6080 = vunpack.c.h.b16 %v4974
    %v6081 = vunpack.c.l.b16 %v4975
    %v6082 = vunpack.c.h.b16 %v4975
    %v6083 = vunpack.c.l.b16 %v4976
    %v6084 = vunpack.c.h.b16 %v4976
    %v6085 = vunpack.c.l.b16 %v4977
    %v6086 = vunpack.c.h.b16 %v4977
    %v6087 = vunpack.c.l.b16 %v4978
    %v6088 = vunpack.c.h.b16 %v4978
    %v6089 = vunpack.c.l.b16 %v4979
    %v6090 = vunpack.c.h.b16 %v4979
    %v6091 = vunpack.c.l.b16 %v4980
    %v6092 = vunpack.c.h.b16 %v4980
    %v6093 = vunpack.c.l.b16 %v4981
    %v6094 = vunpack.c.h.b16 %v4981
    %v6095 = vunpack.c.l.b16 %v4982
    %v6096 = vunpack.c.h.b16 %v4982
    %v6097 = vunpack.c.l.b16 %v4983
    %v6098 = vunpack.c.h.b16 %v4983
    %v6099 = vunpack.c.l.b16 %v4984
    %v6100 = vunpack.c.h.b16 %v4984
    %v6101 = vunpack.c.l.b16 %v4985
    %v6102 = vunpack.c.h.b16 %v4985
    %v6103 = vunpack.c.l.b16 %v4986
    %v6104 = vunpack.c.h.b16 %v4986
    %v6105 = vunpack.c.l.b16 %v4987
    %v6106 = vunpack.c.h.b16 %v4987
    %v6107 = vunpack.c.l.b16 %v4988
    %v6108 = vunpack.c.h.b16 %v4988
    %v6109 = vunpack.c.l.b16 %v4989
    %v6110 = vunpack.c.h.b16 %v4989
    %v6111 = vunpack.c.l.b16 %v4990
    %v6112 = vunpack.c.h.b16 %v4990
    %v6113 = vunpack.c.l.b16 %v4991
    %v6114 = vunpack.c.h.b16 %v4991
    %v6115 = vunpack.c.l.b16 %v4992
    %v6116 = vunpack.c.h.b16 %v4992
    %v6117 = vunpack.c.l.b16 %v4993
    %v6118 = vunpack.c.h.b16 %v4993
    %v6119 = vunpack.c.l.b16 %v4994
    %v6120 = vunpack.c.h.b16 %v4994
    %v6121 = vunpack.c.l.b16 %v4995
    %v6122 = vunpack.c.h.b16 %v4995
    %v6123 = vunpack.c.l.b16 %v4996
    %v6124 = vunpack.c.h.b16 %v4996
    %v6125 = vunpack.c.l.b16 %v4997
    %v6126 = vunpack.c.h.b16 %v4997
    %v6127 = vunpack.c.l.b16 %v4998
    %v6128 = vunpack.c.h.b16 %v4998
    %v6129 = vunpack.c.l.b16 %v4999
    %v6130 = vunpack.c.h.b16 %v4999
    %v6131 = vunpack.c.l.b16 %v5000
    %v6132 = vunpack.c.h.b16 %v5000
    %v6133 = vunpack.c.l.b16 %v5001
    %v6134 = vunpack.c.h.b16 %v5001
    %v6135 = vunpack.c.l.b16 %v5002
    %v6136 = vunpack.c.h.b16 %v5002
    %v6137 = vunpack.c.l.b16 %v5003
    %v6138 = vunpack.c.h.b16 %v5003
    %v6139 = vunpack.c.l.b16 %v5004
    %v6140 = vunpack.c.h.b16 %v5004
    %v6141 = vunpack.c.l.b16 %v5005
    %v6142 = vunpack.c.h.b16 %v5005
    %v6143 = vunpack.c.l.b16 %v5006
    %v6144 = vunpack.c.h.b16 %v5006
    %v6145 = vunpack.c.l.b16 %v5007
    %v6146 = vunpack.c.h.b16 %v5007
    %v6147 = vunpack.c.l.b16 %v5008
    %v6148 = vunpack.c.h.b16 %v5008
    %v6149 = vunpack.c.l.b16 %v5009
    %v6150 = vunpack.c.h.b16 %v5009
    %v6151 = vunpack.c.l.b16 %v5010
    %v6152 = vunpack.c.h.b16 %v5010
    %v6153 = vunpack.c.l.b16 %v5011
    %v6154 = vunpack.c.h.b16 %v5011
    %v6155 = vunpack.c.l.b16 %v5012
    %v6156 = vunpack.c.h.b16 %v5012
    %v6157 = vunpack.c.l.b16 %v5013
    %v6158 = vunpack.c.h.b16 %v5013
    %v6159 = vunpack.c.l.b16 %v5014
    %v6160 = vunpack.c.h.b16 %v5014
    %v6161 = vunpack.c.l.b16 %v5015
    %v6162 = vunpack.c.h.b16 %v5015
    %v6163 = vunpack.c.l.b16 %v5016
    %v6164 = vunpack.c.h.b16 %v5016
    %v6165 = vunpack.c.l.b16 %v5017
    %v6166 = vunpack.c.h.b16 %v5017
    %v6167 = vunpack.c.l.b16 %v5018
    %v6168 = vunpack.c.h.b16 %v5018
    %v6169 = vunpack.c.l.b16 %v5019
    %v6170 = vunpack.c.h.b16 %v5019
    %v6171 = vunpack.c.l.b16 %v5020
    %v6172 = vunpack.c.h.b16 %v5020
    %v6173 = vunpack.c.l.b16 %v5021
    %v6174 = vunpack.c.h.b16 %v5021
    %v6175 = vunpack.c.l.b16 %v5022
    %v6176 = vunpack.c.h.b16 %v5022
    %v6177 = vunpack.c.l.b16 %v5023
    %v6178 = vunpack.c.h.b16 %v5023
    %v6179 = vunpack.c.l.b16 %v5024
    %v6180 = vunpack.c.h.b16 %v5024
    %v6181 = vunpack.c.l.b16 %v5025
    %v6182 = vunpack.c.h.b16 %v5025
    %v6183 = vunpack.c.l.b16 %v5026
    %v6184 = vunpack.c.h.b16 %v5026
    %v6185 = vunpack.c.l.b16 %v5027
    %v6186 = vunpack.c.h.b16 %v5027
    %v6187 = vunpack.c.l.b16 %v5028
    %v6188 = vunpack.c.h.b16 %v5028
    %v6189 = vunpack.c.l.b16 %v5029
    %v6190 = vunpack.c.h.b16 %v5029
    %v6191 = vunpack.c.l.b16 %v5030
    %v6192 = vunpack.c.h.b16 %v5030
    %v6193 = vunpack.c.l.b16 %v5031
    %v6194 = vunpack.c.h.b16 %v5031
    %v6195 = vunpack.c.l.b16 %v5032
    %v6196 = vunpack.c.h.b16 %v5032
    %v6197 = vunpack.c.l.b16 %v5033
    %v6198 = vunpack.c.h.b16 %v5033
    %v6199 = vunpack.c.l.b16 %v5034
    %v6200 = vunpack.c.h.b16 %v5034
    %v6201 = vunpack.c.l.b16 %v5035
    %v6202 = vunpack.c.h.b16 %v5035
    %v6203 = vunpack.c.l.b16 %v5036
    %v6204 = vunpack.c.h.b16 %v5036
    %v6205 = vunpack.c.l.b16 %v5037
    %v6206 = vunpack.c.h.b16 %v5037
    %v6207 = vunpack.c.l.b16 %v5038
    %v6208 = vunpack.c.h.b16 %v5038
    %v6209 = vunpack.c.l.b16 %v5039
    %v6210 = vunpack.c.h.b16 %v5039
    %v6211 = vunpack.c.l.b16 %v5040
    %v6212 = vunpack.c.h.b16 %v5040
    %v6213 = vunpack.c.l.b16 %v5041
    %v6214 = vunpack.c.h.b16 %v5041
    %v6215 = vunpack.c.l.b16 %v5042
    %v6216 = vunpack.c.h.b16 %v5042
    %v6217 = vunpack.c.l.b16 %v5043
    %v6218 = vunpack.c.h.b16 %v5043
    %v6219 = vunpack.c.l.b16 %v5044
    %v6220 = vunpack.c.h.b16 %v5044
    %v6221 = vunpack.c.l.b16 %v5045
    %v6222 = vunpack.c.h.b16 %v5045
    %v6223 = vunpack.c.l.b16 %v5046
    %v6224 = vunpack.c.h.b16 %v5046
    %v6225 = vunpack.c.l.b16 %v5047
    %v6226 = vunpack.c.h.b16 %v5047
    %v6227 = vunpack.c.l.b16 %v5048
    %v6228 = vunpack.c.h.b16 %v5048
    %v6229 = vunpack.c.l.b16 %v5049
    %v6230 = vunpack.c.h.b16 %v5049
    %v6231 = vunpack.c.l.b16 %v5050
    %v6232 = vunpack.c.h.b16 %v5050
    %v6233 = vunpack.c.l.b16 %v5051
    %v6234 = vunpack.c.h.b16 %v5051
    %v6235 = vunpack.c.l.b16 %v5052
    %v6236 = vunpack.c.h.b16 %v5052
    %v6237 = vunpack.c.l.b16 %v5053
    %v6238 = vunpack.c.h.b16 %v5053
    %v6239 = vunpack.c.l.b16 %v5054
    %v6240 = vunpack.c.h.b16 %v5054
    %v6241 = vunpack.c.l.b16 %v5055
    %v6242 = vunpack.c.h.b16 %v5055
    %v6243 = vunpack.c.l.b16 %v5056
    %v6244 = vunpack.c.h.b16 %v5056
    %v6245 = vunpack.c.l.b16 %v5057
    %v6246 = vunpack.c.h.b16 %v5057
    %v6247 = vunpack.c.l.b16 %v5058
    %v6248 = vunpack.c.h.b16 %v5058
    %v6249 = vunpack.c.l.b16 %v5059
    %v6250 = vunpack.c.h.b16 %v5059
    %v6251 = vunpack.c.l.b16 %v5060
    %v6252 = vunpack.c.h.b16 %v5060
    %v6253 = vunpack.c.l.b16 %v5061
    %v6254 = vunpack.c.h.b16 %v5061
    %v6255 = vunpack.c.l.b16 %v5062
    %v6256 = vunpack.c.h.b16 %v5062
    %v6257 = vunpack.c.l.b16 %v5063
    %v6258 = vunpack.c.h.b16 %v5063
    %v6259 = vunpack.c.l.b16 %v5064
    %v6260 = vunpack.c.h.b16 %v5064
    %v6261 = vunpack.c.l.b16 %v5065
    %v6262 = vunpack.c.h.b16 %v5065
    %v6263 = vunpack.c.l.b16 %v5066
    %v6264 = vunpack.c.h.b16 %v5066
    %v6265 = vunpack.c.l.b16 %v5067
    %v6266 = vunpack.c.h.b16 %v5067
    %v6267 = vunpack.c.l.b16 %v5068
    %v6268 = vunpack.c.h.b16 %v5068
    %v6269 = vunpack.c.l.b16 %v5069
    %v6270 = vunpack.c.h.b16 %v5069
    %v6271 = vunpack.c.l.b16 %v5070
    %v6272 = vunpack.c.h.b16 %v5070
    %v6273 = vunpack.c.l.b16 %v5071
    %v6274 = vunpack.c.h.b16 %v5071
    %v6275 = vunpack.c.l.b16 %v5072
    %v6276 = vunpack.c.h.b16 %v5072
    %v6277 = vunpack.c.l.b16 %v5073
    %v6278 = vunpack.c.h.b16 %v5073
    %v6279 = vunpack.c.l.b16 %v5074
    %v6280 = vunpack.c.h.b16 %v5074
    %v6281 = vunpack.c.l.b16 %v5075
    %v6282 = vunpack.c.h.b16 %v5075
    %v6283 = vunpack.c.l.b16 %v5076
    %v6284 = vunpack.c.h.b16 %v5076
    %v6285 = vunpack.c.l.b16 %v5077
    %v6286 = vunpack.c.h.b16 %v5077
    %v6287 = vunpack.c.l.b16 %v5078
    %v6288 = vunpack.c.h.b16 %v5078
    %v6289 = vunpack.c.l.b16 %v5079
    %v6290 = vunpack.c.h.b16 %v5079
    %v6291 = vunpack.c.l.b16 %v5080
    %v6292 = vunpack.c.h.b16 %v5080
    %v6293 = vunpack.c.l.b16 %v5081
    %v6294 = vunpack.c.h.b16 %v5081
    %v6295 = vunpack.c.l.b16 %v5082
    %v6296 = vunpack.c.h.b16 %v5082
    %v6297 = vunpack.c.l.b16 %v5083
    %v6298 = vunpack.c.h.b16 %v5083
    %v6299 = vunpack.c.l.b16 %v5084
    %v6300 = vunpack.c.h.b16 %v5084
    %v6301 = vunpack.c.l.b16 %v5085
    %v6302 = vunpack.c.h.b16 %v5085
    %v6303 = vunpack.c.l.b16 %v5086
    %v6304 = vunpack.c.h.b16 %v5086
    %v6305 = vunpack.c.l.b16 %v5087
    %v6306 = vunpack.c.h.b16 %v5087
    %v6307 = vunpack.c.l.b16 %v5088
    %v6308 = vunpack.c.h.b16 %v5088
    %v6309 = vunpack.c.l.b16 %v5089
    %v6310 = vunpack.c.h.b16 %v5089
    %v6311 = vunpack.c.l.b16 %v5090
    %v6312 = vunpack.c.h.b16 %v5090
    %v6313 = vunpack.c.l.b16 %v5091
    %v6314 = vunpack.c.h.b16 %v5091
    %v6315 = vunpack.c.l.b16 %v5092
    %v6316 = vunpack.c.h.b16 %v5092
    %v6317 = vunpack.c.l.b16 %v5093
    %v6318 = vunpack.c.h.b16 %v5093
    %v6319 = vunpack.c.l.b16 %v5094
    %v6320 = vunpack.c.h.b16 %v5094
    %v6321 = vunpack.c.l.b16 %v5095
    %v6322 = vunpack.c.h.b16 %v5095
    %v6323 = vunpack.c.l.b16 %v5096
    %v6324 = vunpack.c.h.b16 %v5096
    %v6325 = vunpack.c.l.b16 %v5097
    %v6326 = vunpack.c.h.b16 %v5097
    %v6327 = vunpack.c.l.b16 %v5098
    %v6328 = vunpack.c.h.b16 %v5098
    %v6329 = vunpack.c.l.b16 %v5099
    %v6330 = vunpack.c.h.b16 %v5099
    %v6331 = vunpack.c.l.b16 %v5100
    %v6332 = vunpack.c.h.b16 %v5100
    %v6333 = vunpack.c.l.b16 %v5101
    %v6334 = vunpack.c.h.b16 %v5101
    %v6335 = vunpack.c.l.b16 %v5102
    %v6336 = vunpack.c.h.b16 %v5102
    %v6337 = vunpack.c.l.b16 %v5103
    %v6338 = vunpack.c.h.b16 %v5103
    %v6339 = vunpack.c.l.b16 %v5104
    %v6340 = vunpack.c.h.b16 %v5104
    %v6341 = vunpack.c.l.b16 %v5105
    %v6342 = vunpack.c.h.b16 %v5105
    %v6343 = vunpack.c.l.b16 %v5106
    %v6344 = vunpack.c.h.b16 %v5106
    %v6345 = vunpack.c.l.b16 %v5107
    %v6346 = vunpack.c.h.b16 %v5107
    %v6347 = vunpack.c.l.b16 %v5108
    %v6348 = vunpack.c.h.b16 %v5108
    %v6349 = vunpack.c.l.b16 %v5109
    %v6350 = vunpack.c.h.b16 %v5109
    %v6351 = vunpack.c.l.b16 %v5110
    %v6352 = vunpack.c.h.b16 %v5110
    %v6353 = vunpack.c.l.b16 %v5111
    %v6354 = vunpack.c.h.b16 %v5111
    %v6355 = vunpack.c.l.b16 %v5112
    %v6356 = vunpack.c.h.b16 %v5112
    %v6357 = vunpack.c.l.b16 %v5113
    %v6358 = vunpack.c.h.b16 %v5113
    %v6359 = vunpack.c.l.b16 %v5114
    %v6360 = vunpack.c.h.b16 %v5114
    %v6361 = vunpack.c.l.b16 %v5115
    %v6362 = vunpack.c.h.b16 %v5115
    %v6363 = vunpack.c.l.b16 %v5116
    %v6364 = vunpack.c.h.b16 %v5116
    %v6365 = vunpack.c.l.b16 %v5117
    %v6366 = vunpack.c.h.b16 %v5117
    %v6367 = vunpack.c.l.b16 %v5118
    %v6368 = vunpack.c.h.b16 %v5118
    %v6369 = vunpack.c.l.b16 %v5119
    %v6370 = vunpack.c.h.b16 %v5119
    %v6371 = vunpack.c.l.b16 %v5120
    %v6372 = vunpack.c.h.b16 %v5120
    %v6373 = vunpack.c.l.b16 %v5121
    %v6374 = vunpack.c.h.b16 %v5121
    %v6375 = vunpack.c.l.b16 %v5122
    %v6376 = vunpack.c.h.b16 %v5122
    %v6377 = vunpack.c.l.b16 %v5123
    %v6378 = vunpack.c.h.b16 %v5123
    %v6379 = vunpack.c.l.b16 %v5124
    %v6380 = vunpack.c.h.b16 %v5124
    %v6381 = vunpack.c.l.b16 %v5125
    %v6382 = vunpack.c.h.b16 %v5125
    %v6383 = vunpack.c.l.b16 %v5126
    %v6384 = vunpack.c.h.b16 %v5126
    %v6385 = vunpack.c.l.b16 %v5127
    %v6386 = vunpack.c.h.b16 %v5127
    %v6387 = vunpack.c.l.b16 %v5128
    %v6388 = vunpack.c.h.b16 %v5128
    %v6389 = vunpack.c.l.b16 %v5129
    %v6390 = vunpack.c.h.b16 %v5129
    %v6391 = vunpack.c.l.b16 %v5130
    %v6392 = vunpack.c.h.b16 %v5130
    %v6393 = vunpack.c.l.b16 %v5131
    %v6394 = vunpack.c.h.b16 %v5131
    %v6395 = vunpack.c.l.b16 %v5132
    %v6396 = vunpack.c.h.b16 %v5132
    %v6397 = vunpack.c.l.b16 %v5133
    %v6398 = vunpack.c.h.b16 %v5133
    %v6399 = vunpack.c.l.b16 %v5134
    %v6400 = vunpack.c.h.b16 %v5134
    %v6401 = vunpack.c.l.b16 %v5135
    %v6402 = vunpack.c.h.b16 %v5135
    %v6403 = vunpack.c.l.b16 %v5136
    %v6404 = vunpack.c.h.b16 %v5136
    %v6405 = vunpack.c.l.b16 %v5137
    %v6406 = vunpack.c.h.b16 %v5137
    %v6407 = vunpack.c.l.b16 %v5138
    %v6408 = vunpack.c.h.b16 %v5138
    %v6409 = vunpack.c.l.b16 %v5139
    %v6410 = vunpack.c.h.b16 %v5139
    %v6411 = vunpack.c.l.b16 %v5140
    %v6412 = vunpack.c.h.b16 %v5140
    %v6413 = vunpack.c.l.b16 %v5141
    %v6414 = vunpack.c.h.b16 %v5141
    %v6415 = vunpack.c.l.b16 %v5142
    %v6416 = vunpack.c.h.b16 %v5142
    %v6417 = vunpack.c.l.b16 %v5143
    %v6418 = vunpack.c.h.b16 %v5143
    %v6419 = vunpack.c.l.b16 %v5144
    %v6420 = vunpack.c.h.b16 %v5144
    %v6421 = vunpack.c.l.b16 %v5145
    %v6422 = vunpack.c.h.b16 %v5145
    %v6423 = vunpack.c.l.b16 %v5146
    %v6424 = vunpack.c.h.b16 %v5146
    %v6425 = vunpack.c.l.b16 %v5147
    %v6426 = vunpack.c.h.b16 %v5147
    %v6427 = vunpack.c.l.b16 %v5148
    %v6428 = vunpack.c.h.b16 %v5148
    %v6429 = vunpack.c.l.b16 %v5149
    %v6430 = vunpack.c.h.b16 %v5149
    %v6431 = vunpack.c.l.b16 %v5150
    %v6432 = vunpack.c.h.b16 %v5150
    %v6433 = vunpack.c.l.b16 %v5151
    %v6434 = vunpack.c.h.b16 %v5151
    %v6435 = vunpack.c.l.b16 %v5152
    %v6436 = vunpack.c.h.b16 %v5152
    %v6437 = vunpack.c.l.b16 %v5153
    %v6438 = vunpack.c.h.b16 %v5153
    %v6439 = vunpack.c.l.b16 %v5154
    %v6440 = vunpack.c.h.b16 %v5154
    %v6441 = vunpack.c.l.b16 %v5155
    %v6442 = vunpack.c.h.b16 %v5155
    %v6443 = vunpack.c.l.b16 %v5156
    %v6444 = vunpack.c.h.b16 %v5156
    %v6445 = vunpack.c.l.b16 %v5157
    %v6446 = vunpack.c.h.b16 %v5157
    %v6447 = vunpack.c.l.b16 %v5158
    %v6448 = vunpack.c.h.b16 %v5158
    %v6449 = vunpack.c.l.b16 %v5159
    %v6450 = vunpack.c.h.b16 %v5159
    %v6451 = vunpack.c.l.b16 %v5160
    %v6452 = vunpack.c.h.b16 %v5160
    %v6453 = vunpack.c.l.b16 %v5161
    %v6454 = vunpack.c.h.b16 %v5161
    %v6455 = vunpack.c.l.b16 %v5162
    %v6456 = vunpack.c.h.b16 %v5162
    %v6457 = vunpack.c.l.b16 %v5163
    %v6458 = vunpack.c.h.b16 %v5163
    %v6459 = vunpack.c.l.b16 %v5164
    %v6460 = vunpack.c.h.b16 %v5164
    %v6461 = vunpack.c.l.b16 %v5165
    %v6462 = vunpack.c.h.b16 %v5165
    %v6463 = vunpack.c.l.b16 %v5166
    %v6464 = vunpack.c.h.b16 %v5166
    %v6465 = vunpack.c.l.b16 %v5167
    %v6466 = vunpack.c.h.b16 %v5167
    %v6467 = vunpack.c.l.b16 %v5168
    %v6468 = vunpack.c.h.b16 %v5168
    %v6469 = vunpack.c.l.b16 %v5169
    %v6470 = vunpack.c.h.b16 %v5169
    %v6471 = vunpack.c.l.b16 %v5170
    %v6472 = vunpack.c.h.b16 %v5170
    %v6473 = vunpack.c.l.b16 %v5171
    %v6474 = vunpack.c.h.b16 %v5171
    %v6475 = vunpack.c.l.b16 %v5172
    %v6476 = vunpack.c.h.b16 %v5172
    %v6477 = vunpack.c.l.b16 %v5173
    %v6478 = vunpack.c.h.b16 %v5173
    %v6479 = vunpack.c.l.b16 %v5174
    %v6480 = vunpack.c.h.b16 %v5174
    %v6481 = vunpack.c.l.b16 %v5175
    %v6482 = vunpack.c.h.b16 %v5175
    %v6483 = vunpack.c.l.b16 %v5176
    %v6484 = vunpack.c.h.b16 %v5176
    %v6485 = vunpack.c.l.b16 %v5177
    %v6486 = vunpack.c.h.b16 %v5177
    %v6487 = vunpack.c.l.b16 %v5178
    %v6488 = vunpack.c.h.b16 %v5178
    %v6489 = vunpack.c.l.b16 %v5179
    %v6490 = vunpack.c.h.b16 %v5179
    %v6491 = vunpack.c.l.b16 %v5180
    %v6492 = vunpack.c.h.b16 %v5180
    %v6493 = vunpack.c.l.b16 %v5181
    %v6494 = vunpack.c.h.b16 %v5181
    %v6495 = vunpack.c.l.b16 %v5182
    %v6496 = vunpack.c.h.b16 %v5182
    %v6497 = vunpack.c.l.b16 %v5183
    %v6498 = vunpack.c.h.b16 %v5183
    %v6499 = vunpack.c.l.b16 %v5184
    %v6500 = vunpack.c.h.b16 %v5184
    %v6501 = vunpack.c.l.b16 %v5185
    %v6502 = vunpack.c.h.b16 %v5185
    %v6503 = vunpack.c.l.b16 %v5186
    %v6504 = vunpack.c.h.b16 %v5186
    %v6505 = vunpack.c.l.b16 %v5187
    %v6506 = vunpack.c.h.b16 %v5187
    %v6507 = vunpack.c.l.b16 %v5188
    %v6508 = vunpack.c.h.b16 %v5188
    %v6509 = vunpack.c.l.b16 %v5189
    %v6510 = vunpack.c.h.b16 %v5189
    %v6511 = vunpack.c.l.b16 %v5190
    %v6512 = vunpack.c.h.b16 %v5190
    %v6513 = vunpack.c.l.b16 %v5191
    %v6514 = vunpack.c.h.b16 %v5191
    %v6515 = vunpack.c.l.b16 %v5192
    %v6516 = vunpack.c.h.b16 %v5192
    %v6517 = vunpack.c.l.b16 %v5193
    %v6518 = vunpack.c.h.b16 %v5193
    %v6519 = vunpack.c.l.b16 %v5194
    %v6520 = vunpack.c.h.b16 %v5194
    %v6521 = vunpack.c.l.b16 %v5195
    %v6522 = vunpack.c.h.b16 %v5195
    %v6523 = vunpack.c.l.b16 %v5196
    %v6524 = vunpack.c.h.b16 %v5196
    %v6525 = vunpack.c.l.b16 %v5197
    %v6526 = vunpack.c.h.b16 %v5197
    %v6527 = vunpack.c.l.b16 %v5198
    %v6528 = vunpack.c.h.b16 %v5198
    %v6529 = vunpack.c.l.b16 %v5199
    %v6530 = vunpack.c.h.b16 %v5199
    %v6531 = vunpack.c.l.b16 %v5200
    %v6532 = vunpack.c.h.b16 %v5200
    %v6533 = vunpack.c.l.b16 %v5201
    %v6534 = vunpack.c.h.b16 %v5201
    %v6535 = vunpack.c.l.b16 %v5202
    %v6536 = vunpack.c.h.b16 %v5202
    %v6537 = vunpack.c.l.b16 %v5203
    %v6538 = vunpack.c.h.b16 %v5203
    %v6539 = vunpack.c.l.b16 %v5204
    %v6540 = vunpack.c.h.b16 %v5204
    %v6541 = vunpack.c.l.b16 %v5205
    %v6542 = vunpack.c.h.b16 %v5205
    %v6543 = vunpack.c.l.b16 %v5206
    %v6544 = vunpack.c.h.b16 %v5206
    %v6545 = vunpack.c.l.b16 %v5207
    %v6546 = vunpack.c.h.b16 %v5207
    %v6547 = vunpack.c.l.b16 %v5208
    %v6548 = vunpack.c.h.b16 %v5208
    %v6549 = vunpack.c.l.b16 %v5209
    %v6550 = vunpack.c.h.b16 %v5209
    %v6551 = vunpack.c.l.b16 %v5210
    %v6552 = vunpack.c.h.b16 %v5210
    %v6553 = vunpack.c.l.b16 %v5211
    %v6554 = vunpack.c.h.b16 %v5211
    %v6555 = vunpack.c.l.b16 %v5212
    %v6556 = vunpack.c.h.b16 %v5212
    %v6557 = vunpack.c.l.b16 %v5213
    %v6558 = vunpack.c.h.b16 %v5213
    %v6559 = vunpack.c.l.b16 %v5214
    %v6560 = vunpack.c.h.b16 %v5214
    %v6561 = vunpack.c.l.b16 %v5215
    %v6562 = vunpack.c.h.b16 %v5215
    %v6563 = vunpack.c.l.b16 %v5216
    %v6564 = vunpack.c.h.b16 %v5216
    %v6565 = vunpack.c.l.b16 %v5217
    %v6566 = vunpack.c.h.b16 %v5217
    %v6567 = vunpack.c.l.b16 %v5218
    %v6568 = vunpack.c.h.b16 %v5218
    %v6569 = vunpack.c.l.b16 %v5219
    %v6570 = vunpack.c.h.b16 %v5219
    %v6571 = vunpack.c.l.b16 %v5220
    %v6572 = vunpack.c.h.b16 %v5220
    %v6573 = vunpack.c.l.b16 %v5221
    %v6574 = vunpack.c.h.b16 %v5221
    %v6575 = vunpack.c.l.b16 %v5222
    %v6576 = vunpack.c.h.b16 %v5222
    %v6577 = vunpack.c.l.b16 %v5223
    %v6578 = vunpack.c.h.b16 %v5223
    %v6579 = vunpack.c.l.b16 %v5224
    %v6580 = vunpack.c.h.b16 %v5224
    %v6581 = vunpack.c.l.b16 %v5225
    %v6582 = vunpack.c.h.b16 %v5225
    %v6583 = vunpack.c.l.b16 %v5226
    %v6584 = vunpack.c.h.b16 %v5226
    %v6585 = vunpack.c.l.b16 %v5227
    %v6586 = vunpack.c.h.b16 %v5227
    %v6587 = vunpack.c.l.b16 %v5228
    %v6588 = vunpack.c.h.b16 %v5228
    %v6589 = vunpack.c.l.b16 %v5229
    %v6590 = vunpack.c.h.b16 %v5229
    %v6591 = vunpack.c.l.b16 %v5230
    %v6592 = vunpack.c.h.b16 %v5230
    %v6593 = vunpack.c.l.b16 %v5231
    %v6594 = vunpack.c.h.b16 %v5231
    %v6595 = vunpack.c.l.b16 %v5232
    %v6596 = vunpack.c.h.b16 %v5232
    %v6597 = vunpack.c.l.b16 %v5233
    %v6598 = vunpack.c.h.b16 %v5233
    %v6599 = vunpack.c.l.b16 %v5234
    %v6600 = vunpack.c.h.b16 %v5234
    %v6601 = vunpack.c.l.b16 %v5235
    %v6602 = vunpack.c.h.b16 %v5235
    %v6603 = vunpack.c.l.b16 %v5236
    %v6604 = vunpack.c.h.b16 %v5236
    %v6605 = vunpack.c.l.b16 %v5237
    %v6606 = vunpack.c.h.b16 %v5237
    %v6607 = vunpack.c.l.b16 %v5238
    %v6608 = vunpack.c.h.b16 %v5238
    %v6609 = vunpack.c.l.b16 %v5239
    %v6610 = vunpack.c.h.b16 %v5239
    %v6611 = vunpack.c.l.b16 %v5240
    %v6612 = vunpack.c.h.b16 %v5240
    %v6613 = vunpack.c.l.b16 %v5241
    %v6614 = vunpack.c.h.b16 %v5241
    %v6615 = vunpack.c.l.b16 %v5242
    %v6616 = vunpack.c.h.b16 %v5242
    %v6617 = vunpack.c.l.b16 %v5243
    %v6618 = vunpack.c.h.b16 %v5243
    %v6619 = vunpack.c.l.b16 %v5244
    %v6620 = vunpack.c.h.b16 %v5244
    %v6621 = vunpack.c.l.b16 %v5245
    %v6622 = vunpack.c.h.b16 %v5245
    %v6623 = vunpack.c.l.b16 %v5246
    %v6624 = vunpack.c.h.b16 %v5246
    %v6625 = vunpack.c.l.b16 %v5247
    %v6626 = vunpack.c.h.b16 %v5247
    %v6627 = vunpack.c.l.b16 %v5248
    %v6628 = vunpack.c.h.b16 %v5248
    %v6629 = vunpack.c.l.b16 %v5249
    %v6630 = vunpack.c.h.b16 %v5249
    %v6631 = vunpack.c.l.b16 %v5250
    %v6632 = vunpack.c.h.b16 %v5250
    %v6633 = vunpack.c.l.b16 %v5251
    %v6634 = vunpack.c.h.b16 %v5251
    %v6635 = vunpack.c.l.b16 %v5252
    %v6636 = vunpack.c.h.b16 %v5252
    %v6637 = vunpack.c.l.b16 %v5253
    %v6638 = vunpack.c.h.b16 %v5253
    %v6639 = vunpack.c.l.b16 %v5254
    %v6640 = vunpack.c.h.b16 %v5254
    %v6641 = vunpack.c.l.b16 %v5255
    %v6642 = vunpack.c.h.b16 %v5255
    %v6643 = vunpack.c.l.b16 %v5256
    %v6644 = vunpack.c.h.b16 %v5256
    %v6645 = vunpack.c.l.b16 %v5257
    %v6646 = vunpack.c.h.b16 %v5257
    %v6647 = vunpack.c.l.b16 %v5258
    %v6648 = vunpack.c.h.b16 %v5258
    %v6649 = vunpack.c.l.b16 %v5259
    %v6650 = vunpack.c.h.b16 %v5259
    %v6651 = vunpack.c.l.b16 %v5260
    %v6652 = vunpack.c.h.b16 %v5260
    %v6653 = vunpack.c.l.b16 %v5261
    %v6654 = vunpack.c.h.b16 %v5261
    %v6655 = vunpack.c.l.b16 %v5262
    %v6656 = vunpack.c.h.b16 %v5262
    %v6657 = vunpack.c.l.b16 %v5263
    %v6658 = vunpack.c.h.b16 %v5263
    %v6659 = vunpack.c.l.b16 %v5264
    %v6660 = vunpack.c.h.b16 %v5264
    %v6661 = vunpack.c.l.b16 %v5265
    %v6662 = vunpack.c.h.b16 %v5265
    %v6663 = vunpack.c.l.b16 %v5266
    %v6664 = vunpack.c.h.b16 %v5266
    %v6665 = vunpack.c.l.b16 %v5267
    %v6666 = vunpack.c.h.b16 %v5267
    %v6667 = vunpack.c.l.b16 %v5268
    %v6668 = vunpack.c.h.b16 %v5268
    %v6669 = vunpack.c.l.b16 %v5269
    %v6670 = vunpack.c.h.b16 %v5269
    %v6671 = vunpack.c.l.b16 %v5270
    %v6672 = vunpack.c.h.b16 %v5270
    %v6673 = vunpack.c.l.b16 %v5271
    %v6674 = vunpack.c.h.b16 %v5271
    %v6675 = vunpack.c.l.b16 %v5272
    %v6676 = vunpack.c.h.b16 %v5272
    %v6677 = vunpack.c.l.b16 %v5273
    %v6678 = vunpack.c.h.b16 %v5273
    %v6679 = vunpack.c.l.b16 %v5274
    %v6680 = vunpack.c.h.b16 %v5274
    %v6681 = vunpack.c.l.b16 %v5275
    %v6682 = vunpack.c.h.b16 %v5275
    %v6683 = vunpack.c.l.b16 %v5276
    %v6684 = vunpack.c.h.b16 %v5276
    %v6685 = vunpack.c.l.b16 %v5277
    %v6686 = vunpack.c.h.b16 %v5277
    %v6687 = vunpack.c.l.b16 %v5278
    %v6688 = vunpack.c.h.b16 %v5278
    %v6689 = vunpack.c.l.b16 %v5279
    %v6690 = vunpack.c.h.b16 %v5279
    %v6691 = vunpack.c.l.b16 %v5280
    %v6692 = vunpack.c.h.b16 %v5280
    %v6693 = vunpack.c.l.b16 %v5281
    %v6694 = vunpack.c.h.b16 %v5281
    %v6695 = vunpack.c.l.b16 %v5282
    %v6696 = vunpack.c.h.b16 %v5282
    %v6697 = vunpack.c.l.b16 %v5283
    %v6698 = vunpack.c.h.b16 %v5283
    %v6699 = vunpack.c.l.b16 %v5284
    %v6700 = vunpack.c.h.b16 %v5284
    %v6701 = vunpack.c.l.b16 %v5285
    %v6702 = vunpack.c.h.b16 %v5285
    %v6703 = vunpack.c.l.b16 %v5286
    %v6704 = vunpack.c.h.b16 %v5286
    %v6705 = vunpack.c.l.b16 %v5287
    %v6706 = vunpack.c.h.b16 %v5287
    %v6707 = vunpack.c.l.b16 %v5288
    %v6708 = vunpack.c.h.b16 %v5288
    %v6709 = vunpack.c.l.b16 %v5289
    %v6710 = vunpack.c.h.b16 %v5289
    %v6711 = vunpack.c.l.b16 %v5290
    %v6712 = vunpack.c.h.b16 %v5290
    %v6713 = vunpack.c.l.b16 %v5291
    %v6714 = vunpack.c.h.b16 %v5291
    %v6715 = vunpack.c.l.b16 %v5292
    %v6716 = vunpack.c.h.b16 %v5292
    %v6717 = vunpack.c.l.b16 %v5293
    %v6718 = vunpack.c.h.b16 %v5293
    %v6719 = vunpack.c.l.b16 %v5294
    %v6720 = vunpack.c.h.b16 %v5294
    %v6721 = vunpack.c.l.b16 %v5295
    %v6722 = vunpack.c.h.b16 %v5295
    %v6723 = vunpack.c.l.b16 %v5296
    %v6724 = vunpack.c.h.b16 %v5296
    %v6725 = vunpack.c.l.b16 %v5297
    %v6726 = vunpack.c.h.b16 %v5297
    %v6727 = vunpack.c.l.b16 %v5298
    %v6728 = vunpack.c.h.b16 %v5298
    %v6729 = vunpack.c.l.b16 %v5299
    %v6730 = vunpack.c.h.b16 %v5299
    %v6731 = vunpack.c.l.b16 %v5300
    %v6732 = vunpack.c.h.b16 %v5300
    %v6733 = vunpack.c.l.b16 %v5301
    %v6734 = vunpack.c.h.b16 %v5301
    %v6735 = vunpack.c.l.b16 %v5302
    %v6736 = vunpack.c.h.b16 %v5302
    %v6737 = vunpack.c.l.b16 %v5303
    %v6738 = vunpack.c.h.b16 %v5303
    %v6739 = vunpack.c.l.b16 %v5304
    %v6740 = vunpack.c.h.b16 %v5304
    %v6741 = vunpack.c.l.b16 %v5305
    %v6742 = vunpack.c.h.b16 %v5305
    %v6743 = vunpack.c.l.b16 %v5306
    %v6744 = vunpack.c.h.b16 %v5306
    %v6745 = vunpack.c.l.b16 %v5307
    %v6746 = vunpack.c.h.b16 %v5307
    %v6747 = vunpack.c.l.b16 %v5308
    %v6748 = vunpack.c.h.b16 %v5308
    %v6749 = vunpack.c.l.b16 %v5309
    %v6750 = vunpack.c.h.b16 %v5309
    %v6751 = vunpack.c.l.b16 %v5310
    %v6752 = vunpack.c.h.b16 %v5310
    %v6753 = vunpack.c.l.b16 %v5311
    %v6754 = vunpack.c.h.b16 %v5311
    %v6755 = vunpack.c.l.b16 %v5312
    %v6756 = vunpack.c.h.b16 %v5312
    %v6757 = vunpack.c.l.b16 %v5313
    %v6758 = vunpack.c.h.b16 %v5313
    %v6759 = vunpack.c.l.b16 %v5314
    %v6760 = vunpack.c.h.b16 %v5314
    %v6761 = vunpack.c.l.b16 %v5315
    %v6762 = vunpack.c.h.b16 %v5315
    %v6763 = vunpack.c.l.b16 %v5316
    %v6764 = vunpack.c.h.b16 %v5316
    %v6765 = vunpack.c.l.b16 %v5317
    %v6766 = vunpack.c.h.b16 %v5317
    %v6767 = vunpack.c.l.b16 %v5318
    %v6768 = vunpack.c.h.b16 %v5318
    %v6769 = vunpack.c.l.b16 %v5319
    %v6770 = vunpack.c.h.b16 %v5319
    %v6771 = vunpack.c.l.b16 %v5320
    %v6772 = vunpack.c.h.b16 %v5320
    %v6773 = vunpack.c.l.b16 %v5321
    %v6774 = vunpack.c.h.b16 %v5321
    %v6775 = vunpack.c.l.b16 %v5322
    %v6776 = vunpack.c.h.b16 %v5322
    %v6777 = vunpack.c.l.b16 %v5323
    %v6778 = vunpack.c.h.b16 %v5323
    %v6779 = vunpack.c.l.b16 %v5324
    %v6780 = vunpack.c.h.b16 %v5324
    %v6781 = vunpack.c.l.b16 %v5325
    %v6782 = vunpack.c.h.b16 %v5325
    %v6783 = vunpack.c.l.b16 %v5326
    %v6784 = vunpack.c.h.b16 %v5326
    %v6785 = vunpack.c.l.b16 %v5327
    %v6786 = vunpack.c.h.b16 %v5327
    %v6787 = vunpack.c.l.b16 %v5328
    %v6788 = vunpack.c.h.b16 %v5328
    %v6789 = vunpack.c.l.b16 %v5329
    %v6790 = vunpack.c.h.b16 %v5329
    %v6791 = vunpack.c.l.b16 %v5330
    %v6792 = vunpack.c.h.b16 %v5330
    %v6793 = vunpack.c.l.b16 %v5331
    %v6794 = vunpack.c.h.b16 %v5331
    %v6795 = vunpack.c.l.b16 %v5332
    %v6796 = vunpack.c.h.b16 %v5332
    %v6797 = vunpack.c.l.b16 %v5333
    %v6798 = vunpack.c.h.b16 %v5333
    %v6799 = vunpack.c.l.b16 %v5334
    %v6800 = vunpack.c.h.b16 %v5334
    %v6801 = vunpack.c.l.b16 %v5335
    %v6802 = vunpack.c.h.b16 %v5335
    %v6803 = vunpack.c.l.b16 %v5336
    %v6804 = vunpack.c.h.b16 %v5336
    %v6805 = vunpack.c.l.b16 %v5337
    %v6806 = vunpack.c.h.b16 %v5337
    %v6807 = vunpack.c.l.b16 %v5338
    %v6808 = vunpack.c.h.b16 %v5338
    %v6809 = vunpack.c.l.b16 %v5339
    %v6810 = vunpack.c.h.b16 %v5339
    %v6811 = vunpack.c.l.b16 %v5340
    %v6812 = vunpack.c.h.b16 %v5340
    %v6813 = vunpack.c.l.b16 %v5341
    %v6814 = vunpack.c.h.b16 %v5341
    %v6815 = vunpack.c.l.b16 %v5342
    %v6816 = vunpack.c.h.b16 %v5342
    %v6817 = vunpack.c.l.b16 %v5343
    %v6818 = vunpack.c.h.b16 %v5343
    %v6819 = vunpack.c.l.b16 %v5344
    %v6820 = vunpack.c.h.b16 %v5344
    %v6821 = vunpack.c.l.b16 %v5345
    %v6822 = vunpack.c.h.b16 %v5345
    %v6823 = vunpack.c.l.b16 %v5346
    %v6824 = vunpack.c.h.b16 %v5346
    %v6825 = vunpack.c.l.b16 %v5347
    %v6826 = vunpack.c.h.b16 %v5347
    %v6827 = vunpack.c.l.b16 %v5348
    %v6828 = vunpack.c.h.b16 %v5348
    %v6829 = vunpack.c.l.b16 %v5349
    %v6830 = vunpack.c.h.b16 %v5349
    %v6831 = vunpack.c.l.b16 %v5350
    %v6832 = vunpack.c.h.b16 %v5350
    %v6833 = vunpack.c.l.b16 %v5351
    %v6834 = vunpack.c.h.b16 %v5351
    %v6835 = vunpack.c.l.b16 %v5352
    %v6836 = vunpack.c.h.b16 %v5352
    %v6837 = vunpack.c.l.b16 %v5353
    %v6838 = vunpack.c.h.b16 %v5353
    %v6839 = vunpack.c.l.b16 %v5354
    %v6840 = vunpack.c.h.b16 %v5354
    %v6841 = vunpack.c.l.b16 %v5355
    %v6842 = vunpack.c.h.b16 %v5355
    %v6843 = vunpack.c.l.b16 %v5356
    %v6844 = vunpack.c.h.b16 %v5356
    %v6845 = vunpack.c.l.b16 %v5357
    %v6846 = vunpack.c.h.b16 %v5357
    %v6847 = vunpack.c.l.b16 %v5358
    %v6848 = vunpack.c.h.b16 %v5358
    %v6849 = vunpack.c.l.b16 %v5359
    %v6850 = vunpack.c.h.b16 %v5359
    %v6851 = vunpack.c.l.b16 %v5360
    %v6852 = vunpack.c.h.b16 %v5360
    %v6853 = vunpack.c.l.b16 %v5361
    %v6854 = vunpack.c.h.b16 %v5361
    %v6855 = vunpack.c.l.b16 %v5362
    %v6856 = vunpack.c.h.b16 %v5362
    %v6857 = vunpack.c.l.b16 %v5363
    %v6858 = vunpack.c.h.b16 %v5363
    %v6859 = vunpack.c.l.b16 %v5364
    %v6860 = vunpack.c.h.b16 %v5364
    %v6861 = vunpack.c.l.b16 %v5365
    %v6862 = vunpack.c.h.b16 %v5365
    %v6863 = vunpack.c.l.b16 %v5366
    %v6864 = vunpack.c.h.b16 %v5366
    %v6865 = vunpack.c.l.b16 %v5367
    %v6866 = vunpack.c.h.b16 %v5367
    %v6867 = vunpack.c.l.b16 %v5368
    %v6868 = vunpack.c.h.b16 %v5368
    %v6869 = vunpack.c.l.b16 %v5369
    %v6870 = vunpack.c.h.b16 %v5369
    %v6871 = vunpack.c.l.b16 %v5370
    %v6872 = vunpack.c.h.b16 %v5370
    %v6873 = vunpack.c.l.b16 %v5371
    %v6874 = vunpack.c.h.b16 %v5371
    %v6875 = vunpack.c.l.b16 %v5372
    %v6876 = vunpack.c.h.b16 %v5372
    %v6877 = vunpack.c.l.b16 %v5373
    %v6878 = vunpack.c.h.b16 %v5373
    %v6879 = vunpack.c.l.b16 %v5374
    %v6880 = vunpack.c.h.b16 %v5374
    %v6881 = vunpack.c.l.b16 %v5375
    %v6882 = vunpack.c.h.b16 %v5375
    %v6883 = vunpack.c.l.b16 %v5376
    %v6884 = vunpack.c.h.b16 %v5376
    %v6885 = vunpack.c.l.b16 %v5377
    %v6886 = vunpack.c.h.b16 %v5377
    %v6887 = vunpack.c.l.b16 %v5378
    %v6888 = vunpack.c.h.b16 %v5378
    %v6889 = vunpack.c.l.b16 %v5379
    %v6890 = vunpack.c.h.b16 %v5379
    %v6891 = vunpack.c.l.b16 %v5380
    %v6892 = vunpack.c.h.b16 %v5380
    %v6893 = vunpack.c.l.b16 %v5381
    %v6894 = vunpack.c.h.b16 %v5381
    %v6895 = vunpack.c.l.b16 %v5382
    %v6896 = vunpack.c.h.b16 %v5382
    %v6897 = vunpack.c.l.b16 %v5383
    %v6898 = vunpack.c.h.b16 %v5383
    %v6899 = vunpack.c.l.b16 %v5384
    %v6900 = vunpack.c.h.b16 %v5384
    %v6901 = vunpack.c.l.b16 %v5385
    %v6902 = vunpack.c.h.b16 %v5385
    %v6903 = vunpack.c.l.b16 %v5386
    %v6904 = vunpack.c.h.b16 %v5386
    %v6905 = vunpack.c.l.b16 %v5387
    %v6906 = vunpack.c.h.b16 %v5387
    %v6907 = vunpack.c.l.b16 %v5388
    %v6908 = vunpack.c.h.b16 %v5388
    %v6909 = vunpack.c.l.b16 %v5389
    %v6910 = vunpack.c.h.b16 %v5389
    %v6911 = vunpack.c.l.b16 %v5390
    %v6912 = vunpack.c.h.b16 %v5390
    %v6913 = vunpack.c.l.b16 %v5391
    %v6914 = vunpack.c.h.b16 %v5391
    %v6915 = vunpack.c.l.b16 %v5392
    %v6916 = vunpack.c.h.b16 %v5392
    %v6917 = vunpack.c.l.b16 %v5393
    %v6918 = vunpack.c.h.b16 %v5393
    %v6919 = vunpack.c.l.b16 %v5394
    %v6920 = vunpack.c.h.b16 %v5394
    %v6921 = vunpack.c.l.b16 %v5395
    %v6922 = vunpack.c.h.b16 %v5395
    %v6923 = vunpack.c.l.b16 %v5396
    %v6924 = vunpack.c.h.b16 %v5396
    %v6925 = vunpack.c.l.b16 %v5397
    %v6926 = vunpack.c.h.b16 %v5397
    %v6927 = vunpack.c.l.b16 %v5398
    %v6928 = vunpack.c.h.b16 %v5398
    %v6929 = vunpack.c.l.b16 %v5399
    %v6930 = vunpack.c.h.b16 %v5399
    %v6931 = vunpack.c.l.b16 %v5400
    %v6932 = vunpack.c.h.b16 %v5400
    %v6933 = vunpack.c.l.b16 %v5401
    %v6934 = vunpack.c.h.b16 %v5401
    %v6935 = vunpack.c.l.b16 %v5402
    %v6936 = vunpack.c.h.b16 %v5402
    %v6937 = vunpack.c.l.b16 %v5403
    %v6938 = vunpack.c.h.b16 %v5403
    %v6939 = vunpack.c.l.b16 %v5404
    %v6940 = vunpack.c.h.b16 %v5404
    %v6941 = vpack.c.b16 %v5933, %v5917
    %v6942 = vpack.c.b16 %v5934, %v5918
    %v6943 = vpack.c.b16 %v5935, %v5919
    %v6944 = vpack.c.b16 %v5936, %v5920
    %v6945 = vpack.c.b16 %v5937, %v5921
    %v6946 = vpack.c.b16 %v5938, %v5922
    %v6947 = vpack.c.b16 %v5939, %v5923
    %v6948 = vpack.c.b16 %v5940, %v5924
    %v6949 = vpack.c.b16 %v5941, %v5925
    %v6950 = vpack.c.b16 %v5942, %v5926
    %v6951 = vpack.c.b16 %v5943, %v5927
    %v6952 = vpack.c.b16 %v5944, %v5928
    %v6953 = vpack.c.b16 %v5945, %v5929
    %v6954 = vpack.c.b16 %v5946, %v5930
    %v6955 = vpack.c.b16 %v5947, %v5931
    %v6956 = vpack.c.b16 %v5948, %v5932
    %v6957 = vpack.c.b16 %v5965, %v5949
    %v6958 = vpack.c.b16 %v5966, %v5950
    %v6959 = vpack.c.b16 %v5967, %v5951
    %v6960 = vpack.c.b16 %v5968, %v5952
    %v6961 = vpack.c.b16 %v5969, %v5953
    %v6962 = vpack.c.b16 %v5970, %v5954
    %v6963 = vpack.c.b16 %v5971, %v5955
    %v6964 = vpack.c.b16 %v5972, %v5956
    %v6965 = vpack.c.b16 %v5973, %v5957
    %v6966 = vpack.c.b16 %v5974, %v5958
    %v6967 = vpack.c.b16 %v5975, %v5959
    %v6968 = vpack.c.b16 %v5976, %v5960
    %v6969 = vpack.c.b16 %v5977, %v5961
    %v6970 = vpack.c.b16 %v5978, %v5962
    %v6971 = vpack.c.b16 %v5979, %v5963
    %v6972 = vpack.c.b16 %v5980, %v5964
    %v6973 = vpack.c.b16 %v5997, %v5981
    %v6974 = vpack.c.b16 %v5998, %v5982
    %v6975 = vpack.c.b16 %v5999, %v5983
    %v6976 = vpack.c.b16 %v6000, %v5984
    %v6977 = vpack.c.b16 %v6001, %v5985
    %v6978 = vpack.c.b16 %v6002, %v5986
    %v6979 = vpack.c.b16 %v6003, %v5987
    %v6980 = vpack.c.b16 %v6004, %v5988
    %v6981 = vpack.c.b16 %v6005, %v5989
    %v6982 = vpack.c.b16 %v6006, %v5990
    %v6983 = vpack.c.b16 %v6007, %v5991
    %v6984 = vpack.c.b16 %v6008, %v5992
    %v6985 = vpack.c.b16 %v6009, %v5993
    %v6986 = vpack.c.b16 %v6010, %v5994
    %v6987 = vpack.c.b16 %v6011, %v5995
    %v6988 = vpack.c.b16 %v6012, %v5996
    %v6989 = vpack.c.b16 %v6029, %v6013
    %v6990 = vpack.c.b16 %v6030, %v6014
    %v6991 = vpack.c.b16 %v6031, %v6015
    %v6992 = vpack.c.b16 %v6032, %v6016
    %v6993 = vpack.c.b16 %v6033, %v6017
    %v6994 = vpack.c.b16 %v6034, %v6018
    %v6995 = vpack.c.b16 %v6035, %v6019
    %v6996 = vpack.c.b16 %v6036, %v6020
    %v6997 = vpack.c.b16 %v6037, %v6021
    %v6998 = vpack.c.b16 %v6038, %v6022
    %v6999 = vpack.c.b16 %v6039, %v6023
    %v7000 = vpack.c.b16 %v6040, %v6024
    %v7001 = vpack.c.b16 %v6041, %v6025
    %v7002 = vpack.c.b16 %v6042, %v6026
    %v7003 = vpack.c.b16 %v6043, %v6027
    %v7004 = vpack.c.b16 %v6044, %v6028
    %v7005 = vpack.c.b16 %v6061, %v6045
    %v7006 = vpack.c.b16 %v6062, %v6046
    %v7007 = vpack.c.b16 %v6063, %v6047
    %v7008 = vpack.c.b16 %v6064, %v6048
    %v7009 = vpack.c.b16 %v6065, %v6049
    %v7010 = vpack.c.b16 %v6066, %v6050
    %v7011 = vpack.c.b16 %v6067, %v6051
    %v7012 = vpack.c.b16 %v6068, %v6052
    %v7013 = vpack.c.b16 %v6069, %v6053
    %v7014 = vpack.c.b16 %v6070, %v6054
    %v7015 = vpack.c.b16 %v6071, %v6055
    %v7016 = vpack.c.b16 %v6072, %v6056
    %v7017 = vpack.c.b16 %v6073, %v6057
    %v7018 = vpack.c.b16 %v6074, %v6058
    %v7019 = vpack.c.b16 %v6075, %v6059
    %v7020 = vpack.c.b16 %v6076, %v6060
    %v7021 = vpack.c.b16 %v6093, %v6077
    %v7022 = vpack.c.b16 %v6094, %v6078
    %v7023 = vpack.c.b16 %v6095, %v6079
    %v7024 = vpack.c.b16 %v6096, %v6080
    %v7025 = vpack.c.b16 %v6097, %v6081
    %v7026 = vpack.c.b16 %v6098, %v6082
    %v7027 = vpack.c.b16 %v6099, %v6083
    %v7028 = vpack.c.b16 %v6100, %v6084
    %v7029 = vpack.c.b16 %v6101, %v6085
    %v7030 = vpack.c.b16 %v6102, %v6086
    %v7031 = vpack.c.b16 %v6103, %v6087
    %v7032 = vpack.c.b16 %v6104, %v6088
    %v7033 = vpack.c.b16 %v6105, %v6089
    %v7034 = vpack.c.b16 %v6106, %v6090
    %v7035 = vpack.c.b16 %v6107, %v6091
    %v7036 = vpack.c.b16 %v6108, %v6092
    %v7037 = vpack.c.b16 %v6125, %v6109
    %v7038 = vpack.c.b16 %v6126, %v6110
    %v7039 = vpack.c.b16 %v6127, %v6111
    %v7040 = vpack.c.b16 %v6128, %v6112
    %v7041 = vpack.c.b16 %v6129, %v6113
    %v7042 = vpack.c.b16 %v6130, %v6114
    %v7043 = vpack.c.b16 %v6131, %v6115
    %v7044 = vpack.c.b16 %v6132, %v6116
    %v7045 = vpack.c.b16 %v6133, %v6117
    %v7046 = vpack.c.b16 %v6134, %v6118
    %v7047 = vpack.c.b16 %v6135, %v6119
    %v7048 = vpack.c.b16 %v6136, %v6120
    %v7049 = vpack.c.b16 %v6137, %v6121
    %v7050 = vpack.c.b16 %v6138, %v6122
    %v7051 = vpack.c.b16 %v6139, %v6123
    %v7052 = vpack.c.b16 %v6140, %v6124
    %v7053 = vpack.c.b16 %v6157, %v6141
    %v7054 = vpack.c.b16 %v6158, %v6142
    %v7055 = vpack.c.b16 %v6159, %v6143
    %v7056 = vpack.c.b16 %v6160, %v6144
    %v7057 = vpack.c.b16 %v6161, %v6145
    %v7058 = vpack.c.b16 %v6162, %v6146
    %v7059 = vpack.c.b16 %v6163, %v6147
    %v7060 = vpack.c.b16 %v6164, %v6148
    %v7061 = vpack.c.b16 %v6165, %v6149
    %v7062 = vpack.c.b16 %v6166, %v6150
    %v7063 = vpack.c.b16 %v6167, %v6151
    %v7064 = vpack.c.b16 %v6168, %v6152
    %v7065 = vpack.c.b16 %v6169, %v6153
    %v7066 = vpack.c.b16 %v6170, %v6154
    %v7067 = vpack.c.b16 %v6171, %v6155
    %v7068 = vpack.c.b16 %v6172, %v6156
    %v7069 = vpack.c.b16 %v6189, %v6173
    %v7070 = vpack.c.b16 %v6190, %v6174
    %v7071 = vpack.c.b16 %v6191, %v6175
    %v7072 = vpack.c.b16 %v6192, %v6176
    %v7073 = vpack.c.b16 %v6193, %v6177
    %v7074 = vpack.c.b16 %v6194, %v6178
    %v7075 = vpack.c.b16 %v6195, %v6179
    %v7076 = vpack.c.b16 %v6196, %v6180
    %v7077 = vpack.c.b16 %v6197, %v6181
    %v7078 = vpack.c.b16 %v6198, %v6182
    %v7079 = vpack.c.b16 %v6199, %v6183
    %v7080 = vpack.c.b16 %v6200, %v6184
    %v7081 = vpack.c.b16 %v6201, %v6185
    %v7082 = vpack.c.b16 %v6202, %v6186
    %v7083 = vpack.c.b16 %v6203, %v6187
    %v7084 = vpack.c.b16 %v6204, %v6188
    %v7085 = vpack.c.b16 %v6221, %v6205
    %v7086 = vpack.c.b16 %v6222, %v6206
    %v7087 = vpack.c.b16 %v6223, %v6207
    %v7088 = vpack.c.b16 %v6224, %v6208
    %v7089 = vpack.c.b16 %v6225, %v6209
    %v7090 = vpack.c.b16 %v6226, %v6210
    %v7091 = vpack.c.b16 %v6227, %v6211
    %v7092 = vpack.c.b16 %v6228, %v6212
    %v7093 = vpack.c.b16 %v6229, %v6213
    %v7094 = vpack.c.b16 %v6230, %v6214
    %v7095 = vpack.c.b16 %v6231, %v6215
    %v7096 = vpack.c.b16 %v6232, %v6216
    %v7097 = vpack.c.b16 %v6233, %v6217
    %v7098 = vpack.c.b16 %v6234, %v6218
    %v7099 = vpack.c.b16 %v6235, %v6219
    %v7100 = vpack.c.b16 %v6236, %v6220
    %v7101 = vpack.c.b16 %v6253, %v6237
    %v7102 = vpack.c.b16 %v6254, %v6238
    %v7103 = vpack.c.b16 %v6255, %v6239
    %v7104 = vpack.c.b16 %v6256, %v6240
    %v7105 = vpack.c.b16 %v6257, %v6241
    %v7106 = vpack.c.b16 %v6258, %v6242
    %v7107 = vpack.c.b16 %v6259, %v6243
    %v7108 = vpack.c.b16 %v6260, %v6244
    %v7109 = vpack.c.b16 %v6261, %v6245
    %v7110 = vpack.c.b16 %v6262, %v6246
    %v7111 = vpack.c.b16 %v6263, %v6247
    %v7112 = vpack.c.b16 %v6264, %v6248
    %v7113 = vpack.c.b16 %v6265, %v6249
    %v7114 = vpack.c.b16 %v6266, %v6250
    %v7115 = vpack.c.b16 %v6267, %v6251
    %v7116 = vpack.c.b16 %v6268, %v6252
    %v7117 = vpack.c.b16 %v6285, %v6269
    %v7118 = vpack.c.b16 %v6286, %v6270
    %v7119 = vpack.c.b16 %v6287, %v6271
    %v7120 = vpack.c.b16 %v6288, %v6272
    %v7121 = vpack.c.b16 %v6289, %v6273
    %v7122 = vpack.c.b16 %v6290, %v6274
    %v7123 = vpack.c.b16 %v6291, %v6275
    %v7124 = vpack.c.b16 %v6292, %v6276
    %v7125 = vpack.c.b16 %v6293, %v6277
    %v7126 = vpack.c.b16 %v6294, %v6278
    %v7127 = vpack.c.b16 %v6295, %v6279
    %v7128 = vpack.c.b16 %v6296, %v6280
    %v7129 = vpack.c.b16 %v6297, %v6281
    %v7130 = vpack.c.b16 %v6298, %v6282
    %v7131 = vpack.c.b16 %v6299, %v6283
    %v7132 = vpack.c.b16 %v6300, %v6284
    %v7133 = vpack.c.b16 %v6317, %v6301
    %v7134 = vpack.c.b16 %v6318, %v6302
    %v7135 = vpack.c.b16 %v6319, %v6303
    %v7136 = vpack.c.b16 %v6320, %v6304
    %v7137 = vpack.c.b16 %v6321, %v6305
    %v7138 = vpack.c.b16 %v6322, %v6306
    %v7139 = vpack.c.b16 %v6323, %v6307
    %v7140 = vpack.c.b16 %v6324, %v6308
    %v7141 = vpack.c.b16 %v6325, %v6309
    %v7142 = vpack.c.b16 %v6326, %v6310
    %v7143 = vpack.c.b16 %v6327, %v6311
    %v7144 = vpack.c.b16 %v6328, %v6312
    %v7145 = vpack.c.b16 %v6329, %v6313
    %v7146 = vpack.c.b16 %v6330, %v6314
    %v7147 = vpack.c.b16 %v6331, %v6315
    %v7148 = vpack.c.b16 %v6332, %v6316
    %v7149 = vpack.c.b16 %v6349, %v6333
    %v7150 = vpack.c.b16 %v6350, %v6334
    %v7151 = vpack.c.b16 %v6351, %v6335
    %v7152 = vpack.c.b16 %v6352, %v6336
    %v7153 = vpack.c.b16 %v6353, %v6337
    %v7154 = vpack.c.b16 %v6354, %v6338
    %v7155 = vpack.c.b16 %v6355, %v6339
    %v7156 = vpack.c.b16 %v6356, %v6340
    %v7157 = vpack.c.b16 %v6357, %v6341
    %v7158 = vpack.c.b16 %v6358, %v6342
    %v7159 = vpack.c.b16 %v6359, %v6343
    %v7160 = vpack.c.b16 %v6360, %v6344
    %v7161 = vpack.c.b16 %v6361, %v6345
    %v7162 = vpack.c.b16 %v6362, %v6346
    %v7163 = vpack.c.b16 %v6363, %v6347
    %v7164 = vpack.c.b16 %v6364, %v6348
    %v7165 = vpack.c.b16 %v6381, %v6365
    %v7166 = vpack.c.b16 %v6382, %v6366
    %v7167 = vpack.c.b16 %v6383, %v6367
    %v7168 = vpack.c.b16 %v6384, %v6368
    %v7169 = vpack.c.b16 %v6385, %v6369
    %v7170 = vpack.c.b16 %v6386, %v6370
    %v7171 = vpack.c.b16 %v6387, %v6371
    %v7172 = vpack.c.b16 %v6388, %v6372
    %v7173 = vpack.c.b16 %v6389, %v6373
    %v7174 = vpack.c.b16 %v6390, %v6374
    %v7175 = vpack.c.b16 %v6391, %v6375
    %v7176 = vpack.c.b16 %v6392, %v6376
    %v7177 = vpack.c.b16 %v6393, %v6377
    %v7178 = vpack.c.b16 %v6394, %v6378
    %v7179 = vpack.c.b16 %v6395, %v6379
    %v7180 = vpack.c.b16 %v6396, %v6380
    %v7181 = vpack.c.b16 %v6413, %v6397
    %v7182 = vpack.c.b16 %v6414, %v6398
    %v7183 = vpack.c.b16 %v6415, %v6399
    %v7184 = vpack.c.b16 %v6416, %v6400
    %v7185 = vpack.c.b16 %v6417, %v6401
    %v7186 = vpack.c.b16 %v6418, %v6402
    %v7187 = vpack.c.b16 %v6419, %v6403
    %v7188 = vpack.c.b16 %v6420, %v6404
    %v7189 = vpack.c.b16 %v6421, %v6405
    %v7190 = vpack.c.b16 %v6422, %v6406
    %v7191 = vpack.c.b16 %v6423, %v6407
    %v7192 = vpack.c.b16 %v6424, %v6408
    %v7193 = vpack.c.b16 %v6425, %v6409
    %v7194 = vpack.c.b16 %v6426, %v6410
    %v7195 = vpack.c.b16 %v6427, %v6411
    %v7196 = vpack.c.b16 %v6428, %v6412
    %v7197 = vpack.c.b16 %v6445, %v6429
    %v7198 = vpack.c.b16 %v6446, %v6430
    %v7199 = vpack.c.b16 %v6447, %v6431
    %v7200 = vpack.c.b16 %v6448, %v6432
    %v7201 = vpack.c.b16 %v6449, %v6433
    %v7202 = vpack.c.b16 %v6450, %v6434
    %v7203 = vpack.c.b16 %v6451, %v6435
    %v7204 = vpack.c.b16 %v6452, %v6436
    %v7205 = vpack.c.b16 %v6453, %v6437
    %v7206 = vpack.c.b16 %v6454, %v6438
    %v7207 = vpack.c.b16 %v6455, %v6439
    %v7208 = vpack.c.b16 %v6456, %v6440
    %v7209 = vpack.c.b16 %v6457, %v6441
    %v7210 = vpack.c.b16 %v6458, %v6442
    %v7211 = vpack.c.b16 %v6459, %v6443
    %v7212 = vpack.c.b16 %v6460, %v6444
    %v7213 = vpack.c.b16 %v6477, %v6461
    %v7214 = vpack.c.b16 %v6478, %v6462
    %v7215 = vpack.c.b16 %v6479, %v6463
    %v7216 = vpack.c.b16 %v6480, %v6464
    %v7217 = vpack.c.b16 %v6481, %v6465
    %v7218 = vpack.c.b16 %v6482, %v6466
    %v7219 = vpack.c.b16 %v6483, %v6467
    %v7220 = vpack.c.b16 %v6484, %v6468
    %v7221 = vpack.c.b16 %v6485, %v6469
    %v7222 = vpack.c.b16 %v6486, %v6470
    %v7223 = vpack.c.b16 %v6487, %v6471
    %v7224 = vpack.c.b16 %v6488, %v6472
    %v7225 = vpack.c.b16 %v6489, %v6473
    %v7226 = vpack.c.b16 %v6490, %v6474
    %v7227 = vpack.c.b16 %v6491, %v6475
    %v7228 = vpack.c.b16 %v6492, %v6476
    %v7229 = vpack.c.b16 %v6509, %v6493
    %v7230 = vpack.c.b16 %v6510, %v6494
    %v7231 = vpack.c.b16 %v6511, %v6495
    %v7232 = vpack.c.b16 %v6512, %v6496
    %v7233 = vpack.c.b16 %v6513, %v6497
    %v7234 = vpack.c.b16 %v6514, %v6498
    %v7235 = vpack.c.b16 %v6515, %v6499
    %v7236 = vpack.c.b16 %v6516, %v6500
    %v7237 = vpack.c.b16 %v6517, %v6501
    %v7238 = vpack.c.b16 %v6518, %v6502
    %v7239 = vpack.c.b16 %v6519, %v6503
    %v7240 = vpack.c.b16 %v6520, %v6504
    %v7241 = vpack.c.b16 %v6521, %v6505
    %v7242 = vpack.c.b16 %v6522, %v6506
    %v7243 = vpack.c.b16 %v6523, %v6507
    %v7244 = vpack.c.b16 %v6524, %v6508
    %v7245 = vpack.c.b16 %v6541, %v6525
    %v7246 = vpack.c.b16 %v6542, %v6526
    %v7247 = vpack.c.b16 %v6543, %v6527
    %v7248 = vpack.c.b16 %v6544, %v6528
    %v7249 = vpack.c.b16 %v6545, %v6529
    %v7250 = vpack.c.b16 %v6546, %v6530
    %v7251 = vpack.c.b16 %v6547, %v6531
    %v7252 = vpack.c.b16 %v6548, %v6532
    %v7253 = vpack.c.b16 %v6549, %v6533
    %v7254 = vpack.c.b16 %v6550, %v6534
    %v7255 = vpack.c.b16 %v6551, %v6535
    %v7256 = vpack.c.b16 %v6552, %v6536
    %v7257 = vpack.c.b16 %v6553, %v6537
    %v7258 = vpack.c.b16 %v6554, %v6538
    %v7259 = vpack.c.b16 %v6555, %v6539
    %v7260 = vpack.c.b16 %v6556, %v6540
    %v7261 = vpack.c.b16 %v6573, %v6557
    %v7262 = vpack.c.b16 %v6574, %v6558
    %v7263 = vpack.c.b16 %v6575, %v6559
    %v7264 = vpack.c.b16 %v6576, %v6560
    %v7265 = vpack.c.b16 %v6577, %v6561
    %v7266 = vpack.c.b16 %v6578, %v6562
    %v7267 = vpack.c.b16 %v6579, %v6563
    %v7268 = vpack.c.b16 %v6580, %v6564
    %v7269 = vpack.c.b16 %v6581, %v6565
    %v7270 = vpack.c.b16 %v6582, %v6566
    %v7271 = vpack.c.b16 %v6583, %v6567
    %v7272 = vpack.c.b16 %v6584, %v6568
    %v7273 = vpack.c.b16 %v6585, %v6569
    %v7274 = vpack.c.b16 %v6586, %v6570
    %v7275 = vpack.c.b16 %v6587, %v6571
    %v7276 = vpack.c.b16 %v6588, %v6572
    %v7277 = vpack.c.b16 %v6605, %v6589
    %v7278 = vpack.c.b16 %v6606, %v6590
    %v7279 = vpack.c.b16 %v6607, %v6591
    %v7280 = vpack.c.b16 %v6608, %v6592
    %v7281 = vpack.c.b16 %v6609, %v6593
    %v7282 = vpack.c.b16 %v6610, %v6594
    %v7283 = vpack.c.b16 %v6611, %v6595
    %v7284 = vpack.c.b16 %v6612, %v6596
    %v7285 = vpack.c.b16 %v6613, %v6597
    %v7286 = vpack.c.b16 %v6614, %v6598
    %v7287 = vpack.c.b16 %v6615, %v6599
    %v7288 = vpack.c.b16 %v6616, %v6600
    %v7289 = vpack.c.b16 %v6617, %v6601
    %v7290 = vpack.c.b16 %v6618, %v6602
    %v7291 = vpack.c.b16 %v6619, %v6603
    %v7292 = vpack.c.b16 %v6620, %v6604
    %v7293 = vpack.c.b16 %v6637, %v6621
    %v7294 = vpack.c.b16 %v6638, %v6622
    %v7295 = vpack.c.b16 %v6639, %v6623
    %v7296 = vpack.c.b16 %v6640, %v6624
    %v7297 = vpack.c.b16 %v6641, %v6625
    %v7298 = vpack.c.b16 %v6642, %v6626
    %v7299 = vpack.c.b16 %v6643, %v6627
    %v7300 = vpack.c.b16 %v6644, %v6628
    %v7301 = vpack.c.b16 %v6645, %v6629
    %v7302 = vpack.c.b16 %v6646, %v6630
    %v7303 = vpack.c.b16 %v6647, %v6631
    %v7304 = vpack.c.b16 %v6648, %v6632
    %v7305 = vpack.c.b16 %v6649, %v6633
    %v7306 = vpack.c.b16 %v6650, %v6634
    %v7307 = vpack.c.b16 %v6651, %v6635
    %v7308 = vpack.c.b16 %v6652, %v6636
    %v7309 = vpack.c.b16 %v6669, %v6653
    %v7310 = vpack.c.b16 %v6670, %v6654
    %v7311 = vpack.c.b16 %v6671, %v6655
    %v7312 = vpack.c.b16 %v6672, %v6656
    %v7313 = vpack.c.b16 %v6673, %v6657
    %v7314 = vpack.c.b16 %v6674, %v6658
    %v7315 = vpack.c.b16 %v6675, %v6659
    %v7316 = vpack.c.b16 %v6676, %v6660
    %v7317 = vpack.c.b16 %v6677, %v6661
    %v7318 = vpack.c.b16 %v6678, %v6662
    %v7319 = vpack.c.b16 %v6679, %v6663
    %v7320 = vpack.c.b16 %v6680, %v6664
    %v7321 = vpack.c.b16 %v6681, %v6665
    %v7322 = vpack.c.b16 %v6682, %v6666
    %v7323 = vpack.c.b16 %v6683, %v6667
    %v7324 = vpack.c.b16 %v6684, %v6668
    %v7325 = vpack.c.b16 %v6701, %v6685
    %v7326 = vpack.c.b16 %v6702, %v6686
    %v7327 = vpack.c.b16 %v6703, %v6687
    %v7328 = vpack.c.b16 %v6704, %v6688
    %v7329 = vpack.c.b16 %v6705, %v6689
    %v7330 = vpack.c.b16 %v6706, %v6690
    %v7331 = vpack.c.b16 %v6707, %v6691
    %v7332 = vpack.c.b16 %v6708, %v6692
    %v7333 = vpack.c.b16 %v6709, %v6693
    %v7334 = vpack.c.b16 %v6710, %v6694
    %v7335 = vpack.c.b16 %v6711, %v6695
    %v7336 = vpack.c.b16 %v6712, %v6696
    %v7337 = vpack.c.b16 %v6713, %v6697
    %v7338 = vpack.c.b16 %v6714, %v6698
    %v7339 = vpack.c.b16 %v6715, %v6699
    %v7340 = vpack.c.b16 %v6716, %v6700
    %v7341 = vpack.c.b16 %v6733, %v6717
    %v7342 = vpack.c.b16 %v6734, %v6718
    %v7343 = vpack.c.b16 %v6735, %v6719
    %v7344 = vpack.c.b16 %v6736, %v6720
    %v7345 = vpack.c.b16 %v6737, %v6721
    %v7346 = vpack.c.b16 %v6738, %v6722
    %v7347 = vpack.c.b16 %v6739, %v6723
    %v7348 = vpack.c.b16 %v6740, %v6724
    %v7349 = vpack.c.b16 %v6741, %v6725
    %v7350 = vpack.c.b16 %v6742, %v6726
    %v7351 = vpack.c.b16 %v6743, %v6727
    %v7352 = vpack.c.b16 %v6744, %v6728
    %v7353 = vpack.c.b16 %v6745, %v6729
    %v7354 = vpack.c.b16 %v6746, %v6730
    %v7355 = vpack.c.b16 %v6747, %v6731
    %v7356 = vpack.c.b16 %v6748, %v6732
    %v7357 = vpack.c.b16 %v6765, %v6749
    %v7358 = vpack.c.b16 %v6766, %v6750
    %v7359 = vpack.c.b16 %v6767, %v6751
    %v7360 = vpack.c.b16 %v6768, %v6752
    %v7361 = vpack.c.b16 %v6769, %v6753
    %v7362 = vpack.c.b16 %v6770, %v6754
    %v7363 = vpack.c.b16 %v6771, %v6755
    %v7364 = vpack.c.b16 %v6772, %v6756
    %v7365 = vpack.c.b16 %v6773, %v6757
    %v7366 = vpack.c.b16 %v6774, %v6758
    %v7367 = vpack.c.b16 %v6775, %v6759
    %v7368 = vpack.c.b16 %v6776, %v6760
    %v7369 = vpack.c.b16 %v6777, %v6761
    %v7370 = vpack.c.b16 %v6778, %v6762
    %v7371 = vpack.c.b16 %v6779, %v6763
    %v7372 = vpack.c.b16 %v6780, %v6764
    %v7373 = vpack.c.b16 %v6797, %v6781
    %v7374 = vpack.c.b16 %v6798, %v6782
    %v7375 = vpack.c.b16 %v6799, %v6783
    %v7376 = vpack.c.b16 %v6800, %v6784
    %v7377 = vpack.c.b16 %v6801, %v6785
    %v7378 = vpack.c.b16 %v6802, %v6786
    %v7379 = vpack.c.b16 %v6803, %v6787
    %v7380 = vpack.c.b16 %v6804, %v6788
    %v7381 = vpack.c.b16 %v6805, %v6789
    %v7382 = vpack.c.b16 %v6806, %v6790
    %v7383 = vpack.c.b16 %v6807, %v6791
    %v7384 = vpack.c.b16 %v6808, %v6792
    %v7385 = vpack.c.b16 %v6809, %v6793
    %v7386 = vpack.c.b16 %v6810, %v6794
    %v7387 = vpack.c.b16 %v6811, %v6795
    %v7388 = vpack.c.b16 %v6812, %v6796
    %v7389 = vpack.c.b16 %v6829, %v6813
    %v7390 = vpack.c.b16 %v6830, %v6814
    %v7391 = vpack.c.b16 %v6831, %v6815
    %v7392 = vpack.c.b16 %v6832, %v6816
    %v7393 = vpack.c.b16 %v6833, %v6817
    %v7394 = vpack.c.b16 %v6834, %v6818
    %v7395 = vpack.c.b16 %v6835, %v6819
    %v7396 = vpack.c.b16 %v6836, %v6820
    %v7397 = vpack.c.b16 %v6837, %v6821
    %v7398 = vpack.c.b16 %v6838, %v6822
    %v7399 = vpack.c.b16 %v6839, %v6823
    %v7400 = vpack.c.b16 %v6840, %v6824
    %v7401 = vpack.c.b16 %v6841, %v6825
    %v7402 = vpack.c.b16 %v6842, %v6826
    %v7403 = vpack.c.b16 %v6843, %v6827
    %v7404 = vpack.c.b16 %v6844, %v6828
    %v7405 = vpack.c.b16 %v6861, %v6845
    %v7406 = vpack.c.b16 %v6862, %v6846
    %v7407 = vpack.c.b16 %v6863, %v6847
    %v7408 = vpack.c.b16 %v6864, %v6848
    %v7409 = vpack.c.b16 %v6865, %v6849
    %v7410 = vpack.c.b16 %v6866, %v6850
    %v7411 = vpack.c.b16 %v6867, %v6851
    %v7412 = vpack.c.b16 %v6868, %v6852
    %v7413 = vpack.c.b16 %v6869, %v6853
    %v7414 = vpack.c.b16 %v6870, %v6854
    %v7415 = vpack.c.b16 %v6871, %v6855
    %v7416 = vpack.c.b16 %v6872, %v6856
    %v7417 = vpack.c.b16 %v6873, %v6857
    %v7418 = vpack.c.b16 %v6874, %v6858
    %v7419 = vpack.c.b16 %v6875, %v6859
    %v7420 = vpack.c.b16 %v6876, %v6860
    %v7421 = vpack.c.b16 %v6893, %v6877
    %v7422 = vpack.c.b16 %v6894, %v6878
    %v7423 = vpack.c.b16 %v6895, %v6879
    %v7424 = vpack.c.b16 %v6896, %v6880
    %v7425 = vpack.c.b16 %v6897, %v6881
    %v7426 = vpack.c.b16 %v6898, %v6882
    %v7427 = vpack.c.b16 %v6899, %v6883
    %v7428 = vpack.c.b16 %v6900, %v6884
    %v7429 = vpack.c.b16 %v6901, %v6885
    %v7430 = vpack.c.b16 %v6902, %v6886
    %v7431 = vpack.c.b16 %v6903, %v6887
    %v7432 = vpack.c.b16 %v6904, %v6888
    %v7433 = vpack.c.b16 %v6905, %v6889
    %v7434 = vpack.c.b16 %v6906, %v6890
    %v7435 = vpack.c.b16 %v6907, %v6891
    %v7436 = vpack.c.b16 %v6908, %v6892
    %v7437 = vpack.c.b16 %v6925, %v6909
    %v7438 = vpack.c.b16 %v6926, %v6910
    %v7439 = vpack.c.b16 %v6927, %v6911
    %v7440 = vpack.c.b16 %v6928, %v6912
    %v7441 = vpack.c.b16 %v6929, %v6913
    %v7442 = vpack.c.b16 %v6930, %v6914
    %v7443 = vpack.c.b16 %v6931, %v6915
    %v7444 = vpack.c.b16 %v6932, %v6916
    %v7445 = vpack.c.b16 %v6933, %v6917
    %v7446 = vpack.c.b16 %v6934, %v6918
    %v7447 = vpack.c.b16 %v6935, %v6919
    %v7448 = vpack.c.b16 %v6936, %v6920
    %v7449 = vpack.c.b16 %v6937, %v6921
    %v7450 = vpack.c.b16 %v6938, %v6922
    %v7451 = vpack.c.b16 %v6939, %v6923
    %v7452 = vpack.c.b16 %v6940, %v6924
    %7965 = vmatpush.bf16.msra.mxu0 %v7053
    %7966 = vmatpush.bf16.msra.mxu0 %v7037
    %7967 = vmatpush.bf16.msra.mxu0 %v7021
    %7968 = vmatpush.bf16.msra.mxu0 %v7005
    %7969 = vmatpush.bf16.msra.mxu0 %v6989
    %7970 = vmatpush.bf16.msra.mxu0 %v6973
    %7971 = vmatpush.bf16.msra.mxu0 %v6957
    %7972 = vmatpush.bf16.msra.mxu0 %v6941
    %7973 = vmatmul.bf16.gmra.mxu0 %v4889
    %v7974 = vpop.f32.mrf.mxu0
    %v7975 = vadd.f32 0.0, %v7974
    %v7976 = vpop.f32.mrf.mxu0
    %7977 = vdwg.mxu0
    %7978 = vmatpush.bf16.msra.mxu0 %v7181
    %7979 = vmatpush.bf16.msra.mxu0 %v7165
    %7980 = vmatpush.bf16.msra.mxu0 %v7149
    %7981 = vmatpush.bf16.msra.mxu0 %v7133
    %7982 = vmatpush.bf16.msra.mxu0 %v7117
    %7983 = vmatpush.bf16.msra.mxu0 %v7101
    %7984 = vmatpush.bf16.msra.mxu0 %v7085
    %7985 = vmatpush.bf16.msra.mxu0 %v7069
    %7986 = vmatmul.bf16.gmra.mxu0 %v4890
    %v7987 = vpop.f32.mrf.mxu0
    %v7988 = vadd.f32 %v7975, %v7987
    %v7989 = vpop.f32.mrf.mxu0
    %7990 = vdwg.mxu0
    %7991 = vmatpush.bf16.msra.mxu0 %v7309
    %7992 = vmatpush.bf16.msra.mxu0 %v7293
    %7993 = vmatpush.bf16.msra.mxu0 %v7277
    %7994 = vmatpush.bf16.msra.mxu0 %v7261
    %7995 = vmatpush.bf16.msra.mxu0 %v7245
    %7996 = vmatpush.bf16.msra.mxu0 %v7229
    %7997 = vmatpush.bf16.msra.mxu0 %v7213
    %7998 = vmatpush.bf16.msra.mxu0 %v7197
    %7999 = vmatmul.bf16.gmra.mxu0 %v4891
    %v8000 = vpop.f32.mrf.mxu0
    %v8001 = vadd.f32 %v7988, %v8000
    %v8002 = vpop.f32.mrf.mxu0
    %8003 = vdwg.mxu0
    %8004 = vmatpush.bf16.msra.mxu0 %v7437
    %8005 = vmatpush.bf16.msra.mxu0 %v7421
    %8006 = vmatpush.bf16.msra.mxu0 %v7405
    %8007 = vmatpush.bf16.msra.mxu0 %v7389
    %8008 = vmatpush.bf16.msra.mxu0 %v7373
    %8009 = vmatpush.bf16.msra.mxu0 %v7357
    %8010 = vmatpush.bf16.msra.mxu0 %v7341
    %8011 = vmatpush.bf16.msra.mxu0 %v7325
    %8012 = vmatmul.bf16.gmra.mxu0 %v4892
    %v8013 = vpop.f32.mrf.mxu0
    %v8014 = vadd.f32 %v8001, %v8013
    %v8015 = vpop.f32.mrf.mxu0
    %8016 = vdwg.mxu0
    %8017 = vmatpush.bf16.msra.mxu0 %v7054
    %8018 = vmatpush.bf16.msra.mxu0 %v7038
    %8019 = vmatpush.bf16.msra.mxu0 %v7022
    %8020 = vmatpush.bf16.msra.mxu0 %v7006
    %8021 = vmatpush.bf16.msra.mxu0 %v6990
    %8022 = vmatpush.bf16.msra.mxu0 %v6974
    %8023 = vmatpush.bf16.msra.mxu0 %v6958
    %8024 = vmatpush.bf16.msra.mxu0 %v6942
    %8025 = vmatmul.bf16.gmra.mxu0 %v4889
    %v8026 = vpop.f32.mrf.mxu0
    %v8027 = vadd.f32 0.0, %v8026
    %v8028 = vpop.f32.mrf.mxu0
    %8029 = vdwg.mxu0
    %8030 = vmatpush.bf16.msra.mxu0 %v7182
    %8031 = vmatpush.bf16.msra.mxu0 %v7166
    %8032 = vmatpush.bf16.msra.mxu0 %v7150
    %8033 = vmatpush.bf16.msra.mxu0 %v7134
    %8034 = vmatpush.bf16.msra.mxu0 %v7118
    %8035 = vmatpush.bf16.msra.mxu0 %v7102
    %8036 = vmatpush.bf16.msra.mxu0 %v7086
    %8037 = vmatpush.bf16.msra.mxu0 %v7070
    %8038 = vmatmul.bf16.gmra.mxu0 %v4890
    %v8039 = vpop.f32.mrf.mxu0
    %v8040 = vadd.f32 %v8027, %v8039
    %v8041 = vpop.f32.mrf.mxu0
    %8042 = vdwg.mxu0
    %8043 = vmatpush.bf16.msra.mxu0 %v7310
    %8044 = vmatpush.bf16.msra.mxu0 %v7294
    %8045 = vmatpush.bf16.msra.mxu0 %v7278
    %8046 = vmatpush.bf16.msra.mxu0 %v7262
    %8047 = vmatpush.bf16.msra.mxu0 %v7246
    %8048 = vmatpush.bf16.msra.mxu0 %v7230
    %8049 = vmatpush.bf16.msra.mxu0 %v7214
    %8050 = vmatpush.bf16.msra.mxu0 %v7198
    %8051 = vmatmul.bf16.gmra.mxu0 %v4891
    %v8052 = vpop.f32.mrf.mxu0
    %v8053 = vadd.f32 %v8040, %v8052
    %v8054 = vpop.f32.mrf.mxu0
    %8055 = vdwg.mxu0
    %8056 = vmatpush.bf16.msra.mxu0 %v7438
    %8057 = vmatpush.bf16.msra.mxu0 %v7422
    %8058 = vmatpush.bf16.msra.mxu0 %v7406
    %8059 = vmatpush.bf16.msra.mxu0 %v7390
    %8060 = vmatpush.bf16.msra.mxu0 %v7374
    %8061 = vmatpush.bf16.msra.mxu0 %v7358
    %8062 = vmatpush.bf16.msra.mxu0 %v7342
    %8063 = vmatpush.bf16.msra.mxu0 %v7326
    %8064 = vmatmul.bf16.gmra.mxu0 %v4892
    %v8065 = vpop.f32.mrf.mxu0
    %v8066 = vadd.f32 %v8053, %v8065
    %v8067 = vpop.f32.mrf.mxu0
    %8068 = vdwg.mxu0
    %8069 = vmatpush.bf16.msra.mxu0 %v7055
    %8070 = vmatpush.bf16.msra.mxu0 %v7039
    %8071 = vmatpush.bf16.msra.mxu0 %v7023
    %8072 = vmatpush.bf16.msra.mxu0 %v7007
    %8073 = vmatpush.bf16.msra.mxu0 %v6991
    %8074 = vmatpush.bf16.msra.mxu0 %v6975
    %8075 = vmatpush.bf16.msra.mxu0 %v6959
    %8076 = vmatpush.bf16.msra.mxu0 %v6943
    %8077 = vmatmul.bf16.gmra.mxu0 %v4889
    %v8078 = vpop.f32.mrf.mxu0
    %v8079 = vadd.f32 0.0, %v8078
    %v8080 = vpop.f32.mrf.mxu0
    %8081 = vdwg.mxu0
    %8082 = vmatpush.bf16.msra.mxu0 %v7183
    %8083 = vmatpush.bf16.msra.mxu0 %v7167
    %8084 = vmatpush.bf16.msra.mxu0 %v7151
    %8085 = vmatpush.bf16.msra.mxu0 %v7135
    %8086 = vmatpush.bf16.msra.mxu0 %v7119
    %8087 = vmatpush.bf16.msra.mxu0 %v7103
    %8088 = vmatpush.bf16.msra.mxu0 %v7087
    %8089 = vmatpush.bf16.msra.mxu0 %v7071
    %8090 = vmatmul.bf16.gmra.mxu0 %v4890
    %v8091 = vpop.f32.mrf.mxu0
    %v8092 = vadd.f32 %v8079, %v8091
    %v8093 = vpop.f32.mrf.mxu0
    %8094 = vdwg.mxu0
    %8095 = vmatpush.bf16.msra.mxu0 %v7311
    %8096 = vmatpush.bf16.msra.mxu0 %v7295
    %8097 = vmatpush.bf16.msra.mxu0 %v7279
    %8098 = vmatpush.bf16.msra.mxu0 %v7263
    %8099 = vmatpush.bf16.msra.mxu0 %v7247
    %8100 = vmatpush.bf16.msra.mxu0 %v7231
    %8101 = vmatpush.bf16.msra.mxu0 %v7215
    %8102 = vmatpush.bf16.msra.mxu0 %v7199
    %8103 = vmatmul.bf16.gmra.mxu0 %v4891
    %v8104 = vpop.f32.mrf.mxu0
    %v8105 = vadd.f32 %v8092, %v8104
    %v8106 = vpop.f32.mrf.mxu0
    %8107 = vdwg.mxu0
    %8108 = vmatpush.bf16.msra.mxu0 %v7439
    %8109 = vmatpush.bf16.msra.mxu0 %v7423
    %8110 = vmatpush.bf16.msra.mxu0 %v7407
    %8111 = vmatpush.bf16.msra.mxu0 %v7391
    %8112 = vmatpush.bf16.msra.mxu0 %v7375
    %8113 = vmatpush.bf16.msra.mxu0 %v7359
    %8114 = vmatpush.bf16.msra.mxu0 %v7343
    %8115 = vmatpush.bf16.msra.mxu0 %v7327
    %8116 = vmatmul.bf16.gmra.mxu0 %v4892
    %v8117 = vpop.f32.mrf.mxu0
    %v8118 = vadd.f32 %v8105, %v8117
    %v8119 = vpop.f32.mrf.mxu0
    %8120 = vdwg.mxu0
    %8121 = vmatpush.bf16.msra.mxu0 %v7056
    %8122 = vmatpush.bf16.msra.mxu0 %v7040
    %8123 = vmatpush.bf16.msra.mxu0 %v7024
    %8124 = vmatpush.bf16.msra.mxu0 %v7008
    %8125 = vmatpush.bf16.msra.mxu0 %v6992
    %8126 = vmatpush.bf16.msra.mxu0 %v6976
    %8127 = vmatpush.bf16.msra.mxu0 %v6960
    %8128 = vmatpush.bf16.msra.mxu0 %v6944
    %8129 = vmatmul.bf16.gmra.mxu0 %v4889
    %v8130 = vpop.f32.mrf.mxu0
    %v8131 = vadd.f32 0.0, %v8130
    %v8132 = vpop.f32.mrf.mxu0
    %8133 = vdwg.mxu0
    %8134 = vmatpush.bf16.msra.mxu0 %v7184
    %8135 = vmatpush.bf16.msra.mxu0 %v7168
    %8136 = vmatpush.bf16.msra.mxu0 %v7152
    %8137 = vmatpush.bf16.msra.mxu0 %v7136
    %8138 = vmatpush.bf16.msra.mxu0 %v7120
    %8139 = vmatpush.bf16.msra.mxu0 %v7104
    %8140 = vmatpush.bf16.msra.mxu0 %v7088
    %8141 = vmatpush.bf16.msra.mxu0 %v7072
    %8142 = vmatmul.bf16.gmra.mxu0 %v4890
    %v8143 = vpop.f32.mrf.mxu0
    %v8144 = vadd.f32 %v8131, %v8143
    %v8145 = vpop.f32.mrf.mxu0
    %8146 = vdwg.mxu0
    %8147 = vmatpush.bf16.msra.mxu0 %v7312
    %8148 = vmatpush.bf16.msra.mxu0 %v7296
    %8149 = vmatpush.bf16.msra.mxu0 %v7280
    %8150 = vmatpush.bf16.msra.mxu0 %v7264
    %8151 = vmatpush.bf16.msra.mxu0 %v7248
    %8152 = vmatpush.bf16.msra.mxu0 %v7232
    %8153 = vmatpush.bf16.msra.mxu0 %v7216
    %8154 = vmatpush.bf16.msra.mxu0 %v7200
    %8155 = vmatmul.bf16.gmra.mxu0 %v4891
    %v8156 = vpop.f32.mrf.mxu0
    %v8157 = vadd.f32 %v8144, %v8156
    %v8158 = vpop.f32.mrf.mxu0
    %8159 = vdwg.mxu0
    %8160 = vmatpush.bf16.msra.mxu0 %v7440
    %8161 = vmatpush.bf16.msra.mxu0 %v7424
    %8162 = vmatpush.bf16.msra.mxu0 %v7408
    %8163 = vmatpush.bf16.msra.mxu0 %v7392
    %8164 = vmatpush.bf16.msra.mxu0 %v7376
    %8165 = vmatpush.bf16.msra.mxu0 %v7360
    %8166 = vmatpush.bf16.msra.mxu0 %v7344
    %8167 = vmatpush.bf16.msra.mxu0 %v7328
    %8168 = vmatmul.bf16.gmra.mxu0 %v4892
    %v8169 = vpop.f32.mrf.mxu0
    %v8170 = vadd.f32 %v8157, %v8169
    %v8171 = vpop.f32.mrf.mxu0
    %8172 = vdwg.mxu0
    %8173 = vmatpush.bf16.msra.mxu0 %v7057
    %8174 = vmatpush.bf16.msra.mxu0 %v7041
    %8175 = vmatpush.bf16.msra.mxu0 %v7025
    %8176 = vmatpush.bf16.msra.mxu0 %v7009
    %8177 = vmatpush.bf16.msra.mxu0 %v6993
    %8178 = vmatpush.bf16.msra.mxu0 %v6977
    %8179 = vmatpush.bf16.msra.mxu0 %v6961
    %8180 = vmatpush.bf16.msra.mxu0 %v6945
    %8181 = vmatmul.bf16.gmra.mxu0 %v4889
    %v8182 = vpop.f32.mrf.mxu0
    %v8183 = vadd.f32 0.0, %v8182
    %v8184 = vpop.f32.mrf.mxu0
    %8185 = vdwg.mxu0
    %8186 = vmatpush.bf16.msra.mxu0 %v7185
    %8187 = vmatpush.bf16.msra.mxu0 %v7169
    %8188 = vmatpush.bf16.msra.mxu0 %v7153
    %8189 = vmatpush.bf16.msra.mxu0 %v7137
    %8190 = vmatpush.bf16.msra.mxu0 %v7121
    %8191 = vmatpush.bf16.msra.mxu0 %v7105
    %8192 = vmatpush.bf16.msra.mxu0 %v7089
    %8193 = vmatpush.bf16.msra.mxu0 %v7073
    %8194 = vmatmul.bf16.gmra.mxu0 %v4890
    %v8195 = vpop.f32.mrf.mxu0
    %v8196 = vadd.f32 %v8183, %v8195
    %v8197 = vpop.f32.mrf.mxu0
    %8198 = vdwg.mxu0
    %8199 = vmatpush.bf16.msra.mxu0 %v7313
    %8200 = vmatpush.bf16.msra.mxu0 %v7297
    %8201 = vmatpush.bf16.msra.mxu0 %v7281
    %8202 = vmatpush.bf16.msra.mxu0 %v7265
    %8203 = vmatpush.bf16.msra.mxu0 %v7249
    %8204 = vmatpush.bf16.msra.mxu0 %v7233
    %8205 = vmatpush.bf16.msra.mxu0 %v7217
    %8206 = vmatpush.bf16.msra.mxu0 %v7201
    %8207 = vmatmul.bf16.gmra.mxu0 %v4891
    %v8208 = vpop.f32.mrf.mxu0
    %v8209 = vadd.f32 %v8196, %v8208
    %v8210 = vpop.f32.mrf.mxu0
    %8211 = vdwg.mxu0
    %8212 = vmatpush.bf16.msra.mxu0 %v7441
    %8213 = vmatpush.bf16.msra.mxu0 %v7425
    %8214 = vmatpush.bf16.msra.mxu0 %v7409
    %8215 = vmatpush.bf16.msra.mxu0 %v7393
    %8216 = vmatpush.bf16.msra.mxu0 %v7377
    %8217 = vmatpush.bf16.msra.mxu0 %v7361
    %8218 = vmatpush.bf16.msra.mxu0 %v7345
    %8219 = vmatpush.bf16.msra.mxu0 %v7329
    %8220 = vmatmul.bf16.gmra.mxu0 %v4892
    %v8221 = vpop.f32.mrf.mxu0
    %v8222 = vadd.f32 %v8209, %v8221
    %v8223 = vpop.f32.mrf.mxu0
    %8224 = vdwg.mxu0
    %8225 = vmatpush.bf16.msra.mxu0 %v7058
    %8226 = vmatpush.bf16.msra.mxu0 %v7042
    %8227 = vmatpush.bf16.msra.mxu0 %v7026
    %8228 = vmatpush.bf16.msra.mxu0 %v7010
    %8229 = vmatpush.bf16.msra.mxu0 %v6994
    %8230 = vmatpush.bf16.msra.mxu0 %v6978
    %8231 = vmatpush.bf16.msra.mxu0 %v6962
    %8232 = vmatpush.bf16.msra.mxu0 %v6946
    %8233 = vmatmul.bf16.gmra.mxu0 %v4889
    %v8234 = vpop.f32.mrf.mxu0
    %v8235 = vadd.f32 0.0, %v8234
    %v8236 = vpop.f32.mrf.mxu0
    %8237 = vdwg.mxu0
    %8238 = vmatpush.bf16.msra.mxu0 %v7186
    %8239 = vmatpush.bf16.msra.mxu0 %v7170
    %8240 = vmatpush.bf16.msra.mxu0 %v7154
    %8241 = vmatpush.bf16.msra.mxu0 %v7138
    %8242 = vmatpush.bf16.msra.mxu0 %v7122
    %8243 = vmatpush.bf16.msra.mxu0 %v7106
    %8244 = vmatpush.bf16.msra.mxu0 %v7090
    %8245 = vmatpush.bf16.msra.mxu0 %v7074
    %8246 = vmatmul.bf16.gmra.mxu0 %v4890
    %v8247 = vpop.f32.mrf.mxu0
    %v8248 = vadd.f32 %v8235, %v8247
    %v8249 = vpop.f32.mrf.mxu0
    %8250 = vdwg.mxu0
    %8251 = vmatpush.bf16.msra.mxu0 %v7314
    %8252 = vmatpush.bf16.msra.mxu0 %v7298
    %8253 = vmatpush.bf16.msra.mxu0 %v7282
    %8254 = vmatpush.bf16.msra.mxu0 %v7266
    %8255 = vmatpush.bf16.msra.mxu0 %v7250
    %8256 = vmatpush.bf16.msra.mxu0 %v7234
    %8257 = vmatpush.bf16.msra.mxu0 %v7218
    %8258 = vmatpush.bf16.msra.mxu0 %v7202
    %8259 = vmatmul.bf16.gmra.mxu0 %v4891
    %v8260 = vpop.f32.mrf.mxu0
    %v8261 = vadd.f32 %v8248, %v8260
    %v8262 = vpop.f32.mrf.mxu0
    %8263 = vdwg.mxu0
    %8264 = vmatpush.bf16.msra.mxu0 %v7442
    %8265 = vmatpush.bf16.msra.mxu0 %v7426
    %8266 = vmatpush.bf16.msra.mxu0 %v7410
    %8267 = vmatpush.bf16.msra.mxu0 %v7394
    %8268 = vmatpush.bf16.msra.mxu0 %v7378
    %8269 = vmatpush.bf16.msra.mxu0 %v7362
    %8270 = vmatpush.bf16.msra.mxu0 %v7346
    %8271 = vmatpush.bf16.msra.mxu0 %v7330
    %8272 = vmatmul.bf16.gmra.mxu0 %v4892
    %v8273 = vpop.f32.mrf.mxu0
    %v8274 = vadd.f32 %v8261, %v8273
    %v8275 = vpop.f32.mrf.mxu0
    %8276 = vdwg.mxu0
    %8277 = vmatpush.bf16.msra.mxu0 %v7059
    %8278 = vmatpush.bf16.msra.mxu0 %v7043
    %8279 = vmatpush.bf16.msra.mxu0 %v7027
    %8280 = vmatpush.bf16.msra.mxu0 %v7011
    %8281 = vmatpush.bf16.msra.mxu0 %v6995
    %8282 = vmatpush.bf16.msra.mxu0 %v6979
    %8283 = vmatpush.bf16.msra.mxu0 %v6963
    %8284 = vmatpush.bf16.msra.mxu0 %v6947
    %8285 = vmatmul.bf16.gmra.mxu0 %v4889
    %v8286 = vpop.f32.mrf.mxu0
    %v8287 = vadd.f32 0.0, %v8286
    %v8288 = vpop.f32.mrf.mxu0
    %8289 = vdwg.mxu0
    %8290 = vmatpush.bf16.msra.mxu0 %v7187
    %8291 = vmatpush.bf16.msra.mxu0 %v7171
    %8292 = vmatpush.bf16.msra.mxu0 %v7155
    %8293 = vmatpush.bf16.msra.mxu0 %v7139
    %8294 = vmatpush.bf16.msra.mxu0 %v7123
    %8295 = vmatpush.bf16.msra.mxu0 %v7107
    %8296 = vmatpush.bf16.msra.mxu0 %v7091
    %8297 = vmatpush.bf16.msra.mxu0 %v7075
    %8298 = vmatmul.bf16.gmra.mxu0 %v4890
    %v8299 = vpop.f32.mrf.mxu0
    %v8300 = vadd.f32 %v8287, %v8299
    %v8301 = vpop.f32.mrf.mxu0
    %8302 = vdwg.mxu0
    %8303 = vmatpush.bf16.msra.mxu0 %v7315
    %8304 = vmatpush.bf16.msra.mxu0 %v7299
    %8305 = vmatpush.bf16.msra.mxu0 %v7283
    %8306 = vmatpush.bf16.msra.mxu0 %v7267
    %8307 = vmatpush.bf16.msra.mxu0 %v7251
    %8308 = vmatpush.bf16.msra.mxu0 %v7235
    %8309 = vmatpush.bf16.msra.mxu0 %v7219
    %8310 = vmatpush.bf16.msra.mxu0 %v7203
    %8311 = vmatmul.bf16.gmra.mxu0 %v4891
    %v8312 = vpop.f32.mrf.mxu0
    %v8313 = vadd.f32 %v8300, %v8312
    %v8314 = vpop.f32.mrf.mxu0
    %8315 = vdwg.mxu0
    %8316 = vmatpush.bf16.msra.mxu0 %v7443
    %8317 = vmatpush.bf16.msra.mxu0 %v7427
    %8318 = vmatpush.bf16.msra.mxu0 %v7411
    %8319 = vmatpush.bf16.msra.mxu0 %v7395
    %8320 = vmatpush.bf16.msra.mxu0 %v7379
    %8321 = vmatpush.bf16.msra.mxu0 %v7363
    %8322 = vmatpush.bf16.msra.mxu0 %v7347
    %8323 = vmatpush.bf16.msra.mxu0 %v7331
    %8324 = vmatmul.bf16.gmra.mxu0 %v4892
    %v8325 = vpop.f32.mrf.mxu0
    %v8326 = vadd.f32 %v8313, %v8325
    %v8327 = vpop.f32.mrf.mxu0
    %8328 = vdwg.mxu0
    %8329 = vmatpush.bf16.msra.mxu0 %v7060
    %8330 = vmatpush.bf16.msra.mxu0 %v7044
    %8331 = vmatpush.bf16.msra.mxu0 %v7028
    %8332 = vmatpush.bf16.msra.mxu0 %v7012
    %8333 = vmatpush.bf16.msra.mxu0 %v6996
    %8334 = vmatpush.bf16.msra.mxu0 %v6980
    %8335 = vmatpush.bf16.msra.mxu0 %v6964
    %8336 = vmatpush.bf16.msra.mxu0 %v6948
    %8337 = vmatmul.bf16.gmra.mxu0 %v4889
    %v8338 = vpop.f32.mrf.mxu0
    %v8339 = vadd.f32 0.0, %v8338
    %v8340 = vpop.f32.mrf.mxu0
    %8341 = vdwg.mxu0
    %8342 = vmatpush.bf16.msra.mxu0 %v7188
    %8343 = vmatpush.bf16.msra.mxu0 %v7172
    %8344 = vmatpush.bf16.msra.mxu0 %v7156
    %8345 = vmatpush.bf16.msra.mxu0 %v7140
    %8346 = vmatpush.bf16.msra.mxu0 %v7124
    %8347 = vmatpush.bf16.msra.mxu0 %v7108
    %8348 = vmatpush.bf16.msra.mxu0 %v7092
    %8349 = vmatpush.bf16.msra.mxu0 %v7076
    %8350 = vmatmul.bf16.gmra.mxu0 %v4890
    %v8351 = vpop.f32.mrf.mxu0
    %v8352 = vadd.f32 %v8339, %v8351
    %v8353 = vpop.f32.mrf.mxu0
    %8354 = vdwg.mxu0
    %8355 = vmatpush.bf16.msra.mxu0 %v7316
    %8356 = vmatpush.bf16.msra.mxu0 %v7300
    %8357 = vmatpush.bf16.msra.mxu0 %v7284
    %8358 = vmatpush.bf16.msra.mxu0 %v7268
    %8359 = vmatpush.bf16.msra.mxu0 %v7252
    %8360 = vmatpush.bf16.msra.mxu0 %v7236
    %8361 = vmatpush.bf16.msra.mxu0 %v7220
    %8362 = vmatpush.bf16.msra.mxu0 %v7204
    %8363 = vmatmul.bf16.gmra.mxu0 %v4891
    %v8364 = vpop.f32.mrf.mxu0
    %v8365 = vadd.f32 %v8352, %v8364
    %v8366 = vpop.f32.mrf.mxu0
    %8367 = vdwg.mxu0
    %8368 = vmatpush.bf16.msra.mxu0 %v7444
    %8369 = vmatpush.bf16.msra.mxu0 %v7428
    %8370 = vmatpush.bf16.msra.mxu0 %v7412
    %8371 = vmatpush.bf16.msra.mxu0 %v7396
    %8372 = vmatpush.bf16.msra.mxu0 %v7380
    %8373 = vmatpush.bf16.msra.mxu0 %v7364
    %8374 = vmatpush.bf16.msra.mxu0 %v7348
    %8375 = vmatpush.bf16.msra.mxu0 %v7332
    %8376 = vmatmul.bf16.gmra.mxu0 %v4892
    %v8377 = vpop.f32.mrf.mxu0
    %v8378 = vadd.f32 %v8365, %v8377
    %v8379 = vpop.f32.mrf.mxu0
    %8380 = vdwg.mxu0
    %8381 = vmatpush.bf16.msra.mxu0 %v7061
    %8382 = vmatpush.bf16.msra.mxu0 %v7045
    %8383 = vmatpush.bf16.msra.mxu0 %v7029
    %8384 = vmatpush.bf16.msra.mxu0 %v7013
    %8385 = vmatpush.bf16.msra.mxu0 %v6997
    %8386 = vmatpush.bf16.msra.mxu0 %v6981
    %8387 = vmatpush.bf16.msra.mxu0 %v6965
    %8388 = vmatpush.bf16.msra.mxu0 %v6949
    %8389 = vmatmul.bf16.gmra.mxu0 %v4889
    %v8390 = vpop.f32.mrf.mxu0
    %v8391 = vadd.f32 0.0, %v8390
    %v8392 = vpop.f32.mrf.mxu0
    %8393 = vdwg.mxu0
    %8394 = vmatpush.bf16.msra.mxu0 %v7189
    %8395 = vmatpush.bf16.msra.mxu0 %v7173
    %8396 = vmatpush.bf16.msra.mxu0 %v7157
    %8397 = vmatpush.bf16.msra.mxu0 %v7141
    %8398 = vmatpush.bf16.msra.mxu0 %v7125
    %8399 = vmatpush.bf16.msra.mxu0 %v7109
    %8400 = vmatpush.bf16.msra.mxu0 %v7093
    %8401 = vmatpush.bf16.msra.mxu0 %v7077
    %8402 = vmatmul.bf16.gmra.mxu0 %v4890
    %v8403 = vpop.f32.mrf.mxu0
    %v8404 = vadd.f32 %v8391, %v8403
    %v8405 = vpop.f32.mrf.mxu0
    %8406 = vdwg.mxu0
    %8407 = vmatpush.bf16.msra.mxu0 %v7317
    %8408 = vmatpush.bf16.msra.mxu0 %v7301
    %8409 = vmatpush.bf16.msra.mxu0 %v7285
    %8410 = vmatpush.bf16.msra.mxu0 %v7269
    %8411 = vmatpush.bf16.msra.mxu0 %v7253
    %8412 = vmatpush.bf16.msra.mxu0 %v7237
    %8413 = vmatpush.bf16.msra.mxu0 %v7221
    %8414 = vmatpush.bf16.msra.mxu0 %v7205
    %8415 = vmatmul.bf16.gmra.mxu0 %v4891
    %v8416 = vpop.f32.mrf.mxu0
    %v8417 = vadd.f32 %v8404, %v8416
    %v8418 = vpop.f32.mrf.mxu0
    %8419 = vdwg.mxu0
    %8420 = vmatpush.bf16.msra.mxu0 %v7445
    %8421 = vmatpush.bf16.msra.mxu0 %v7429
    %8422 = vmatpush.bf16.msra.mxu0 %v7413
    %8423 = vmatpush.bf16.msra.mxu0 %v7397
    %8424 = vmatpush.bf16.msra.mxu0 %v7381
    %8425 = vmatpush.bf16.msra.mxu0 %v7365
    %8426 = vmatpush.bf16.msra.mxu0 %v7349
    %8427 = vmatpush.bf16.msra.mxu0 %v7333
    %8428 = vmatmul.bf16.gmra.mxu0 %v4892
    %v8429 = vpop.f32.mrf.mxu0
    %v8430 = vadd.f32 %v8417, %v8429
    %v8431 = vpop.f32.mrf.mxu0
    %8432 = vdwg.mxu0
    %8433 = vmatpush.bf16.msra.mxu0 %v7062
    %8434 = vmatpush.bf16.msra.mxu0 %v7046
    %8435 = vmatpush.bf16.msra.mxu0 %v7030
    %8436 = vmatpush.bf16.msra.mxu0 %v7014
    %8437 = vmatpush.bf16.msra.mxu0 %v6998
    %8438 = vmatpush.bf16.msra.mxu0 %v6982
    %8439 = vmatpush.bf16.msra.mxu0 %v6966
    %8440 = vmatpush.bf16.msra.mxu0 %v6950
    %8441 = vmatmul.bf16.gmra.mxu0 %v4889
    %v8442 = vpop.f32.mrf.mxu0
    %v8443 = vadd.f32 0.0, %v8442
    %v8444 = vpop.f32.mrf.mxu0
    %8445 = vdwg.mxu0
    %8446 = vmatpush.bf16.msra.mxu0 %v7190
    %8447 = vmatpush.bf16.msra.mxu0 %v7174
    %8448 = vmatpush.bf16.msra.mxu0 %v7158
    %8449 = vmatpush.bf16.msra.mxu0 %v7142
    %8450 = vmatpush.bf16.msra.mxu0 %v7126
    %8451 = vmatpush.bf16.msra.mxu0 %v7110
    %8452 = vmatpush.bf16.msra.mxu0 %v7094
    %8453 = vmatpush.bf16.msra.mxu0 %v7078
    %8454 = vmatmul.bf16.gmra.mxu0 %v4890
    %v8455 = vpop.f32.mrf.mxu0
    %v8456 = vadd.f32 %v8443, %v8455
    %v8457 = vpop.f32.mrf.mxu0
    %8458 = vdwg.mxu0
    %8459 = vmatpush.bf16.msra.mxu0 %v7318
    %8460 = vmatpush.bf16.msra.mxu0 %v7302
    %8461 = vmatpush.bf16.msra.mxu0 %v7286
    %8462 = vmatpush.bf16.msra.mxu0 %v7270
    %8463 = vmatpush.bf16.msra.mxu0 %v7254
    %8464 = vmatpush.bf16.msra.mxu0 %v7238
    %8465 = vmatpush.bf16.msra.mxu0 %v7222
    %8466 = vmatpush.bf16.msra.mxu0 %v7206
    %8467 = vmatmul.bf16.gmra.mxu0 %v4891
    %v8468 = vpop.f32.mrf.mxu0
    %v8469 = vadd.f32 %v8456, %v8468
    %v8470 = vpop.f32.mrf.mxu0
    %8471 = vdwg.mxu0
    %8472 = vmatpush.bf16.msra.mxu0 %v7446
    %8473 = vmatpush.bf16.msra.mxu0 %v7430
    %8474 = vmatpush.bf16.msra.mxu0 %v7414
    %8475 = vmatpush.bf16.msra.mxu0 %v7398
    %8476 = vmatpush.bf16.msra.mxu0 %v7382
    %8477 = vmatpush.bf16.msra.mxu0 %v7366
    %8478 = vmatpush.bf16.msra.mxu0 %v7350
    %8479 = vmatpush.bf16.msra.mxu0 %v7334
    %8480 = vmatmul.bf16.gmra.mxu0 %v4892
    %v8481 = vpop.f32.mrf.mxu0
    %v8482 = vadd.f32 %v8469, %v8481
    %v8483 = vpop.f32.mrf.mxu0
    %8484 = vdwg.mxu0
    %8485 = vmatpush.bf16.msra.mxu0 %v7063
    %8486 = vmatpush.bf16.msra.mxu0 %v7047
    %8487 = vmatpush.bf16.msra.mxu0 %v7031
    %8488 = vmatpush.bf16.msra.mxu0 %v7015
    %8489 = vmatpush.bf16.msra.mxu0 %v6999
    %8490 = vmatpush.bf16.msra.mxu0 %v6983
    %8491 = vmatpush.bf16.msra.mxu0 %v6967
    %8492 = vmatpush.bf16.msra.mxu0 %v6951
    %8493 = vmatmul.bf16.gmra.mxu0 %v4889
    %v8494 = vpop.f32.mrf.mxu0
    %v8495 = vadd.f32 0.0, %v8494
    %v8496 = vpop.f32.mrf.mxu0
    %8497 = vdwg.mxu0
    %8498 = vmatpush.bf16.msra.mxu0 %v7191
    %8499 = vmatpush.bf16.msra.mxu0 %v7175
    %8500 = vmatpush.bf16.msra.mxu0 %v7159
    %8501 = vmatpush.bf16.msra.mxu0 %v7143
    %8502 = vmatpush.bf16.msra.mxu0 %v7127
    %8503 = vmatpush.bf16.msra.mxu0 %v7111
    %8504 = vmatpush.bf16.msra.mxu0 %v7095
    %8505 = vmatpush.bf16.msra.mxu0 %v7079
    %8506 = vmatmul.bf16.gmra.mxu0 %v4890
    %v8507 = vpop.f32.mrf.mxu0
    %v8508 = vadd.f32 %v8495, %v8507
    %v8509 = vpop.f32.mrf.mxu0
    %8510 = vdwg.mxu0
    %8511 = vmatpush.bf16.msra.mxu0 %v7319
    %8512 = vmatpush.bf16.msra.mxu0 %v7303
    %8513 = vmatpush.bf16.msra.mxu0 %v7287
    %8514 = vmatpush.bf16.msra.mxu0 %v7271
    %8515 = vmatpush.bf16.msra.mxu0 %v7255
    %8516 = vmatpush.bf16.msra.mxu0 %v7239
    %8517 = vmatpush.bf16.msra.mxu0 %v7223
    %8518 = vmatpush.bf16.msra.mxu0 %v7207
    %8519 = vmatmul.bf16.gmra.mxu0 %v4891
    %v8520 = vpop.f32.mrf.mxu0
    %v8521 = vadd.f32 %v8508, %v8520
    %v8522 = vpop.f32.mrf.mxu0
    %8523 = vdwg.mxu0
    %8524 = vmatpush.bf16.msra.mxu0 %v7447
    %8525 = vmatpush.bf16.msra.mxu0 %v7431
    %8526 = vmatpush.bf16.msra.mxu0 %v7415
    %8527 = vmatpush.bf16.msra.mxu0 %v7399
    %8528 = vmatpush.bf16.msra.mxu0 %v7383
    %8529 = vmatpush.bf16.msra.mxu0 %v7367
    %8530 = vmatpush.bf16.msra.mxu0 %v7351
    %8531 = vmatpush.bf16.msra.mxu0 %v7335
    %8532 = vmatmul.bf16.gmra.mxu0 %v4892
    %v8533 = vpop.f32.mrf.mxu0
    %v8534 = vadd.f32 %v8521, %v8533
    %v8535 = vpop.f32.mrf.mxu0
    %8536 = vdwg.mxu0
    %8537 = vmatpush.bf16.msra.mxu0 %v7064
    %8538 = vmatpush.bf16.msra.mxu0 %v7048
    %8539 = vmatpush.bf16.msra.mxu0 %v7032
    %8540 = vmatpush.bf16.msra.mxu0 %v7016
    %8541 = vmatpush.bf16.msra.mxu0 %v7000
    %8542 = vmatpush.bf16.msra.mxu0 %v6984
    %8543 = vmatpush.bf16.msra.mxu0 %v6968
    %8544 = vmatpush.bf16.msra.mxu0 %v6952
    %8545 = vmatmul.bf16.gmra.mxu0 %v4889
    %v8546 = vpop.f32.mrf.mxu0
    %v8547 = vadd.f32 0.0, %v8546
    %v8548 = vpop.f32.mrf.mxu0
    %8549 = vdwg.mxu0
    %8550 = vmatpush.bf16.msra.mxu0 %v7192
    %8551 = vmatpush.bf16.msra.mxu0 %v7176
    %8552 = vmatpush.bf16.msra.mxu0 %v7160
    %8553 = vmatpush.bf16.msra.mxu0 %v7144
    %8554 = vmatpush.bf16.msra.mxu0 %v7128
    %8555 = vmatpush.bf16.msra.mxu0 %v7112
    %8556 = vmatpush.bf16.msra.mxu0 %v7096
    %8557 = vmatpush.bf16.msra.mxu0 %v7080
    %8558 = vmatmul.bf16.gmra.mxu0 %v4890
    %v8559 = vpop.f32.mrf.mxu0
    %v8560 = vadd.f32 %v8547, %v8559
    %v8561 = vpop.f32.mrf.mxu0
    %8562 = vdwg.mxu0
    %8563 = vmatpush.bf16.msra.mxu0 %v7320
    %8564 = vmatpush.bf16.msra.mxu0 %v7304
    %8565 = vmatpush.bf16.msra.mxu0 %v7288
    %8566 = vmatpush.bf16.msra.mxu0 %v7272
    %8567 = vmatpush.bf16.msra.mxu0 %v7256
    %8568 = vmatpush.bf16.msra.mxu0 %v7240
    %8569 = vmatpush.bf16.msra.mxu0 %v7224
    %8570 = vmatpush.bf16.msra.mxu0 %v7208
    %8571 = vmatmul.bf16.gmra.mxu0 %v4891
    %v8572 = vpop.f32.mrf.mxu0
    %v8573 = vadd.f32 %v8560, %v8572
    %v8574 = vpop.f32.mrf.mxu0
    %8575 = vdwg.mxu0
    %8576 = vmatpush.bf16.msra.mxu0 %v7448
    %8577 = vmatpush.bf16.msra.mxu0 %v7432
    %8578 = vmatpush.bf16.msra.mxu0 %v7416
    %8579 = vmatpush.bf16.msra.mxu0 %v7400
    %8580 = vmatpush.bf16.msra.mxu0 %v7384
    %8581 = vmatpush.bf16.msra.mxu0 %v7368
    %8582 = vmatpush.bf16.msra.mxu0 %v7352
    %8583 = vmatpush.bf16.msra.mxu0 %v7336
    %8584 = vmatmul.bf16.gmra.mxu0 %v4892
    %v8585 = vpop.f32.mrf.mxu0
    %v8586 = vadd.f32 %v8573, %v8585
    %v8587 = vpop.f32.mrf.mxu0
    %8588 = vdwg.mxu0
    %8589 = vmatpush.bf16.msra.mxu0 %v7065
    %8590 = vmatpush.bf16.msra.mxu0 %v7049
    %8591 = vmatpush.bf16.msra.mxu0 %v7033
    %8592 = vmatpush.bf16.msra.mxu0 %v7017
    %8593 = vmatpush.bf16.msra.mxu0 %v7001
    %8594 = vmatpush.bf16.msra.mxu0 %v6985
    %8595 = vmatpush.bf16.msra.mxu0 %v6969
    %8596 = vmatpush.bf16.msra.mxu0 %v6953
    %8597 = vmatmul.bf16.gmra.mxu0 %v4889
    %v8598 = vpop.f32.mrf.mxu0
    %v8599 = vadd.f32 0.0, %v8598
    %v8600 = vpop.f32.mrf.mxu0
    %8601 = vdwg.mxu0
    %8602 = vmatpush.bf16.msra.mxu0 %v7193
    %8603 = vmatpush.bf16.msra.mxu0 %v7177
    %8604 = vmatpush.bf16.msra.mxu0 %v7161
    %8605 = vmatpush.bf16.msra.mxu0 %v7145
    %8606 = vmatpush.bf16.msra.mxu0 %v7129
    %8607 = vmatpush.bf16.msra.mxu0 %v7113
    %8608 = vmatpush.bf16.msra.mxu0 %v7097
    %8609 = vmatpush.bf16.msra.mxu0 %v7081
    %8610 = vmatmul.bf16.gmra.mxu0 %v4890
    %v8611 = vpop.f32.mrf.mxu0
    %v8612 = vadd.f32 %v8599, %v8611
    %v8613 = vpop.f32.mrf.mxu0
    %8614 = vdwg.mxu0
    %8615 = vmatpush.bf16.msra.mxu0 %v7321
    %8616 = vmatpush.bf16.msra.mxu0 %v7305
    %8617 = vmatpush.bf16.msra.mxu0 %v7289
    %8618 = vmatpush.bf16.msra.mxu0 %v7273
    %8619 = vmatpush.bf16.msra.mxu0 %v7257
    %8620 = vmatpush.bf16.msra.mxu0 %v7241
    %8621 = vmatpush.bf16.msra.mxu0 %v7225
    %8622 = vmatpush.bf16.msra.mxu0 %v7209
    %8623 = vmatmul.bf16.gmra.mxu0 %v4891
    %v8624 = vpop.f32.mrf.mxu0
    %v8625 = vadd.f32 %v8612, %v8624
    %v8626 = vpop.f32.mrf.mxu0
    %8627 = vdwg.mxu0
    %8628 = vmatpush.bf16.msra.mxu0 %v7449
    %8629 = vmatpush.bf16.msra.mxu0 %v7433
    %8630 = vmatpush.bf16.msra.mxu0 %v7417
    %8631 = vmatpush.bf16.msra.mxu0 %v7401
    %8632 = vmatpush.bf16.msra.mxu0 %v7385
    %8633 = vmatpush.bf16.msra.mxu0 %v7369
    %8634 = vmatpush.bf16.msra.mxu0 %v7353
    %8635 = vmatpush.bf16.msra.mxu0 %v7337
    %8636 = vmatmul.bf16.gmra.mxu0 %v4892
    %v8637 = vpop.f32.mrf.mxu0
    %v8638 = vadd.f32 %v8625, %v8637
    %v8639 = vpop.f32.mrf.mxu0
    %8640 = vdwg.mxu0
    %8641 = vmatpush.bf16.msra.mxu0 %v7066
    %8642 = vmatpush.bf16.msra.mxu0 %v7050
    %8643 = vmatpush.bf16.msra.mxu0 %v7034
    %8644 = vmatpush.bf16.msra.mxu0 %v7018
    %8645 = vmatpush.bf16.msra.mxu0 %v7002
    %8646 = vmatpush.bf16.msra.mxu0 %v6986
    %8647 = vmatpush.bf16.msra.mxu0 %v6970
    %8648 = vmatpush.bf16.msra.mxu0 %v6954
    %8649 = vmatmul.bf16.gmra.mxu0 %v4889
    %v8650 = vpop.f32.mrf.mxu0
    %v8651 = vadd.f32 0.0, %v8650
    %v8652 = vpop.f32.mrf.mxu0
    %8653 = vdwg.mxu0
    %8654 = vmatpush.bf16.msra.mxu0 %v7194
    %8655 = vmatpush.bf16.msra.mxu0 %v7178
    %8656 = vmatpush.bf16.msra.mxu0 %v7162
    %8657 = vmatpush.bf16.msra.mxu0 %v7146
    %8658 = vmatpush.bf16.msra.mxu0 %v7130
    %8659 = vmatpush.bf16.msra.mxu0 %v7114
    %8660 = vmatpush.bf16.msra.mxu0 %v7098
    %8661 = vmatpush.bf16.msra.mxu0 %v7082
    %8662 = vmatmul.bf16.gmra.mxu0 %v4890
    %v8663 = vpop.f32.mrf.mxu0
    %v8664 = vadd.f32 %v8651, %v8663
    %v8665 = vpop.f32.mrf.mxu0
    %8666 = vdwg.mxu0
    %8667 = vmatpush.bf16.msra.mxu0 %v7322
    %8668 = vmatpush.bf16.msra.mxu0 %v7306
    %8669 = vmatpush.bf16.msra.mxu0 %v7290
    %8670 = vmatpush.bf16.msra.mxu0 %v7274
    %8671 = vmatpush.bf16.msra.mxu0 %v7258
    %8672 = vmatpush.bf16.msra.mxu0 %v7242
    %8673 = vmatpush.bf16.msra.mxu0 %v7226
    %8674 = vmatpush.bf16.msra.mxu0 %v7210
    %8675 = vmatmul.bf16.gmra.mxu0 %v4891
    %v8676 = vpop.f32.mrf.mxu0
    %v8677 = vadd.f32 %v8664, %v8676
    %v8678 = vpop.f32.mrf.mxu0
    %8679 = vdwg.mxu0
    %8680 = vmatpush.bf16.msra.mxu0 %v7450
    %8681 = vmatpush.bf16.msra.mxu0 %v7434
    %8682 = vmatpush.bf16.msra.mxu0 %v7418
    %8683 = vmatpush.bf16.msra.mxu0 %v7402
    %8684 = vmatpush.bf16.msra.mxu0 %v7386
    %8685 = vmatpush.bf16.msra.mxu0 %v7370
    %8686 = vmatpush.bf16.msra.mxu0 %v7354
    %8687 = vmatpush.bf16.msra.mxu0 %v7338
    %8688 = vmatmul.bf16.gmra.mxu0 %v4892
    %v8689 = vpop.f32.mrf.mxu0
    %v8690 = vadd.f32 %v8677, %v8689
    %v8691 = vpop.f32.mrf.mxu0
    %8692 = vdwg.mxu0
    %8693 = vmatpush.bf16.msra.mxu0 %v7067
    %8694 = vmatpush.bf16.msra.mxu0 %v7051
    %8695 = vmatpush.bf16.msra.mxu0 %v7035
    %8696 = vmatpush.bf16.msra.mxu0 %v7019
    %8697 = vmatpush.bf16.msra.mxu0 %v7003
    %8698 = vmatpush.bf16.msra.mxu0 %v6987
    %8699 = vmatpush.bf16.msra.mxu0 %v6971
    %8700 = vmatpush.bf16.msra.mxu0 %v6955
    %8701 = vmatmul.bf16.gmra.mxu0 %v4889
    %v8702 = vpop.f32.mrf.mxu0
    %v8703 = vadd.f32 0.0, %v8702
    %v8704 = vpop.f32.mrf.mxu0
    %8705 = vdwg.mxu0
    %8706 = vmatpush.bf16.msra.mxu0 %v7195
    %8707 = vmatpush.bf16.msra.mxu0 %v7179
    %8708 = vmatpush.bf16.msra.mxu0 %v7163
    %8709 = vmatpush.bf16.msra.mxu0 %v7147
    %8710 = vmatpush.bf16.msra.mxu0 %v7131
    %8711 = vmatpush.bf16.msra.mxu0 %v7115
    %8712 = vmatpush.bf16.msra.mxu0 %v7099
    %8713 = vmatpush.bf16.msra.mxu0 %v7083
    %8714 = vmatmul.bf16.gmra.mxu0 %v4890
    %v8715 = vpop.f32.mrf.mxu0
    %v8716 = vadd.f32 %v8703, %v8715
    %v8717 = vpop.f32.mrf.mxu0
    %8718 = vdwg.mxu0
    %8719 = vmatpush.bf16.msra.mxu0 %v7323
    %8720 = vmatpush.bf16.msra.mxu0 %v7307
    %8721 = vmatpush.bf16.msra.mxu0 %v7291
    %8722 = vmatpush.bf16.msra.mxu0 %v7275
    %8723 = vmatpush.bf16.msra.mxu0 %v7259
    %8724 = vmatpush.bf16.msra.mxu0 %v7243
    %8725 = vmatpush.bf16.msra.mxu0 %v7227
    %8726 = vmatpush.bf16.msra.mxu0 %v7211
    %8727 = vmatmul.bf16.gmra.mxu0 %v4891
    %v8728 = vpop.f32.mrf.mxu0
    %v8729 = vadd.f32 %v8716, %v8728
    %v8730 = vpop.f32.mrf.mxu0
    %8731 = vdwg.mxu0
    %8732 = vmatpush.bf16.msra.mxu0 %v7451
    %8733 = vmatpush.bf16.msra.mxu0 %v7435
    %8734 = vmatpush.bf16.msra.mxu0 %v7419
    %8735 = vmatpush.bf16.msra.mxu0 %v7403
    %8736 = vmatpush.bf16.msra.mxu0 %v7387
    %8737 = vmatpush.bf16.msra.mxu0 %v7371
    %8738 = vmatpush.bf16.msra.mxu0 %v7355
    %8739 = vmatpush.bf16.msra.mxu0 %v7339
    %8740 = vmatmul.bf16.gmra.mxu0 %v4892
    %v8741 = vpop.f32.mrf.mxu0
    %v8742 = vadd.f32 %v8729, %v8741
    %v8743 = vpop.f32.mrf.mxu0
    %8744 = vdwg.mxu0
    %8745 = vmatpush.bf16.msra.mxu0 %v7068
    %8746 = vmatpush.bf16.msra.mxu0 %v7052
    %8747 = vmatpush.bf16.msra.mxu0 %v7036
    %8748 = vmatpush.bf16.msra.mxu0 %v7020
    %8749 = vmatpush.bf16.msra.mxu0 %v7004
    %8750 = vmatpush.bf16.msra.mxu0 %v6988
    %8751 = vmatpush.bf16.msra.mxu0 %v6972
    %8752 = vmatpush.bf16.msra.mxu0 %v6956
    %8753 = vmatmul.bf16.gmra.mxu0 %v4889
    %v8754 = vpop.f32.mrf.mxu0
    %v8755 = vadd.f32 0.0, %v8754
    %v8756 = vpop.f32.mrf.mxu0
    %8757 = vdwg.mxu0
    %8758 = vmatpush.bf16.msra.mxu0 %v7196
    %8759 = vmatpush.bf16.msra.mxu0 %v7180
    %8760 = vmatpush.bf16.msra.mxu0 %v7164
    %8761 = vmatpush.bf16.msra.mxu0 %v7148
    %8762 = vmatpush.bf16.msra.mxu0 %v7132
    %8763 = vmatpush.bf16.msra.mxu0 %v7116
    %8764 = vmatpush.bf16.msra.mxu0 %v7100
    %8765 = vmatpush.bf16.msra.mxu0 %v7084
    %8766 = vmatmul.bf16.gmra.mxu0 %v4890
    %v8767 = vpop.f32.mrf.mxu0
    %v8768 = vadd.f32 %v8755, %v8767
    %v8769 = vpop.f32.mrf.mxu0
    %8770 = vdwg.mxu0
    %8771 = vmatpush.bf16.msra.mxu0 %v7324
    %8772 = vmatpush.bf16.msra.mxu0 %v7308
    %8773 = vmatpush.bf16.msra.mxu0 %v7292
    %8774 = vmatpush.bf16.msra.mxu0 %v7276
    %8775 = vmatpush.bf16.msra.mxu0 %v7260
    %8776 = vmatpush.bf16.msra.mxu0 %v7244
    %8777 = vmatpush.bf16.msra.mxu0 %v7228
    %8778 = vmatpush.bf16.msra.mxu0 %v7212
    %8779 = vmatmul.bf16.gmra.mxu0 %v4891
    %v8780 = vpop.f32.mrf.mxu0
    %v8781 = vadd.f32 %v8768, %v8780
    %v8782 = vpop.f32.mrf.mxu0
    %8783 = vdwg.mxu0
    %8784 = vmatpush.bf16.msra.mxu0 %v7452
    %8785 = vmatpush.bf16.msra.mxu0 %v7436
    %8786 = vmatpush.bf16.msra.mxu0 %v7420
    %8787 = vmatpush.bf16.msra.mxu0 %v7404
    %8788 = vmatpush.bf16.msra.mxu0 %v7388
    %8789 = vmatpush.bf16.msra.mxu0 %v7372
    %8790 = vmatpush.bf16.msra.mxu0 %v7356
    %8791 = vmatpush.bf16.msra.mxu0 %v7340
    %8792 = vmatmul.bf16.gmra.mxu0 %v4892
    %v8793 = vpop.f32.mrf.mxu0
    %v8794 = vadd.f32 %v8781, %v8793
    %v8795 = vpop.f32.mrf.mxu0
    %8796 = vdwg.mxu0
    loop: start=0, step=1, limit=8
    $region93: #{pointer_network_forward.1} parent=1 // loop_pre_header
      _
    $region94: #{pointer_network_forward.1} parent=1 // loop_header
      %s8798 = sphi 0, %s8802
      %p8799 = scmp.ge.s32.totalorder %s8798, 8
      %v8803 = vphi %v8014, %v13116
      %v8804 = vphi %v8066, %v13168
      %v8805 = vphi %v8118, %v13220
      %v8806 = vphi %v8170, %v13272
      %v8807 = vphi %v8222, %v13324
      %v8808 = vphi %v8274, %v13376
      %v8809 = vphi %v8326, %v13428
      %v8810 = vphi %v8378, %v13480
      %v8811 = vphi %v8430, %v13532
      %v8812 = vphi %v8482, %v13584
      %v8813 = vphi %v8534, %v13636
      %v8814 = vphi %v8586, %v13688
      %v8815 = vphi %v8638, %v13740
      %v8816 = vphi %v8690, %v13792
      %v8817 = vphi %v8742, %v13844
      %v8818 = vphi %v8794, %v13896
      %v8819 = vphi %v191, %v14083
      %v8820 = vphi %v192, %v14085
      %v8821 = vphi %v193, %v14087
      %v8822 = vphi %v194, %v14089
      %v8823 = vphi 0.0, %v14066
      %v8824 = vphi 0.0, %v14073
    $region95: #{pointer_network_forward.1} parent=1 // loop_header_branch
      %8801 = sbr.rel (%p8799) target = $region99
    $region96: #{pointer_network_forward.1} parent=1 // loop_body
      %v8825 = vld [vmem:[#allocation11] ss:$2 sm:$0xff]
      %s8826 = scalar_lea.vmem [#allocation11], 16
      %v8827 = vld [vmem:[%s8826] ss:$2 sm:$0xff]
      %8829 = vset.pattern.permute.xlu0 0
      %8830 = vperm.xlu0 %8829, %v8823
      %v8831 = vpop.permute.xlu0 %8830
      %8834 = vset.pattern.permute.xlu0 0
      %8835 = vperm.xlu0 %8834, %v8824
      %v8836 = vpop.permute.xlu0 %8835
      %v8840 = vperm.slane %v8825, 0
      %v8841 = vperm.slane %v8825, 1
      %v8842 = vperm.slane %v8825, 2
      %v8843 = vperm.slane %v8825, 3
      %v8844 = vperm.slane %v8825, 4
      %v8845 = vperm.slane %v8825, 5
      %v8846 = vperm.slane %v8825, 6
      %v8847 = vperm.slane %v8825, 7
      %v8848 = vperm.slane %v8827, 0
      %v8849 = vperm.slane %v8827, 1
      %v8850 = vperm.slane %v8827, 2
      %v8851 = vperm.slane %v8827, 3
      %v8852 = vperm.slane %v8827, 4
      %v8853 = vperm.slane %v8827, 5
      %v8854 = vperm.slane %v8827, 6
      %v8855 = vperm.slane %v8827, 7
      %v8872 = vmul.f32 %v8831, %v8840
      %v8873 = vmul.f32 %v8831, %v8841
      %v8874 = vmul.f32 %v8831, %v8842
      %v8875 = vmul.f32 %v8831, %v8843
      %v8876 = vmul.f32 %v8831, %v8844
      %v8877 = vmul.f32 %v8831, %v8845
      %v8878 = vmul.f32 %v8831, %v8846
      %v8879 = vmul.f32 %v8831, %v8847
      %v8880 = vmul.f32 %v8831, %v8848
      %v8881 = vmul.f32 %v8831, %v8849
      %v8882 = vmul.f32 %v8831, %v8850
      %v8883 = vmul.f32 %v8831, %v8851
      %v8884 = vmul.f32 %v8831, %v8852
      %v8885 = vmul.f32 %v8831, %v8853
      %v8886 = vmul.f32 %v8831, %v8854
      %v8887 = vmul.f32 %v8831, %v8855
      %v8888 = vmul.f32 %v8836, %v8840
      %v8889 = vmul.f32 %v8836, %v8841
      %v8890 = vmul.f32 %v8836, %v8842
      %v8891 = vmul.f32 %v8836, %v8843
      %v8892 = vmul.f32 %v8836, %v8844
      %v8893 = vmul.f32 %v8836, %v8845
      %v8894 = vmul.f32 %v8836, %v8846
      %v8895 = vmul.f32 %v8836, %v8847
      %v8896 = vmul.f32 %v8836, %v8848
      %v8897 = vmul.f32 %v8836, %v8849
      %v8898 = vmul.f32 %v8836, %v8850
      %v8899 = vmul.f32 %v8836, %v8851
      %v8900 = vmul.f32 %v8836, %v8852
      %v8901 = vmul.f32 %v8836, %v8853
      %v8902 = vmul.f32 %v8836, %v8854
      %v8903 = vmul.f32 %v8836, %v8855
      %s8904 = scalar_lea.vmem [#allocation11], 1
      %v8905 = vld [vmem:[%s8904] ss:$2 sm:$0xff]
      %s8906 = scalar_lea.vmem [#allocation11], 17
      %v8907 = vld [vmem:[%s8906] ss:$2 sm:$0xff]
      %8908 = vset.pattern.permute.xlu0 1
      %8909 = vperm.xlu0 %8908, %v8823
      %v8910 = vpop.permute.xlu0 %8909
      %8912 = vset.pattern.permute.xlu0 1
      %8913 = vperm.xlu0 %8912, %v8824
      %v8914 = vpop.permute.xlu0 %8913
      %v8918 = vperm.slane %v8905, 0
      %v8919 = vperm.slane %v8905, 1
      %v8920 = vperm.slane %v8905, 2
      %v8921 = vperm.slane %v8905, 3
      %v8922 = vperm.slane %v8905, 4
      %v8923 = vperm.slane %v8905, 5
      %v8924 = vperm.slane %v8905, 6
      %v8925 = vperm.slane %v8905, 7
      %v8926 = vperm.slane %v8907, 0
      %v8927 = vperm.slane %v8907, 1
      %v8928 = vperm.slane %v8907, 2
      %v8929 = vperm.slane %v8907, 3
      %v8930 = vperm.slane %v8907, 4
      %v8931 = vperm.slane %v8907, 5
      %v8932 = vperm.slane %v8907, 6
      %v8933 = vperm.slane %v8907, 7
      %v8950 = vmul.f32 %v8910, %v8918
      %v8951 = vmul.f32 %v8910, %v8919
      %v8952 = vmul.f32 %v8910, %v8920
      %v8953 = vmul.f32 %v8910, %v8921
      %v8954 = vmul.f32 %v8910, %v8922
      %v8955 = vmul.f32 %v8910, %v8923
      %v8956 = vmul.f32 %v8910, %v8924
      %v8957 = vmul.f32 %v8910, %v8925
      %v8958 = vmul.f32 %v8910, %v8926
      %v8959 = vmul.f32 %v8910, %v8927
      %v8960 = vmul.f32 %v8910, %v8928
      %v8961 = vmul.f32 %v8910, %v8929
      %v8962 = vmul.f32 %v8910, %v8930
      %v8963 = vmul.f32 %v8910, %v8931
      %v8964 = vmul.f32 %v8910, %v8932
      %v8965 = vmul.f32 %v8910, %v8933
      %v8966 = vmul.f32 %v8914, %v8918
      %v8967 = vmul.f32 %v8914, %v8919
      %v8968 = vmul.f32 %v8914, %v8920
      %v8969 = vmul.f32 %v8914, %v8921
      %v8970 = vmul.f32 %v8914, %v8922
      %v8971 = vmul.f32 %v8914, %v8923
      %v8972 = vmul.f32 %v8914, %v8924
      %v8973 = vmul.f32 %v8914, %v8925
      %v8974 = vmul.f32 %v8914, %v8926
      %v8975 = vmul.f32 %v8914, %v8927
      %v8976 = vmul.f32 %v8914, %v8928
      %v8977 = vmul.f32 %v8914, %v8929
      %v8978 = vmul.f32 %v8914, %v8930
      %v8979 = vmul.f32 %v8914, %v8931
      %v8980 = vmul.f32 %v8914, %v8932
      %v8981 = vmul.f32 %v8914, %v8933
      %v8982 = vadd.f32 %v8872, %v8950
      %v8983 = vadd.f32 %v8873, %v8951
      %v8984 = vadd.f32 %v8874, %v8952
      %v8985 = vadd.f32 %v8875, %v8953
      %v8986 = vadd.f32 %v8876, %v8954
      %v8987 = vadd.f32 %v8877, %v8955
      %v8988 = vadd.f32 %v8878, %v8956
      %v8989 = vadd.f32 %v8879, %v8957
      %v8990 = vadd.f32 %v8880, %v8958
      %v8991 = vadd.f32 %v8881, %v8959
      %v8992 = vadd.f32 %v8882, %v8960
      %v8993 = vadd.f32 %v8883, %v8961
      %v8994 = vadd.f32 %v8884, %v8962
      %v8995 = vadd.f32 %v8885, %v8963
      %v8996 = vadd.f32 %v8886, %v8964
      %v8997 = vadd.f32 %v8887, %v8965
      %v8998 = vadd.f32 %v8888, %v8966
      %v8999 = vadd.f32 %v8889, %v8967
      %v9000 = vadd.f32 %v8890, %v8968
      %v9001 = vadd.f32 %v8891, %v8969
      %v9002 = vadd.f32 %v8892, %v8970
      %v9003 = vadd.f32 %v8893, %v8971
      %v9004 = vadd.f32 %v8894, %v8972
      %v9005 = vadd.f32 %v8895, %v8973
      %v9006 = vadd.f32 %v8896, %v8974
      %v9007 = vadd.f32 %v8897, %v8975
      %v9008 = vadd.f32 %v8898, %v8976
      %v9009 = vadd.f32 %v8899, %v8977
      %v9010 = vadd.f32 %v8900, %v8978
      %v9011 = vadd.f32 %v8901, %v8979
      %v9012 = vadd.f32 %v8902, %v8980
      %v9013 = vadd.f32 %v8903, %v8981
      %v9014 = vld [vmem:[#allocation14] sm:$0xff]
      %v9015 = vld [vmem:[#allocation14 + $0x8] sm:$0xff]
      %v9032 = vrot.slane %v8803, 1
      %v9033 = vrot.slane %v8804, 1
      %v9034 = vrot.slane %v8805, 1
      %v9035 = vrot.slane %v8806, 1
      %v9036 = vrot.slane %v8807, 1
      %v9037 = vrot.slane %v8808, 1
      %v9038 = vrot.slane %v8809, 1
      %v9039 = vrot.slane %v8810, 1
      %v9040 = vrot.slane %v8811, 1
      %v9041 = vrot.slane %v8812, 1
      %v9042 = vrot.slane %v8813, 1
      %v9043 = vrot.slane %v8814, 1
      %v9044 = vrot.slane %v8815, 1
      %v9045 = vrot.slane %v8816, 1
      %v9046 = vrot.slane %v8817, 1
      %v9047 = vrot.slane %v8818, 1
      %v9080 = vadd.f32 %v8982, %v8803
      %v9081 = vadd.f32 %v8983, %v8804
      %v9082 = vadd.f32 %v8984, %v8805
      %v9083 = vadd.f32 %v8985, %v8806
      %v9084 = vadd.f32 %v8986, %v8807
      %v9085 = vadd.f32 %v8987, %v8808
      %v9086 = vadd.f32 %v8988, %v8809
      %v9087 = vadd.f32 %v8989, %v8810
      %v9088 = vadd.f32 %v8990, %v8811
      %v9089 = vadd.f32 %v8991, %v8812
      %v9090 = vadd.f32 %v8992, %v8813
      %v9091 = vadd.f32 %v8993, %v8814
      %v9092 = vadd.f32 %v8994, %v8815
      %v9093 = vadd.f32 %v8995, %v8816
      %v9094 = vadd.f32 %v8996, %v8817
      %v9095 = vadd.f32 %v8997, %v8818
      %v9096 = vadd.f32 %v8998, %v9032
      %v9097 = vadd.f32 %v8999, %v9033
      %v9098 = vadd.f32 %v9000, %v9034
      %v9099 = vadd.f32 %v9001, %v9035
      %v9100 = vadd.f32 %v9002, %v9036
      %v9101 = vadd.f32 %v9003, %v9037
      %v9102 = vadd.f32 %v9004, %v9038
      %v9103 = vadd.f32 %v9005, %v9039
      %v9104 = vadd.f32 %v9006, %v9040
      %v9105 = vadd.f32 %v9007, %v9041
      %v9106 = vadd.f32 %v9008, %v9042
      %v9107 = vadd.f32 %v9009, %v9043
      %v9108 = vadd.f32 %v9010, %v9044
      %v9109 = vadd.f32 %v9011, %v9045
      %v9110 = vadd.f32 %v9012, %v9046
      %v9111 = vadd.f32 %v9013, %v9047
      %v9114 = vperm.slane %v9014, 0
      %v9115 = vperm.slane %v9014, 1
      %v9116 = vperm.slane %v9014, 2
      %v9117 = vperm.slane %v9014, 3
      %v9118 = vperm.slane %v9014, 4
      %v9119 = vperm.slane %v9014, 5
      %v9120 = vperm.slane %v9014, 6
      %v9121 = vperm.slane %v9014, 7
      %v9122 = vperm.slane %v9015, 0
      %v9123 = vperm.slane %v9015, 1
      %v9124 = vperm.slane %v9015, 2
      %v9125 = vperm.slane %v9015, 3
      %v9126 = vperm.slane %v9015, 4
      %v9127 = vperm.slane %v9015, 5
      %v9128 = vperm.slane %v9015, 6
      %v9129 = vperm.slane %v9015, 7
      %v9146 = vadd.f32 %v9080, %v9114
      %v9147 = vadd.f32 %v9081, %v9115
      %v9148 = vadd.f32 %v9082, %v9116
      %v9149 = vadd.f32 %v9083, %v9117
      %v9150 = vadd.f32 %v9084, %v9118
      %v9151 = vadd.f32 %v9085, %v9119
      %v9152 = vadd.f32 %v9086, %v9120
      %v9153 = vadd.f32 %v9087, %v9121
      %v9154 = vadd.f32 %v9088, %v9122
      %v9155 = vadd.f32 %v9089, %v9123
      %v9156 = vadd.f32 %v9090, %v9124
      %v9157 = vadd.f32 %v9091, %v9125
      %v9158 = vadd.f32 %v9092, %v9126
      %v9159 = vadd.f32 %v9093, %v9127
      %v9160 = vadd.f32 %v9094, %v9128
      %v9161 = vadd.f32 %v9095, %v9129
      %v9162 = vadd.f32 %v9096, %v9114
      %v9163 = vadd.f32 %v9097, %v9115
      %v9164 = vadd.f32 %v9098, %v9116
      %v9165 = vadd.f32 %v9099, %v9117
      %v9166 = vadd.f32 %v9100, %v9118
      %v9167 = vadd.f32 %v9101, %v9119
      %v9168 = vadd.f32 %v9102, %v9120
      %v9169 = vadd.f32 %v9103, %v9121
      %v9170 = vadd.f32 %v9104, %v9122
      %v9171 = vadd.f32 %v9105, %v9123
      %v9172 = vadd.f32 %v9106, %v9124
      %v9173 = vadd.f32 %v9107, %v9125
      %v9174 = vadd.f32 %v9108, %v9126
      %v9175 = vadd.f32 %v9109, %v9127
      %v9176 = vadd.f32 %v9110, %v9128
      %v9177 = vadd.f32 %v9111, %v9129
      %v9178 = vxor.u32 %v9146, 2147483648
      %v9179 = vxor.u32 %v9147, 2147483648
      %v9180 = vxor.u32 %v9148, 2147483648
      %v9181 = vxor.u32 %v9149, 2147483648
      %v9182 = vxor.u32 %v9162, 2147483648
      %v9183 = vxor.u32 %v9163, 2147483648
      %v9184 = vxor.u32 %v9164, 2147483648
      %v9185 = vxor.u32 %v9165, 2147483648
      %v9186 = vmul.f32 %v9178, 1.442695
      %v9187 = vpow.pop %v9186
      %v9188 = vmul.f32 %v9179, 1.442695
      %v9189 = vpow.pop %v9188
      %v9190 = vmul.f32 %v9180, 1.442695
      %v9191 = vpow.pop %v9190
      %v9192 = vmul.f32 %v9181, 1.442695
      %v9193 = vpow.pop %v9192
      %v9194 = vmul.f32 %v9182, 1.442695
      %v9195 = vpow.pop %v9194
      %v9196 = vmul.f32 %v9183, 1.442695
      %v9197 = vpow.pop %v9196
      %v9198 = vmul.f32 %v9184, 1.442695
      %v9199 = vpow.pop %v9198
      %v9200 = vmul.f32 %v9185, 1.442695
      %v9201 = vpow.pop %v9200
      %v9202 = vadd.f32 %v9187, 1.0
      %v9203 = vadd.f32 %v9189, 1.0
      %v9204 = vadd.f32 %v9191, 1.0
      %v9205 = vadd.f32 %v9193, 1.0
      %v9206 = vadd.f32 %v9195, 1.0
      %v9207 = vadd.f32 %v9197, 1.0
      %v9208 = vadd.f32 %v9199, 1.0
      %v9209 = vadd.f32 %v9201, 1.0
      %v9210 = vrcp.pop %v9202
      %v9211 = vmul.f32 %v9202, %v9210
      %v9212 = vsub.f32 1.0, %v9211
      %v9213 = vmul.f32 %v9210, %v9212
      %v9214 = vadd.f32 %v9210, %v9213
      %vm9215 = vweird.f32 %v9202
      %vm9216 = vweird.f32 %v9210
      %vm9217 = vmor %vm9215, %vm9216
      %v9218 = vsel %vm9217, %v9210, %v9214
      %v9219 = vand.u32 2147483647, %v9202
      %vm9220 = vcmp.eq.f32.partialorder %v9219, 8.507059e+37
      %v9221 = vand.u32 %v9202, 2147483648
      %v9222 = vor.u32 1.1754944e-38, %v9221
      %v9223 = vsel %vm9220, %v9222, %v9218
      %v9224 = vmul.f32 1.0, %v9223
      %v9225 = vrcp.pop %v9203
      %v9226 = vmul.f32 %v9203, %v9225
      %v9227 = vsub.f32 1.0, %v9226
      %v9228 = vmul.f32 %v9225, %v9227
      %v9229 = vadd.f32 %v9225, %v9228
      %vm9230 = vweird.f32 %v9203
      %vm9231 = vweird.f32 %v9225
      %vm9232 = vmor %vm9230, %vm9231
      %v9233 = vsel %vm9232, %v9225, %v9229
      %v9234 = vand.u32 2147483647, %v9203
      %vm9235 = vcmp.eq.f32.partialorder %v9234, 8.507059e+37
      %v9236 = vand.u32 %v9203, 2147483648
      %v9237 = vor.u32 1.1754944e-38, %v9236
      %v9238 = vsel %vm9235, %v9237, %v9233
      %v9239 = vmul.f32 1.0, %v9238
      %v9240 = vrcp.pop %v9204
      %v9241 = vmul.f32 %v9204, %v9240
      %v9242 = vsub.f32 1.0, %v9241
      %v9243 = vmul.f32 %v9240, %v9242
      %v9244 = vadd.f32 %v9240, %v9243
      %vm9245 = vweird.f32 %v9204
      %vm9246 = vweird.f32 %v9240
      %vm9247 = vmor %vm9245, %vm9246
      %v9248 = vsel %vm9247, %v9240, %v9244
      %v9249 = vand.u32 2147483647, %v9204
      %vm9250 = vcmp.eq.f32.partialorder %v9249, 8.507059e+37
      %v9251 = vand.u32 %v9204, 2147483648
      %v9252 = vor.u32 1.1754944e-38, %v9251
      %v9253 = vsel %vm9250, %v9252, %v9248
      %v9254 = vmul.f32 1.0, %v9253
      %v9255 = vrcp.pop %v9205
      %v9256 = vmul.f32 %v9205, %v9255
      %v9257 = vsub.f32 1.0, %v9256
      %v9258 = vmul.f32 %v9255, %v9257
      %v9259 = vadd.f32 %v9255, %v9258
      %vm9260 = vweird.f32 %v9205
      %vm9261 = vweird.f32 %v9255
      %vm9262 = vmor %vm9260, %vm9261
      %v9263 = vsel %vm9262, %v9255, %v9259
      %v9264 = vand.u32 2147483647, %v9205
      %vm9265 = vcmp.eq.f32.partialorder %v9264, 8.507059e+37
      %v9266 = vand.u32 %v9205, 2147483648
      %v9267 = vor.u32 1.1754944e-38, %v9266
      %v9268 = vsel %vm9265, %v9267, %v9263
      %v9269 = vmul.f32 1.0, %v9268
      %v9270 = vrcp.pop %v9206
      %v9271 = vmul.f32 %v9206, %v9270
      %v9272 = vsub.f32 1.0, %v9271
      %v9273 = vmul.f32 %v9270, %v9272
      %v9274 = vadd.f32 %v9270, %v9273
      %vm9275 = vweird.f32 %v9206
      %vm9276 = vweird.f32 %v9270
      %vm9277 = vmor %vm9275, %vm9276
      %v9278 = vsel %vm9277, %v9270, %v9274
      %v9279 = vand.u32 2147483647, %v9206
      %vm9280 = vcmp.eq.f32.partialorder %v9279, 8.507059e+37
      %v9281 = vand.u32 %v9206, 2147483648
      %v9282 = vor.u32 1.1754944e-38, %v9281
      %v9283 = vsel %vm9280, %v9282, %v9278
      %v9284 = vmul.f32 1.0, %v9283
      %v9285 = vrcp.pop %v9207
      %v9286 = vmul.f32 %v9207, %v9285
      %v9287 = vsub.f32 1.0, %v9286
      %v9288 = vmul.f32 %v9285, %v9287
      %v9289 = vadd.f32 %v9285, %v9288
      %vm9290 = vweird.f32 %v9207
      %vm9291 = vweird.f32 %v9285
      %vm9292 = vmor %vm9290, %vm9291
      %v9293 = vsel %vm9292, %v9285, %v9289
      %v9294 = vand.u32 2147483647, %v9207
      %vm9295 = vcmp.eq.f32.partialorder %v9294, 8.507059e+37
      %v9296 = vand.u32 %v9207, 2147483648
      %v9297 = vor.u32 1.1754944e-38, %v9296
      %v9298 = vsel %vm9295, %v9297, %v9293
      %v9299 = vmul.f32 1.0, %v9298
      %v9300 = vrcp.pop %v9208
      %v9301 = vmul.f32 %v9208, %v9300
      %v9302 = vsub.f32 1.0, %v9301
      %v9303 = vmul.f32 %v9300, %v9302
      %v9304 = vadd.f32 %v9300, %v9303
      %vm9305 = vweird.f32 %v9208
      %vm9306 = vweird.f32 %v9300
      %vm9307 = vmor %vm9305, %vm9306
      %v9308 = vsel %vm9307, %v9300, %v9304
      %v9309 = vand.u32 2147483647, %v9208
      %vm9310 = vcmp.eq.f32.partialorder %v9309, 8.507059e+37
      %v9311 = vand.u32 %v9208, 2147483648
      %v9312 = vor.u32 1.1754944e-38, %v9311
      %v9313 = vsel %vm9310, %v9312, %v9308
      %v9314 = vmul.f32 1.0, %v9313
      %v9315 = vrcp.pop %v9209
      %v9316 = vmul.f32 %v9209, %v9315
      %v9317 = vsub.f32 1.0, %v9316
      %v9318 = vmul.f32 %v9315, %v9317
      %v9319 = vadd.f32 %v9315, %v9318
      %vm9320 = vweird.f32 %v9209
      %vm9321 = vweird.f32 %v9315
      %vm9322 = vmor %vm9320, %vm9321
      %v9323 = vsel %vm9322, %v9315, %v9319
      %v9324 = vand.u32 2147483647, %v9209
      %vm9325 = vcmp.eq.f32.partialorder %v9324, 8.507059e+37
      %v9326 = vand.u32 %v9209, 2147483648
      %v9327 = vor.u32 1.1754944e-38, %v9326
      %v9328 = vsel %vm9325, %v9327, %v9323
      %v9329 = vmul.f32 1.0, %v9328
      %v9330 = vxor.u32 %v9150, 2147483648
      %v9331 = vxor.u32 %v9151, 2147483648
      %v9332 = vxor.u32 %v9152, 2147483648
      %v9333 = vxor.u32 %v9153, 2147483648
      %v9334 = vxor.u32 %v9166, 2147483648
      %v9335 = vxor.u32 %v9167, 2147483648
      %v9336 = vxor.u32 %v9168, 2147483648
      %v9337 = vxor.u32 %v9169, 2147483648
      %v9338 = vmul.f32 %v9330, 1.442695
      %v9339 = vpow.pop %v9338
      %v9340 = vmul.f32 %v9331, 1.442695
      %v9341 = vpow.pop %v9340
      %v9342 = vmul.f32 %v9332, 1.442695
      %v9343 = vpow.pop %v9342
      %v9344 = vmul.f32 %v9333, 1.442695
      %v9345 = vpow.pop %v9344
      %v9346 = vmul.f32 %v9334, 1.442695
      %v9347 = vpow.pop %v9346
      %v9348 = vmul.f32 %v9335, 1.442695
      %v9349 = vpow.pop %v9348
      %v9350 = vmul.f32 %v9336, 1.442695
      %v9351 = vpow.pop %v9350
      %v9352 = vmul.f32 %v9337, 1.442695
      %v9353 = vpow.pop %v9352
      %v9354 = vadd.f32 %v9339, 1.0
      %v9355 = vadd.f32 %v9341, 1.0
      %v9356 = vadd.f32 %v9343, 1.0
      %v9357 = vadd.f32 %v9345, 1.0
      %v9358 = vadd.f32 %v9347, 1.0
      %v9359 = vadd.f32 %v9349, 1.0
      %v9360 = vadd.f32 %v9351, 1.0
      %v9361 = vadd.f32 %v9353, 1.0
      %v9362 = vrcp.pop %v9354
      %v9363 = vmul.f32 %v9354, %v9362
      %v9364 = vsub.f32 1.0, %v9363
      %v9365 = vmul.f32 %v9362, %v9364
      %v9366 = vadd.f32 %v9362, %v9365
      %vm9367 = vweird.f32 %v9354
      %vm9368 = vweird.f32 %v9362
      %vm9369 = vmor %vm9367, %vm9368
      %v9370 = vsel %vm9369, %v9362, %v9366
      %v9371 = vand.u32 2147483647, %v9354
      %vm9372 = vcmp.eq.f32.partialorder %v9371, 8.507059e+37
      %v9373 = vand.u32 %v9354, 2147483648
      %v9374 = vor.u32 1.1754944e-38, %v9373
      %v9375 = vsel %vm9372, %v9374, %v9370
      %v9376 = vmul.f32 1.0, %v9375
      %v9377 = vrcp.pop %v9355
      %v9378 = vmul.f32 %v9355, %v9377
      %v9379 = vsub.f32 1.0, %v9378
      %v9380 = vmul.f32 %v9377, %v9379
      %v9381 = vadd.f32 %v9377, %v9380
      %vm9382 = vweird.f32 %v9355
      %vm9383 = vweird.f32 %v9377
      %vm9384 = vmor %vm9382, %vm9383
      %v9385 = vsel %vm9384, %v9377, %v9381
      %v9386 = vand.u32 2147483647, %v9355
      %vm9387 = vcmp.eq.f32.partialorder %v9386, 8.507059e+37
      %v9388 = vand.u32 %v9355, 2147483648
      %v9389 = vor.u32 1.1754944e-38, %v9388
      %v9390 = vsel %vm9387, %v9389, %v9385
      %v9391 = vmul.f32 1.0, %v9390
      %v9392 = vrcp.pop %v9356
      %v9393 = vmul.f32 %v9356, %v9392
      %v9394 = vsub.f32 1.0, %v9393
      %v9395 = vmul.f32 %v9392, %v9394
      %v9396 = vadd.f32 %v9392, %v9395
      %vm9397 = vweird.f32 %v9356
      %vm9398 = vweird.f32 %v9392
      %vm9399 = vmor %vm9397, %vm9398
      %v9400 = vsel %vm9399, %v9392, %v9396
      %v9401 = vand.u32 2147483647, %v9356
      %vm9402 = vcmp.eq.f32.partialorder %v9401, 8.507059e+37
      %v9403 = vand.u32 %v9356, 2147483648
      %v9404 = vor.u32 1.1754944e-38, %v9403
      %v9405 = vsel %vm9402, %v9404, %v9400
      %v9406 = vmul.f32 1.0, %v9405
      %v9407 = vrcp.pop %v9357
      %v9408 = vmul.f32 %v9357, %v9407
      %v9409 = vsub.f32 1.0, %v9408
      %v9410 = vmul.f32 %v9407, %v9409
      %v9411 = vadd.f32 %v9407, %v9410
      %vm9412 = vweird.f32 %v9357
      %vm9413 = vweird.f32 %v9407
      %vm9414 = vmor %vm9412, %vm9413
      %v9415 = vsel %vm9414, %v9407, %v9411
      %v9416 = vand.u32 2147483647, %v9357
      %vm9417 = vcmp.eq.f32.partialorder %v9416, 8.507059e+37
      %v9418 = vand.u32 %v9357, 2147483648
      %v9419 = vor.u32 1.1754944e-38, %v9418
      %v9420 = vsel %vm9417, %v9419, %v9415
      %v9421 = vmul.f32 1.0, %v9420
      %v9422 = vrcp.pop %v9358
      %v9423 = vmul.f32 %v9358, %v9422
      %v9424 = vsub.f32 1.0, %v9423
      %v9425 = vmul.f32 %v9422, %v9424
      %v9426 = vadd.f32 %v9422, %v9425
      %vm9427 = vweird.f32 %v9358
      %vm9428 = vweird.f32 %v9422
      %vm9429 = vmor %vm9427, %vm9428
      %v9430 = vsel %vm9429, %v9422, %v9426
      %v9431 = vand.u32 2147483647, %v9358
      %vm9432 = vcmp.eq.f32.partialorder %v9431, 8.507059e+37
      %v9433 = vand.u32 %v9358, 2147483648
      %v9434 = vor.u32 1.1754944e-38, %v9433
      %v9435 = vsel %vm9432, %v9434, %v9430
      %v9436 = vmul.f32 1.0, %v9435
      %v9437 = vrcp.pop %v9359
      %v9438 = vmul.f32 %v9359, %v9437
      %v9439 = vsub.f32 1.0, %v9438
      %v9440 = vmul.f32 %v9437, %v9439
      %v9441 = vadd.f32 %v9437, %v9440
      %vm9442 = vweird.f32 %v9359
      %vm9443 = vweird.f32 %v9437
      %vm9444 = vmor %vm9442, %vm9443
      %v9445 = vsel %vm9444, %v9437, %v9441
      %v9446 = vand.u32 2147483647, %v9359
      %vm9447 = vcmp.eq.f32.partialorder %v9446, 8.507059e+37
      %v9448 = vand.u32 %v9359, 2147483648
      %v9449 = vor.u32 1.1754944e-38, %v9448
      %v9450 = vsel %vm9447, %v9449, %v9445
      %v9451 = vmul.f32 1.0, %v9450
      %v9452 = vrcp.pop %v9360
      %v9453 = vmul.f32 %v9360, %v9452
      %v9454 = vsub.f32 1.0, %v9453
      %v9455 = vmul.f32 %v9452, %v9454
      %v9456 = vadd.f32 %v9452, %v9455
      %vm9457 = vweird.f32 %v9360
      %vm9458 = vweird.f32 %v9452
      %vm9459 = vmor %vm9457, %vm9458
      %v9460 = vsel %vm9459, %v9452, %v9456
      %v9461 = vand.u32 2147483647, %v9360
      %vm9462 = vcmp.eq.f32.partialorder %v9461, 8.507059e+37
      %v9463 = vand.u32 %v9360, 2147483648
      %v9464 = vor.u32 1.1754944e-38, %v9463
      %v9465 = vsel %vm9462, %v9464, %v9460
      %v9466 = vmul.f32 1.0, %v9465
      %v9467 = vrcp.pop %v9361
      %v9468 = vmul.f32 %v9361, %v9467
      %v9469 = vsub.f32 1.0, %v9468
      %v9470 = vmul.f32 %v9467, %v9469
      %v9471 = vadd.f32 %v9467, %v9470
      %vm9472 = vweird.f32 %v9361
      %vm9473 = vweird.f32 %v9467
      %vm9474 = vmor %vm9472, %vm9473
      %v9475 = vsel %vm9474, %v9467, %v9471
      %v9476 = vand.u32 2147483647, %v9361
      %vm9477 = vcmp.eq.f32.partialorder %v9476, 8.507059e+37
      %v9478 = vand.u32 %v9361, 2147483648
      %v9479 = vor.u32 1.1754944e-38, %v9478
      %v9480 = vsel %vm9477, %v9479, %v9475
      %v9481 = vmul.f32 1.0, %v9480
      %v9482 = vtanh.pop %v9154
      %v9483 = vtanh.pop %v9155
      %v9484 = vtanh.pop %v9156
      %v9485 = vtanh.pop %v9157
      %v9486 = vtanh.pop %v9170
      %v9487 = vtanh.pop %v9171
      %v9488 = vtanh.pop %v9172
      %v9489 = vtanh.pop %v9173
      %v9490 = vxor.u32 %v9158, 2147483648
      %v9491 = vxor.u32 %v9159, 2147483648
      %v9492 = vxor.u32 %v9160, 2147483648
      %v9493 = vxor.u32 %v9161, 2147483648
      %v9494 = vxor.u32 %v9174, 2147483648
      %v9495 = vxor.u32 %v9175, 2147483648
      %v9496 = vxor.u32 %v9176, 2147483648
      %v9497 = vxor.u32 %v9177, 2147483648
      %v9498 = vmul.f32 %v9490, 1.442695
      %v9499 = vpow.pop %v9498
      %v9500 = vmul.f32 %v9491, 1.442695
      %v9501 = vpow.pop %v9500
      %v9502 = vmul.f32 %v9492, 1.442695
      %v9503 = vpow.pop %v9502
      %v9504 = vmul.f32 %v9493, 1.442695
      %v9505 = vpow.pop %v9504
      %v9506 = vmul.f32 %v9494, 1.442695
      %v9507 = vpow.pop %v9506
      %v9508 = vmul.f32 %v9495, 1.442695
      %v9509 = vpow.pop %v9508
      %v9510 = vmul.f32 %v9496, 1.442695
      %v9511 = vpow.pop %v9510
      %v9512 = vmul.f32 %v9497, 1.442695
      %v9513 = vpow.pop %v9512
      %v9514 = vadd.f32 %v9499, 1.0
      %v9515 = vadd.f32 %v9501, 1.0
      %v9516 = vadd.f32 %v9503, 1.0
      %v9517 = vadd.f32 %v9505, 1.0
      %v9518 = vadd.f32 %v9507, 1.0
      %v9519 = vadd.f32 %v9509, 1.0
      %v9520 = vadd.f32 %v9511, 1.0
      %v9521 = vadd.f32 %v9513, 1.0
      %v9522 = vrcp.pop %v9514
      %v9523 = vmul.f32 %v9514, %v9522
      %v9524 = vsub.f32 1.0, %v9523
      %v9525 = vmul.f32 %v9522, %v9524
      %v9526 = vadd.f32 %v9522, %v9525
      %vm9527 = vweird.f32 %v9514
      %vm9528 = vweird.f32 %v9522
      %vm9529 = vmor %vm9527, %vm9528
      %v9530 = vsel %vm9529, %v9522, %v9526
      %v9531 = vand.u32 2147483647, %v9514
      %vm9532 = vcmp.eq.f32.partialorder %v9531, 8.507059e+37
      %v9533 = vand.u32 %v9514, 2147483648
      %v9534 = vor.u32 1.1754944e-38, %v9533
      %v9535 = vsel %vm9532, %v9534, %v9530
      %v9536 = vmul.f32 1.0, %v9535
      %v9537 = vrcp.pop %v9515
      %v9538 = vmul.f32 %v9515, %v9537
      %v9539 = vsub.f32 1.0, %v9538
      %v9540 = vmul.f32 %v9537, %v9539
      %v9541 = vadd.f32 %v9537, %v9540
      %vm9542 = vweird.f32 %v9515
      %vm9543 = vweird.f32 %v9537
      %vm9544 = vmor %vm9542, %vm9543
      %v9545 = vsel %vm9544, %v9537, %v9541
      %v9546 = vand.u32 2147483647, %v9515
      %vm9547 = vcmp.eq.f32.partialorder %v9546, 8.507059e+37
      %v9548 = vand.u32 %v9515, 2147483648
      %v9549 = vor.u32 1.1754944e-38, %v9548
      %v9550 = vsel %vm9547, %v9549, %v9545
      %v9551 = vmul.f32 1.0, %v9550
      %v9552 = vrcp.pop %v9516
      %v9553 = vmul.f32 %v9516, %v9552
      %v9554 = vsub.f32 1.0, %v9553
      %v9555 = vmul.f32 %v9552, %v9554
      %v9556 = vadd.f32 %v9552, %v9555
      %vm9557 = vweird.f32 %v9516
      %vm9558 = vweird.f32 %v9552
      %vm9559 = vmor %vm9557, %vm9558
      %v9560 = vsel %vm9559, %v9552, %v9556
      %v9561 = vand.u32 2147483647, %v9516
      %vm9562 = vcmp.eq.f32.partialorder %v9561, 8.507059e+37
      %v9563 = vand.u32 %v9516, 2147483648
      %v9564 = vor.u32 1.1754944e-38, %v9563
      %v9565 = vsel %vm9562, %v9564, %v9560
      %v9566 = vmul.f32 1.0, %v9565
      %v9567 = vrcp.pop %v9517
      %v9568 = vmul.f32 %v9517, %v9567
      %v9569 = vsub.f32 1.0, %v9568
      %v9570 = vmul.f32 %v9567, %v9569
      %v9571 = vadd.f32 %v9567, %v9570
      %vm9572 = vweird.f32 %v9517
      %vm9573 = vweird.f32 %v9567
      %vm9574 = vmor %vm9572, %vm9573
      %v9575 = vsel %vm9574, %v9567, %v9571
      %v9576 = vand.u32 2147483647, %v9517
      %vm9577 = vcmp.eq.f32.partialorder %v9576, 8.507059e+37
      %v9578 = vand.u32 %v9517, 2147483648
      %v9579 = vor.u32 1.1754944e-38, %v9578
      %v9580 = vsel %vm9577, %v9579, %v9575
      %v9581 = vmul.f32 1.0, %v9580
      %v9582 = vrcp.pop %v9518
      %v9583 = vmul.f32 %v9518, %v9582
      %v9584 = vsub.f32 1.0, %v9583
      %v9585 = vmul.f32 %v9582, %v9584
      %v9586 = vadd.f32 %v9582, %v9585
      %vm9587 = vweird.f32 %v9518
      %vm9588 = vweird.f32 %v9582
      %vm9589 = vmor %vm9587, %vm9588
      %v9590 = vsel %vm9589, %v9582, %v9586
      %v9591 = vand.u32 2147483647, %v9518
      %vm9592 = vcmp.eq.f32.partialorder %v9591, 8.507059e+37
      %v9593 = vand.u32 %v9518, 2147483648
      %v9594 = vor.u32 1.1754944e-38, %v9593
      %v9595 = vsel %vm9592, %v9594, %v9590
      %v9596 = vmul.f32 1.0, %v9595
      %v9597 = vrcp.pop %v9519
      %v9598 = vmul.f32 %v9519, %v9597
      %v9599 = vsub.f32 1.0, %v9598
      %v9600 = vmul.f32 %v9597, %v9599
      %v9601 = vadd.f32 %v9597, %v9600
      %vm9602 = vweird.f32 %v9519
      %vm9603 = vweird.f32 %v9597
      %vm9604 = vmor %vm9602, %vm9603
      %v9605 = vsel %vm9604, %v9597, %v9601
      %v9606 = vand.u32 2147483647, %v9519
      %vm9607 = vcmp.eq.f32.partialorder %v9606, 8.507059e+37
      %v9608 = vand.u32 %v9519, 2147483648
      %v9609 = vor.u32 1.1754944e-38, %v9608
      %v9610 = vsel %vm9607, %v9609, %v9605
      %v9611 = vmul.f32 1.0, %v9610
      %v9612 = vrcp.pop %v9520
      %v9613 = vmul.f32 %v9520, %v9612
      %v9614 = vsub.f32 1.0, %v9613
      %v9615 = vmul.f32 %v9612, %v9614
      %v9616 = vadd.f32 %v9612, %v9615
      %vm9617 = vweird.f32 %v9520
      %vm9618 = vweird.f32 %v9612
      %vm9619 = vmor %vm9617, %vm9618
      %v9620 = vsel %vm9619, %v9612, %v9616
      %v9621 = vand.u32 2147483647, %v9520
      %vm9622 = vcmp.eq.f32.partialorder %v9621, 8.507059e+37
      %v9623 = vand.u32 %v9520, 2147483648
      %v9624 = vor.u32 1.1754944e-38, %v9623
      %v9625 = vsel %vm9622, %v9624, %v9620
      %v9626 = vmul.f32 1.0, %v9625
      %v9627 = vrcp.pop %v9521
      %v9628 = vmul.f32 %v9521, %v9627
      %v9629 = vsub.f32 1.0, %v9628
      %v9630 = vmul.f32 %v9627, %v9629
      %v9631 = vadd.f32 %v9627, %v9630
      %vm9632 = vweird.f32 %v9521
      %vm9633 = vweird.f32 %v9627
      %vm9634 = vmor %vm9632, %vm9633
      %v9635 = vsel %vm9634, %v9627, %v9631
      %v9636 = vand.u32 2147483647, %v9521
      %vm9637 = vcmp.eq.f32.partialorder %v9636, 8.507059e+37
      %v9638 = vand.u32 %v9521, 2147483648
      %v9639 = vor.u32 1.1754944e-38, %v9638
      %v9640 = vsel %vm9637, %v9639, %v9635
      %v9641 = vmul.f32 1.0, %v9640
      %v9646 = vrot.slane %v8819, 1
      %v9647 = vrot.slane %v8820, 1
      %v9648 = vrot.slane %v8821, 1
      %v9649 = vrot.slane %v8822, 1
      %v9658 = vmul.f32 %v9376, %v8819
      %v9659 = vmul.f32 %v9391, %v8820
      %v9660 = vmul.f32 %v9406, %v8821
      %v9661 = vmul.f32 %v9421, %v8822
      %v9662 = vmul.f32 %v9436, %v9646
      %v9663 = vmul.f32 %v9451, %v9647
      %v9664 = vmul.f32 %v9466, %v9648
      %v9665 = vmul.f32 %v9481, %v9649
      %v9666 = vmul.f32 %v9224, %v9482
      %v9667 = vmul.f32 %v9239, %v9483
      %v9668 = vmul.f32 %v9254, %v9484
      %v9669 = vmul.f32 %v9269, %v9485
      %v9670 = vmul.f32 %v9284, %v9486
      %v9671 = vmul.f32 %v9299, %v9487
      %v9672 = vmul.f32 %v9314, %v9488
      %v9673 = vmul.f32 %v9329, %v9489
      %v9674 = vadd.f32 %v9658, %v9666
      %v9675 = vadd.f32 %v9659, %v9667
      %v9676 = vadd.f32 %v9660, %v9668
      %v9677 = vadd.f32 %v9661, %v9669
      %v9678 = vadd.f32 %v9662, %v9670
      %v9679 = vadd.f32 %v9663, %v9671
      %v9680 = vadd.f32 %v9664, %v9672
      %v9681 = vadd.f32 %v9665, %v9673
      %v9682 = vtanh.pop %v9674
      %v9683 = vtanh.pop %v9675
      %v9684 = vtanh.pop %v9676
      %v9685 = vtanh.pop %v9677
      %v9686 = vtanh.pop %v9678
      %v9687 = vtanh.pop %v9679
      %v9688 = vtanh.pop %v9680
      %v9689 = vtanh.pop %v9681
      %v9690 = vmul.f32 %v9536, %v9682
      %v9691 = vmul.f32 %v9551, %v9683
      %v9692 = vmul.f32 %v9566, %v9684
      %v9693 = vmul.f32 %v9581, %v9685
      %v9694 = vmul.f32 %v9596, %v9686
      %v9695 = vmul.f32 %v9611, %v9687
      %v9696 = vmul.f32 %v9626, %v9688
      %v9697 = vmul.f32 %v9641, %v9689
      %v9698 = vpack.c.bf16 %v9690, %v9690
      %v9699 = vpack.c.bf16 %v9691, %v9691
      %v9700 = vpack.c.bf16 %v9692, %v9692
      %v9701 = vpack.c.bf16 %v9693, %v9693
      %v9702 = vpack.c.bf16 %v9694, %v9694
      %v9703 = vpack.c.bf16 %v9695, %v9695
      %v9704 = vpack.c.bf16 %v9696, %v9696
      %v9705 = vpack.c.bf16 %v9697, %v9697
      %v9706 = vld [vmem:[#allocation12] sm:$0xff]
      %v9707 = vld [vmem:[#allocation12 + $0x8] sm:$0xff]
      %v9708 = vld [vmem:[#allocation12 + $0x10] sm:$0xff]
      %v9709 = vld [vmem:[#allocation12 + $0x18] sm:$0xff]
      %v9710 = vld [vmem:[#allocation12 + $0x20] sm:$0xff]
      %v9711 = vld [vmem:[#allocation12 + $0x28] sm:$0xff]
      %v9712 = vld [vmem:[#allocation12 + $0x30] sm:$0xff]
      %v9713 = vld [vmem:[#allocation12 + $0x38] sm:$0xff]
      %v9714 = vld [vmem:[#allocation12 + $0x40] sm:$0xf]
      %v9715 = vld [vmem:[#allocation12 + $0x44] sm:$0xff]
      %v9716 = vld [vmem:[#allocation12 + $0x4c] sm:$0xff]
      %v9717 = vld [vmem:[#allocation12 + $0x54] sm:$0xff]
      %v9718 = vld [vmem:[#allocation12 + $0x5c] sm:$0xff]
      %v9719 = vld [vmem:[#allocation12 + $0x64] sm:$0xff]
      %v9720 = vld [vmem:[#allocation12 + $0x6c] sm:$0xff]
      %v9721 = vld [vmem:[#allocation12 + $0x74] sm:$0xff]
      %v9722 = vld [vmem:[#allocation12 + $0x7c] sm:$0xff]
      %v9723 = vld [vmem:[#allocation12 + $0x84] sm:$0xf]
      %v9724 = vld [vmem:[#allocation12 + $0x88] sm:$0xff]
      %v9725 = vld [vmem:[#allocation12 + $0x90] sm:$0xff]
      %v9726 = vld [vmem:[#allocation12 + $0x98] sm:$0xff]
      %v9727 = vld [vmem:[#allocation12 + $0xa0] sm:$0xff]
      %v9728 = vld [vmem:[#allocation12 + $0xa8] sm:$0xff]
      %v9729 = vld [vmem:[#allocation12 + $0xb0] sm:$0xff]
      %v9730 = vld [vmem:[#allocation12 + $0xb8] sm:$0xff]
      %v9731 = vld [vmem:[#allocation12 + $0xc0] sm:$0xff]
      %v9732 = vld [vmem:[#allocation12 + $0xc8] sm:$0xf]
      %v9733 = vld [vmem:[#allocation12 + $0xcc] sm:$0xff]
      %v9734 = vld [vmem:[#allocation12 + $0xd4] sm:$0xff]
      %v9735 = vld [vmem:[#allocation12 + $0xdc] sm:$0xff]
      %v9736 = vld [vmem:[#allocation12 + $0xe4] sm:$0xff]
      %v9737 = vld [vmem:[#allocation12 + $0xec] sm:$0xff]
      %v9738 = vld [vmem:[#allocation12 + $0xf4] sm:$0xff]
      %v9739 = vld [vmem:[#allocation12 + $0xfc] sm:$0xff]
      %v9740 = vld [vmem:[#allocation12 + $0x104] sm:$0xff]
      %v9741 = vld [vmem:[#allocation12 + $0x10c] sm:$0xf]
      %v9742 = vld [vmem:[#allocation12 + $0x110] sm:$0xff]
      %v9743 = vld [vmem:[#allocation12 + $0x118] sm:$0xff]
      %v9744 = vld [vmem:[#allocation12 + $0x120] sm:$0xff]
      %v9745 = vld [vmem:[#allocation12 + $0x128] sm:$0xff]
      %v9746 = vld [vmem:[#allocation12 + $0x130] sm:$0xff]
      %v9747 = vld [vmem:[#allocation12 + $0x138] sm:$0xff]
      %v9748 = vld [vmem:[#allocation12 + $0x140] sm:$0xff]
      %v9749 = vld [vmem:[#allocation12 + $0x148] sm:$0xff]
      %v9750 = vld [vmem:[#allocation12 + $0x150] sm:$0xf]
      %v9751 = vld [vmem:[#allocation12 + $0x154] sm:$0xff]
      %v9752 = vld [vmem:[#allocation12 + $0x15c] sm:$0xff]
      %v9753 = vld [vmem:[#allocation12 + $0x164] sm:$0xff]
      %v9754 = vld [vmem:[#allocation12 + $0x16c] sm:$0xff]
      %v9755 = vld [vmem:[#allocation12 + $0x174] sm:$0xff]
      %v9756 = vld [vmem:[#allocation12 + $0x17c] sm:$0xff]
      %v9757 = vld [vmem:[#allocation12 + $0x184] sm:$0xff]
      %v9758 = vld [vmem:[#allocation12 + $0x18c] sm:$0xff]
      %v9759 = vld [vmem:[#allocation12 + $0x194] sm:$0xf]
      %v9760 = vld [vmem:[#allocation12 + $0x198] sm:$0xff]
      %v9761 = vld [vmem:[#allocation12 + $0x1a0] sm:$0xff]
      %v9762 = vld [vmem:[#allocation12 + $0x1a8] sm:$0xff]
      %v9763 = vld [vmem:[#allocation12 + $0x1b0] sm:$0xff]
      %v9764 = vld [vmem:[#allocation12 + $0x1b8] sm:$0xff]
      %v9765 = vld [vmem:[#allocation12 + $0x1c0] sm:$0xff]
      %v9766 = vld [vmem:[#allocation12 + $0x1c8] sm:$0xff]
      %v9767 = vld [vmem:[#allocation12 + $0x1d0] sm:$0xff]
      %v9768 = vld [vmem:[#allocation12 + $0x1d8] sm:$0xf]
      %v9769 = vld [vmem:[#allocation12 + $0x1dc] sm:$0xff]
      %v9770 = vld [vmem:[#allocation12 + $0x1e4] sm:$0xff]
      %v9771 = vld [vmem:[#allocation12 + $0x1ec] sm:$0xff]
      %v9772 = vld [vmem:[#allocation12 + $0x1f4] sm:$0xff]
      %v9773 = vld [vmem:[#allocation12 + $0x1fc] sm:$0xff]
      %v9774 = vld [vmem:[#allocation12 + $0x204] sm:$0xff]
      %v9775 = vld [vmem:[#allocation12 + $0x20c] sm:$0xff]
      %v9776 = vld [vmem:[#allocation12 + $0x214] sm:$0xff]
      %v9777 = vld [vmem:[#allocation12 + $0x21c] sm:$0xf]
      %v9778 = vld [vmem:[#allocation12 + $0x220] sm:$0xff]
      %v9779 = vld [vmem:[#allocation12 + $0x228] sm:$0xff]
      %v9780 = vld [vmem:[#allocation12 + $0x230] sm:$0xff]
      %v9781 = vld [vmem:[#allocation12 + $0x238] sm:$0xff]
      %v9782 = vld [vmem:[#allocation12 + $0x240] sm:$0xff]
      %v9783 = vld [vmem:[#allocation12 + $0x248] sm:$0xff]
      %v9784 = vld [vmem:[#allocation12 + $0x250] sm:$0xff]
      %v9785 = vld [vmem:[#allocation12 + $0x258] sm:$0xff]
      %v9786 = vld [vmem:[#allocation12 + $0x260] sm:$0xf]
      %v9787 = vld [vmem:[#allocation12 + $0x264] sm:$0xff]
      %v9788 = vld [vmem:[#allocation12 + $0x26c] sm:$0xff]
      %v9789 = vld [vmem:[#allocation12 + $0x274] sm:$0xff]
      %v9790 = vld [vmem:[#allocation12 + $0x27c] sm:$0xff]
      %v9791 = vld [vmem:[#allocation12 + $0x284] sm:$0xff]
      %v9792 = vld [vmem:[#allocation12 + $0x28c] sm:$0xff]
      %v9793 = vld [vmem:[#allocation12 + $0x294] sm:$0xff]
      %v9794 = vld [vmem:[#allocation12 + $0x29c] sm:$0xff]
      %v9795 = vld [vmem:[#allocation12 + $0x2a4] sm:$0xf]
      %v9796 = vld [vmem:[#allocation12 + $0x2a8] sm:$0xff]
      %v9797 = vld [vmem:[#allocation12 + $0x2b0] sm:$0xff]
      %v9798 = vld [vmem:[#allocation12 + $0x2b8] sm:$0xff]
      %v9799 = vld [vmem:[#allocation12 + $0x2c0] sm:$0xff]
      %v9800 = vld [vmem:[#allocation12 + $0x2c8] sm:$0xff]
      %v9801 = vld [vmem:[#allocation12 + $0x2d0] sm:$0xff]
      %v9802 = vld [vmem:[#allocation12 + $0x2d8] sm:$0xff]
      %v9803 = vld [vmem:[#allocation12 + $0x2e0] sm:$0xff]
      %v9804 = vld [vmem:[#allocation12 + $0x2e8] sm:$0xf]
      %v9805 = vld [vmem:[#allocation12 + $0x2ec] sm:$0xff]
      %v9806 = vld [vmem:[#allocation12 + $0x2f4] sm:$0xff]
      %v9807 = vld [vmem:[#allocation12 + $0x2fc] sm:$0xff]
      %v9808 = vld [vmem:[#allocation12 + $0x304] sm:$0xff]
      %v9809 = vld [vmem:[#allocation12 + $0x30c] sm:$0xff]
      %v9810 = vld [vmem:[#allocation12 + $0x314] sm:$0xff]
      %v9811 = vld [vmem:[#allocation12 + $0x31c] sm:$0xff]
      %v9812 = vld [vmem:[#allocation12 + $0x324] sm:$0xff]
      %v9813 = vld [vmem:[#allocation12 + $0x32c] sm:$0xf]
      %v9814 = vld [vmem:[#allocation12 + $0x330] sm:$0xff]
      %v9815 = vld [vmem:[#allocation12 + $0x338] sm:$0xff]
      %v9816 = vld [vmem:[#allocation12 + $0x340] sm:$0xff]
      %v9817 = vld [vmem:[#allocation12 + $0x348] sm:$0xff]
      %v9818 = vld [vmem:[#allocation12 + $0x350] sm:$0xff]
      %v9819 = vld [vmem:[#allocation12 + $0x358] sm:$0xff]
      %v9820 = vld [vmem:[#allocation12 + $0x360] sm:$0xff]
      %v9821 = vld [vmem:[#allocation12 + $0x368] sm:$0xff]
      %v9822 = vld [vmem:[#allocation12 + $0x370] sm:$0xf]
      %v9823 = vld [vmem:[#allocation12 + $0x374] sm:$0xff]
      %v9824 = vld [vmem:[#allocation12 + $0x37c] sm:$0xff]
      %v9825 = vld [vmem:[#allocation12 + $0x384] sm:$0xff]
      %v9826 = vld [vmem:[#allocation12 + $0x38c] sm:$0xff]
      %v9827 = vld [vmem:[#allocation12 + $0x394] sm:$0xff]
      %v9828 = vld [vmem:[#allocation12 + $0x39c] sm:$0xff]
      %v9829 = vld [vmem:[#allocation12 + $0x3a4] sm:$0xff]
      %v9830 = vld [vmem:[#allocation12 + $0x3ac] sm:$0xff]
      %v9831 = vld [vmem:[#allocation12 + $0x3b4] sm:$0xf]
      %v9832 = vld [vmem:[#allocation12 + $0x3b8] sm:$0xff]
      %v9833 = vld [vmem:[#allocation12 + $0x3c0] sm:$0xff]
      %v9834 = vld [vmem:[#allocation12 + $0x3c8] sm:$0xff]
      %v9835 = vld [vmem:[#allocation12 + $0x3d0] sm:$0xff]
      %v9836 = vld [vmem:[#allocation12 + $0x3d8] sm:$0xff]
      %v9837 = vld [vmem:[#allocation12 + $0x3e0] sm:$0xff]
      %v9838 = vld [vmem:[#allocation12 + $0x3e8] sm:$0xff]
      %v9839 = vld [vmem:[#allocation12 + $0x3f0] sm:$0xff]
      %v9840 = vld [vmem:[#allocation12 + $0x3f8] sm:$0xf]
      %v9841 = vld [vmem:[#allocation12 + $0x3fc] sm:$0xff]
      %v9842 = vld [vmem:[#allocation12 + $0x404] sm:$0xff]
      %v9843 = vld [vmem:[#allocation12 + $0x40c] sm:$0xff]
      %v9844 = vld [vmem:[#allocation12 + $0x414] sm:$0xff]
      %v9845 = vld [vmem:[#allocation12 + $0x41c] sm:$0xff]
      %v9846 = vld [vmem:[#allocation12 + $0x424] sm:$0xff]
      %v9847 = vld [vmem:[#allocation12 + $0x42c] sm:$0xff]
      %v9848 = vld [vmem:[#allocation12 + $0x434] sm:$0xff]
      %v9849 = vld [vmem:[#allocation12 + $0x43c] sm:$0xf]
      %v9850 = vld [vmem:[#allocation12 + $0x440] sm:$0xff]
      %v9851 = vld [vmem:[#allocation12 + $0x448] sm:$0xff]
      %v9852 = vld [vmem:[#allocation12 + $0x450] sm:$0xff]
      %v9853 = vld [vmem:[#allocation12 + $0x458] sm:$0xff]
      %v9854 = vld [vmem:[#allocation12 + $0x460] sm:$0xff]
      %v9855 = vld [vmem:[#allocation12 + $0x468] sm:$0xff]
      %v9856 = vld [vmem:[#allocation12 + $0x470] sm:$0xff]
      %v9857 = vld [vmem:[#allocation12 + $0x478] sm:$0xff]
      %v9858 = vld [vmem:[#allocation12 + $0x480] sm:$0xf]
      %v9859 = vld [vmem:[#allocation12 + $0x484] sm:$0xff]
      %v9860 = vld [vmem:[#allocation12 + $0x48c] sm:$0xff]
      %v9861 = vld [vmem:[#allocation12 + $0x494] sm:$0xff]
      %v9862 = vld [vmem:[#allocation12 + $0x49c] sm:$0xff]
      %v9863 = vld [vmem:[#allocation12 + $0x4a4] sm:$0xff]
      %v9864 = vld [vmem:[#allocation12 + $0x4ac] sm:$0xff]
      %v9865 = vld [vmem:[#allocation12 + $0x4b4] sm:$0xff]
      %v9866 = vld [vmem:[#allocation12 + $0x4bc] sm:$0xff]
      %v9867 = vld [vmem:[#allocation12 + $0x4c4] sm:$0xf]
      %v9868 = vld [vmem:[#allocation12 + $0x4c8] sm:$0xff]
      %v9869 = vld [vmem:[#allocation12 + $0x4d0] sm:$0xff]
      %v9870 = vld [vmem:[#allocation12 + $0x4d8] sm:$0xff]
      %v9871 = vld [vmem:[#allocation12 + $0x4e0] sm:$0xff]
      %v9872 = vld [vmem:[#allocation12 + $0x4e8] sm:$0xff]
      %v9873 = vld [vmem:[#allocation12 + $0x4f0] sm:$0xff]
      %v9874 = vld [vmem:[#allocation12 + $0x4f8] sm:$0xff]
      %v9875 = vld [vmem:[#allocation12 + $0x500] sm:$0xff]
      %v9876 = vld [vmem:[#allocation12 + $0x508] sm:$0xf]
      %v9877 = vld [vmem:[#allocation12 + $0x50c] sm:$0xff]
      %v9878 = vld [vmem:[#allocation12 + $0x514] sm:$0xff]
      %v9879 = vld [vmem:[#allocation12 + $0x51c] sm:$0xff]
      %v9880 = vld [vmem:[#allocation12 + $0x524] sm:$0xff]
      %v9881 = vld [vmem:[#allocation12 + $0x52c] sm:$0xff]
      %v9882 = vld [vmem:[#allocation12 + $0x534] sm:$0xff]
      %v9883 = vld [vmem:[#allocation12 + $0x53c] sm:$0xff]
      %v9884 = vld [vmem:[#allocation12 + $0x544] sm:$0xff]
      %v9885 = vld [vmem:[#allocation12 + $0x54c] sm:$0xf]
      %v9886 = vld [vmem:[#allocation12 + $0x550] sm:$0xff]
      %v9887 = vld [vmem:[#allocation12 + $0x558] sm:$0xff]
      %v9888 = vld [vmem:[#allocation12 + $0x560] sm:$0xff]
      %v9889 = vld [vmem:[#allocation12 + $0x568] sm:$0xff]
      %v9890 = vld [vmem:[#allocation12 + $0x570] sm:$0xff]
      %v9891 = vld [vmem:[#allocation12 + $0x578] sm:$0xff]
      %v9892 = vld [vmem:[#allocation12 + $0x580] sm:$0xff]
      %v9893 = vld [vmem:[#allocation12 + $0x588] sm:$0xff]
      %v9894 = vld [vmem:[#allocation12 + $0x590] sm:$0xf]
      %v9895 = vld [vmem:[#allocation12 + $0x594] sm:$0xff]
      %v9896 = vld [vmem:[#allocation12 + $0x59c] sm:$0xff]
      %v9897 = vld [vmem:[#allocation12 + $0x5a4] sm:$0xff]
      %v9898 = vld [vmem:[#allocation12 + $0x5ac] sm:$0xff]
      %v9899 = vld [vmem:[#allocation12 + $0x5b4] sm:$0xff]
      %v9900 = vld [vmem:[#allocation12 + $0x5bc] sm:$0xff]
      %v9901 = vld [vmem:[#allocation12 + $0x5c4] sm:$0xff]
      %v9902 = vld [vmem:[#allocation12 + $0x5cc] sm:$0xff]
      %v9903 = vld [vmem:[#allocation12 + $0x5d4] sm:$0xf]
      %v9904 = vld [vmem:[#allocation12 + $0x5d8] sm:$0xff]
      %v9905 = vld [vmem:[#allocation12 + $0x5e0] sm:$0xff]
      %v9906 = vld [vmem:[#allocation12 + $0x5e8] sm:$0xff]
      %v9907 = vld [vmem:[#allocation12 + $0x5f0] sm:$0xff]
      %v9908 = vld [vmem:[#allocation12 + $0x5f8] sm:$0xff]
      %v9909 = vld [vmem:[#allocation12 + $0x600] sm:$0xff]
      %v9910 = vld [vmem:[#allocation12 + $0x608] sm:$0xff]
      %v9911 = vld [vmem:[#allocation12 + $0x610] sm:$0xff]
      %v9912 = vld [vmem:[#allocation12 + $0x618] sm:$0xf]
      %v9913 = vld [vmem:[#allocation12 + $0x61c] sm:$0xff]
      %v9914 = vld [vmem:[#allocation12 + $0x624] sm:$0xff]
      %v9915 = vld [vmem:[#allocation12 + $0x62c] sm:$0xff]
      %v9916 = vld [vmem:[#allocation12 + $0x634] sm:$0xff]
      %v9917 = vld [vmem:[#allocation12 + $0x63c] sm:$0xff]
      %v9918 = vld [vmem:[#allocation12 + $0x644] sm:$0xff]
      %v9919 = vld [vmem:[#allocation12 + $0x64c] sm:$0xff]
      %v9920 = vld [vmem:[#allocation12 + $0x654] sm:$0xff]
      %v9921 = vld [vmem:[#allocation12 + $0x65c] sm:$0xf]
      %v9922 = vld [vmem:[#allocation12 + $0x660] sm:$0xff]
      %v9923 = vld [vmem:[#allocation12 + $0x668] sm:$0xff]
      %v9924 = vld [vmem:[#allocation12 + $0x670] sm:$0xff]
      %v9925 = vld [vmem:[#allocation12 + $0x678] sm:$0xff]
      %v9926 = vld [vmem:[#allocation12 + $0x680] sm:$0xff]
      %v9927 = vld [vmem:[#allocation12 + $0x688] sm:$0xff]
      %v9928 = vld [vmem:[#allocation12 + $0x690] sm:$0xff]
      %v9929 = vld [vmem:[#allocation12 + $0x698] sm:$0xff]
      %v9930 = vld [vmem:[#allocation12 + $0x6a0] sm:$0xf]
      %v9931 = vld [vmem:[#allocation12 + $0x6a4] sm:$0xff]
      %v9932 = vld [vmem:[#allocation12 + $0x6ac] sm:$0xff]
      %v9933 = vld [vmem:[#allocation12 + $0x6b4] sm:$0xff]
      %v9934 = vld [vmem:[#allocation12 + $0x6bc] sm:$0xff]
      %v9935 = vld [vmem:[#allocation12 + $0x6c4] sm:$0xff]
      %v9936 = vld [vmem:[#allocation12 + $0x6cc] sm:$0xff]
      %v9937 = vld [vmem:[#allocation12 + $0x6d4] sm:$0xff]
      %v9938 = vld [vmem:[#allocation12 + $0x6dc] sm:$0xff]
      %v9939 = vld [vmem:[#allocation12 + $0x6e4] sm:$0xf]
      %v9940 = vld [vmem:[#allocation12 + $0x6e8] sm:$0xff]
      %v9941 = vld [vmem:[#allocation12 + $0x6f0] sm:$0xff]
      %v9942 = vld [vmem:[#allocation12 + $0x6f8] sm:$0xff]
      %v9943 = vld [vmem:[#allocation12 + $0x700] sm:$0xff]
      %v9944 = vld [vmem:[#allocation12 + $0x708] sm:$0xff]
      %v9945 = vld [vmem:[#allocation12 + $0x710] sm:$0xff]
      %v9946 = vld [vmem:[#allocation12 + $0x718] sm:$0xff]
      %v9947 = vld [vmem:[#allocation12 + $0x720] sm:$0xff]
      %v9948 = vld [vmem:[#allocation12 + $0x728] sm:$0xf]
      %v9949 = vld [vmem:[#allocation12 + $0x72c] sm:$0xff]
      %v9950 = vld [vmem:[#allocation12 + $0x734] sm:$0xff]
      %v9951 = vld [vmem:[#allocation12 + $0x73c] sm:$0xff]
      %v9952 = vld [vmem:[#allocation12 + $0x744] sm:$0xff]
      %v9953 = vld [vmem:[#allocation12 + $0x74c] sm:$0xff]
      %v9954 = vld [vmem:[#allocation12 + $0x754] sm:$0xff]
      %v9955 = vld [vmem:[#allocation12 + $0x75c] sm:$0xff]
      %v9956 = vld [vmem:[#allocation12 + $0x764] sm:$0xff]
      %v9957 = vld [vmem:[#allocation12 + $0x76c] sm:$0xf]
      %v9958 = vld [vmem:[#allocation12 + $0x770] sm:$0xff]
      %v9959 = vld [vmem:[#allocation12 + $0x778] sm:$0xff]
      %v9960 = vld [vmem:[#allocation12 + $0x780] sm:$0xff]
      %v9961 = vld [vmem:[#allocation12 + $0x788] sm:$0xff]
      %v9962 = vld [vmem:[#allocation12 + $0x790] sm:$0xff]
      %v9963 = vld [vmem:[#allocation12 + $0x798] sm:$0xff]
      %v9964 = vld [vmem:[#allocation12 + $0x7a0] sm:$0xff]
      %v9965 = vld [vmem:[#allocation12 + $0x7a8] sm:$0xff]
      %v9966 = vld [vmem:[#allocation12 + $0x7b0] sm:$0xf]
      %v9967 = vld [vmem:[#allocation12 + $0x7b4] sm:$0xff]
      %v9968 = vld [vmem:[#allocation12 + $0x7bc] sm:$0xff]
      %v9969 = vld [vmem:[#allocation12 + $0x7c4] sm:$0xff]
      %v9970 = vld [vmem:[#allocation12 + $0x7cc] sm:$0xff]
      %v9971 = vld [vmem:[#allocation12 + $0x7d4] sm:$0xff]
      %v9972 = vld [vmem:[#allocation12 + $0x7dc] sm:$0xff]
      %v9973 = vld [vmem:[#allocation12 + $0x7e4] sm:$0xff]
      %v9974 = vld [vmem:[#allocation12 + $0x7ec] sm:$0xff]
      %v9975 = vld [vmem:[#allocation12 + $0x7f4] sm:$0xf]
      %v9976 = vld [vmem:[#allocation12 + $0x7f8] sm:$0xff]
      %v9977 = vld [vmem:[#allocation12 + $0x800] sm:$0xff]
      %v9978 = vld [vmem:[#allocation12 + $0x808] sm:$0xff]
      %v9979 = vld [vmem:[#allocation12 + $0x810] sm:$0xff]
      %v9980 = vld [vmem:[#allocation12 + $0x818] sm:$0xff]
      %v9981 = vld [vmem:[#allocation12 + $0x820] sm:$0xff]
      %v9982 = vld [vmem:[#allocation12 + $0x828] sm:$0xff]
      %v9983 = vld [vmem:[#allocation12 + $0x830] sm:$0xff]
      %v9984 = vld [vmem:[#allocation12 + $0x838] sm:$0xf]
      %v9985 = vld [vmem:[#allocation12 + $0x83c] sm:$0xff]
      %v9986 = vld [vmem:[#allocation12 + $0x844] sm:$0xff]
      %v9987 = vld [vmem:[#allocation12 + $0x84c] sm:$0xff]
      %v9988 = vld [vmem:[#allocation12 + $0x854] sm:$0xff]
      %v9989 = vld [vmem:[#allocation12 + $0x85c] sm:$0xff]
      %v9990 = vld [vmem:[#allocation12 + $0x864] sm:$0xff]
      %v9991 = vld [vmem:[#allocation12 + $0x86c] sm:$0xff]
      %v9992 = vld [vmem:[#allocation12 + $0x874] sm:$0xff]
      %v9993 = vld [vmem:[#allocation12 + $0x87c] sm:$0xf]
      %v9994 = vld [vmem:[#allocation12 + $0x880] sm:$0xff]
      %v9995 = vld [vmem:[#allocation12 + $0x888] sm:$0xff]
      %v9996 = vld [vmem:[#allocation12 + $0x890] sm:$0xff]
      %v9997 = vld [vmem:[#allocation12 + $0x898] sm:$0xff]
      %v9998 = vld [vmem:[#allocation12 + $0x8a0] sm:$0xff]
      %v9999 = vld [vmem:[#allocation12 + $0x8a8] sm:$0xff]
      %v10000 = vld [vmem:[#allocation12 + $0x8b0] sm:$0xff]
      %v10001 = vld [vmem:[#allocation12 + $0x8b8] sm:$0xff]
      %v10002 = vld [vmem:[#allocation12 + $0x8c0] sm:$0xf]
      %v10003 = vld [vmem:[#allocation12 + $0x8c4] sm:$0xff]
      %v10004 = vld [vmem:[#allocation12 + $0x8cc] sm:$0xff]
      %v10005 = vld [vmem:[#allocation12 + $0x8d4] sm:$0xff]
      %v10006 = vld [vmem:[#allocation12 + $0x8dc] sm:$0xff]
      %v10007 = vld [vmem:[#allocation12 + $0x8e4] sm:$0xff]
      %v10008 = vld [vmem:[#allocation12 + $0x8ec] sm:$0xff]
      %v10009 = vld [vmem:[#allocation12 + $0x8f4] sm:$0xff]
      %v10010 = vld [vmem:[#allocation12 + $0x8fc] sm:$0xff]
      %v10011 = vld [vmem:[#allocation12 + $0x904] sm:$0xf]
      %v10012 = vld [vmem:[#allocation12 + $0x908] sm:$0xff]
      %v10013 = vld [vmem:[#allocation12 + $0x910] sm:$0xff]
      %v10014 = vld [vmem:[#allocation12 + $0x918] sm:$0xff]
      %v10015 = vld [vmem:[#allocation12 + $0x920] sm:$0xff]
      %v10016 = vld [vmem:[#allocation12 + $0x928] sm:$0xff]
      %v10017 = vld [vmem:[#allocation12 + $0x930] sm:$0xff]
      %v10018 = vld [vmem:[#allocation12 + $0x938] sm:$0xff]
      %v10019 = vld [vmem:[#allocation12 + $0x940] sm:$0xff]
      %v10020 = vld [vmem:[#allocation12 + $0x948] sm:$0xf]
      %v10021 = vld [vmem:[#allocation12 + $0x94c] sm:$0xff]
      %v10022 = vld [vmem:[#allocation12 + $0x954] sm:$0xff]
      %v10023 = vld [vmem:[#allocation12 + $0x95c] sm:$0xff]
      %v10024 = vld [vmem:[#allocation12 + $0x964] sm:$0xff]
      %v10025 = vld [vmem:[#allocation12 + $0x96c] sm:$0xff]
      %v10026 = vld [vmem:[#allocation12 + $0x974] sm:$0xff]
      %v10027 = vld [vmem:[#allocation12 + $0x97c] sm:$0xff]
      %v10028 = vld [vmem:[#allocation12 + $0x984] sm:$0xff]
      %v10029 = vld [vmem:[#allocation12 + $0x98c] sm:$0xf]
      %v10030 = vld [vmem:[#allocation12 + $0x990] sm:$0xff]
      %v10031 = vld [vmem:[#allocation12 + $0x998] sm:$0xff]
      %v10032 = vld [vmem:[#allocation12 + $0x9a0] sm:$0xff]
      %v10033 = vld [vmem:[#allocation12 + $0x9a8] sm:$0xff]
      %v10034 = vld [vmem:[#allocation12 + $0x9b0] sm:$0xff]
      %v10035 = vld [vmem:[#allocation12 + $0x9b8] sm:$0xff]
      %v10036 = vld [vmem:[#allocation12 + $0x9c0] sm:$0xff]
      %v10037 = vld [vmem:[#allocation12 + $0x9c8] sm:$0xff]
      %v10038 = vld [vmem:[#allocation12 + $0x9d0] sm:$0xf]
      %v10039 = vld [vmem:[#allocation12 + $0x9d4] sm:$0xff]
      %v10040 = vld [vmem:[#allocation12 + $0x9dc] sm:$0xff]
      %v10041 = vld [vmem:[#allocation12 + $0x9e4] sm:$0xff]
      %v10042 = vld [vmem:[#allocation12 + $0x9ec] sm:$0xff]
      %v10043 = vld [vmem:[#allocation12 + $0x9f4] sm:$0xff]
      %v10044 = vld [vmem:[#allocation12 + $0x9fc] sm:$0xff]
      %v10045 = vld [vmem:[#allocation12 + $0xa04] sm:$0xff]
      %v10046 = vld [vmem:[#allocation12 + $0xa0c] sm:$0xff]
      %v10047 = vld [vmem:[#allocation12 + $0xa14] sm:$0xf]
      %v10048 = vld [vmem:[#allocation12 + $0xa18] sm:$0xff]
      %v10049 = vld [vmem:[#allocation12 + $0xa20] sm:$0xff]
      %v10050 = vld [vmem:[#allocation12 + $0xa28] sm:$0xff]
      %v10051 = vld [vmem:[#allocation12 + $0xa30] sm:$0xff]
      %v10052 = vld [vmem:[#allocation12 + $0xa38] sm:$0xff]
      %v10053 = vld [vmem:[#allocation12 + $0xa40] sm:$0xff]
      %v10054 = vld [vmem:[#allocation12 + $0xa48] sm:$0xff]
      %v10055 = vld [vmem:[#allocation12 + $0xa50] sm:$0xff]
      %v10056 = vld [vmem:[#allocation12 + $0xa58] sm:$0xf]
      %v10057 = vld [vmem:[#allocation12 + $0xa5c] sm:$0xff]
      %v10058 = vld [vmem:[#allocation12 + $0xa64] sm:$0xff]
      %v10059 = vld [vmem:[#allocation12 + $0xa6c] sm:$0xff]
      %v10060 = vld [vmem:[#allocation12 + $0xa74] sm:$0xff]
      %v10061 = vld [vmem:[#allocation12 + $0xa7c] sm:$0xff]
      %v10062 = vld [vmem:[#allocation12 + $0xa84] sm:$0xff]
      %v10063 = vld [vmem:[#allocation12 + $0xa8c] sm:$0xff]
      %v10064 = vld [vmem:[#allocation12 + $0xa94] sm:$0xff]
      %v10065 = vld [vmem:[#allocation12 + $0xa9c] sm:$0xf]
      %v10066 = vld [vmem:[#allocation12 + $0xaa0] sm:$0xff]
      %v10067 = vld [vmem:[#allocation12 + $0xaa8] sm:$0xff]
      %v10068 = vld [vmem:[#allocation12 + $0xab0] sm:$0xff]
      %v10069 = vld [vmem:[#allocation12 + $0xab8] sm:$0xff]
      %v10070 = vld [vmem:[#allocation12 + $0xac0] sm:$0xff]
      %v10071 = vld [vmem:[#allocation12 + $0xac8] sm:$0xff]
      %v10072 = vld [vmem:[#allocation12 + $0xad0] sm:$0xff]
      %v10073 = vld [vmem:[#allocation12 + $0xad8] sm:$0xff]
      %v10074 = vld [vmem:[#allocation12 + $0xae0] sm:$0xf]
      %v10075 = vld [vmem:[#allocation12 + $0xae4] sm:$0xff]
      %v10076 = vld [vmem:[#allocation12 + $0xaec] sm:$0xff]
      %v10077 = vld [vmem:[#allocation12 + $0xaf4] sm:$0xff]
      %v10078 = vld [vmem:[#allocation12 + $0xafc] sm:$0xff]
      %v10079 = vld [vmem:[#allocation12 + $0xb04] sm:$0xff]
      %v10080 = vld [vmem:[#allocation12 + $0xb0c] sm:$0xff]
      %v10081 = vld [vmem:[#allocation12 + $0xb14] sm:$0xff]
      %v10082 = vld [vmem:[#allocation12 + $0xb1c] sm:$0xff]
      %v10083 = vld [vmem:[#allocation12 + $0xb24] sm:$0xf]
      %v10084 = vld [vmem:[#allocation12 + $0xb28] sm:$0xff]
      %v10085 = vld [vmem:[#allocation12 + $0xb30] sm:$0xff]
      %v10086 = vld [vmem:[#allocation12 + $0xb38] sm:$0xff]
      %v10087 = vld [vmem:[#allocation12 + $0xb40] sm:$0xff]
      %v10088 = vld [vmem:[#allocation12 + $0xb48] sm:$0xff]
      %v10089 = vld [vmem:[#allocation12 + $0xb50] sm:$0xff]
      %v10090 = vld [vmem:[#allocation12 + $0xb58] sm:$0xff]
      %v10091 = vld [vmem:[#allocation12 + $0xb60] sm:$0xff]
      %v10092 = vld [vmem:[#allocation12 + $0xb68] sm:$0xf]
      %v10093 = vld [vmem:[#allocation12 + $0xb6c] sm:$0xff]
      %v10094 = vld [vmem:[#allocation12 + $0xb74] sm:$0xff]
      %v10095 = vld [vmem:[#allocation12 + $0xb7c] sm:$0xff]
      %v10096 = vld [vmem:[#allocation12 + $0xb84] sm:$0xff]
      %v10097 = vld [vmem:[#allocation12 + $0xb8c] sm:$0xff]
      %v10098 = vld [vmem:[#allocation12 + $0xb94] sm:$0xff]
      %v10099 = vld [vmem:[#allocation12 + $0xb9c] sm:$0xff]
      %v10100 = vld [vmem:[#allocation12 + $0xba4] sm:$0xff]
      %v10101 = vld [vmem:[#allocation12 + $0xbac] sm:$0xf]
      %v10102 = vld [vmem:[#allocation12 + $0xbb0] sm:$0xff]
      %v10103 = vld [vmem:[#allocation12 + $0xbb8] sm:$0xff]
      %v10104 = vld [vmem:[#allocation12 + $0xbc0] sm:$0xff]
      %v10105 = vld [vmem:[#allocation12 + $0xbc8] sm:$0xff]
      %v10106 = vld [vmem:[#allocation12 + $0xbd0] sm:$0xff]
      %v10107 = vld [vmem:[#allocation12 + $0xbd8] sm:$0xff]
      %v10108 = vld [vmem:[#allocation12 + $0xbe0] sm:$0xff]
      %v10109 = vld [vmem:[#allocation12 + $0xbe8] sm:$0xff]
      %v10110 = vld [vmem:[#allocation12 + $0xbf0] sm:$0xf]
      %v10111 = vld [vmem:[#allocation12 + $0xbf4] sm:$0xff]
      %v10112 = vld [vmem:[#allocation12 + $0xbfc] sm:$0xff]
      %v10113 = vld [vmem:[#allocation12 + $0xc04] sm:$0xff]
      %v10114 = vld [vmem:[#allocation12 + $0xc0c] sm:$0xff]
      %v10115 = vld [vmem:[#allocation12 + $0xc14] sm:$0xff]
      %v10116 = vld [vmem:[#allocation12 + $0xc1c] sm:$0xff]
      %v10117 = vld [vmem:[#allocation12 + $0xc24] sm:$0xff]
      %v10118 = vld [vmem:[#allocation12 + $0xc2c] sm:$0xff]
      %v10119 = vld [vmem:[#allocation12 + $0xc34] sm:$0xf]
      %v10120 = vld [vmem:[#allocation12 + $0xc38] sm:$0xff]
      %v10121 = vld [vmem:[#allocation12 + $0xc40] sm:$0xff]
      %v10122 = vld [vmem:[#allocation12 + $0xc48] sm:$0xff]
      %v10123 = vld [vmem:[#allocation12 + $0xc50] sm:$0xff]
      %v10124 = vld [vmem:[#allocation12 + $0xc58] sm:$0xff]
      %v10125 = vld [vmem:[#allocation12 + $0xc60] sm:$0xff]
      %v10126 = vld [vmem:[#allocation12 + $0xc68] sm:$0xff]
      %v10127 = vld [vmem:[#allocation12 + $0xc70] sm:$0xff]
      %v10128 = vld [vmem:[#allocation12 + $0xc78] sm:$0xf]
      %v10129 = vld [vmem:[#allocation12 + $0xc7c] sm:$0xff]
      %v10130 = vld [vmem:[#allocation12 + $0xc84] sm:$0xff]
      %v10131 = vld [vmem:[#allocation12 + $0xc8c] sm:$0xff]
      %v10132 = vld [vmem:[#allocation12 + $0xc94] sm:$0xff]
      %v10133 = vld [vmem:[#allocation12 + $0xc9c] sm:$0xff]
      %v10134 = vld [vmem:[#allocation12 + $0xca4] sm:$0xff]
      %v10135 = vld [vmem:[#allocation12 + $0xcac] sm:$0xff]
      %v10136 = vld [vmem:[#allocation12 + $0xcb4] sm:$0xff]
      %v10137 = vld [vmem:[#allocation12 + $0xcbc] sm:$0xf]
      %v10138 = vld [vmem:[#allocation12 + $0xcc0] sm:$0xff]
      %v10139 = vld [vmem:[#allocation12 + $0xcc8] sm:$0xff]
      %v10140 = vld [vmem:[#allocation12 + $0xcd0] sm:$0xff]
      %v10141 = vld [vmem:[#allocation12 + $0xcd8] sm:$0xff]
      %v10142 = vld [vmem:[#allocation12 + $0xce0] sm:$0xff]
      %v10143 = vld [vmem:[#allocation12 + $0xce8] sm:$0xff]
      %v10144 = vld [vmem:[#allocation12 + $0xcf0] sm:$0xff]
      %v10145 = vld [vmem:[#allocation12 + $0xcf8] sm:$0xff]
      %v10146 = vld [vmem:[#allocation12 + $0xd00] sm:$0xf]
      %v10147 = vld [vmem:[#allocation12 + $0xd04] sm:$0xff]
      %v10148 = vld [vmem:[#allocation12 + $0xd0c] sm:$0xff]
      %v10149 = vld [vmem:[#allocation12 + $0xd14] sm:$0xff]
      %v10150 = vld [vmem:[#allocation12 + $0xd1c] sm:$0xff]
      %v10151 = vld [vmem:[#allocation12 + $0xd24] sm:$0xff]
      %v10152 = vld [vmem:[#allocation12 + $0xd2c] sm:$0xff]
      %v10153 = vld [vmem:[#allocation12 + $0xd34] sm:$0xff]
      %v10154 = vld [vmem:[#allocation12 + $0xd3c] sm:$0xff]
      %v10155 = vld [vmem:[#allocation12 + $0xd44] sm:$0xf]
      %v10156 = vld [vmem:[#allocation12 + $0xd48] sm:$0xff]
      %v10157 = vld [vmem:[#allocation12 + $0xd50] sm:$0xff]
      %v10158 = vld [vmem:[#allocation12 + $0xd58] sm:$0xff]
      %v10159 = vld [vmem:[#allocation12 + $0xd60] sm:$0xff]
      %v10160 = vld [vmem:[#allocation12 + $0xd68] sm:$0xff]
      %v10161 = vld [vmem:[#allocation12 + $0xd70] sm:$0xff]
      %v10162 = vld [vmem:[#allocation12 + $0xd78] sm:$0xff]
      %v10163 = vld [vmem:[#allocation12 + $0xd80] sm:$0xff]
      %v10164 = vld [vmem:[#allocation12 + $0xd88] sm:$0xf]
      %v10165 = vld [vmem:[#allocation12 + $0xd8c] sm:$0xff]
      %v10166 = vld [vmem:[#allocation12 + $0xd94] sm:$0xff]
      %v10167 = vld [vmem:[#allocation12 + $0xd9c] sm:$0xff]
      %v10168 = vld [vmem:[#allocation12 + $0xda4] sm:$0xff]
      %v10169 = vld [vmem:[#allocation12 + $0xdac] sm:$0xff]
      %v10170 = vld [vmem:[#allocation12 + $0xdb4] sm:$0xff]
      %v10171 = vld [vmem:[#allocation12 + $0xdbc] sm:$0xff]
      %v10172 = vld [vmem:[#allocation12 + $0xdc4] sm:$0xff]
      %v10173 = vld [vmem:[#allocation12 + $0xdcc] sm:$0xf]
      %v10174 = vld [vmem:[#allocation12 + $0xdd0] sm:$0xff]
      %v10175 = vld [vmem:[#allocation12 + $0xdd8] sm:$0xff]
      %v10176 = vld [vmem:[#allocation12 + $0xde0] sm:$0xff]
      %v10177 = vld [vmem:[#allocation12 + $0xde8] sm:$0xff]
      %v10178 = vld [vmem:[#allocation12 + $0xdf0] sm:$0xff]
      %v10179 = vld [vmem:[#allocation12 + $0xdf8] sm:$0xff]
      %v10180 = vld [vmem:[#allocation12 + $0xe00] sm:$0xff]
      %v10181 = vld [vmem:[#allocation12 + $0xe08] sm:$0xff]
      %v10182 = vld [vmem:[#allocation12 + $0xe10] sm:$0xf]
      %v10183 = vld [vmem:[#allocation12 + $0xe14] sm:$0xff]
      %v10184 = vld [vmem:[#allocation12 + $0xe1c] sm:$0xff]
      %v10185 = vld [vmem:[#allocation12 + $0xe24] sm:$0xff]
      %v10186 = vld [vmem:[#allocation12 + $0xe2c] sm:$0xff]
      %v10187 = vld [vmem:[#allocation12 + $0xe34] sm:$0xff]
      %v10188 = vld [vmem:[#allocation12 + $0xe3c] sm:$0xff]
      %v10189 = vld [vmem:[#allocation12 + $0xe44] sm:$0xff]
      %v10190 = vld [vmem:[#allocation12 + $0xe4c] sm:$0xff]
      %v10191 = vld [vmem:[#allocation12 + $0xe54] sm:$0xf]
      %v10192 = vld [vmem:[#allocation12 + $0xe58] sm:$0xff]
      %v10193 = vld [vmem:[#allocation12 + $0xe60] sm:$0xff]
      %v10194 = vld [vmem:[#allocation12 + $0xe68] sm:$0xff]
      %v10195 = vld [vmem:[#allocation12 + $0xe70] sm:$0xff]
      %v10196 = vld [vmem:[#allocation12 + $0xe78] sm:$0xff]
      %v10197 = vld [vmem:[#allocation12 + $0xe80] sm:$0xff]
      %v10198 = vld [vmem:[#allocation12 + $0xe88] sm:$0xff]
      %v10199 = vld [vmem:[#allocation12 + $0xe90] sm:$0xff]
      %v10200 = vld [vmem:[#allocation12 + $0xe98] sm:$0xf]
      %v10201 = vld [vmem:[#allocation12 + $0xe9c] sm:$0xff]
      %v10202 = vld [vmem:[#allocation12 + $0xea4] sm:$0xff]
      %v10203 = vld [vmem:[#allocation12 + $0xeac] sm:$0xff]
      %v10204 = vld [vmem:[#allocation12 + $0xeb4] sm:$0xff]
      %v10205 = vld [vmem:[#allocation12 + $0xebc] sm:$0xff]
      %v10206 = vld [vmem:[#allocation12 + $0xec4] sm:$0xff]
      %v10207 = vld [vmem:[#allocation12 + $0xecc] sm:$0xff]
      %v10208 = vld [vmem:[#allocation12 + $0xed4] sm:$0xff]
      %v10209 = vld [vmem:[#allocation12 + $0xedc] sm:$0xf]
      %v10210 = vld [vmem:[#allocation12 + $0xee0] sm:$0xff]
      %v10211 = vld [vmem:[#allocation12 + $0xee8] sm:$0xff]
      %v10212 = vld [vmem:[#allocation12 + $0xef0] sm:$0xff]
      %v10213 = vld [vmem:[#allocation12 + $0xef8] sm:$0xff]
      %v10214 = vld [vmem:[#allocation12 + $0xf00] sm:$0xff]
      %v10215 = vld [vmem:[#allocation12 + $0xf08] sm:$0xff]
      %v10216 = vld [vmem:[#allocation12 + $0xf10] sm:$0xff]
      %v10217 = vld [vmem:[#allocation12 + $0xf18] sm:$0xff]
      %v10218 = vld [vmem:[#allocation12 + $0xf20] sm:$0xf]
      %v10219 = vld [vmem:[#allocation12 + $0xf24] sm:$0xff]
      %v10220 = vld [vmem:[#allocation12 + $0xf2c] sm:$0xff]
      %v10221 = vld [vmem:[#allocation12 + $0xf34] sm:$0xff]
      %v10222 = vld [vmem:[#allocation12 + $0xf3c] sm:$0xff]
      %v10223 = vld [vmem:[#allocation12 + $0xf44] sm:$0xff]
      %v10224 = vld [vmem:[#allocation12 + $0xf4c] sm:$0xff]
      %v10225 = vld [vmem:[#allocation12 + $0xf54] sm:$0xff]
      %v10226 = vld [vmem:[#allocation12 + $0xf5c] sm:$0xff]
      %v10227 = vld [vmem:[#allocation12 + $0xf64] sm:$0xf]
      %v10228 = vld [vmem:[#allocation12 + $0xf68] sm:$0xff]
      %v10229 = vld [vmem:[#allocation12 + $0xf70] sm:$0xff]
      %v10230 = vld [vmem:[#allocation12 + $0xf78] sm:$0xff]
      %v10231 = vld [vmem:[#allocation12 + $0xf80] sm:$0xff]
      %v10232 = vld [vmem:[#allocation12 + $0xf88] sm:$0xff]
      %v10233 = vld [vmem:[#allocation12 + $0xf90] sm:$0xff]
      %v10234 = vld [vmem:[#allocation12 + $0xf98] sm:$0xff]
      %v10235 = vld [vmem:[#allocation12 + $0xfa0] sm:$0xff]
      %v10236 = vld [vmem:[#allocation12 + $0xfa8] sm:$0xf]
      %v10237 = vld [vmem:[#allocation12 + $0xfac] sm:$0xff]
      %v10238 = vld [vmem:[#allocation12 + $0xfb4] sm:$0xff]
      %v10239 = vld [vmem:[#allocation12 + $0xfbc] sm:$0xff]
      %v10240 = vld [vmem:[#allocation12 + $0xfc4] sm:$0xff]
      %v10241 = vld [vmem:[#allocation12 + $0xfcc] sm:$0xff]
      %v10242 = vld [vmem:[#allocation12 + $0xfd4] sm:$0xff]
      %v10243 = vld [vmem:[#allocation12 + $0xfdc] sm:$0xff]
      %v10244 = vld [vmem:[#allocation12 + $0xfe4] sm:$0xff]
      %v10245 = vld [vmem:[#allocation12 + $0xfec] sm:$0xf]
      %v10246 = vld [vmem:[#allocation12 + $0xff0] sm:$0xff]
      %v10247 = vld [vmem:[#allocation12 + $0xff8] sm:$0xff]
      %v10248 = vld [vmem:[#allocation12 + $0x1000] sm:$0xff]
      %v10249 = vld [vmem:[#allocation12 + $0x1008] sm:$0xff]
      %v10250 = vld [vmem:[#allocation12 + $0x1010] sm:$0xff]
      %v10251 = vld [vmem:[#allocation12 + $0x1018] sm:$0xff]
      %v10252 = vld [vmem:[#allocation12 + $0x1020] sm:$0xff]
      %v10253 = vld [vmem:[#allocation12 + $0x1028] sm:$0xff]
      %v10254 = vld [vmem:[#allocation12 + $0x1030] sm:$0xf]
      %v10255 = vld [vmem:[#allocation12 + $0x1034] sm:$0xff]
      %v10256 = vld [vmem:[#allocation12 + $0x103c] sm:$0xff]
      %v10257 = vld [vmem:[#allocation12 + $0x1044] sm:$0xff]
      %v10258 = vld [vmem:[#allocation12 + $0x104c] sm:$0xff]
      %v10259 = vld [vmem:[#allocation12 + $0x1054] sm:$0xff]
      %v10260 = vld [vmem:[#allocation12 + $0x105c] sm:$0xff]
      %v10261 = vld [vmem:[#allocation12 + $0x1064] sm:$0xff]
      %v10262 = vld [vmem:[#allocation12 + $0x106c] sm:$0xff]
      %v10263 = vld [vmem:[#allocation12 + $0x1074] sm:$0xf]
      %v10264 = vld [vmem:[#allocation12 + $0x1078] sm:$0xff]
      %v10265 = vld [vmem:[#allocation12 + $0x1080] sm:$0xff]
      %v10266 = vld [vmem:[#allocation12 + $0x1088] sm:$0xff]
      %v10267 = vld [vmem:[#allocation12 + $0x1090] sm:$0xff]
      %v10268 = vld [vmem:[#allocation12 + $0x1098] sm:$0xff]
      %v10269 = vld [vmem:[#allocation12 + $0x10a0] sm:$0xff]
      %v10270 = vld [vmem:[#allocation12 + $0x10a8] sm:$0xff]
      %v10271 = vld [vmem:[#allocation12 + $0x10b0] sm:$0xff]
      %v10272 = vld [vmem:[#allocation12 + $0x10b8] sm:$0xf]
      %v10273 = vld [vmem:[#allocation12 + $0x10bc] sm:$0xff]
      %v10274 = vld [vmem:[#allocation12 + $0x10c4] sm:$0xff]
      %v10275 = vld [vmem:[#allocation12 + $0x10cc] sm:$0xff]
      %v10276 = vld [vmem:[#allocation12 + $0x10d4] sm:$0xff]
      %v10277 = vld [vmem:[#allocation12 + $0x10dc] sm:$0xff]
      %v10278 = vld [vmem:[#allocation12 + $0x10e4] sm:$0xff]
      %v10279 = vld [vmem:[#allocation12 + $0x10ec] sm:$0xff]
      %v10280 = vld [vmem:[#allocation12 + $0x10f4] sm:$0xff]
      %v10281 = vld [vmem:[#allocation12 + $0x10fc] sm:$0xf]
      %v10290 = vunpack.c.l.b16 %v9698
      %v10291 = vunpack.c.l.b16 %v9699
      %v10292 = vunpack.c.l.b16 %v9700
      %v10293 = vunpack.c.l.b16 %v9701
      %v10294 = vunpack.c.l.b16 %v9702
      %v10295 = vunpack.c.l.b16 %v9703
      %v10296 = vunpack.c.l.b16 %v9704
      %v10297 = vunpack.c.l.b16 %v9705
      %v10298 = vrot.slane %v10294, 7
      %vm10299 = vcmask 1041409
      %v10300 = vsel %vm10299, %v10298, %v10290
      %v10301 = vrot.slane %v10295, 7
      %v10302 = vsel %vm10299, %v10301, %v10291
      %v10303 = vrot.slane %v10296, 7
      %v10304 = vsel %vm10299, %v10303, %v10292
      %v10305 = vrot.slane %v10297, 7
      %v10306 = vsel %vm10299, %v10305, %v10293
      %v10307 = vpack.c.b16 %v10300, %v10300
      %v10308 = vpack.c.b16 %v10302, %v10302
      %v10309 = vpack.c.b16 %v10304, %v10304
      %v10310 = vpack.c.b16 %v10306, %v10306
      %v10891 = vunpack.c.l.b16 %v9706
      %v10892 = vunpack.c.h.b16 %v9706
      %v10893 = vunpack.c.l.b16 %v9707
      %v10894 = vunpack.c.h.b16 %v9707
      %v10895 = vunpack.c.l.b16 %v9708
      %v10896 = vunpack.c.h.b16 %v9708
      %v10897 = vunpack.c.l.b16 %v9709
      %v10898 = vunpack.c.h.b16 %v9709
      %v10899 = vunpack.c.l.b16 %v9710
      %v10900 = vunpack.c.h.b16 %v9710
      %v10901 = vunpack.c.l.b16 %v9711
      %v10902 = vunpack.c.h.b16 %v9711
      %v10903 = vunpack.c.l.b16 %v9712
      %v10904 = vunpack.c.h.b16 %v9712
      %v10905 = vunpack.c.l.b16 %v9713
      %v10906 = vunpack.c.h.b16 %v9713
      %v10907 = vunpack.c.l.b16 %v9714
      %v10908 = vunpack.c.l.b16 %v9715
      %v10909 = vunpack.c.h.b16 %v9715
      %v10910 = vunpack.c.l.b16 %v9716
      %v10911 = vunpack.c.h.b16 %v9716
      %v10912 = vunpack.c.l.b16 %v9717
      %v10913 = vunpack.c.h.b16 %v9717
      %v10914 = vunpack.c.l.b16 %v9718
      %v10915 = vunpack.c.h.b16 %v9718
      %v10916 = vunpack.c.l.b16 %v9719
      %v10917 = vunpack.c.h.b16 %v9719
      %v10918 = vunpack.c.l.b16 %v9720
      %v10919 = vunpack.c.h.b16 %v9720
      %v10920 = vunpack.c.l.b16 %v9721
      %v10921 = vunpack.c.h.b16 %v9721
      %v10922 = vunpack.c.l.b16 %v9722
      %v10923 = vunpack.c.h.b16 %v9722
      %v10924 = vunpack.c.l.b16 %v9723
      %v10925 = vunpack.c.l.b16 %v9724
      %v10926 = vunpack.c.h.b16 %v9724
      %v10927 = vunpack.c.l.b16 %v9725
      %v10928 = vunpack.c.h.b16 %v9725
      %v10929 = vunpack.c.l.b16 %v9726
      %v10930 = vunpack.c.h.b16 %v9726
      %v10931 = vunpack.c.l.b16 %v9727
      %v10932 = vunpack.c.h.b16 %v9727
      %v10933 = vunpack.c.l.b16 %v9728
      %v10934 = vunpack.c.h.b16 %v9728
      %v10935 = vunpack.c.l.b16 %v9729
      %v10936 = vunpack.c.h.b16 %v9729
      %v10937 = vunpack.c.l.b16 %v9730
      %v10938 = vunpack.c.h.b16 %v9730
      %v10939 = vunpack.c.l.b16 %v9731
      %v10940 = vunpack.c.h.b16 %v9731
      %v10941 = vunpack.c.l.b16 %v9732
      %v10942 = vunpack.c.l.b16 %v9733
      %v10943 = vunpack.c.h.b16 %v9733
      %v10944 = vunpack.c.l.b16 %v9734
      %v10945 = vunpack.c.h.b16 %v9734
      %v10946 = vunpack.c.l.b16 %v9735
      %v10947 = vunpack.c.h.b16 %v9735
      %v10948 = vunpack.c.l.b16 %v9736
      %v10949 = vunpack.c.h.b16 %v9736
      %v10950 = vunpack.c.l.b16 %v9737
      %v10951 = vunpack.c.h.b16 %v9737
      %v10952 = vunpack.c.l.b16 %v9738
      %v10953 = vunpack.c.h.b16 %v9738
      %v10954 = vunpack.c.l.b16 %v9739
      %v10955 = vunpack.c.h.b16 %v9739
      %v10956 = vunpack.c.l.b16 %v9740
      %v10957 = vunpack.c.h.b16 %v9740
      %v10958 = vunpack.c.l.b16 %v9741
      %v10959 = vunpack.c.l.b16 %v9742
      %v10960 = vunpack.c.h.b16 %v9742
      %v10961 = vunpack.c.l.b16 %v9743
      %v10962 = vunpack.c.h.b16 %v9743
      %v10963 = vunpack.c.l.b16 %v9744
      %v10964 = vunpack.c.h.b16 %v9744
      %v10965 = vunpack.c.l.b16 %v9745
      %v10966 = vunpack.c.h.b16 %v9745
      %v10967 = vunpack.c.l.b16 %v9746
      %v10968 = vunpack.c.h.b16 %v9746
      %v10969 = vunpack.c.l.b16 %v9747
      %v10970 = vunpack.c.h.b16 %v9747
      %v10971 = vunpack.c.l.b16 %v9748
      %v10972 = vunpack.c.h.b16 %v9748
      %v10973 = vunpack.c.l.b16 %v9749
      %v10974 = vunpack.c.h.b16 %v9749
      %v10975 = vunpack.c.l.b16 %v9750
      %v10976 = vunpack.c.l.b16 %v9751
      %v10977 = vunpack.c.h.b16 %v9751
      %v10978 = vunpack.c.l.b16 %v9752
      %v10979 = vunpack.c.h.b16 %v9752
      %v10980 = vunpack.c.l.b16 %v9753
      %v10981 = vunpack.c.h.b16 %v9753
      %v10982 = vunpack.c.l.b16 %v9754
      %v10983 = vunpack.c.h.b16 %v9754
      %v10984 = vunpack.c.l.b16 %v9755
      %v10985 = vunpack.c.h.b16 %v9755
      %v10986 = vunpack.c.l.b16 %v9756
      %v10987 = vunpack.c.h.b16 %v9756
      %v10988 = vunpack.c.l.b16 %v9757
      %v10989 = vunpack.c.h.b16 %v9757
      %v10990 = vunpack.c.l.b16 %v9758
      %v10991 = vunpack.c.h.b16 %v9758
      %v10992 = vunpack.c.l.b16 %v9759
      %v10993 = vunpack.c.l.b16 %v9760
      %v10994 = vunpack.c.h.b16 %v9760
      %v10995 = vunpack.c.l.b16 %v9761
      %v10996 = vunpack.c.h.b16 %v9761
      %v10997 = vunpack.c.l.b16 %v9762
      %v10998 = vunpack.c.h.b16 %v9762
      %v10999 = vunpack.c.l.b16 %v9763
      %v11000 = vunpack.c.h.b16 %v9763
      %v11001 = vunpack.c.l.b16 %v9764
      %v11002 = vunpack.c.h.b16 %v9764
      %v11003 = vunpack.c.l.b16 %v9765
      %v11004 = vunpack.c.h.b16 %v9765
      %v11005 = vunpack.c.l.b16 %v9766
      %v11006 = vunpack.c.h.b16 %v9766
      %v11007 = vunpack.c.l.b16 %v9767
      %v11008 = vunpack.c.h.b16 %v9767
      %v11009 = vunpack.c.l.b16 %v9768
      %v11010 = vunpack.c.l.b16 %v9769
      %v11011 = vunpack.c.h.b16 %v9769
      %v11012 = vunpack.c.l.b16 %v9770
      %v11013 = vunpack.c.h.b16 %v9770
      %v11014 = vunpack.c.l.b16 %v9771
      %v11015 = vunpack.c.h.b16 %v9771
      %v11016 = vunpack.c.l.b16 %v9772
      %v11017 = vunpack.c.h.b16 %v9772
      %v11018 = vunpack.c.l.b16 %v9773
      %v11019 = vunpack.c.h.b16 %v9773
      %v11020 = vunpack.c.l.b16 %v9774
      %v11021 = vunpack.c.h.b16 %v9774
      %v11022 = vunpack.c.l.b16 %v9775
      %v11023 = vunpack.c.h.b16 %v9775
      %v11024 = vunpack.c.l.b16 %v9776
      %v11025 = vunpack.c.h.b16 %v9776
      %v11026 = vunpack.c.l.b16 %v9777
      %v11027 = vunpack.c.l.b16 %v9778
      %v11028 = vunpack.c.h.b16 %v9778
      %v11029 = vunpack.c.l.b16 %v9779
      %v11030 = vunpack.c.h.b16 %v9779
      %v11031 = vunpack.c.l.b16 %v9780
      %v11032 = vunpack.c.h.b16 %v9780
      %v11033 = vunpack.c.l.b16 %v9781
      %v11034 = vunpack.c.h.b16 %v9781
      %v11035 = vunpack.c.l.b16 %v9782
      %v11036 = vunpack.c.h.b16 %v9782
      %v11037 = vunpack.c.l.b16 %v9783
      %v11038 = vunpack.c.h.b16 %v9783
      %v11039 = vunpack.c.l.b16 %v9784
      %v11040 = vunpack.c.h.b16 %v9784
      %v11041 = vunpack.c.l.b16 %v9785
      %v11042 = vunpack.c.h.b16 %v9785
      %v11043 = vunpack.c.l.b16 %v9786
      %v11044 = vunpack.c.l.b16 %v9787
      %v11045 = vunpack.c.h.b16 %v9787
      %v11046 = vunpack.c.l.b16 %v9788
      %v11047 = vunpack.c.h.b16 %v9788
      %v11048 = vunpack.c.l.b16 %v9789
      %v11049 = vunpack.c.h.b16 %v9789
      %v11050 = vunpack.c.l.b16 %v9790
      %v11051 = vunpack.c.h.b16 %v9790
      %v11052 = vunpack.c.l.b16 %v9791
      %v11053 = vunpack.c.h.b16 %v9791
      %v11054 = vunpack.c.l.b16 %v9792
      %v11055 = vunpack.c.h.b16 %v9792
      %v11056 = vunpack.c.l.b16 %v9793
      %v11057 = vunpack.c.h.b16 %v9793
      %v11058 = vunpack.c.l.b16 %v9794
      %v11059 = vunpack.c.h.b16 %v9794
      %v11060 = vunpack.c.l.b16 %v9795
      %v11061 = vunpack.c.l.b16 %v9796
      %v11062 = vunpack.c.h.b16 %v9796
      %v11063 = vunpack.c.l.b16 %v9797
      %v11064 = vunpack.c.h.b16 %v9797
      %v11065 = vunpack.c.l.b16 %v9798
      %v11066 = vunpack.c.h.b16 %v9798
      %v11067 = vunpack.c.l.b16 %v9799
      %v11068 = vunpack.c.h.b16 %v9799
      %v11069 = vunpack.c.l.b16 %v9800
      %v11070 = vunpack.c.h.b16 %v9800
      %v11071 = vunpack.c.l.b16 %v9801
      %v11072 = vunpack.c.h.b16 %v9801
      %v11073 = vunpack.c.l.b16 %v9802
      %v11074 = vunpack.c.h.b16 %v9802
      %v11075 = vunpack.c.l.b16 %v9803
      %v11076 = vunpack.c.h.b16 %v9803
      %v11077 = vunpack.c.l.b16 %v9804
      %v11078 = vunpack.c.l.b16 %v9805
      %v11079 = vunpack.c.h.b16 %v9805
      %v11080 = vunpack.c.l.b16 %v9806
      %v11081 = vunpack.c.h.b16 %v9806
      %v11082 = vunpack.c.l.b16 %v9807
      %v11083 = vunpack.c.h.b16 %v9807
      %v11084 = vunpack.c.l.b16 %v9808
      %v11085 = vunpack.c.h.b16 %v9808
      %v11086 = vunpack.c.l.b16 %v9809
      %v11087 = vunpack.c.h.b16 %v9809
      %v11088 = vunpack.c.l.b16 %v9810
      %v11089 = vunpack.c.h.b16 %v9810
      %v11090 = vunpack.c.l.b16 %v9811
      %v11091 = vunpack.c.h.b16 %v9811
      %v11092 = vunpack.c.l.b16 %v9812
      %v11093 = vunpack.c.h.b16 %v9812
      %v11094 = vunpack.c.l.b16 %v9813
      %v11095 = vunpack.c.l.b16 %v9814
      %v11096 = vunpack.c.h.b16 %v9814
      %v11097 = vunpack.c.l.b16 %v9815
      %v11098 = vunpack.c.h.b16 %v9815
      %v11099 = vunpack.c.l.b16 %v9816
      %v11100 = vunpack.c.h.b16 %v9816
      %v11101 = vunpack.c.l.b16 %v9817
      %v11102 = vunpack.c.h.b16 %v9817
      %v11103 = vunpack.c.l.b16 %v9818
      %v11104 = vunpack.c.h.b16 %v9818
      %v11105 = vunpack.c.l.b16 %v9819
      %v11106 = vunpack.c.h.b16 %v9819
      %v11107 = vunpack.c.l.b16 %v9820
      %v11108 = vunpack.c.h.b16 %v9820
      %v11109 = vunpack.c.l.b16 %v9821
      %v11110 = vunpack.c.h.b16 %v9821
      %v11111 = vunpack.c.l.b16 %v9822
      %v11112 = vunpack.c.l.b16 %v9823
      %v11113 = vunpack.c.h.b16 %v9823
      %v11114 = vunpack.c.l.b16 %v9824
      %v11115 = vunpack.c.h.b16 %v9824
      %v11116 = vunpack.c.l.b16 %v9825
      %v11117 = vunpack.c.h.b16 %v9825
      %v11118 = vunpack.c.l.b16 %v9826
      %v11119 = vunpack.c.h.b16 %v9826
      %v11120 = vunpack.c.l.b16 %v9827
      %v11121 = vunpack.c.h.b16 %v9827
      %v11122 = vunpack.c.l.b16 %v9828
      %v11123 = vunpack.c.h.b16 %v9828
      %v11124 = vunpack.c.l.b16 %v9829
      %v11125 = vunpack.c.h.b16 %v9829
      %v11126 = vunpack.c.l.b16 %v9830
      %v11127 = vunpack.c.h.b16 %v9830
      %v11128 = vunpack.c.l.b16 %v9831
      %v11129 = vunpack.c.l.b16 %v9832
      %v11130 = vunpack.c.h.b16 %v9832
      %v11131 = vunpack.c.l.b16 %v9833
      %v11132 = vunpack.c.h.b16 %v9833
      %v11133 = vunpack.c.l.b16 %v9834
      %v11134 = vunpack.c.h.b16 %v9834
      %v11135 = vunpack.c.l.b16 %v9835
      %v11136 = vunpack.c.h.b16 %v9835
      %v11137 = vunpack.c.l.b16 %v9836
      %v11138 = vunpack.c.h.b16 %v9836
      %v11139 = vunpack.c.l.b16 %v9837
      %v11140 = vunpack.c.h.b16 %v9837
      %v11141 = vunpack.c.l.b16 %v9838
      %v11142 = vunpack.c.h.b16 %v9838
      %v11143 = vunpack.c.l.b16 %v9839
      %v11144 = vunpack.c.h.b16 %v9839
      %v11145 = vunpack.c.l.b16 %v9840
      %v11146 = vunpack.c.l.b16 %v9841
      %v11147 = vunpack.c.h.b16 %v9841
      %v11148 = vunpack.c.l.b16 %v9842
      %v11149 = vunpack.c.h.b16 %v9842
      %v11150 = vunpack.c.l.b16 %v9843
      %v11151 = vunpack.c.h.b16 %v9843
      %v11152 = vunpack.c.l.b16 %v9844
      %v11153 = vunpack.c.h.b16 %v9844
      %v11154 = vunpack.c.l.b16 %v9845
      %v11155 = vunpack.c.h.b16 %v9845
      %v11156 = vunpack.c.l.b16 %v9846
      %v11157 = vunpack.c.h.b16 %v9846
      %v11158 = vunpack.c.l.b16 %v9847
      %v11159 = vunpack.c.h.b16 %v9847
      %v11160 = vunpack.c.l.b16 %v9848
      %v11161 = vunpack.c.h.b16 %v9848
      %v11162 = vunpack.c.l.b16 %v9849
      %v11163 = vunpack.c.l.b16 %v9850
      %v11164 = vunpack.c.h.b16 %v9850
      %v11165 = vunpack.c.l.b16 %v9851
      %v11166 = vunpack.c.h.b16 %v9851
      %v11167 = vunpack.c.l.b16 %v9852
      %v11168 = vunpack.c.h.b16 %v9852
      %v11169 = vunpack.c.l.b16 %v9853
      %v11170 = vunpack.c.h.b16 %v9853
      %v11171 = vunpack.c.l.b16 %v9854
      %v11172 = vunpack.c.h.b16 %v9854
      %v11173 = vunpack.c.l.b16 %v9855
      %v11174 = vunpack.c.h.b16 %v9855
      %v11175 = vunpack.c.l.b16 %v9856
      %v11176 = vunpack.c.h.b16 %v9856
      %v11177 = vunpack.c.l.b16 %v9857
      %v11178 = vunpack.c.h.b16 %v9857
      %v11179 = vunpack.c.l.b16 %v9858
      %v11180 = vunpack.c.l.b16 %v9859
      %v11181 = vunpack.c.h.b16 %v9859
      %v11182 = vunpack.c.l.b16 %v9860
      %v11183 = vunpack.c.h.b16 %v9860
      %v11184 = vunpack.c.l.b16 %v9861
      %v11185 = vunpack.c.h.b16 %v9861
      %v11186 = vunpack.c.l.b16 %v9862
      %v11187 = vunpack.c.h.b16 %v9862
      %v11188 = vunpack.c.l.b16 %v9863
      %v11189 = vunpack.c.h.b16 %v9863
      %v11190 = vunpack.c.l.b16 %v9864
      %v11191 = vunpack.c.h.b16 %v9864
      %v11192 = vunpack.c.l.b16 %v9865
      %v11193 = vunpack.c.h.b16 %v9865
      %v11194 = vunpack.c.l.b16 %v9866
      %v11195 = vunpack.c.h.b16 %v9866
      %v11196 = vunpack.c.l.b16 %v9867
      %v11197 = vunpack.c.l.b16 %v9868
      %v11198 = vunpack.c.h.b16 %v9868
      %v11199 = vunpack.c.l.b16 %v9869
      %v11200 = vunpack.c.h.b16 %v9869
      %v11201 = vunpack.c.l.b16 %v9870
      %v11202 = vunpack.c.h.b16 %v9870
      %v11203 = vunpack.c.l.b16 %v9871
      %v11204 = vunpack.c.h.b16 %v9871
      %v11205 = vunpack.c.l.b16 %v9872
      %v11206 = vunpack.c.h.b16 %v9872
      %v11207 = vunpack.c.l.b16 %v9873
      %v11208 = vunpack.c.h.b16 %v9873
      %v11209 = vunpack.c.l.b16 %v9874
      %v11210 = vunpack.c.h.b16 %v9874
      %v11211 = vunpack.c.l.b16 %v9875
      %v11212 = vunpack.c.h.b16 %v9875
      %v11213 = vunpack.c.l.b16 %v9876
      %v11214 = vunpack.c.l.b16 %v9877
      %v11215 = vunpack.c.h.b16 %v9877
      %v11216 = vunpack.c.l.b16 %v9878
      %v11217 = vunpack.c.h.b16 %v9878
      %v11218 = vunpack.c.l.b16 %v9879
      %v11219 = vunpack.c.h.b16 %v9879
      %v11220 = vunpack.c.l.b16 %v9880
      %v11221 = vunpack.c.h.b16 %v9880
      %v11222 = vunpack.c.l.b16 %v9881
      %v11223 = vunpack.c.h.b16 %v9881
      %v11224 = vunpack.c.l.b16 %v9882
      %v11225 = vunpack.c.h.b16 %v9882
      %v11226 = vunpack.c.l.b16 %v9883
      %v11227 = vunpack.c.h.b16 %v9883
      %v11228 = vunpack.c.l.b16 %v9884
      %v11229 = vunpack.c.h.b16 %v9884
      %v11230 = vunpack.c.l.b16 %v9885
      %v11231 = vunpack.c.l.b16 %v9886
      %v11232 = vunpack.c.h.b16 %v9886
      %v11233 = vunpack.c.l.b16 %v9887
      %v11234 = vunpack.c.h.b16 %v9887
      %v11235 = vunpack.c.l.b16 %v9888
      %v11236 = vunpack.c.h.b16 %v9888
      %v11237 = vunpack.c.l.b16 %v9889
      %v11238 = vunpack.c.h.b16 %v9889
      %v11239 = vunpack.c.l.b16 %v9890
      %v11240 = vunpack.c.h.b16 %v9890
      %v11241 = vunpack.c.l.b16 %v9891
      %v11242 = vunpack.c.h.b16 %v9891
      %v11243 = vunpack.c.l.b16 %v9892
      %v11244 = vunpack.c.h.b16 %v9892
      %v11245 = vunpack.c.l.b16 %v9893
      %v11246 = vunpack.c.h.b16 %v9893
      %v11247 = vunpack.c.l.b16 %v9894
      %v11248 = vunpack.c.l.b16 %v9895
      %v11249 = vunpack.c.h.b16 %v9895
      %v11250 = vunpack.c.l.b16 %v9896
      %v11251 = vunpack.c.h.b16 %v9896
      %v11252 = vunpack.c.l.b16 %v9897
      %v11253 = vunpack.c.h.b16 %v9897
      %v11254 = vunpack.c.l.b16 %v9898
      %v11255 = vunpack.c.h.b16 %v9898
      %v11256 = vunpack.c.l.b16 %v9899
      %v11257 = vunpack.c.h.b16 %v9899
      %v11258 = vunpack.c.l.b16 %v9900
      %v11259 = vunpack.c.h.b16 %v9900
      %v11260 = vunpack.c.l.b16 %v9901
      %v11261 = vunpack.c.h.b16 %v9901
      %v11262 = vunpack.c.l.b16 %v9902
      %v11263 = vunpack.c.h.b16 %v9902
      %v11264 = vunpack.c.l.b16 %v9903
      %v11265 = vunpack.c.l.b16 %v9904
      %v11266 = vunpack.c.h.b16 %v9904
      %v11267 = vunpack.c.l.b16 %v9905
      %v11268 = vunpack.c.h.b16 %v9905
      %v11269 = vunpack.c.l.b16 %v9906
      %v11270 = vunpack.c.h.b16 %v9906
      %v11271 = vunpack.c.l.b16 %v9907
      %v11272 = vunpack.c.h.b16 %v9907
      %v11273 = vunpack.c.l.b16 %v9908
      %v11274 = vunpack.c.h.b16 %v9908
      %v11275 = vunpack.c.l.b16 %v9909
      %v11276 = vunpack.c.h.b16 %v9909
      %v11277 = vunpack.c.l.b16 %v9910
      %v11278 = vunpack.c.h.b16 %v9910
      %v11279 = vunpack.c.l.b16 %v9911
      %v11280 = vunpack.c.h.b16 %v9911
      %v11281 = vunpack.c.l.b16 %v9912
      %v11282 = vunpack.c.l.b16 %v9913
      %v11283 = vunpack.c.h.b16 %v9913
      %v11284 = vunpack.c.l.b16 %v9914
      %v11285 = vunpack.c.h.b16 %v9914
      %v11286 = vunpack.c.l.b16 %v9915
      %v11287 = vunpack.c.h.b16 %v9915
      %v11288 = vunpack.c.l.b16 %v9916
      %v11289 = vunpack.c.h.b16 %v9916
      %v11290 = vunpack.c.l.b16 %v9917
      %v11291 = vunpack.c.h.b16 %v9917
      %v11292 = vunpack.c.l.b16 %v9918
      %v11293 = vunpack.c.h.b16 %v9918
      %v11294 = vunpack.c.l.b16 %v9919
      %v11295 = vunpack.c.h.b16 %v9919
      %v11296 = vunpack.c.l.b16 %v9920
      %v11297 = vunpack.c.h.b16 %v9920
      %v11298 = vunpack.c.l.b16 %v9921
      %v11299 = vunpack.c.l.b16 %v9922
      %v11300 = vunpack.c.h.b16 %v9922
      %v11301 = vunpack.c.l.b16 %v9923
      %v11302 = vunpack.c.h.b16 %v9923
      %v11303 = vunpack.c.l.b16 %v9924
      %v11304 = vunpack.c.h.b16 %v9924
      %v11305 = vunpack.c.l.b16 %v9925
      %v11306 = vunpack.c.h.b16 %v9925
      %v11307 = vunpack.c.l.b16 %v9926
      %v11308 = vunpack.c.h.b16 %v9926
      %v11309 = vunpack.c.l.b16 %v9927
      %v11310 = vunpack.c.h.b16 %v9927
      %v11311 = vunpack.c.l.b16 %v9928
      %v11312 = vunpack.c.h.b16 %v9928
      %v11313 = vunpack.c.l.b16 %v9929
      %v11314 = vunpack.c.h.b16 %v9929
      %v11315 = vunpack.c.l.b16 %v9930
      %v11316 = vunpack.c.l.b16 %v9931
      %v11317 = vunpack.c.h.b16 %v9931
      %v11318 = vunpack.c.l.b16 %v9932
      %v11319 = vunpack.c.h.b16 %v9932
      %v11320 = vunpack.c.l.b16 %v9933
      %v11321 = vunpack.c.h.b16 %v9933
      %v11322 = vunpack.c.l.b16 %v9934
      %v11323 = vunpack.c.h.b16 %v9934
      %v11324 = vunpack.c.l.b16 %v9935
      %v11325 = vunpack.c.h.b16 %v9935
      %v11326 = vunpack.c.l.b16 %v9936
      %v11327 = vunpack.c.h.b16 %v9936
      %v11328 = vunpack.c.l.b16 %v9937
      %v11329 = vunpack.c.h.b16 %v9937
      %v11330 = vunpack.c.l.b16 %v9938
      %v11331 = vunpack.c.h.b16 %v9938
      %v11332 = vunpack.c.l.b16 %v9939
      %v11333 = vunpack.c.l.b16 %v9940
      %v11334 = vunpack.c.h.b16 %v9940
      %v11335 = vunpack.c.l.b16 %v9941
      %v11336 = vunpack.c.h.b16 %v9941
      %v11337 = vunpack.c.l.b16 %v9942
      %v11338 = vunpack.c.h.b16 %v9942
      %v11339 = vunpack.c.l.b16 %v9943
      %v11340 = vunpack.c.h.b16 %v9943
      %v11341 = vunpack.c.l.b16 %v9944
      %v11342 = vunpack.c.h.b16 %v9944
      %v11343 = vunpack.c.l.b16 %v9945
      %v11344 = vunpack.c.h.b16 %v9945
      %v11345 = vunpack.c.l.b16 %v9946
      %v11346 = vunpack.c.h.b16 %v9946
      %v11347 = vunpack.c.l.b16 %v9947
      %v11348 = vunpack.c.h.b16 %v9947
      %v11349 = vunpack.c.l.b16 %v9948
      %v11350 = vunpack.c.l.b16 %v9949
      %v11351 = vunpack.c.h.b16 %v9949
      %v11352 = vunpack.c.l.b16 %v9950
      %v11353 = vunpack.c.h.b16 %v9950
      %v11354 = vunpack.c.l.b16 %v9951
      %v11355 = vunpack.c.h.b16 %v9951
      %v11356 = vunpack.c.l.b16 %v9952
      %v11357 = vunpack.c.h.b16 %v9952
      %v11358 = vunpack.c.l.b16 %v9953
      %v11359 = vunpack.c.h.b16 %v9953
      %v11360 = vunpack.c.l.b16 %v9954
      %v11361 = vunpack.c.h.b16 %v9954
      %v11362 = vunpack.c.l.b16 %v9955
      %v11363 = vunpack.c.h.b16 %v9955
      %v11364 = vunpack.c.l.b16 %v9956
      %v11365 = vunpack.c.h.b16 %v9956
      %v11366 = vunpack.c.l.b16 %v9957
      %v11367 = vunpack.c.l.b16 %v9958
      %v11368 = vunpack.c.h.b16 %v9958
      %v11369 = vunpack.c.l.b16 %v9959
      %v11370 = vunpack.c.h.b16 %v9959
      %v11371 = vunpack.c.l.b16 %v9960
      %v11372 = vunpack.c.h.b16 %v9960
      %v11373 = vunpack.c.l.b16 %v9961
      %v11374 = vunpack.c.h.b16 %v9961
      %v11375 = vunpack.c.l.b16 %v9962
      %v11376 = vunpack.c.h.b16 %v9962
      %v11377 = vunpack.c.l.b16 %v9963
      %v11378 = vunpack.c.h.b16 %v9963
      %v11379 = vunpack.c.l.b16 %v9964
      %v11380 = vunpack.c.h.b16 %v9964
      %v11381 = vunpack.c.l.b16 %v9965
      %v11382 = vunpack.c.h.b16 %v9965
      %v11383 = vunpack.c.l.b16 %v9966
      %v11384 = vunpack.c.l.b16 %v9967
      %v11385 = vunpack.c.h.b16 %v9967
      %v11386 = vunpack.c.l.b16 %v9968
      %v11387 = vunpack.c.h.b16 %v9968
      %v11388 = vunpack.c.l.b16 %v9969
      %v11389 = vunpack.c.h.b16 %v9969
      %v11390 = vunpack.c.l.b16 %v9970
      %v11391 = vunpack.c.h.b16 %v9970
      %v11392 = vunpack.c.l.b16 %v9971
      %v11393 = vunpack.c.h.b16 %v9971
      %v11394 = vunpack.c.l.b16 %v9972
      %v11395 = vunpack.c.h.b16 %v9972
      %v11396 = vunpack.c.l.b16 %v9973
      %v11397 = vunpack.c.h.b16 %v9973
      %v11398 = vunpack.c.l.b16 %v9974
      %v11399 = vunpack.c.h.b16 %v9974
      %v11400 = vunpack.c.l.b16 %v9975
      %v11401 = vunpack.c.l.b16 %v9976
      %v11402 = vunpack.c.h.b16 %v9976
      %v11403 = vunpack.c.l.b16 %v9977
      %v11404 = vunpack.c.h.b16 %v9977
      %v11405 = vunpack.c.l.b16 %v9978
      %v11406 = vunpack.c.h.b16 %v9978
      %v11407 = vunpack.c.l.b16 %v9979
      %v11408 = vunpack.c.h.b16 %v9979
      %v11409 = vunpack.c.l.b16 %v9980
      %v11410 = vunpack.c.h.b16 %v9980
      %v11411 = vunpack.c.l.b16 %v9981
      %v11412 = vunpack.c.h.b16 %v9981
      %v11413 = vunpack.c.l.b16 %v9982
      %v11414 = vunpack.c.h.b16 %v9982
      %v11415 = vunpack.c.l.b16 %v9983
      %v11416 = vunpack.c.h.b16 %v9983
      %v11417 = vunpack.c.l.b16 %v9984
      %v11418 = vunpack.c.l.b16 %v9985
      %v11419 = vunpack.c.h.b16 %v9985
      %v11420 = vunpack.c.l.b16 %v9986
      %v11421 = vunpack.c.h.b16 %v9986
      %v11422 = vunpack.c.l.b16 %v9987
      %v11423 = vunpack.c.h.b16 %v9987
      %v11424 = vunpack.c.l.b16 %v9988
      %v11425 = vunpack.c.h.b16 %v9988
      %v11426 = vunpack.c.l.b16 %v9989
      %v11427 = vunpack.c.h.b16 %v9989
      %v11428 = vunpack.c.l.b16 %v9990
      %v11429 = vunpack.c.h.b16 %v9990
      %v11430 = vunpack.c.l.b16 %v9991
      %v11431 = vunpack.c.h.b16 %v9991
      %v11432 = vunpack.c.l.b16 %v9992
      %v11433 = vunpack.c.h.b16 %v9992
      %v11434 = vunpack.c.l.b16 %v9993
      %v11435 = vunpack.c.l.b16 %v9994
      %v11436 = vunpack.c.h.b16 %v9994
      %v11437 = vunpack.c.l.b16 %v9995
      %v11438 = vunpack.c.h.b16 %v9995
      %v11439 = vunpack.c.l.b16 %v9996
      %v11440 = vunpack.c.h.b16 %v9996
      %v11441 = vunpack.c.l.b16 %v9997
      %v11442 = vunpack.c.h.b16 %v9997
      %v11443 = vunpack.c.l.b16 %v9998
      %v11444 = vunpack.c.h.b16 %v9998
      %v11445 = vunpack.c.l.b16 %v9999
      %v11446 = vunpack.c.h.b16 %v9999
      %v11447 = vunpack.c.l.b16 %v10000
      %v11448 = vunpack.c.h.b16 %v10000
      %v11449 = vunpack.c.l.b16 %v10001
      %v11450 = vunpack.c.h.b16 %v10001
      %v11451 = vunpack.c.l.b16 %v10002
      %v11452 = vunpack.c.l.b16 %v10003
      %v11453 = vunpack.c.h.b16 %v10003
      %v11454 = vunpack.c.l.b16 %v10004
      %v11455 = vunpack.c.h.b16 %v10004
      %v11456 = vunpack.c.l.b16 %v10005
      %v11457 = vunpack.c.h.b16 %v10005
      %v11458 = vunpack.c.l.b16 %v10006
      %v11459 = vunpack.c.h.b16 %v10006
      %v11460 = vunpack.c.l.b16 %v10007
      %v11461 = vunpack.c.h.b16 %v10007
      %v11462 = vunpack.c.l.b16 %v10008
      %v11463 = vunpack.c.h.b16 %v10008
      %v11464 = vunpack.c.l.b16 %v10009
      %v11465 = vunpack.c.h.b16 %v10009
      %v11466 = vunpack.c.l.b16 %v10010
      %v11467 = vunpack.c.h.b16 %v10010
      %v11468 = vunpack.c.l.b16 %v10011
      %v11469 = vunpack.c.l.b16 %v10012
      %v11470 = vunpack.c.h.b16 %v10012
      %v11471 = vunpack.c.l.b16 %v10013
      %v11472 = vunpack.c.h.b16 %v10013
      %v11473 = vunpack.c.l.b16 %v10014
      %v11474 = vunpack.c.h.b16 %v10014
      %v11475 = vunpack.c.l.b16 %v10015
      %v11476 = vunpack.c.h.b16 %v10015
      %v11477 = vunpack.c.l.b16 %v10016
      %v11478 = vunpack.c.h.b16 %v10016
      %v11479 = vunpack.c.l.b16 %v10017
      %v11480 = vunpack.c.h.b16 %v10017
      %v11481 = vunpack.c.l.b16 %v10018
      %v11482 = vunpack.c.h.b16 %v10018
      %v11483 = vunpack.c.l.b16 %v10019
      %v11484 = vunpack.c.h.b16 %v10019
      %v11485 = vunpack.c.l.b16 %v10020
      %v11486 = vunpack.c.l.b16 %v10021
      %v11487 = vunpack.c.h.b16 %v10021
      %v11488 = vunpack.c.l.b16 %v10022
      %v11489 = vunpack.c.h.b16 %v10022
      %v11490 = vunpack.c.l.b16 %v10023
      %v11491 = vunpack.c.h.b16 %v10023
      %v11492 = vunpack.c.l.b16 %v10024
      %v11493 = vunpack.c.h.b16 %v10024
      %v11494 = vunpack.c.l.b16 %v10025
      %v11495 = vunpack.c.h.b16 %v10025
      %v11496 = vunpack.c.l.b16 %v10026
      %v11497 = vunpack.c.h.b16 %v10026
      %v11498 = vunpack.c.l.b16 %v10027
      %v11499 = vunpack.c.h.b16 %v10027
      %v11500 = vunpack.c.l.b16 %v10028
      %v11501 = vunpack.c.h.b16 %v10028
      %v11502 = vunpack.c.l.b16 %v10029
      %v11503 = vunpack.c.l.b16 %v10030
      %v11504 = vunpack.c.h.b16 %v10030
      %v11505 = vunpack.c.l.b16 %v10031
      %v11506 = vunpack.c.h.b16 %v10031
      %v11507 = vunpack.c.l.b16 %v10032
      %v11508 = vunpack.c.h.b16 %v10032
      %v11509 = vunpack.c.l.b16 %v10033
      %v11510 = vunpack.c.h.b16 %v10033
      %v11511 = vunpack.c.l.b16 %v10034
      %v11512 = vunpack.c.h.b16 %v10034
      %v11513 = vunpack.c.l.b16 %v10035
      %v11514 = vunpack.c.h.b16 %v10035
      %v11515 = vunpack.c.l.b16 %v10036
      %v11516 = vunpack.c.h.b16 %v10036
      %v11517 = vunpack.c.l.b16 %v10037
      %v11518 = vunpack.c.h.b16 %v10037
      %v11519 = vunpack.c.l.b16 %v10038
      %v11520 = vunpack.c.l.b16 %v10039
      %v11521 = vunpack.c.h.b16 %v10039
      %v11522 = vunpack.c.l.b16 %v10040
      %v11523 = vunpack.c.h.b16 %v10040
      %v11524 = vunpack.c.l.b16 %v10041
      %v11525 = vunpack.c.h.b16 %v10041
      %v11526 = vunpack.c.l.b16 %v10042
      %v11527 = vunpack.c.h.b16 %v10042
      %v11528 = vunpack.c.l.b16 %v10043
      %v11529 = vunpack.c.h.b16 %v10043
      %v11530 = vunpack.c.l.b16 %v10044
      %v11531 = vunpack.c.h.b16 %v10044
      %v11532 = vunpack.c.l.b16 %v10045
      %v11533 = vunpack.c.h.b16 %v10045
      %v11534 = vunpack.c.l.b16 %v10046
      %v11535 = vunpack.c.h.b16 %v10046
      %v11536 = vunpack.c.l.b16 %v10047
      %v11537 = vunpack.c.l.b16 %v10048
      %v11538 = vunpack.c.h.b16 %v10048
      %v11539 = vunpack.c.l.b16 %v10049
      %v11540 = vunpack.c.h.b16 %v10049
      %v11541 = vunpack.c.l.b16 %v10050
      %v11542 = vunpack.c.h.b16 %v10050
      %v11543 = vunpack.c.l.b16 %v10051
      %v11544 = vunpack.c.h.b16 %v10051
      %v11545 = vunpack.c.l.b16 %v10052
      %v11546 = vunpack.c.h.b16 %v10052
      %v11547 = vunpack.c.l.b16 %v10053
      %v11548 = vunpack.c.h.b16 %v10053
      %v11549 = vunpack.c.l.b16 %v10054
      %v11550 = vunpack.c.h.b16 %v10054
      %v11551 = vunpack.c.l.b16 %v10055
      %v11552 = vunpack.c.h.b16 %v10055
      %v11553 = vunpack.c.l.b16 %v10056
      %v11554 = vunpack.c.l.b16 %v10057
      %v11555 = vunpack.c.h.b16 %v10057
      %v11556 = vunpack.c.l.b16 %v10058
      %v11557 = vunpack.c.h.b16 %v10058
      %v11558 = vunpack.c.l.b16 %v10059
      %v11559 = vunpack.c.h.b16 %v10059
      %v11560 = vunpack.c.l.b16 %v10060
      %v11561 = vunpack.c.h.b16 %v10060
      %v11562 = vunpack.c.l.b16 %v10061
      %v11563 = vunpack.c.h.b16 %v10061
      %v11564 = vunpack.c.l.b16 %v10062
      %v11565 = vunpack.c.h.b16 %v10062
      %v11566 = vunpack.c.l.b16 %v10063
      %v11567 = vunpack.c.h.b16 %v10063
      %v11568 = vunpack.c.l.b16 %v10064
      %v11569 = vunpack.c.h.b16 %v10064
      %v11570 = vunpack.c.l.b16 %v10065
      %v11571 = vunpack.c.l.b16 %v10066
      %v11572 = vunpack.c.h.b16 %v10066
      %v11573 = vunpack.c.l.b16 %v10067
      %v11574 = vunpack.c.h.b16 %v10067
      %v11575 = vunpack.c.l.b16 %v10068
      %v11576 = vunpack.c.h.b16 %v10068
      %v11577 = vunpack.c.l.b16 %v10069
      %v11578 = vunpack.c.h.b16 %v10069
      %v11579 = vunpack.c.l.b16 %v10070
      %v11580 = vunpack.c.h.b16 %v10070
      %v11581 = vunpack.c.l.b16 %v10071
      %v11582 = vunpack.c.h.b16 %v10071
      %v11583 = vunpack.c.l.b16 %v10072
      %v11584 = vunpack.c.h.b16 %v10072
      %v11585 = vunpack.c.l.b16 %v10073
      %v11586 = vunpack.c.h.b16 %v10073
      %v11587 = vunpack.c.l.b16 %v10074
      %v11588 = vunpack.c.l.b16 %v10075
      %v11589 = vunpack.c.h.b16 %v10075
      %v11590 = vunpack.c.l.b16 %v10076
      %v11591 = vunpack.c.h.b16 %v10076
      %v11592 = vunpack.c.l.b16 %v10077
      %v11593 = vunpack.c.h.b16 %v10077
      %v11594 = vunpack.c.l.b16 %v10078
      %v11595 = vunpack.c.h.b16 %v10078
      %v11596 = vunpack.c.l.b16 %v10079
      %v11597 = vunpack.c.h.b16 %v10079
      %v11598 = vunpack.c.l.b16 %v10080
      %v11599 = vunpack.c.h.b16 %v10080
      %v11600 = vunpack.c.l.b16 %v10081
      %v11601 = vunpack.c.h.b16 %v10081
      %v11602 = vunpack.c.l.b16 %v10082
      %v11603 = vunpack.c.h.b16 %v10082
      %v11604 = vunpack.c.l.b16 %v10083
      %v11605 = vunpack.c.l.b16 %v10084
      %v11606 = vunpack.c.h.b16 %v10084
      %v11607 = vunpack.c.l.b16 %v10085
      %v11608 = vunpack.c.h.b16 %v10085
      %v11609 = vunpack.c.l.b16 %v10086
      %v11610 = vunpack.c.h.b16 %v10086
      %v11611 = vunpack.c.l.b16 %v10087
      %v11612 = vunpack.c.h.b16 %v10087
      %v11613 = vunpack.c.l.b16 %v10088
      %v11614 = vunpack.c.h.b16 %v10088
      %v11615 = vunpack.c.l.b16 %v10089
      %v11616 = vunpack.c.h.b16 %v10089
      %v11617 = vunpack.c.l.b16 %v10090
      %v11618 = vunpack.c.h.b16 %v10090
      %v11619 = vunpack.c.l.b16 %v10091
      %v11620 = vunpack.c.h.b16 %v10091
      %v11621 = vunpack.c.l.b16 %v10092
      %v11622 = vunpack.c.l.b16 %v10093
      %v11623 = vunpack.c.h.b16 %v10093
      %v11624 = vunpack.c.l.b16 %v10094
      %v11625 = vunpack.c.h.b16 %v10094
      %v11626 = vunpack.c.l.b16 %v10095
      %v11627 = vunpack.c.h.b16 %v10095
      %v11628 = vunpack.c.l.b16 %v10096
      %v11629 = vunpack.c.h.b16 %v10096
      %v11630 = vunpack.c.l.b16 %v10097
      %v11631 = vunpack.c.h.b16 %v10097
      %v11632 = vunpack.c.l.b16 %v10098
      %v11633 = vunpack.c.h.b16 %v10098
      %v11634 = vunpack.c.l.b16 %v10099
      %v11635 = vunpack.c.h.b16 %v10099
      %v11636 = vunpack.c.l.b16 %v10100
      %v11637 = vunpack.c.h.b16 %v10100
      %v11638 = vunpack.c.l.b16 %v10101
      %v11639 = vunpack.c.l.b16 %v10102
      %v11640 = vunpack.c.h.b16 %v10102
      %v11641 = vunpack.c.l.b16 %v10103
      %v11642 = vunpack.c.h.b16 %v10103
      %v11643 = vunpack.c.l.b16 %v10104
      %v11644 = vunpack.c.h.b16 %v10104
      %v11645 = vunpack.c.l.b16 %v10105
      %v11646 = vunpack.c.h.b16 %v10105
      %v11647 = vunpack.c.l.b16 %v10106
      %v11648 = vunpack.c.h.b16 %v10106
      %v11649 = vunpack.c.l.b16 %v10107
      %v11650 = vunpack.c.h.b16 %v10107
      %v11651 = vunpack.c.l.b16 %v10108
      %v11652 = vunpack.c.h.b16 %v10108
      %v11653 = vunpack.c.l.b16 %v10109
      %v11654 = vunpack.c.h.b16 %v10109
      %v11655 = vunpack.c.l.b16 %v10110
      %v11656 = vunpack.c.l.b16 %v10111
      %v11657 = vunpack.c.h.b16 %v10111
      %v11658 = vunpack.c.l.b16 %v10112
      %v11659 = vunpack.c.h.b16 %v10112
      %v11660 = vunpack.c.l.b16 %v10113
      %v11661 = vunpack.c.h.b16 %v10113
      %v11662 = vunpack.c.l.b16 %v10114
      %v11663 = vunpack.c.h.b16 %v10114
      %v11664 = vunpack.c.l.b16 %v10115
      %v11665 = vunpack.c.h.b16 %v10115
      %v11666 = vunpack.c.l.b16 %v10116
      %v11667 = vunpack.c.h.b16 %v10116
      %v11668 = vunpack.c.l.b16 %v10117
      %v11669 = vunpack.c.h.b16 %v10117
      %v11670 = vunpack.c.l.b16 %v10118
      %v11671 = vunpack.c.h.b16 %v10118
      %v11672 = vunpack.c.l.b16 %v10119
      %v11673 = vunpack.c.l.b16 %v10120
      %v11674 = vunpack.c.h.b16 %v10120
      %v11675 = vunpack.c.l.b16 %v10121
      %v11676 = vunpack.c.h.b16 %v10121
      %v11677 = vunpack.c.l.b16 %v10122
      %v11678 = vunpack.c.h.b16 %v10122
      %v11679 = vunpack.c.l.b16 %v10123
      %v11680 = vunpack.c.h.b16 %v10123
      %v11681 = vunpack.c.l.b16 %v10124
      %v11682 = vunpack.c.h.b16 %v10124
      %v11683 = vunpack.c.l.b16 %v10125
      %v11684 = vunpack.c.h.b16 %v10125
      %v11685 = vunpack.c.l.b16 %v10126
      %v11686 = vunpack.c.h.b16 %v10126
      %v11687 = vunpack.c.l.b16 %v10127
      %v11688 = vunpack.c.h.b16 %v10127
      %v11689 = vunpack.c.l.b16 %v10128
      %v11690 = vunpack.c.l.b16 %v10129
      %v11691 = vunpack.c.h.b16 %v10129
      %v11692 = vunpack.c.l.b16 %v10130
      %v11693 = vunpack.c.h.b16 %v10130
      %v11694 = vunpack.c.l.b16 %v10131
      %v11695 = vunpack.c.h.b16 %v10131
      %v11696 = vunpack.c.l.b16 %v10132
      %v11697 = vunpack.c.h.b16 %v10132
      %v11698 = vunpack.c.l.b16 %v10133
      %v11699 = vunpack.c.h.b16 %v10133
      %v11700 = vunpack.c.l.b16 %v10134
      %v11701 = vunpack.c.h.b16 %v10134
      %v11702 = vunpack.c.l.b16 %v10135
      %v11703 = vunpack.c.h.b16 %v10135
      %v11704 = vunpack.c.l.b16 %v10136
      %v11705 = vunpack.c.h.b16 %v10136
      %v11706 = vunpack.c.l.b16 %v10137
      %v11707 = vunpack.c.l.b16 %v10138
      %v11708 = vunpack.c.h.b16 %v10138
      %v11709 = vunpack.c.l.b16 %v10139
      %v11710 = vunpack.c.h.b16 %v10139
      %v11711 = vunpack.c.l.b16 %v10140
      %v11712 = vunpack.c.h.b16 %v10140
      %v11713 = vunpack.c.l.b16 %v10141
      %v11714 = vunpack.c.h.b16 %v10141
      %v11715 = vunpack.c.l.b16 %v10142
      %v11716 = vunpack.c.h.b16 %v10142
      %v11717 = vunpack.c.l.b16 %v10143
      %v11718 = vunpack.c.h.b16 %v10143
      %v11719 = vunpack.c.l.b16 %v10144
      %v11720 = vunpack.c.h.b16 %v10144
      %v11721 = vunpack.c.l.b16 %v10145
      %v11722 = vunpack.c.h.b16 %v10145
      %v11723 = vunpack.c.l.b16 %v10146
      %v11724 = vunpack.c.l.b16 %v10147
      %v11725 = vunpack.c.h.b16 %v10147
      %v11726 = vunpack.c.l.b16 %v10148
      %v11727 = vunpack.c.h.b16 %v10148
      %v11728 = vunpack.c.l.b16 %v10149
      %v11729 = vunpack.c.h.b16 %v10149
      %v11730 = vunpack.c.l.b16 %v10150
      %v11731 = vunpack.c.h.b16 %v10150
      %v11732 = vunpack.c.l.b16 %v10151
      %v11733 = vunpack.c.h.b16 %v10151
      %v11734 = vunpack.c.l.b16 %v10152
      %v11735 = vunpack.c.h.b16 %v10152
      %v11736 = vunpack.c.l.b16 %v10153
      %v11737 = vunpack.c.h.b16 %v10153
      %v11738 = vunpack.c.l.b16 %v10154
      %v11739 = vunpack.c.h.b16 %v10154
      %v11740 = vunpack.c.l.b16 %v10155
      %v11741 = vunpack.c.l.b16 %v10156
      %v11742 = vunpack.c.h.b16 %v10156
      %v11743 = vunpack.c.l.b16 %v10157
      %v11744 = vunpack.c.h.b16 %v10157
      %v11745 = vunpack.c.l.b16 %v10158
      %v11746 = vunpack.c.h.b16 %v10158
      %v11747 = vunpack.c.l.b16 %v10159
      %v11748 = vunpack.c.h.b16 %v10159
      %v11749 = vunpack.c.l.b16 %v10160
      %v11750 = vunpack.c.h.b16 %v10160
      %v11751 = vunpack.c.l.b16 %v10161
      %v11752 = vunpack.c.h.b16 %v10161
      %v11753 = vunpack.c.l.b16 %v10162
      %v11754 = vunpack.c.h.b16 %v10162
      %v11755 = vunpack.c.l.b16 %v10163
      %v11756 = vunpack.c.h.b16 %v10163
      %v11757 = vunpack.c.l.b16 %v10164
      %v11758 = vunpack.c.l.b16 %v10165
      %v11759 = vunpack.c.h.b16 %v10165
      %v11760 = vunpack.c.l.b16 %v10166
      %v11761 = vunpack.c.h.b16 %v10166
      %v11762 = vunpack.c.l.b16 %v10167
      %v11763 = vunpack.c.h.b16 %v10167
      %v11764 = vunpack.c.l.b16 %v10168
      %v11765 = vunpack.c.h.b16 %v10168
      %v11766 = vunpack.c.l.b16 %v10169
      %v11767 = vunpack.c.h.b16 %v10169
      %v11768 = vunpack.c.l.b16 %v10170
      %v11769 = vunpack.c.h.b16 %v10170
      %v11770 = vunpack.c.l.b16 %v10171
      %v11771 = vunpack.c.h.b16 %v10171
      %v11772 = vunpack.c.l.b16 %v10172
      %v11773 = vunpack.c.h.b16 %v10172
      %v11774 = vunpack.c.l.b16 %v10173
      %v11775 = vunpack.c.l.b16 %v10174
      %v11776 = vunpack.c.h.b16 %v10174
      %v11777 = vunpack.c.l.b16 %v10175
      %v11778 = vunpack.c.h.b16 %v10175
      %v11779 = vunpack.c.l.b16 %v10176
      %v11780 = vunpack.c.h.b16 %v10176
      %v11781 = vunpack.c.l.b16 %v10177
      %v11782 = vunpack.c.h.b16 %v10177
      %v11783 = vunpack.c.l.b16 %v10178
      %v11784 = vunpack.c.h.b16 %v10178
      %v11785 = vunpack.c.l.b16 %v10179
      %v11786 = vunpack.c.h.b16 %v10179
      %v11787 = vunpack.c.l.b16 %v10180
      %v11788 = vunpack.c.h.b16 %v10180
      %v11789 = vunpack.c.l.b16 %v10181
      %v11790 = vunpack.c.h.b16 %v10181
      %v11791 = vunpack.c.l.b16 %v10182
      %v11792 = vunpack.c.l.b16 %v10183
      %v11793 = vunpack.c.h.b16 %v10183
      %v11794 = vunpack.c.l.b16 %v10184
      %v11795 = vunpack.c.h.b16 %v10184
      %v11796 = vunpack.c.l.b16 %v10185
      %v11797 = vunpack.c.h.b16 %v10185
      %v11798 = vunpack.c.l.b16 %v10186
      %v11799 = vunpack.c.h.b16 %v10186
      %v11800 = vunpack.c.l.b16 %v10187
      %v11801 = vunpack.c.h.b16 %v10187
      %v11802 = vunpack.c.l.b16 %v10188
      %v11803 = vunpack.c.h.b16 %v10188
      %v11804 = vunpack.c.l.b16 %v10189
      %v11805 = vunpack.c.h.b16 %v10189
      %v11806 = vunpack.c.l.b16 %v10190
      %v11807 = vunpack.c.h.b16 %v10190
      %v11808 = vunpack.c.l.b16 %v10191
      %v11809 = vunpack.c.l.b16 %v10192
      %v11810 = vunpack.c.h.b16 %v10192
      %v11811 = vunpack.c.l.b16 %v10193
      %v11812 = vunpack.c.h.b16 %v10193
      %v11813 = vunpack.c.l.b16 %v10194
      %v11814 = vunpack.c.h.b16 %v10194
      %v11815 = vunpack.c.l.b16 %v10195
      %v11816 = vunpack.c.h.b16 %v10195
      %v11817 = vunpack.c.l.b16 %v10196
      %v11818 = vunpack.c.h.b16 %v10196
      %v11819 = vunpack.c.l.b16 %v10197
      %v11820 = vunpack.c.h.b16 %v10197
      %v11821 = vunpack.c.l.b16 %v10198
      %v11822 = vunpack.c.h.b16 %v10198
      %v11823 = vunpack.c.l.b16 %v10199
      %v11824 = vunpack.c.h.b16 %v10199
      %v11825 = vunpack.c.l.b16 %v10200
      %v11826 = vunpack.c.l.b16 %v10201
      %v11827 = vunpack.c.h.b16 %v10201
      %v11828 = vunpack.c.l.b16 %v10202
      %v11829 = vunpack.c.h.b16 %v10202
      %v11830 = vunpack.c.l.b16 %v10203
      %v11831 = vunpack.c.h.b16 %v10203
      %v11832 = vunpack.c.l.b16 %v10204
      %v11833 = vunpack.c.h.b16 %v10204
      %v11834 = vunpack.c.l.b16 %v10205
      %v11835 = vunpack.c.h.b16 %v10205
      %v11836 = vunpack.c.l.b16 %v10206
      %v11837 = vunpack.c.h.b16 %v10206
      %v11838 = vunpack.c.l.b16 %v10207
      %v11839 = vunpack.c.h.b16 %v10207
      %v11840 = vunpack.c.l.b16 %v10208
      %v11841 = vunpack.c.h.b16 %v10208
      %v11842 = vunpack.c.l.b16 %v10209
      %v11843 = vunpack.c.l.b16 %v10210
      %v11844 = vunpack.c.h.b16 %v10210
      %v11845 = vunpack.c.l.b16 %v10211
      %v11846 = vunpack.c.h.b16 %v10211
      %v11847 = vunpack.c.l.b16 %v10212
      %v11848 = vunpack.c.h.b16 %v10212
      %v11849 = vunpack.c.l.b16 %v10213
      %v11850 = vunpack.c.h.b16 %v10213
      %v11851 = vunpack.c.l.b16 %v10214
      %v11852 = vunpack.c.h.b16 %v10214
      %v11853 = vunpack.c.l.b16 %v10215
      %v11854 = vunpack.c.h.b16 %v10215
      %v11855 = vunpack.c.l.b16 %v10216
      %v11856 = vunpack.c.h.b16 %v10216
      %v11857 = vunpack.c.l.b16 %v10217
      %v11858 = vunpack.c.h.b16 %v10217
      %v11859 = vunpack.c.l.b16 %v10218
      %v11860 = vunpack.c.l.b16 %v10219
      %v11861 = vunpack.c.h.b16 %v10219
      %v11862 = vunpack.c.l.b16 %v10220
      %v11863 = vunpack.c.h.b16 %v10220
      %v11864 = vunpack.c.l.b16 %v10221
      %v11865 = vunpack.c.h.b16 %v10221
      %v11866 = vunpack.c.l.b16 %v10222
      %v11867 = vunpack.c.h.b16 %v10222
      %v11868 = vunpack.c.l.b16 %v10223
      %v11869 = vunpack.c.h.b16 %v10223
      %v11870 = vunpack.c.l.b16 %v10224
      %v11871 = vunpack.c.h.b16 %v10224
      %v11872 = vunpack.c.l.b16 %v10225
      %v11873 = vunpack.c.h.b16 %v10225
      %v11874 = vunpack.c.l.b16 %v10226
      %v11875 = vunpack.c.h.b16 %v10226
      %v11876 = vunpack.c.l.b16 %v10227
      %v11877 = vunpack.c.l.b16 %v10228
      %v11878 = vunpack.c.h.b16 %v10228
      %v11879 = vunpack.c.l.b16 %v10229
      %v11880 = vunpack.c.h.b16 %v10229
      %v11881 = vunpack.c.l.b16 %v10230
      %v11882 = vunpack.c.h.b16 %v10230
      %v11883 = vunpack.c.l.b16 %v10231
      %v11884 = vunpack.c.h.b16 %v10231
      %v11885 = vunpack.c.l.b16 %v10232
      %v11886 = vunpack.c.h.b16 %v10232
      %v11887 = vunpack.c.l.b16 %v10233
      %v11888 = vunpack.c.h.b16 %v10233
      %v11889 = vunpack.c.l.b16 %v10234
      %v11890 = vunpack.c.h.b16 %v10234
      %v11891 = vunpack.c.l.b16 %v10235
      %v11892 = vunpack.c.h.b16 %v10235
      %v11893 = vunpack.c.l.b16 %v10236
      %v11894 = vunpack.c.l.b16 %v10237
      %v11895 = vunpack.c.h.b16 %v10237
      %v11896 = vunpack.c.l.b16 %v10238
      %v11897 = vunpack.c.h.b16 %v10238
      %v11898 = vunpack.c.l.b16 %v10239
      %v11899 = vunpack.c.h.b16 %v10239
      %v11900 = vunpack.c.l.b16 %v10240
      %v11901 = vunpack.c.h.b16 %v10240
      %v11902 = vunpack.c.l.b16 %v10241
      %v11903 = vunpack.c.h.b16 %v10241
      %v11904 = vunpack.c.l.b16 %v10242
      %v11905 = vunpack.c.h.b16 %v10242
      %v11906 = vunpack.c.l.b16 %v10243
      %v11907 = vunpack.c.h.b16 %v10243
      %v11908 = vunpack.c.l.b16 %v10244
      %v11909 = vunpack.c.h.b16 %v10244
      %v11910 = vunpack.c.l.b16 %v10245
      %v11911 = vunpack.c.l.b16 %v10246
      %v11912 = vunpack.c.h.b16 %v10246
      %v11913 = vunpack.c.l.b16 %v10247
      %v11914 = vunpack.c.h.b16 %v10247
      %v11915 = vunpack.c.l.b16 %v10248
      %v11916 = vunpack.c.h.b16 %v10248
      %v11917 = vunpack.c.l.b16 %v10249
      %v11918 = vunpack.c.h.b16 %v10249
      %v11919 = vunpack.c.l.b16 %v10250
      %v11920 = vunpack.c.h.b16 %v10250
      %v11921 = vunpack.c.l.b16 %v10251
      %v11922 = vunpack.c.h.b16 %v10251
      %v11923 = vunpack.c.l.b16 %v10252
      %v11924 = vunpack.c.h.b16 %v10252
      %v11925 = vunpack.c.l.b16 %v10253
      %v11926 = vunpack.c.h.b16 %v10253
      %v11927 = vunpack.c.l.b16 %v10254
      %v11928 = vunpack.c.l.b16 %v10255
      %v11929 = vunpack.c.h.b16 %v10255
      %v11930 = vunpack.c.l.b16 %v10256
      %v11931 = vunpack.c.h.b16 %v10256
      %v11932 = vunpack.c.l.b16 %v10257
      %v11933 = vunpack.c.h.b16 %v10257
      %v11934 = vunpack.c.l.b16 %v10258
      %v11935 = vunpack.c.h.b16 %v10258
      %v11936 = vunpack.c.l.b16 %v10259
      %v11937 = vunpack.c.h.b16 %v10259
      %v11938 = vunpack.c.l.b16 %v10260
      %v11939 = vunpack.c.h.b16 %v10260
      %v11940 = vunpack.c.l.b16 %v10261
      %v11941 = vunpack.c.h.b16 %v10261
      %v11942 = vunpack.c.l.b16 %v10262
      %v11943 = vunpack.c.h.b16 %v10262
      %v11944 = vunpack.c.l.b16 %v10263
      %v11945 = vunpack.c.l.b16 %v10264
      %v11946 = vunpack.c.h.b16 %v10264
      %v11947 = vunpack.c.l.b16 %v10265
      %v11948 = vunpack.c.h.b16 %v10265
      %v11949 = vunpack.c.l.b16 %v10266
      %v11950 = vunpack.c.h.b16 %v10266
      %v11951 = vunpack.c.l.b16 %v10267
      %v11952 = vunpack.c.h.b16 %v10267
      %v11953 = vunpack.c.l.b16 %v10268
      %v11954 = vunpack.c.h.b16 %v10268
      %v11955 = vunpack.c.l.b16 %v10269
      %v11956 = vunpack.c.h.b16 %v10269
      %v11957 = vunpack.c.l.b16 %v10270
      %v11958 = vunpack.c.h.b16 %v10270
      %v11959 = vunpack.c.l.b16 %v10271
      %v11960 = vunpack.c.h.b16 %v10271
      %v11961 = vunpack.c.l.b16 %v10272
      %v11962 = vunpack.c.l.b16 %v10273
      %v11963 = vunpack.c.h.b16 %v10273
      %v11964 = vunpack.c.l.b16 %v10274
      %v11965 = vunpack.c.h.b16 %v10274
      %v11966 = vunpack.c.l.b16 %v10275
      %v11967 = vunpack.c.h.b16 %v10275
      %v11968 = vunpack.c.l.b16 %v10276
      %v11969 = vunpack.c.h.b16 %v10276
      %v11970 = vunpack.c.l.b16 %v10277
      %v11971 = vunpack.c.h.b16 %v10277
      %v11972 = vunpack.c.l.b16 %v10278
      %v11973 = vunpack.c.h.b16 %v10278
      %v11974 = vunpack.c.l.b16 %v10279
      %v11975 = vunpack.c.h.b16 %v10279
      %v11976 = vunpack.c.l.b16 %v10280
      %v11977 = vunpack.c.h.b16 %v10280
      %v11978 = vunpack.c.l.b16 %v10281
      %v11979 = vpack.c.b16 %v10908, %v10891
      %v11980 = vpack.c.b16 %v10909, %v10892
      %v11981 = vpack.c.b16 %v10910, %v10893
      %v11982 = vpack.c.b16 %v10911, %v10894
      %v11983 = vpack.c.b16 %v10912, %v10895
      %v11984 = vpack.c.b16 %v10913, %v10896
      %v11985 = vpack.c.b16 %v10914, %v10897
      %v11986 = vpack.c.b16 %v10915, %v10898
      %v11987 = vpack.c.b16 %v10916, %v10899
      %v11988 = vpack.c.b16 %v10917, %v10900
      %v11989 = vpack.c.b16 %v10918, %v10901
      %v11990 = vpack.c.b16 %v10919, %v10902
      %v11991 = vpack.c.b16 %v10920, %v10903
      %v11992 = vpack.c.b16 %v10921, %v10904
      %v11993 = vpack.c.b16 %v10922, %v10905
      %v11994 = vpack.c.b16 %v10923, %v10906
      %v11995 = vpack.c.b16 %v10924, %v10907
      %v11996 = vpack.c.b16 %v10942, %v10925
      %v11997 = vpack.c.b16 %v10943, %v10926
      %v11998 = vpack.c.b16 %v10944, %v10927
      %v11999 = vpack.c.b16 %v10945, %v10928
      %v12000 = vpack.c.b16 %v10946, %v10929
      %v12001 = vpack.c.b16 %v10947, %v10930
      %v12002 = vpack.c.b16 %v10948, %v10931
      %v12003 = vpack.c.b16 %v10949, %v10932
      %v12004 = vpack.c.b16 %v10950, %v10933
      %v12005 = vpack.c.b16 %v10951, %v10934
      %v12006 = vpack.c.b16 %v10952, %v10935
      %v12007 = vpack.c.b16 %v10953, %v10936
      %v12008 = vpack.c.b16 %v10954, %v10937
      %v12009 = vpack.c.b16 %v10955, %v10938
      %v12010 = vpack.c.b16 %v10956, %v10939
      %v12011 = vpack.c.b16 %v10957, %v10940
      %v12012 = vpack.c.b16 %v10958, %v10941
      %v12013 = vpack.c.b16 %v10976, %v10959
      %v12014 = vpack.c.b16 %v10977, %v10960
      %v12015 = vpack.c.b16 %v10978, %v10961
      %v12016 = vpack.c.b16 %v10979, %v10962
      %v12017 = vpack.c.b16 %v10980, %v10963
      %v12018 = vpack.c.b16 %v10981, %v10964
      %v12019 = vpack.c.b16 %v10982, %v10965
      %v12020 = vpack.c.b16 %v10983, %v10966
      %v12021 = vpack.c.b16 %v10984, %v10967
      %v12022 = vpack.c.b16 %v10985, %v10968
      %v12023 = vpack.c.b16 %v10986, %v10969
      %v12024 = vpack.c.b16 %v10987, %v10970
      %v12025 = vpack.c.b16 %v10988, %v10971
      %v12026 = vpack.c.b16 %v10989, %v10972
      %v12027 = vpack.c.b16 %v10990, %v10973
      %v12028 = vpack.c.b16 %v10991, %v10974
      %v12029 = vpack.c.b16 %v10992, %v10975
      %v12030 = vpack.c.b16 %v11010, %v10993
      %v12031 = vpack.c.b16 %v11011, %v10994
      %v12032 = vpack.c.b16 %v11012, %v10995
      %v12033 = vpack.c.b16 %v11013, %v10996
      %v12034 = vpack.c.b16 %v11014, %v10997
      %v12035 = vpack.c.b16 %v11015, %v10998
      %v12036 = vpack.c.b16 %v11016, %v10999
      %v12037 = vpack.c.b16 %v11017, %v11000
      %v12038 = vpack.c.b16 %v11018, %v11001
      %v12039 = vpack.c.b16 %v11019, %v11002
      %v12040 = vpack.c.b16 %v11020, %v11003
      %v12041 = vpack.c.b16 %v11021, %v11004
      %v12042 = vpack.c.b16 %v11022, %v11005
      %v12043 = vpack.c.b16 %v11023, %v11006
      %v12044 = vpack.c.b16 %v11024, %v11007
      %v12045 = vpack.c.b16 %v11025, %v11008
      %v12046 = vpack.c.b16 %v11026, %v11009
      %v12047 = vpack.c.b16 %v11044, %v11027
      %v12048 = vpack.c.b16 %v11045, %v11028
      %v12049 = vpack.c.b16 %v11046, %v11029
      %v12050 = vpack.c.b16 %v11047, %v11030
      %v12051 = vpack.c.b16 %v11048, %v11031
      %v12052 = vpack.c.b16 %v11049, %v11032
      %v12053 = vpack.c.b16 %v11050, %v11033
      %v12054 = vpack.c.b16 %v11051, %v11034
      %v12055 = vpack.c.b16 %v11052, %v11035
      %v12056 = vpack.c.b16 %v11053, %v11036
      %v12057 = vpack.c.b16 %v11054, %v11037
      %v12058 = vpack.c.b16 %v11055, %v11038
      %v12059 = vpack.c.b16 %v11056, %v11039
      %v12060 = vpack.c.b16 %v11057, %v11040
      %v12061 = vpack.c.b16 %v11058, %v11041
      %v12062 = vpack.c.b16 %v11059, %v11042
      %v12063 = vpack.c.b16 %v11060, %v11043
      %v12064 = vpack.c.b16 %v11078, %v11061
      %v12065 = vpack.c.b16 %v11079, %v11062
      %v12066 = vpack.c.b16 %v11080, %v11063
      %v12067 = vpack.c.b16 %v11081, %v11064
      %v12068 = vpack.c.b16 %v11082, %v11065
      %v12069 = vpack.c.b16 %v11083, %v11066
      %v12070 = vpack.c.b16 %v11084, %v11067
      %v12071 = vpack.c.b16 %v11085, %v11068
      %v12072 = vpack.c.b16 %v11086, %v11069
      %v12073 = vpack.c.b16 %v11087, %v11070
      %v12074 = vpack.c.b16 %v11088, %v11071
      %v12075 = vpack.c.b16 %v11089, %v11072
      %v12076 = vpack.c.b16 %v11090, %v11073
      %v12077 = vpack.c.b16 %v11091, %v11074
      %v12078 = vpack.c.b16 %v11092, %v11075
      %v12079 = vpack.c.b16 %v11093, %v11076
      %v12080 = vpack.c.b16 %v11094, %v11077
      %v12081 = vpack.c.b16 %v11112, %v11095
      %v12082 = vpack.c.b16 %v11113, %v11096
      %v12083 = vpack.c.b16 %v11114, %v11097
      %v12084 = vpack.c.b16 %v11115, %v11098
      %v12085 = vpack.c.b16 %v11116, %v11099
      %v12086 = vpack.c.b16 %v11117, %v11100
      %v12087 = vpack.c.b16 %v11118, %v11101
      %v12088 = vpack.c.b16 %v11119, %v11102
      %v12089 = vpack.c.b16 %v11120, %v11103
      %v12090 = vpack.c.b16 %v11121, %v11104
      %v12091 = vpack.c.b16 %v11122, %v11105
      %v12092 = vpack.c.b16 %v11123, %v11106
      %v12093 = vpack.c.b16 %v11124, %v11107
      %v12094 = vpack.c.b16 %v11125, %v11108
      %v12095 = vpack.c.b16 %v11126, %v11109
      %v12096 = vpack.c.b16 %v11127, %v11110
      %v12097 = vpack.c.b16 %v11128, %v11111
      %v12098 = vpack.c.b16 %v11146, %v11129
      %v12099 = vpack.c.b16 %v11147, %v11130
      %v12100 = vpack.c.b16 %v11148, %v11131
      %v12101 = vpack.c.b16 %v11149, %v11132
      %v12102 = vpack.c.b16 %v11150, %v11133
      %v12103 = vpack.c.b16 %v11151, %v11134
      %v12104 = vpack.c.b16 %v11152, %v11135
      %v12105 = vpack.c.b16 %v11153, %v11136
      %v12106 = vpack.c.b16 %v11154, %v11137
      %v12107 = vpack.c.b16 %v11155, %v11138
      %v12108 = vpack.c.b16 %v11156, %v11139
      %v12109 = vpack.c.b16 %v11157, %v11140
      %v12110 = vpack.c.b16 %v11158, %v11141
      %v12111 = vpack.c.b16 %v11159, %v11142
      %v12112 = vpack.c.b16 %v11160, %v11143
      %v12113 = vpack.c.b16 %v11161, %v11144
      %v12114 = vpack.c.b16 %v11162, %v11145
      %v12115 = vpack.c.b16 %v11180, %v11163
      %v12116 = vpack.c.b16 %v11181, %v11164
      %v12117 = vpack.c.b16 %v11182, %v11165
      %v12118 = vpack.c.b16 %v11183, %v11166
      %v12119 = vpack.c.b16 %v11184, %v11167
      %v12120 = vpack.c.b16 %v11185, %v11168
      %v12121 = vpack.c.b16 %v11186, %v11169
      %v12122 = vpack.c.b16 %v11187, %v11170
      %v12123 = vpack.c.b16 %v11188, %v11171
      %v12124 = vpack.c.b16 %v11189, %v11172
      %v12125 = vpack.c.b16 %v11190, %v11173
      %v12126 = vpack.c.b16 %v11191, %v11174
      %v12127 = vpack.c.b16 %v11192, %v11175
      %v12128 = vpack.c.b16 %v11193, %v11176
      %v12129 = vpack.c.b16 %v11194, %v11177
      %v12130 = vpack.c.b16 %v11195, %v11178
      %v12131 = vpack.c.b16 %v11196, %v11179
      %v12132 = vpack.c.b16 %v11214, %v11197
      %v12133 = vpack.c.b16 %v11215, %v11198
      %v12134 = vpack.c.b16 %v11216, %v11199
      %v12135 = vpack.c.b16 %v11217, %v11200
      %v12136 = vpack.c.b16 %v11218, %v11201
      %v12137 = vpack.c.b16 %v11219, %v11202
      %v12138 = vpack.c.b16 %v11220, %v11203
      %v12139 = vpack.c.b16 %v11221, %v11204
      %v12140 = vpack.c.b16 %v11222, %v11205
      %v12141 = vpack.c.b16 %v11223, %v11206
      %v12142 = vpack.c.b16 %v11224, %v11207
      %v12143 = vpack.c.b16 %v11225, %v11208
      %v12144 = vpack.c.b16 %v11226, %v11209
      %v12145 = vpack.c.b16 %v11227, %v11210
      %v12146 = vpack.c.b16 %v11228, %v11211
      %v12147 = vpack.c.b16 %v11229, %v11212
      %v12148 = vpack.c.b16 %v11230, %v11213
      %v12149 = vpack.c.b16 %v11248, %v11231
      %v12150 = vpack.c.b16 %v11249, %v11232
      %v12151 = vpack.c.b16 %v11250, %v11233
      %v12152 = vpack.c.b16 %v11251, %v11234
      %v12153 = vpack.c.b16 %v11252, %v11235
      %v12154 = vpack.c.b16 %v11253, %v11236
      %v12155 = vpack.c.b16 %v11254, %v11237
      %v12156 = vpack.c.b16 %v11255, %v11238
      %v12157 = vpack.c.b16 %v11256, %v11239
      %v12158 = vpack.c.b16 %v11257, %v11240
      %v12159 = vpack.c.b16 %v11258, %v11241
      %v12160 = vpack.c.b16 %v11259, %v11242
      %v12161 = vpack.c.b16 %v11260, %v11243
      %v12162 = vpack.c.b16 %v11261, %v11244
      %v12163 = vpack.c.b16 %v11262, %v11245
      %v12164 = vpack.c.b16 %v11263, %v11246
      %v12165 = vpack.c.b16 %v11264, %v11247
      %v12166 = vpack.c.b16 %v11282, %v11265
      %v12167 = vpack.c.b16 %v11283, %v11266
      %v12168 = vpack.c.b16 %v11284, %v11267
      %v12169 = vpack.c.b16 %v11285, %v11268
      %v12170 = vpack.c.b16 %v11286, %v11269
      %v12171 = vpack.c.b16 %v11287, %v11270
      %v12172 = vpack.c.b16 %v11288, %v11271
      %v12173 = vpack.c.b16 %v11289, %v11272
      %v12174 = vpack.c.b16 %v11290, %v11273
      %v12175 = vpack.c.b16 %v11291, %v11274
      %v12176 = vpack.c.b16 %v11292, %v11275
      %v12177 = vpack.c.b16 %v11293, %v11276
      %v12178 = vpack.c.b16 %v11294, %v11277
      %v12179 = vpack.c.b16 %v11295, %v11278
      %v12180 = vpack.c.b16 %v11296, %v11279
      %v12181 = vpack.c.b16 %v11297, %v11280
      %v12182 = vpack.c.b16 %v11298, %v11281
      %v12183 = vpack.c.b16 %v11316, %v11299
      %v12184 = vpack.c.b16 %v11317, %v11300
      %v12185 = vpack.c.b16 %v11318, %v11301
      %v12186 = vpack.c.b16 %v11319, %v11302
      %v12187 = vpack.c.b16 %v11320, %v11303
      %v12188 = vpack.c.b16 %v11321, %v11304
      %v12189 = vpack.c.b16 %v11322, %v11305
      %v12190 = vpack.c.b16 %v11323, %v11306
      %v12191 = vpack.c.b16 %v11324, %v11307
      %v12192 = vpack.c.b16 %v11325, %v11308
      %v12193 = vpack.c.b16 %v11326, %v11309
      %v12194 = vpack.c.b16 %v11327, %v11310
      %v12195 = vpack.c.b16 %v11328, %v11311
      %v12196 = vpack.c.b16 %v11329, %v11312
      %v12197 = vpack.c.b16 %v11330, %v11313
      %v12198 = vpack.c.b16 %v11331, %v11314
      %v12199 = vpack.c.b16 %v11332, %v11315
      %v12200 = vpack.c.b16 %v11350, %v11333
      %v12201 = vpack.c.b16 %v11351, %v11334
      %v12202 = vpack.c.b16 %v11352, %v11335
      %v12203 = vpack.c.b16 %v11353, %v11336
      %v12204 = vpack.c.b16 %v11354, %v11337
      %v12205 = vpack.c.b16 %v11355, %v11338
      %v12206 = vpack.c.b16 %v11356, %v11339
      %v12207 = vpack.c.b16 %v11357, %v11340
      %v12208 = vpack.c.b16 %v11358, %v11341
      %v12209 = vpack.c.b16 %v11359, %v11342
      %v12210 = vpack.c.b16 %v11360, %v11343
      %v12211 = vpack.c.b16 %v11361, %v11344
      %v12212 = vpack.c.b16 %v11362, %v11345
      %v12213 = vpack.c.b16 %v11363, %v11346
      %v12214 = vpack.c.b16 %v11364, %v11347
      %v12215 = vpack.c.b16 %v11365, %v11348
      %v12216 = vpack.c.b16 %v11366, %v11349
      %v12217 = vpack.c.b16 %v11384, %v11367
      %v12218 = vpack.c.b16 %v11385, %v11368
      %v12219 = vpack.c.b16 %v11386, %v11369
      %v12220 = vpack.c.b16 %v11387, %v11370
      %v12221 = vpack.c.b16 %v11388, %v11371
      %v12222 = vpack.c.b16 %v11389, %v11372
      %v12223 = vpack.c.b16 %v11390, %v11373
      %v12224 = vpack.c.b16 %v11391, %v11374
      %v12225 = vpack.c.b16 %v11392, %v11375
      %v12226 = vpack.c.b16 %v11393, %v11376
      %v12227 = vpack.c.b16 %v11394, %v11377
      %v12228 = vpack.c.b16 %v11395, %v11378
      %v12229 = vpack.c.b16 %v11396, %v11379
      %v12230 = vpack.c.b16 %v11397, %v11380
      %v12231 = vpack.c.b16 %v11398, %v11381
      %v12232 = vpack.c.b16 %v11399, %v11382
      %v12233 = vpack.c.b16 %v11400, %v11383
      %v12234 = vpack.c.b16 %v11418, %v11401
      %v12235 = vpack.c.b16 %v11419, %v11402
      %v12236 = vpack.c.b16 %v11420, %v11403
      %v12237 = vpack.c.b16 %v11421, %v11404
      %v12238 = vpack.c.b16 %v11422, %v11405
      %v12239 = vpack.c.b16 %v11423, %v11406
      %v12240 = vpack.c.b16 %v11424, %v11407
      %v12241 = vpack.c.b16 %v11425, %v11408
      %v12242 = vpack.c.b16 %v11426, %v11409
      %v12243 = vpack.c.b16 %v11427, %v11410
      %v12244 = vpack.c.b16 %v11428, %v11411
      %v12245 = vpack.c.b16 %v11429, %v11412
      %v12246 = vpack.c.b16 %v11430, %v11413
      %v12247 = vpack.c.b16 %v11431, %v11414
      %v12248 = vpack.c.b16 %v11432, %v11415
      %v12249 = vpack.c.b16 %v11433, %v11416
      %v12250 = vpack.c.b16 %v11434, %v11417
      %v12251 = vpack.c.b16 %v11452, %v11435
      %v12252 = vpack.c.b16 %v11453, %v11436
      %v12253 = vpack.c.b16 %v11454, %v11437
      %v12254 = vpack.c.b16 %v11455, %v11438
      %v12255 = vpack.c.b16 %v11456, %v11439
      %v12256 = vpack.c.b16 %v11457, %v11440
      %v12257 = vpack.c.b16 %v11458, %v11441
      %v12258 = vpack.c.b16 %v11459, %v11442
      %v12259 = vpack.c.b16 %v11460, %v11443
      %v12260 = vpack.c.b16 %v11461, %v11444
      %v12261 = vpack.c.b16 %v11462, %v11445
      %v12262 = vpack.c.b16 %v11463, %v11446
      %v12263 = vpack.c.b16 %v11464, %v11447
      %v12264 = vpack.c.b16 %v11465, %v11448
      %v12265 = vpack.c.b16 %v11466, %v11449
      %v12266 = vpack.c.b16 %v11467, %v11450
      %v12267 = vpack.c.b16 %v11468, %v11451
      %v12268 = vpack.c.b16 %v11486, %v11469
      %v12269 = vpack.c.b16 %v11487, %v11470
      %v12270 = vpack.c.b16 %v11488, %v11471
      %v12271 = vpack.c.b16 %v11489, %v11472
      %v12272 = vpack.c.b16 %v11490, %v11473
      %v12273 = vpack.c.b16 %v11491, %v11474
      %v12274 = vpack.c.b16 %v11492, %v11475
      %v12275 = vpack.c.b16 %v11493, %v11476
      %v12276 = vpack.c.b16 %v11494, %v11477
      %v12277 = vpack.c.b16 %v11495, %v11478
      %v12278 = vpack.c.b16 %v11496, %v11479
      %v12279 = vpack.c.b16 %v11497, %v11480
      %v12280 = vpack.c.b16 %v11498, %v11481
      %v12281 = vpack.c.b16 %v11499, %v11482
      %v12282 = vpack.c.b16 %v11500, %v11483
      %v12283 = vpack.c.b16 %v11501, %v11484
      %v12284 = vpack.c.b16 %v11502, %v11485
      %v12285 = vpack.c.b16 %v11520, %v11503
      %v12286 = vpack.c.b16 %v11521, %v11504
      %v12287 = vpack.c.b16 %v11522, %v11505
      %v12288 = vpack.c.b16 %v11523, %v11506
      %v12289 = vpack.c.b16 %v11524, %v11507
      %v12290 = vpack.c.b16 %v11525, %v11508
      %v12291 = vpack.c.b16 %v11526, %v11509
      %v12292 = vpack.c.b16 %v11527, %v11510
      %v12293 = vpack.c.b16 %v11528, %v11511
      %v12294 = vpack.c.b16 %v11529, %v11512
      %v12295 = vpack.c.b16 %v11530, %v11513
      %v12296 = vpack.c.b16 %v11531, %v11514
      %v12297 = vpack.c.b16 %v11532, %v11515
      %v12298 = vpack.c.b16 %v11533, %v11516
      %v12299 = vpack.c.b16 %v11534, %v11517
      %v12300 = vpack.c.b16 %v11535, %v11518
      %v12301 = vpack.c.b16 %v11536, %v11519
      %v12302 = vpack.c.b16 %v11554, %v11537
      %v12303 = vpack.c.b16 %v11555, %v11538
      %v12304 = vpack.c.b16 %v11556, %v11539
      %v12305 = vpack.c.b16 %v11557, %v11540
      %v12306 = vpack.c.b16 %v11558, %v11541
      %v12307 = vpack.c.b16 %v11559, %v11542
      %v12308 = vpack.c.b16 %v11560, %v11543
      %v12309 = vpack.c.b16 %v11561, %v11544
      %v12310 = vpack.c.b16 %v11562, %v11545
      %v12311 = vpack.c.b16 %v11563, %v11546
      %v12312 = vpack.c.b16 %v11564, %v11547
      %v12313 = vpack.c.b16 %v11565, %v11548
      %v12314 = vpack.c.b16 %v11566, %v11549
      %v12315 = vpack.c.b16 %v11567, %v11550
      %v12316 = vpack.c.b16 %v11568, %v11551
      %v12317 = vpack.c.b16 %v11569, %v11552
      %v12318 = vpack.c.b16 %v11570, %v11553
      %v12319 = vpack.c.b16 %v11588, %v11571
      %v12320 = vpack.c.b16 %v11589, %v11572
      %v12321 = vpack.c.b16 %v11590, %v11573
      %v12322 = vpack.c.b16 %v11591, %v11574
      %v12323 = vpack.c.b16 %v11592, %v11575
      %v12324 = vpack.c.b16 %v11593, %v11576
      %v12325 = vpack.c.b16 %v11594, %v11577
      %v12326 = vpack.c.b16 %v11595, %v11578
      %v12327 = vpack.c.b16 %v11596, %v11579
      %v12328 = vpack.c.b16 %v11597, %v11580
      %v12329 = vpack.c.b16 %v11598, %v11581
      %v12330 = vpack.c.b16 %v11599, %v11582
      %v12331 = vpack.c.b16 %v11600, %v11583
      %v12332 = vpack.c.b16 %v11601, %v11584
      %v12333 = vpack.c.b16 %v11602, %v11585
      %v12334 = vpack.c.b16 %v11603, %v11586
      %v12335 = vpack.c.b16 %v11604, %v11587
      %v12336 = vpack.c.b16 %v11622, %v11605
      %v12337 = vpack.c.b16 %v11623, %v11606
      %v12338 = vpack.c.b16 %v11624, %v11607
      %v12339 = vpack.c.b16 %v11625, %v11608
      %v12340 = vpack.c.b16 %v11626, %v11609
      %v12341 = vpack.c.b16 %v11627, %v11610
      %v12342 = vpack.c.b16 %v11628, %v11611
      %v12343 = vpack.c.b16 %v11629, %v11612
      %v12344 = vpack.c.b16 %v11630, %v11613
      %v12345 = vpack.c.b16 %v11631, %v11614
      %v12346 = vpack.c.b16 %v11632, %v11615
      %v12347 = vpack.c.b16 %v11633, %v11616
      %v12348 = vpack.c.b16 %v11634, %v11617
      %v12349 = vpack.c.b16 %v11635, %v11618
      %v12350 = vpack.c.b16 %v11636, %v11619
      %v12351 = vpack.c.b16 %v11637, %v11620
      %v12352 = vpack.c.b16 %v11638, %v11621
      %v12353 = vpack.c.b16 %v11656, %v11639
      %v12354 = vpack.c.b16 %v11657, %v11640
      %v12355 = vpack.c.b16 %v11658, %v11641
      %v12356 = vpack.c.b16 %v11659, %v11642
      %v12357 = vpack.c.b16 %v11660, %v11643
      %v12358 = vpack.c.b16 %v11661, %v11644
      %v12359 = vpack.c.b16 %v11662, %v11645
      %v12360 = vpack.c.b16 %v11663, %v11646
      %v12361 = vpack.c.b16 %v11664, %v11647
      %v12362 = vpack.c.b16 %v11665, %v11648
      %v12363 = vpack.c.b16 %v11666, %v11649
      %v12364 = vpack.c.b16 %v11667, %v11650
      %v12365 = vpack.c.b16 %v11668, %v11651
      %v12366 = vpack.c.b16 %v11669, %v11652
      %v12367 = vpack.c.b16 %v11670, %v11653
      %v12368 = vpack.c.b16 %v11671, %v11654
      %v12369 = vpack.c.b16 %v11672, %v11655
      %v12370 = vpack.c.b16 %v11690, %v11673
      %v12371 = vpack.c.b16 %v11691, %v11674
      %v12372 = vpack.c.b16 %v11692, %v11675
      %v12373 = vpack.c.b16 %v11693, %v11676
      %v12374 = vpack.c.b16 %v11694, %v11677
      %v12375 = vpack.c.b16 %v11695, %v11678
      %v12376 = vpack.c.b16 %v11696, %v11679
      %v12377 = vpack.c.b16 %v11697, %v11680
      %v12378 = vpack.c.b16 %v11698, %v11681
      %v12379 = vpack.c.b16 %v11699, %v11682
      %v12380 = vpack.c.b16 %v11700, %v11683
      %v12381 = vpack.c.b16 %v11701, %v11684
      %v12382 = vpack.c.b16 %v11702, %v11685
      %v12383 = vpack.c.b16 %v11703, %v11686
      %v12384 = vpack.c.b16 %v11704, %v11687
      %v12385 = vpack.c.b16 %v11705, %v11688
      %v12386 = vpack.c.b16 %v11706, %v11689
      %v12387 = vpack.c.b16 %v11724, %v11707
      %v12388 = vpack.c.b16 %v11725, %v11708
      %v12389 = vpack.c.b16 %v11726, %v11709
      %v12390 = vpack.c.b16 %v11727, %v11710
      %v12391 = vpack.c.b16 %v11728, %v11711
      %v12392 = vpack.c.b16 %v11729, %v11712
      %v12393 = vpack.c.b16 %v11730, %v11713
      %v12394 = vpack.c.b16 %v11731, %v11714
      %v12395 = vpack.c.b16 %v11732, %v11715
      %v12396 = vpack.c.b16 %v11733, %v11716
      %v12397 = vpack.c.b16 %v11734, %v11717
      %v12398 = vpack.c.b16 %v11735, %v11718
      %v12399 = vpack.c.b16 %v11736, %v11719
      %v12400 = vpack.c.b16 %v11737, %v11720
      %v12401 = vpack.c.b16 %v11738, %v11721
      %v12402 = vpack.c.b16 %v11739, %v11722
      %v12403 = vpack.c.b16 %v11740, %v11723
      %v12404 = vpack.c.b16 %v11758, %v11741
      %v12405 = vpack.c.b16 %v11759, %v11742
      %v12406 = vpack.c.b16 %v11760, %v11743
      %v12407 = vpack.c.b16 %v11761, %v11744
      %v12408 = vpack.c.b16 %v11762, %v11745
      %v12409 = vpack.c.b16 %v11763, %v11746
      %v12410 = vpack.c.b16 %v11764, %v11747
      %v12411 = vpack.c.b16 %v11765, %v11748
      %v12412 = vpack.c.b16 %v11766, %v11749
      %v12413 = vpack.c.b16 %v11767, %v11750
      %v12414 = vpack.c.b16 %v11768, %v11751
      %v12415 = vpack.c.b16 %v11769, %v11752
      %v12416 = vpack.c.b16 %v11770, %v11753
      %v12417 = vpack.c.b16 %v11771, %v11754
      %v12418 = vpack.c.b16 %v11772, %v11755
      %v12419 = vpack.c.b16 %v11773, %v11756
      %v12420 = vpack.c.b16 %v11774, %v11757
      %v12421 = vpack.c.b16 %v11792, %v11775
      %v12422 = vpack.c.b16 %v11793, %v11776
      %v12423 = vpack.c.b16 %v11794, %v11777
      %v12424 = vpack.c.b16 %v11795, %v11778
      %v12425 = vpack.c.b16 %v11796, %v11779
      %v12426 = vpack.c.b16 %v11797, %v11780
      %v12427 = vpack.c.b16 %v11798, %v11781
      %v12428 = vpack.c.b16 %v11799, %v11782
      %v12429 = vpack.c.b16 %v11800, %v11783
      %v12430 = vpack.c.b16 %v11801, %v11784
      %v12431 = vpack.c.b16 %v11802, %v11785
      %v12432 = vpack.c.b16 %v11803, %v11786
      %v12433 = vpack.c.b16 %v11804, %v11787
      %v12434 = vpack.c.b16 %v11805, %v11788
      %v12435 = vpack.c.b16 %v11806, %v11789
      %v12436 = vpack.c.b16 %v11807, %v11790
      %v12437 = vpack.c.b16 %v11808, %v11791
      %v12438 = vpack.c.b16 %v11826, %v11809
      %v12439 = vpack.c.b16 %v11827, %v11810
      %v12440 = vpack.c.b16 %v11828, %v11811
      %v12441 = vpack.c.b16 %v11829, %v11812
      %v12442 = vpack.c.b16 %v11830, %v11813
      %v12443 = vpack.c.b16 %v11831, %v11814
      %v12444 = vpack.c.b16 %v11832, %v11815
      %v12445 = vpack.c.b16 %v11833, %v11816
      %v12446 = vpack.c.b16 %v11834, %v11817
      %v12447 = vpack.c.b16 %v11835, %v11818
      %v12448 = vpack.c.b16 %v11836, %v11819
      %v12449 = vpack.c.b16 %v11837, %v11820
      %v12450 = vpack.c.b16 %v11838, %v11821
      %v12451 = vpack.c.b16 %v11839, %v11822
      %v12452 = vpack.c.b16 %v11840, %v11823
      %v12453 = vpack.c.b16 %v11841, %v11824
      %v12454 = vpack.c.b16 %v11842, %v11825
      %v12455 = vpack.c.b16 %v11860, %v11843
      %v12456 = vpack.c.b16 %v11861, %v11844
      %v12457 = vpack.c.b16 %v11862, %v11845
      %v12458 = vpack.c.b16 %v11863, %v11846
      %v12459 = vpack.c.b16 %v11864, %v11847
      %v12460 = vpack.c.b16 %v11865, %v11848
      %v12461 = vpack.c.b16 %v11866, %v11849
      %v12462 = vpack.c.b16 %v11867, %v11850
      %v12463 = vpack.c.b16 %v11868, %v11851
      %v12464 = vpack.c.b16 %v11869, %v11852
      %v12465 = vpack.c.b16 %v11870, %v11853
      %v12466 = vpack.c.b16 %v11871, %v11854
      %v12467 = vpack.c.b16 %v11872, %v11855
      %v12468 = vpack.c.b16 %v11873, %v11856
      %v12469 = vpack.c.b16 %v11874, %v11857
      %v12470 = vpack.c.b16 %v11875, %v11858
      %v12471 = vpack.c.b16 %v11876, %v11859
      %v12472 = vpack.c.b16 %v11894, %v11877
      %v12473 = vpack.c.b16 %v11895, %v11878
      %v12474 = vpack.c.b16 %v11896, %v11879
      %v12475 = vpack.c.b16 %v11897, %v11880
      %v12476 = vpack.c.b16 %v11898, %v11881
      %v12477 = vpack.c.b16 %v11899, %v11882
      %v12478 = vpack.c.b16 %v11900, %v11883
      %v12479 = vpack.c.b16 %v11901, %v11884
      %v12480 = vpack.c.b16 %v11902, %v11885
      %v12481 = vpack.c.b16 %v11903, %v11886
      %v12482 = vpack.c.b16 %v11904, %v11887
      %v12483 = vpack.c.b16 %v11905, %v11888
      %v12484 = vpack.c.b16 %v11906, %v11889
      %v12485 = vpack.c.b16 %v11907, %v11890
      %v12486 = vpack.c.b16 %v11908, %v11891
      %v12487 = vpack.c.b16 %v11909, %v11892
      %v12488 = vpack.c.b16 %v11910, %v11893
      %v12489 = vpack.c.b16 %v11928, %v11911
      %v12490 = vpack.c.b16 %v11929, %v11912
      %v12491 = vpack.c.b16 %v11930, %v11913
      %v12492 = vpack.c.b16 %v11931, %v11914
      %v12493 = vpack.c.b16 %v11932, %v11915
      %v12494 = vpack.c.b16 %v11933, %v11916
      %v12495 = vpack.c.b16 %v11934, %v11917
      %v12496 = vpack.c.b16 %v11935, %v11918
      %v12497 = vpack.c.b16 %v11936, %v11919
      %v12498 = vpack.c.b16 %v11937, %v11920
      %v12499 = vpack.c.b16 %v11938, %v11921
      %v12500 = vpack.c.b16 %v11939, %v11922
      %v12501 = vpack.c.b16 %v11940, %v11923
      %v12502 = vpack.c.b16 %v11941, %v11924
      %v12503 = vpack.c.b16 %v11942, %v11925
      %v12504 = vpack.c.b16 %v11943, %v11926
      %v12505 = vpack.c.b16 %v11944, %v11927
      %v12506 = vpack.c.b16 %v11962, %v11945
      %v12507 = vpack.c.b16 %v11963, %v11946
      %v12508 = vpack.c.b16 %v11964, %v11947
      %v12509 = vpack.c.b16 %v11965, %v11948
      %v12510 = vpack.c.b16 %v11966, %v11949
      %v12511 = vpack.c.b16 %v11967, %v11950
      %v12512 = vpack.c.b16 %v11968, %v11951
      %v12513 = vpack.c.b16 %v11969, %v11952
      %v12514 = vpack.c.b16 %v11970, %v11953
      %v12515 = vpack.c.b16 %v11971, %v11954
      %v12516 = vpack.c.b16 %v11972, %v11955
      %v12517 = vpack.c.b16 %v11973, %v11956
      %v12518 = vpack.c.b16 %v11974, %v11957
      %v12519 = vpack.c.b16 %v11975, %v11958
      %v12520 = vpack.c.b16 %v11976, %v11959
      %v12521 = vpack.c.b16 %v11977, %v11960
      %v12522 = vpack.c.b16 %v11978, %v11961
      %13067 = vmatpush.bf16.msra.mxu0 %v12098
      %13068 = vmatpush.bf16.msra.mxu0 %v12081
      %13069 = vmatpush.bf16.msra.mxu0 %v12064
      %13070 = vmatpush.bf16.msra.mxu0 %v12047
      %13071 = vmatpush.bf16.msra.mxu0 %v12030
      %13072 = vmatpush.bf16.msra.mxu0 %v12013
      %13073 = vmatpush.bf16.msra.mxu0 %v11996
      %13074 = vmatpush.bf16.msra.mxu0 %v11979
      %13075 = vmatmul.bf16.gmra.mxu0 %v10307
      %v13076 = vpop.f32.mrf.mxu0
      %v13077 = vadd.f32 0.0, %v13076
      %v13078 = vpop.f32.mrf.mxu0
      %13079 = vdwg.mxu0
      %13080 = vmatpush.bf16.msra.mxu0 %v12234
      %13081 = vmatpush.bf16.msra.mxu0 %v12217
      %13082 = vmatpush.bf16.msra.mxu0 %v12200
      %13083 = vmatpush.bf16.msra.mxu0 %v12183
      %13084 = vmatpush.bf16.msra.mxu0 %v12166
      %13085 = vmatpush.bf16.msra.mxu0 %v12149
      %13086 = vmatpush.bf16.msra.mxu0 %v12132
      %13087 = vmatpush.bf16.msra.mxu0 %v12115
      %13088 = vmatmul.bf16.gmra.mxu0 %v10308
      %v13089 = vpop.f32.mrf.mxu0
      %v13090 = vadd.f32 %v13077, %v13089
      %v13091 = vpop.f32.mrf.mxu0
      %13092 = vdwg.mxu0
      %13093 = vmatpush.bf16.msra.mxu0 %v12370
      %13094 = vmatpush.bf16.msra.mxu0 %v12353
      %13095 = vmatpush.bf16.msra.mxu0 %v12336
      %13096 = vmatpush.bf16.msra.mxu0 %v12319
      %13097 = vmatpush.bf16.msra.mxu0 %v12302
      %13098 = vmatpush.bf16.msra.mxu0 %v12285
      %13099 = vmatpush.bf16.msra.mxu0 %v12268
      %13100 = vmatpush.bf16.msra.mxu0 %v12251
      %13101 = vmatmul.bf16.gmra.mxu0 %v10309
      %v13102 = vpop.f32.mrf.mxu0
      %v13103 = vadd.f32 %v13090, %v13102
      %v13104 = vpop.f32.mrf.mxu0
      %13105 = vdwg.mxu0
      %13106 = vmatpush.bf16.msra.mxu0 %v12506
      %13107 = vmatpush.bf16.msra.mxu0 %v12489
      %13108 = vmatpush.bf16.msra.mxu0 %v12472
      %13109 = vmatpush.bf16.msra.mxu0 %v12455
      %13110 = vmatpush.bf16.msra.mxu0 %v12438
      %13111 = vmatpush.bf16.msra.mxu0 %v12421
      %13112 = vmatpush.bf16.msra.mxu0 %v12404
      %13113 = vmatpush.bf16.msra.mxu0 %v12387
      %13114 = vmatmul.bf16.gmra.mxu0 %v10310
      %v13115 = vpop.f32.mrf.mxu0
      %v13116 = vadd.f32 %v13103, %v13115
      %v13117 = vpop.f32.mrf.mxu0
      %13118 = vdwg.mxu0
      %13119 = vmatpush.bf16.msra.mxu0 %v12099
      %13120 = vmatpush.bf16.msra.mxu0 %v12082
      %13121 = vmatpush.bf16.msra.mxu0 %v12065
      %13122 = vmatpush.bf16.msra.mxu0 %v12048
      %13123 = vmatpush.bf16.msra.mxu0 %v12031
      %13124 = vmatpush.bf16.msra.mxu0 %v12014
      %13125 = vmatpush.bf16.msra.mxu0 %v11997
      %13126 = vmatpush.bf16.msra.mxu0 %v11980
      %13127 = vmatmul.bf16.gmra.mxu0 %v10307
      %v13128 = vpop.f32.mrf.mxu0
      %v13129 = vadd.f32 0.0, %v13128
      %v13130 = vpop.f32.mrf.mxu0
      %13131 = vdwg.mxu0
      %13132 = vmatpush.bf16.msra.mxu0 %v12235
      %13133 = vmatpush.bf16.msra.mxu0 %v12218
      %13134 = vmatpush.bf16.msra.mxu0 %v12201
      %13135 = vmatpush.bf16.msra.mxu0 %v12184
      %13136 = vmatpush.bf16.msra.mxu0 %v12167
      %13137 = vmatpush.bf16.msra.mxu0 %v12150
      %13138 = vmatpush.bf16.msra.mxu0 %v12133
      %13139 = vmatpush.bf16.msra.mxu0 %v12116
      %13140 = vmatmul.bf16.gmra.mxu0 %v10308
      %v13141 = vpop.f32.mrf.mxu0
      %v13142 = vadd.f32 %v13129, %v13141
      %v13143 = vpop.f32.mrf.mxu0
      %13144 = vdwg.mxu0
      %13145 = vmatpush.bf16.msra.mxu0 %v12371
      %13146 = vmatpush.bf16.msra.mxu0 %v12354
      %13147 = vmatpush.bf16.msra.mxu0 %v12337
      %13148 = vmatpush.bf16.msra.mxu0 %v12320
      %13149 = vmatpush.bf16.msra.mxu0 %v12303
      %13150 = vmatpush.bf16.msra.mxu0 %v12286
      %13151 = vmatpush.bf16.msra.mxu0 %v12269
      %13152 = vmatpush.bf16.msra.mxu0 %v12252
      %13153 = vmatmul.bf16.gmra.mxu0 %v10309
      %v13154 = vpop.f32.mrf.mxu0
      %v13155 = vadd.f32 %v13142, %v13154
      %v13156 = vpop.f32.mrf.mxu0
      %13157 = vdwg.mxu0
      %13158 = vmatpush.bf16.msra.mxu0 %v12507
      %13159 = vmatpush.bf16.msra.mxu0 %v12490
      %13160 = vmatpush.bf16.msra.mxu0 %v12473
      %13161 = vmatpush.bf16.msra.mxu0 %v12456
      %13162 = vmatpush.bf16.msra.mxu0 %v12439
      %13163 = vmatpush.bf16.msra.mxu0 %v12422
      %13164 = vmatpush.bf16.msra.mxu0 %v12405
      %13165 = vmatpush.bf16.msra.mxu0 %v12388
      %13166 = vmatmul.bf16.gmra.mxu0 %v10310
      %v13167 = vpop.f32.mrf.mxu0
      %v13168 = vadd.f32 %v13155, %v13167
      %v13169 = vpop.f32.mrf.mxu0
      %13170 = vdwg.mxu0
      %13171 = vmatpush.bf16.msra.mxu0 %v12100
      %13172 = vmatpush.bf16.msra.mxu0 %v12083
      %13173 = vmatpush.bf16.msra.mxu0 %v12066
      %13174 = vmatpush.bf16.msra.mxu0 %v12049
      %13175 = vmatpush.bf16.msra.mxu0 %v12032
      %13176 = vmatpush.bf16.msra.mxu0 %v12015
      %13177 = vmatpush.bf16.msra.mxu0 %v11998
      %13178 = vmatpush.bf16.msra.mxu0 %v11981
      %13179 = vmatmul.bf16.gmra.mxu0 %v10307
      %v13180 = vpop.f32.mrf.mxu0
      %v13181 = vadd.f32 0.0, %v13180
      %v13182 = vpop.f32.mrf.mxu0
      %13183 = vdwg.mxu0
      %13184 = vmatpush.bf16.msra.mxu0 %v12236
      %13185 = vmatpush.bf16.msra.mxu0 %v12219
      %13186 = vmatpush.bf16.msra.mxu0 %v12202
      %13187 = vmatpush.bf16.msra.mxu0 %v12185
      %13188 = vmatpush.bf16.msra.mxu0 %v12168
      %13189 = vmatpush.bf16.msra.mxu0 %v12151
      %13190 = vmatpush.bf16.msra.mxu0 %v12134
      %13191 = vmatpush.bf16.msra.mxu0 %v12117
      %13192 = vmatmul.bf16.gmra.mxu0 %v10308
      %v13193 = vpop.f32.mrf.mxu0
      %v13194 = vadd.f32 %v13181, %v13193
      %v13195 = vpop.f32.mrf.mxu0
      %13196 = vdwg.mxu0
      %13197 = vmatpush.bf16.msra.mxu0 %v12372
      %13198 = vmatpush.bf16.msra.mxu0 %v12355
      %13199 = vmatpush.bf16.msra.mxu0 %v12338
      %13200 = vmatpush.bf16.msra.mxu0 %v12321
      %13201 = vmatpush.bf16.msra.mxu0 %v12304
      %13202 = vmatpush.bf16.msra.mxu0 %v12287
      %13203 = vmatpush.bf16.msra.mxu0 %v12270
      %13204 = vmatpush.bf16.msra.mxu0 %v12253
      %13205 = vmatmul.bf16.gmra.mxu0 %v10309
      %v13206 = vpop.f32.mrf.mxu0
      %v13207 = vadd.f32 %v13194, %v13206
      %v13208 = vpop.f32.mrf.mxu0
      %13209 = vdwg.mxu0
      %13210 = vmatpush.bf16.msra.mxu0 %v12508
      %13211 = vmatpush.bf16.msra.mxu0 %v12491
      %13212 = vmatpush.bf16.msra.mxu0 %v12474
      %13213 = vmatpush.bf16.msra.mxu0 %v12457
      %13214 = vmatpush.bf16.msra.mxu0 %v12440
      %13215 = vmatpush.bf16.msra.mxu0 %v12423
      %13216 = vmatpush.bf16.msra.mxu0 %v12406
      %13217 = vmatpush.bf16.msra.mxu0 %v12389
      %13218 = vmatmul.bf16.gmra.mxu0 %v10310
      %v13219 = vpop.f32.mrf.mxu0
      %v13220 = vadd.f32 %v13207, %v13219
      %v13221 = vpop.f32.mrf.mxu0
      %13222 = vdwg.mxu0
      %13223 = vmatpush.bf16.msra.mxu0 %v12101
      %13224 = vmatpush.bf16.msra.mxu0 %v12084
      %13225 = vmatpush.bf16.msra.mxu0 %v12067
      %13226 = vmatpush.bf16.msra.mxu0 %v12050
      %13227 = vmatpush.bf16.msra.mxu0 %v12033
      %13228 = vmatpush.bf16.msra.mxu0 %v12016
      %13229 = vmatpush.bf16.msra.mxu0 %v11999
      %13230 = vmatpush.bf16.msra.mxu0 %v11982
      %13231 = vmatmul.bf16.gmra.mxu0 %v10307
      %v13232 = vpop.f32.mrf.mxu0
      %v13233 = vadd.f32 0.0, %v13232
      %v13234 = vpop.f32.mrf.mxu0
      %13235 = vdwg.mxu0
      %13236 = vmatpush.bf16.msra.mxu0 %v12237
      %13237 = vmatpush.bf16.msra.mxu0 %v12220
      %13238 = vmatpush.bf16.msra.mxu0 %v12203
      %13239 = vmatpush.bf16.msra.mxu0 %v12186
      %13240 = vmatpush.bf16.msra.mxu0 %v12169
      %13241 = vmatpush.bf16.msra.mxu0 %v12152
      %13242 = vmatpush.bf16.msra.mxu0 %v12135
      %13243 = vmatpush.bf16.msra.mxu0 %v12118
      %13244 = vmatmul.bf16.gmra.mxu0 %v10308
      %v13245 = vpop.f32.mrf.mxu0
      %v13246 = vadd.f32 %v13233, %v13245
      %v13247 = vpop.f32.mrf.mxu0
      %13248 = vdwg.mxu0
      %13249 = vmatpush.bf16.msra.mxu0 %v12373
      %13250 = vmatpush.bf16.msra.mxu0 %v12356
      %13251 = vmatpush.bf16.msra.mxu0 %v12339
      %13252 = vmatpush.bf16.msra.mxu0 %v12322
      %13253 = vmatpush.bf16.msra.mxu0 %v12305
      %13254 = vmatpush.bf16.msra.mxu0 %v12288
      %13255 = vmatpush.bf16.msra.mxu0 %v12271
      %13256 = vmatpush.bf16.msra.mxu0 %v12254
      %13257 = vmatmul.bf16.gmra.mxu0 %v10309
      %v13258 = vpop.f32.mrf.mxu0
      %v13259 = vadd.f32 %v13246, %v13258
      %v13260 = vpop.f32.mrf.mxu0
      %13261 = vdwg.mxu0
      %13262 = vmatpush.bf16.msra.mxu0 %v12509
      %13263 = vmatpush.bf16.msra.mxu0 %v12492
      %13264 = vmatpush.bf16.msra.mxu0 %v12475
      %13265 = vmatpush.bf16.msra.mxu0 %v12458
      %13266 = vmatpush.bf16.msra.mxu0 %v12441
      %13267 = vmatpush.bf16.msra.mxu0 %v12424
      %13268 = vmatpush.bf16.msra.mxu0 %v12407
      %13269 = vmatpush.bf16.msra.mxu0 %v12390
      %13270 = vmatmul.bf16.gmra.mxu0 %v10310
      %v13271 = vpop.f32.mrf.mxu0
      %v13272 = vadd.f32 %v13259, %v13271
      %v13273 = vpop.f32.mrf.mxu0
      %13274 = vdwg.mxu0
      %13275 = vmatpush.bf16.msra.mxu0 %v12102
      %13276 = vmatpush.bf16.msra.mxu0 %v12085
      %13277 = vmatpush.bf16.msra.mxu0 %v12068
      %13278 = vmatpush.bf16.msra.mxu0 %v12051
      %13279 = vmatpush.bf16.msra.mxu0 %v12034
      %13280 = vmatpush.bf16.msra.mxu0 %v12017
      %13281 = vmatpush.bf16.msra.mxu0 %v12000
      %13282 = vmatpush.bf16.msra.mxu0 %v11983
      %13283 = vmatmul.bf16.gmra.mxu0 %v10307
      %v13284 = vpop.f32.mrf.mxu0
      %v13285 = vadd.f32 0.0, %v13284
      %v13286 = vpop.f32.mrf.mxu0
      %13287 = vdwg.mxu0
      %13288 = vmatpush.bf16.msra.mxu0 %v12238
      %13289 = vmatpush.bf16.msra.mxu0 %v12221
      %13290 = vmatpush.bf16.msra.mxu0 %v12204
      %13291 = vmatpush.bf16.msra.mxu0 %v12187
      %13292 = vmatpush.bf16.msra.mxu0 %v12170
      %13293 = vmatpush.bf16.msra.mxu0 %v12153
      %13294 = vmatpush.bf16.msra.mxu0 %v12136
      %13295 = vmatpush.bf16.msra.mxu0 %v12119
      %13296 = vmatmul.bf16.gmra.mxu0 %v10308
      %v13297 = vpop.f32.mrf.mxu0
      %v13298 = vadd.f32 %v13285, %v13297
      %v13299 = vpop.f32.mrf.mxu0
      %13300 = vdwg.mxu0
      %13301 = vmatpush.bf16.msra.mxu0 %v12374
      %13302 = vmatpush.bf16.msra.mxu0 %v12357
      %13303 = vmatpush.bf16.msra.mxu0 %v12340
      %13304 = vmatpush.bf16.msra.mxu0 %v12323
      %13305 = vmatpush.bf16.msra.mxu0 %v12306
      %13306 = vmatpush.bf16.msra.mxu0 %v12289
      %13307 = vmatpush.bf16.msra.mxu0 %v12272
      %13308 = vmatpush.bf16.msra.mxu0 %v12255
      %13309 = vmatmul.bf16.gmra.mxu0 %v10309
      %v13310 = vpop.f32.mrf.mxu0
      %v13311 = vadd.f32 %v13298, %v13310
      %v13312 = vpop.f32.mrf.mxu0
      %13313 = vdwg.mxu0
      %13314 = vmatpush.bf16.msra.mxu0 %v12510
      %13315 = vmatpush.bf16.msra.mxu0 %v12493
      %13316 = vmatpush.bf16.msra.mxu0 %v12476
      %13317 = vmatpush.bf16.msra.mxu0 %v12459
      %13318 = vmatpush.bf16.msra.mxu0 %v12442
      %13319 = vmatpush.bf16.msra.mxu0 %v12425
      %13320 = vmatpush.bf16.msra.mxu0 %v12408
      %13321 = vmatpush.bf16.msra.mxu0 %v12391
      %13322 = vmatmul.bf16.gmra.mxu0 %v10310
      %v13323 = vpop.f32.mrf.mxu0
      %v13324 = vadd.f32 %v13311, %v13323
      %v13325 = vpop.f32.mrf.mxu0
      %13326 = vdwg.mxu0
      %13327 = vmatpush.bf16.msra.mxu0 %v12103
      %13328 = vmatpush.bf16.msra.mxu0 %v12086
      %13329 = vmatpush.bf16.msra.mxu0 %v12069
      %13330 = vmatpush.bf16.msra.mxu0 %v12052
      %13331 = vmatpush.bf16.msra.mxu0 %v12035
      %13332 = vmatpush.bf16.msra.mxu0 %v12018
      %13333 = vmatpush.bf16.msra.mxu0 %v12001
      %13334 = vmatpush.bf16.msra.mxu0 %v11984
      %13335 = vmatmul.bf16.gmra.mxu0 %v10307
      %v13336 = vpop.f32.mrf.mxu0
      %v13337 = vadd.f32 0.0, %v13336
      %v13338 = vpop.f32.mrf.mxu0
      %13339 = vdwg.mxu0
      %13340 = vmatpush.bf16.msra.mxu0 %v12239
      %13341 = vmatpush.bf16.msra.mxu0 %v12222
      %13342 = vmatpush.bf16.msra.mxu0 %v12205
      %13343 = vmatpush.bf16.msra.mxu0 %v12188
      %13344 = vmatpush.bf16.msra.mxu0 %v12171
      %13345 = vmatpush.bf16.msra.mxu0 %v12154
      %13346 = vmatpush.bf16.msra.mxu0 %v12137
      %13347 = vmatpush.bf16.msra.mxu0 %v12120
      %13348 = vmatmul.bf16.gmra.mxu0 %v10308
      %v13349 = vpop.f32.mrf.mxu0
      %v13350 = vadd.f32 %v13337, %v13349
      %v13351 = vpop.f32.mrf.mxu0
      %13352 = vdwg.mxu0
      %13353 = vmatpush.bf16.msra.mxu0 %v12375
      %13354 = vmatpush.bf16.msra.mxu0 %v12358
      %13355 = vmatpush.bf16.msra.mxu0 %v12341
      %13356 = vmatpush.bf16.msra.mxu0 %v12324
      %13357 = vmatpush.bf16.msra.mxu0 %v12307
      %13358 = vmatpush.bf16.msra.mxu0 %v12290
      %13359 = vmatpush.bf16.msra.mxu0 %v12273
      %13360 = vmatpush.bf16.msra.mxu0 %v12256
      %13361 = vmatmul.bf16.gmra.mxu0 %v10309
      %v13362 = vpop.f32.mrf.mxu0
      %v13363 = vadd.f32 %v13350, %v13362
      %v13364 = vpop.f32.mrf.mxu0
      %13365 = vdwg.mxu0
      %13366 = vmatpush.bf16.msra.mxu0 %v12511
      %13367 = vmatpush.bf16.msra.mxu0 %v12494
      %13368 = vmatpush.bf16.msra.mxu0 %v12477
      %13369 = vmatpush.bf16.msra.mxu0 %v12460
      %13370 = vmatpush.bf16.msra.mxu0 %v12443
      %13371 = vmatpush.bf16.msra.mxu0 %v12426
      %13372 = vmatpush.bf16.msra.mxu0 %v12409
      %13373 = vmatpush.bf16.msra.mxu0 %v12392
      %13374 = vmatmul.bf16.gmra.mxu0 %v10310
      %v13375 = vpop.f32.mrf.mxu0
      %v13376 = vadd.f32 %v13363, %v13375
      %v13377 = vpop.f32.mrf.mxu0
      %13378 = vdwg.mxu0
      %13379 = vmatpush.bf16.msra.mxu0 %v12104
      %13380 = vmatpush.bf16.msra.mxu0 %v12087
      %13381 = vmatpush.bf16.msra.mxu0 %v12070
      %13382 = vmatpush.bf16.msra.mxu0 %v12053
      %13383 = vmatpush.bf16.msra.mxu0 %v12036
      %13384 = vmatpush.bf16.msra.mxu0 %v12019
      %13385 = vmatpush.bf16.msra.mxu0 %v12002
      %13386 = vmatpush.bf16.msra.mxu0 %v11985
      %13387 = vmatmul.bf16.gmra.mxu0 %v10307
      %v13388 = vpop.f32.mrf.mxu0
      %v13389 = vadd.f32 0.0, %v13388
      %v13390 = vpop.f32.mrf.mxu0
      %13391 = vdwg.mxu0
      %13392 = vmatpush.bf16.msra.mxu0 %v12240
      %13393 = vmatpush.bf16.msra.mxu0 %v12223
      %13394 = vmatpush.bf16.msra.mxu0 %v12206
      %13395 = vmatpush.bf16.msra.mxu0 %v12189
      %13396 = vmatpush.bf16.msra.mxu0 %v12172
      %13397 = vmatpush.bf16.msra.mxu0 %v12155
      %13398 = vmatpush.bf16.msra.mxu0 %v12138
      %13399 = vmatpush.bf16.msra.mxu0 %v12121
      %13400 = vmatmul.bf16.gmra.mxu0 %v10308
      %v13401 = vpop.f32.mrf.mxu0
      %v13402 = vadd.f32 %v13389, %v13401
      %v13403 = vpop.f32.mrf.mxu0
      %13404 = vdwg.mxu0
      %13405 = vmatpush.bf16.msra.mxu0 %v12376
      %13406 = vmatpush.bf16.msra.mxu0 %v12359
      %13407 = vmatpush.bf16.msra.mxu0 %v12342
      %13408 = vmatpush.bf16.msra.mxu0 %v12325
      %13409 = vmatpush.bf16.msra.mxu0 %v12308
      %13410 = vmatpush.bf16.msra.mxu0 %v12291
      %13411 = vmatpush.bf16.msra.mxu0 %v12274
      %13412 = vmatpush.bf16.msra.mxu0 %v12257
      %13413 = vmatmul.bf16.gmra.mxu0 %v10309
      %v13414 = vpop.f32.mrf.mxu0
      %v13415 = vadd.f32 %v13402, %v13414
      %v13416 = vpop.f32.mrf.mxu0
      %13417 = vdwg.mxu0
      %13418 = vmatpush.bf16.msra.mxu0 %v12512
      %13419 = vmatpush.bf16.msra.mxu0 %v12495
      %13420 = vmatpush.bf16.msra.mxu0 %v12478
      %13421 = vmatpush.bf16.msra.mxu0 %v12461
      %13422 = vmatpush.bf16.msra.mxu0 %v12444
      %13423 = vmatpush.bf16.msra.mxu0 %v12427
      %13424 = vmatpush.bf16.msra.mxu0 %v12410
      %13425 = vmatpush.bf16.msra.mxu0 %v12393
      %13426 = vmatmul.bf16.gmra.mxu0 %v10310
      %v13427 = vpop.f32.mrf.mxu0
      %v13428 = vadd.f32 %v13415, %v13427
      %v13429 = vpop.f32.mrf.mxu0
      %13430 = vdwg.mxu0
      %13431 = vmatpush.bf16.msra.mxu0 %v12105
      %13432 = vmatpush.bf16.msra.mxu0 %v12088
      %13433 = vmatpush.bf16.msra.mxu0 %v12071
      %13434 = vmatpush.bf16.msra.mxu0 %v12054
      %13435 = vmatpush.bf16.msra.mxu0 %v12037
      %13436 = vmatpush.bf16.msra.mxu0 %v12020
      %13437 = vmatpush.bf16.msra.mxu0 %v12003
      %13438 = vmatpush.bf16.msra.mxu0 %v11986
      %13439 = vmatmul.bf16.gmra.mxu0 %v10307
      %v13440 = vpop.f32.mrf.mxu0
      %v13441 = vadd.f32 0.0, %v13440
      %v13442 = vpop.f32.mrf.mxu0
      %13443 = vdwg.mxu0
      %13444 = vmatpush.bf16.msra.mxu0 %v12241
      %13445 = vmatpush.bf16.msra.mxu0 %v12224
      %13446 = vmatpush.bf16.msra.mxu0 %v12207
      %13447 = vmatpush.bf16.msra.mxu0 %v12190
      %13448 = vmatpush.bf16.msra.mxu0 %v12173
      %13449 = vmatpush.bf16.msra.mxu0 %v12156
      %13450 = vmatpush.bf16.msra.mxu0 %v12139
      %13451 = vmatpush.bf16.msra.mxu0 %v12122
      %13452 = vmatmul.bf16.gmra.mxu0 %v10308
      %v13453 = vpop.f32.mrf.mxu0
      %v13454 = vadd.f32 %v13441, %v13453
      %v13455 = vpop.f32.mrf.mxu0
      %13456 = vdwg.mxu0
      %13457 = vmatpush.bf16.msra.mxu0 %v12377
      %13458 = vmatpush.bf16.msra.mxu0 %v12360
      %13459 = vmatpush.bf16.msra.mxu0 %v12343
      %13460 = vmatpush.bf16.msra.mxu0 %v12326
      %13461 = vmatpush.bf16.msra.mxu0 %v12309
      %13462 = vmatpush.bf16.msra.mxu0 %v12292
      %13463 = vmatpush.bf16.msra.mxu0 %v12275
      %13464 = vmatpush.bf16.msra.mxu0 %v12258
      %13465 = vmatmul.bf16.gmra.mxu0 %v10309
      %v13466 = vpop.f32.mrf.mxu0
      %v13467 = vadd.f32 %v13454, %v13466
      %v13468 = vpop.f32.mrf.mxu0
      %13469 = vdwg.mxu0
      %13470 = vmatpush.bf16.msra.mxu0 %v12513
      %13471 = vmatpush.bf16.msra.mxu0 %v12496
      %13472 = vmatpush.bf16.msra.mxu0 %v12479
      %13473 = vmatpush.bf16.msra.mxu0 %v12462
      %13474 = vmatpush.bf16.msra.mxu0 %v12445
      %13475 = vmatpush.bf16.msra.mxu0 %v12428
      %13476 = vmatpush.bf16.msra.mxu0 %v12411
      %13477 = vmatpush.bf16.msra.mxu0 %v12394
      %13478 = vmatmul.bf16.gmra.mxu0 %v10310
      %v13479 = vpop.f32.mrf.mxu0
      %v13480 = vadd.f32 %v13467, %v13479
      %v13481 = vpop.f32.mrf.mxu0
      %13482 = vdwg.mxu0
      %13483 = vmatpush.bf16.msra.mxu0 %v12106
      %13484 = vmatpush.bf16.msra.mxu0 %v12089
      %13485 = vmatpush.bf16.msra.mxu0 %v12072
      %13486 = vmatpush.bf16.msra.mxu0 %v12055
      %13487 = vmatpush.bf16.msra.mxu0 %v12038
      %13488 = vmatpush.bf16.msra.mxu0 %v12021
      %13489 = vmatpush.bf16.msra.mxu0 %v12004
      %13490 = vmatpush.bf16.msra.mxu0 %v11987
      %13491 = vmatmul.bf16.gmra.mxu0 %v10307
      %v13492 = vpop.f32.mrf.mxu0
      %v13493 = vadd.f32 0.0, %v13492
      %v13494 = vpop.f32.mrf.mxu0
      %13495 = vdwg.mxu0
      %13496 = vmatpush.bf16.msra.mxu0 %v12242
      %13497 = vmatpush.bf16.msra.mxu0 %v12225
      %13498 = vmatpush.bf16.msra.mxu0 %v12208
      %13499 = vmatpush.bf16.msra.mxu0 %v12191
      %13500 = vmatpush.bf16.msra.mxu0 %v12174
      %13501 = vmatpush.bf16.msra.mxu0 %v12157
      %13502 = vmatpush.bf16.msra.mxu0 %v12140
      %13503 = vmatpush.bf16.msra.mxu0 %v12123
      %13504 = vmatmul.bf16.gmra.mxu0 %v10308
      %v13505 = vpop.f32.mrf.mxu0
      %v13506 = vadd.f32 %v13493, %v13505
      %v13507 = vpop.f32.mrf.mxu0
      %13508 = vdwg.mxu0
      %13509 = vmatpush.bf16.msra.mxu0 %v12378
      %13510 = vmatpush.bf16.msra.mxu0 %v12361
      %13511 = vmatpush.bf16.msra.mxu0 %v12344
      %13512 = vmatpush.bf16.msra.mxu0 %v12327
      %13513 = vmatpush.bf16.msra.mxu0 %v12310
      %13514 = vmatpush.bf16.msra.mxu0 %v12293
      %13515 = vmatpush.bf16.msra.mxu0 %v12276
      %13516 = vmatpush.bf16.msra.mxu0 %v12259
      %13517 = vmatmul.bf16.gmra.mxu0 %v10309
      %v13518 = vpop.f32.mrf.mxu0
      %v13519 = vadd.f32 %v13506, %v13518
      %v13520 = vpop.f32.mrf.mxu0
      %13521 = vdwg.mxu0
      %13522 = vmatpush.bf16.msra.mxu0 %v12514
      %13523 = vmatpush.bf16.msra.mxu0 %v12497
      %13524 = vmatpush.bf16.msra.mxu0 %v12480
      %13525 = vmatpush.bf16.msra.mxu0 %v12463
      %13526 = vmatpush.bf16.msra.mxu0 %v12446
      %13527 = vmatpush.bf16.msra.mxu0 %v12429
      %13528 = vmatpush.bf16.msra.mxu0 %v12412
      %13529 = vmatpush.bf16.msra.mxu0 %v12395
      %13530 = vmatmul.bf16.gmra.mxu0 %v10310
      %v13531 = vpop.f32.mrf.mxu0
      %v13532 = vadd.f32 %v13519, %v13531
      %v13533 = vpop.f32.mrf.mxu0
      %13534 = vdwg.mxu0
      %13535 = vmatpush.bf16.msra.mxu0 %v12107
      %13536 = vmatpush.bf16.msra.mxu0 %v12090
      %13537 = vmatpush.bf16.msra.mxu0 %v12073
      %13538 = vmatpush.bf16.msra.mxu0 %v12056
      %13539 = vmatpush.bf16.msra.mxu0 %v12039
      %13540 = vmatpush.bf16.msra.mxu0 %v12022
      %13541 = vmatpush.bf16.msra.mxu0 %v12005
      %13542 = vmatpush.bf16.msra.mxu0 %v11988
      %13543 = vmatmul.bf16.gmra.mxu0 %v10307
      %v13544 = vpop.f32.mrf.mxu0
      %v13545 = vadd.f32 0.0, %v13544
      %v13546 = vpop.f32.mrf.mxu0
      %13547 = vdwg.mxu0
      %13548 = vmatpush.bf16.msra.mxu0 %v12243
      %13549 = vmatpush.bf16.msra.mxu0 %v12226
      %13550 = vmatpush.bf16.msra.mxu0 %v12209
      %13551 = vmatpush.bf16.msra.mxu0 %v12192
      %13552 = vmatpush.bf16.msra.mxu0 %v12175
      %13553 = vmatpush.bf16.msra.mxu0 %v12158
      %13554 = vmatpush.bf16.msra.mxu0 %v12141
      %13555 = vmatpush.bf16.msra.mxu0 %v12124
      %13556 = vmatmul.bf16.gmra.mxu0 %v10308
      %v13557 = vpop.f32.mrf.mxu0
      %v13558 = vadd.f32 %v13545, %v13557
      %v13559 = vpop.f32.mrf.mxu0
      %13560 = vdwg.mxu0
      %13561 = vmatpush.bf16.msra.mxu0 %v12379
      %13562 = vmatpush.bf16.msra.mxu0 %v12362
      %13563 = vmatpush.bf16.msra.mxu0 %v12345
      %13564 = vmatpush.bf16.msra.mxu0 %v12328
      %13565 = vmatpush.bf16.msra.mxu0 %v12311
      %13566 = vmatpush.bf16.msra.mxu0 %v12294
      %13567 = vmatpush.bf16.msra.mxu0 %v12277
      %13568 = vmatpush.bf16.msra.mxu0 %v12260
      %13569 = vmatmul.bf16.gmra.mxu0 %v10309
      %v13570 = vpop.f32.mrf.mxu0
      %v13571 = vadd.f32 %v13558, %v13570
      %v13572 = vpop.f32.mrf.mxu0
      %13573 = vdwg.mxu0
      %13574 = vmatpush.bf16.msra.mxu0 %v12515
      %13575 = vmatpush.bf16.msra.mxu0 %v12498
      %13576 = vmatpush.bf16.msra.mxu0 %v12481
      %13577 = vmatpush.bf16.msra.mxu0 %v12464
      %13578 = vmatpush.bf16.msra.mxu0 %v12447
      %13579 = vmatpush.bf16.msra.mxu0 %v12430
      %13580 = vmatpush.bf16.msra.mxu0 %v12413
      %13581 = vmatpush.bf16.msra.mxu0 %v12396
      %13582 = vmatmul.bf16.gmra.mxu0 %v10310
      %v13583 = vpop.f32.mrf.mxu0
      %v13584 = vadd.f32 %v13571, %v13583
      %v13585 = vpop.f32.mrf.mxu0
      %13586 = vdwg.mxu0
      %13587 = vmatpush.bf16.msra.mxu0 %v12108
      %13588 = vmatpush.bf16.msra.mxu0 %v12091
      %13589 = vmatpush.bf16.msra.mxu0 %v12074
      %13590 = vmatpush.bf16.msra.mxu0 %v12057
      %13591 = vmatpush.bf16.msra.mxu0 %v12040
      %13592 = vmatpush.bf16.msra.mxu0 %v12023
      %13593 = vmatpush.bf16.msra.mxu0 %v12006
      %13594 = vmatpush.bf16.msra.mxu0 %v11989
      %13595 = vmatmul.bf16.gmra.mxu0 %v10307
      %v13596 = vpop.f32.mrf.mxu0
      %v13597 = vadd.f32 0.0, %v13596
      %v13598 = vpop.f32.mrf.mxu0
      %13599 = vdwg.mxu0
      %13600 = vmatpush.bf16.msra.mxu0 %v12244
      %13601 = vmatpush.bf16.msra.mxu0 %v12227
      %13602 = vmatpush.bf16.msra.mxu0 %v12210
      %13603 = vmatpush.bf16.msra.mxu0 %v12193
      %13604 = vmatpush.bf16.msra.mxu0 %v12176
      %13605 = vmatpush.bf16.msra.mxu0 %v12159
      %13606 = vmatpush.bf16.msra.mxu0 %v12142
      %13607 = vmatpush.bf16.msra.mxu0 %v12125
      %13608 = vmatmul.bf16.gmra.mxu0 %v10308
      %v13609 = vpop.f32.mrf.mxu0
      %v13610 = vadd.f32 %v13597, %v13609
      %v13611 = vpop.f32.mrf.mxu0
      %13612 = vdwg.mxu0
      %13613 = vmatpush.bf16.msra.mxu0 %v12380
      %13614 = vmatpush.bf16.msra.mxu0 %v12363
      %13615 = vmatpush.bf16.msra.mxu0 %v12346
      %13616 = vmatpush.bf16.msra.mxu0 %v12329
      %13617 = vmatpush.bf16.msra.mxu0 %v12312
      %13618 = vmatpush.bf16.msra.mxu0 %v12295
      %13619 = vmatpush.bf16.msra.mxu0 %v12278
      %13620 = vmatpush.bf16.msra.mxu0 %v12261
      %13621 = vmatmul.bf16.gmra.mxu0 %v10309
      %v13622 = vpop.f32.mrf.mxu0
      %v13623 = vadd.f32 %v13610, %v13622
      %v13624 = vpop.f32.mrf.mxu0
      %13625 = vdwg.mxu0
      %13626 = vmatpush.bf16.msra.mxu0 %v12516
      %13627 = vmatpush.bf16.msra.mxu0 %v12499
      %13628 = vmatpush.bf16.msra.mxu0 %v12482
      %13629 = vmatpush.bf16.msra.mxu0 %v12465
      %13630 = vmatpush.bf16.msra.mxu0 %v12448
      %13631 = vmatpush.bf16.msra.mxu0 %v12431
      %13632 = vmatpush.bf16.msra.mxu0 %v12414
      %13633 = vmatpush.bf16.msra.mxu0 %v12397
      %13634 = vmatmul.bf16.gmra.mxu0 %v10310
      %v13635 = vpop.f32.mrf.mxu0
      %v13636 = vadd.f32 %v13623, %v13635
      %v13637 = vpop.f32.mrf.mxu0
      %13638 = vdwg.mxu0
      %13639 = vmatpush.bf16.msra.mxu0 %v12109
      %13640 = vmatpush.bf16.msra.mxu0 %v12092
      %13641 = vmatpush.bf16.msra.mxu0 %v12075
      %13642 = vmatpush.bf16.msra.mxu0 %v12058
      %13643 = vmatpush.bf16.msra.mxu0 %v12041
      %13644 = vmatpush.bf16.msra.mxu0 %v12024
      %13645 = vmatpush.bf16.msra.mxu0 %v12007
      %13646 = vmatpush.bf16.msra.mxu0 %v11990
      %13647 = vmatmul.bf16.gmra.mxu0 %v10307
      %v13648 = vpop.f32.mrf.mxu0
      %v13649 = vadd.f32 0.0, %v13648
      %v13650 = vpop.f32.mrf.mxu0
      %13651 = vdwg.mxu0
      %13652 = vmatpush.bf16.msra.mxu0 %v12245
      %13653 = vmatpush.bf16.msra.mxu0 %v12228
      %13654 = vmatpush.bf16.msra.mxu0 %v12211
      %13655 = vmatpush.bf16.msra.mxu0 %v12194
      %13656 = vmatpush.bf16.msra.mxu0 %v12177
      %13657 = vmatpush.bf16.msra.mxu0 %v12160
      %13658 = vmatpush.bf16.msra.mxu0 %v12143
      %13659 = vmatpush.bf16.msra.mxu0 %v12126
      %13660 = vmatmul.bf16.gmra.mxu0 %v10308
      %v13661 = vpop.f32.mrf.mxu0
      %v13662 = vadd.f32 %v13649, %v13661
      %v13663 = vpop.f32.mrf.mxu0
      %13664 = vdwg.mxu0
      %13665 = vmatpush.bf16.msra.mxu0 %v12381
      %13666 = vmatpush.bf16.msra.mxu0 %v12364
      %13667 = vmatpush.bf16.msra.mxu0 %v12347
      %13668 = vmatpush.bf16.msra.mxu0 %v12330
      %13669 = vmatpush.bf16.msra.mxu0 %v12313
      %13670 = vmatpush.bf16.msra.mxu0 %v12296
      %13671 = vmatpush.bf16.msra.mxu0 %v12279
      %13672 = vmatpush.bf16.msra.mxu0 %v12262
      %13673 = vmatmul.bf16.gmra.mxu0 %v10309
      %v13674 = vpop.f32.mrf.mxu0
      %v13675 = vadd.f32 %v13662, %v13674
      %v13676 = vpop.f32.mrf.mxu0
      %13677 = vdwg.mxu0
      %13678 = vmatpush.bf16.msra.mxu0 %v12517
      %13679 = vmatpush.bf16.msra.mxu0 %v12500
      %13680 = vmatpush.bf16.msra.mxu0 %v12483
      %13681 = vmatpush.bf16.msra.mxu0 %v12466
      %13682 = vmatpush.bf16.msra.mxu0 %v12449
      %13683 = vmatpush.bf16.msra.mxu0 %v12432
      %13684 = vmatpush.bf16.msra.mxu0 %v12415
      %13685 = vmatpush.bf16.msra.mxu0 %v12398
      %13686 = vmatmul.bf16.gmra.mxu0 %v10310
      %v13687 = vpop.f32.mrf.mxu0
      %v13688 = vadd.f32 %v13675, %v13687
      %v13689 = vpop.f32.mrf.mxu0
      %13690 = vdwg.mxu0
      %13691 = vmatpush.bf16.msra.mxu0 %v12110
      %13692 = vmatpush.bf16.msra.mxu0 %v12093
      %13693 = vmatpush.bf16.msra.mxu0 %v12076
      %13694 = vmatpush.bf16.msra.mxu0 %v12059
      %13695 = vmatpush.bf16.msra.mxu0 %v12042
      %13696 = vmatpush.bf16.msra.mxu0 %v12025
      %13697 = vmatpush.bf16.msra.mxu0 %v12008
      %13698 = vmatpush.bf16.msra.mxu0 %v11991
      %13699 = vmatmul.bf16.gmra.mxu0 %v10307
      %v13700 = vpop.f32.mrf.mxu0
      %v13701 = vadd.f32 0.0, %v13700
      %v13702 = vpop.f32.mrf.mxu0
      %13703 = vdwg.mxu0
      %13704 = vmatpush.bf16.msra.mxu0 %v12246
      %13705 = vmatpush.bf16.msra.mxu0 %v12229
      %13706 = vmatpush.bf16.msra.mxu0 %v12212
      %13707 = vmatpush.bf16.msra.mxu0 %v12195
      %13708 = vmatpush.bf16.msra.mxu0 %v12178
      %13709 = vmatpush.bf16.msra.mxu0 %v12161
      %13710 = vmatpush.bf16.msra.mxu0 %v12144
      %13711 = vmatpush.bf16.msra.mxu0 %v12127
      %13712 = vmatmul.bf16.gmra.mxu0 %v10308
      %v13713 = vpop.f32.mrf.mxu0
      %v13714 = vadd.f32 %v13701, %v13713
      %v13715 = vpop.f32.mrf.mxu0
      %13716 = vdwg.mxu0
      %13717 = vmatpush.bf16.msra.mxu0 %v12382
      %13718 = vmatpush.bf16.msra.mxu0 %v12365
      %13719 = vmatpush.bf16.msra.mxu0 %v12348
      %13720 = vmatpush.bf16.msra.mxu0 %v12331
      %13721 = vmatpush.bf16.msra.mxu0 %v12314
      %13722 = vmatpush.bf16.msra.mxu0 %v12297
      %13723 = vmatpush.bf16.msra.mxu0 %v12280
      %13724 = vmatpush.bf16.msra.mxu0 %v12263
      %13725 = vmatmul.bf16.gmra.mxu0 %v10309
      %v13726 = vpop.f32.mrf.mxu0
      %v13727 = vadd.f32 %v13714, %v13726
      %v13728 = vpop.f32.mrf.mxu0
      %13729 = vdwg.mxu0
      %13730 = vmatpush.bf16.msra.mxu0 %v12518
      %13731 = vmatpush.bf16.msra.mxu0 %v12501
      %13732 = vmatpush.bf16.msra.mxu0 %v12484
      %13733 = vmatpush.bf16.msra.mxu0 %v12467
      %13734 = vmatpush.bf16.msra.mxu0 %v12450
      %13735 = vmatpush.bf16.msra.mxu0 %v12433
      %13736 = vmatpush.bf16.msra.mxu0 %v12416
      %13737 = vmatpush.bf16.msra.mxu0 %v12399
      %13738 = vmatmul.bf16.gmra.mxu0 %v10310
      %v13739 = vpop.f32.mrf.mxu0
      %v13740 = vadd.f32 %v13727, %v13739
      %v13741 = vpop.f32.mrf.mxu0
      %13742 = vdwg.mxu0
      %13743 = vmatpush.bf16.msra.mxu0 %v12111
      %13744 = vmatpush.bf16.msra.mxu0 %v12094
      %13745 = vmatpush.bf16.msra.mxu0 %v12077
      %13746 = vmatpush.bf16.msra.mxu0 %v12060
      %13747 = vmatpush.bf16.msra.mxu0 %v12043
      %13748 = vmatpush.bf16.msra.mxu0 %v12026
      %13749 = vmatpush.bf16.msra.mxu0 %v12009
      %13750 = vmatpush.bf16.msra.mxu0 %v11992
      %13751 = vmatmul.bf16.gmra.mxu0 %v10307
      %v13752 = vpop.f32.mrf.mxu0
      %v13753 = vadd.f32 0.0, %v13752
      %v13754 = vpop.f32.mrf.mxu0
      %13755 = vdwg.mxu0
      %13756 = vmatpush.bf16.msra.mxu0 %v12247
      %13757 = vmatpush.bf16.msra.mxu0 %v12230
      %13758 = vmatpush.bf16.msra.mxu0 %v12213
      %13759 = vmatpush.bf16.msra.mxu0 %v12196
      %13760 = vmatpush.bf16.msra.mxu0 %v12179
      %13761 = vmatpush.bf16.msra.mxu0 %v12162
      %13762 = vmatpush.bf16.msra.mxu0 %v12145
      %13763 = vmatpush.bf16.msra.mxu0 %v12128
      %13764 = vmatmul.bf16.gmra.mxu0 %v10308
      %v13765 = vpop.f32.mrf.mxu0
      %v13766 = vadd.f32 %v13753, %v13765
      %v13767 = vpop.f32.mrf.mxu0
      %13768 = vdwg.mxu0
      %13769 = vmatpush.bf16.msra.mxu0 %v12383
      %13770 = vmatpush.bf16.msra.mxu0 %v12366
      %13771 = vmatpush.bf16.msra.mxu0 %v12349
      %13772 = vmatpush.bf16.msra.mxu0 %v12332
      %13773 = vmatpush.bf16.msra.mxu0 %v12315
      %13774 = vmatpush.bf16.msra.mxu0 %v12298
      %13775 = vmatpush.bf16.msra.mxu0 %v12281
      %13776 = vmatpush.bf16.msra.mxu0 %v12264
      %13777 = vmatmul.bf16.gmra.mxu0 %v10309
      %v13778 = vpop.f32.mrf.mxu0
      %v13779 = vadd.f32 %v13766, %v13778
      %v13780 = vpop.f32.mrf.mxu0
      %13781 = vdwg.mxu0
      %13782 = vmatpush.bf16.msra.mxu0 %v12519
      %13783 = vmatpush.bf16.msra.mxu0 %v12502
      %13784 = vmatpush.bf16.msra.mxu0 %v12485
      %13785 = vmatpush.bf16.msra.mxu0 %v12468
      %13786 = vmatpush.bf16.msra.mxu0 %v12451
      %13787 = vmatpush.bf16.msra.mxu0 %v12434
      %13788 = vmatpush.bf16.msra.mxu0 %v12417
      %13789 = vmatpush.bf16.msra.mxu0 %v12400
      %13790 = vmatmul.bf16.gmra.mxu0 %v10310
      %v13791 = vpop.f32.mrf.mxu0
      %v13792 = vadd.f32 %v13779, %v13791
      %v13793 = vpop.f32.mrf.mxu0
      %13794 = vdwg.mxu0
      %13795 = vmatpush.bf16.msra.mxu0 %v12112
      %13796 = vmatpush.bf16.msra.mxu0 %v12095
      %13797 = vmatpush.bf16.msra.mxu0 %v12078
      %13798 = vmatpush.bf16.msra.mxu0 %v12061
      %13799 = vmatpush.bf16.msra.mxu0 %v12044
      %13800 = vmatpush.bf16.msra.mxu0 %v12027
      %13801 = vmatpush.bf16.msra.mxu0 %v12010
      %13802 = vmatpush.bf16.msra.mxu0 %v11993
      %13803 = vmatmul.bf16.gmra.mxu0 %v10307
      %v13804 = vpop.f32.mrf.mxu0
      %v13805 = vadd.f32 0.0, %v13804
      %v13806 = vpop.f32.mrf.mxu0
      %13807 = vdwg.mxu0
      %13808 = vmatpush.bf16.msra.mxu0 %v12248
      %13809 = vmatpush.bf16.msra.mxu0 %v12231
      %13810 = vmatpush.bf16.msra.mxu0 %v12214
      %13811 = vmatpush.bf16.msra.mxu0 %v12197
      %13812 = vmatpush.bf16.msra.mxu0 %v12180
      %13813 = vmatpush.bf16.msra.mxu0 %v12163
      %13814 = vmatpush.bf16.msra.mxu0 %v12146
      %13815 = vmatpush.bf16.msra.mxu0 %v12129
      %13816 = vmatmul.bf16.gmra.mxu0 %v10308
      %v13817 = vpop.f32.mrf.mxu0
      %v13818 = vadd.f32 %v13805, %v13817
      %v13819 = vpop.f32.mrf.mxu0
      %13820 = vdwg.mxu0
      %13821 = vmatpush.bf16.msra.mxu0 %v12384
      %13822 = vmatpush.bf16.msra.mxu0 %v12367
      %13823 = vmatpush.bf16.msra.mxu0 %v12350
      %13824 = vmatpush.bf16.msra.mxu0 %v12333
      %13825 = vmatpush.bf16.msra.mxu0 %v12316
      %13826 = vmatpush.bf16.msra.mxu0 %v12299
      %13827 = vmatpush.bf16.msra.mxu0 %v12282
      %13828 = vmatpush.bf16.msra.mxu0 %v12265
      %13829 = vmatmul.bf16.gmra.mxu0 %v10309
      %v13830 = vpop.f32.mrf.mxu0
      %v13831 = vadd.f32 %v13818, %v13830
      %v13832 = vpop.f32.mrf.mxu0
      %13833 = vdwg.mxu0
      %13834 = vmatpush.bf16.msra.mxu0 %v12520
      %13835 = vmatpush.bf16.msra.mxu0 %v12503
      %13836 = vmatpush.bf16.msra.mxu0 %v12486
      %13837 = vmatpush.bf16.msra.mxu0 %v12469
      %13838 = vmatpush.bf16.msra.mxu0 %v12452
      %13839 = vmatpush.bf16.msra.mxu0 %v12435
      %13840 = vmatpush.bf16.msra.mxu0 %v12418
      %13841 = vmatpush.bf16.msra.mxu0 %v12401
      %13842 = vmatmul.bf16.gmra.mxu0 %v10310
      %v13843 = vpop.f32.mrf.mxu0
      %v13844 = vadd.f32 %v13831, %v13843
      %v13845 = vpop.f32.mrf.mxu0
      %13846 = vdwg.mxu0
      %13847 = vmatpush.bf16.msra.mxu0 %v12113
      %13848 = vmatpush.bf16.msra.mxu0 %v12096
      %13849 = vmatpush.bf16.msra.mxu0 %v12079
      %13850 = vmatpush.bf16.msra.mxu0 %v12062
      %13851 = vmatpush.bf16.msra.mxu0 %v12045
      %13852 = vmatpush.bf16.msra.mxu0 %v12028
      %13853 = vmatpush.bf16.msra.mxu0 %v12011
      %13854 = vmatpush.bf16.msra.mxu0 %v11994
      %13855 = vmatmul.bf16.gmra.mxu0 %v10307
      %v13856 = vpop.f32.mrf.mxu0
      %v13857 = vadd.f32 0.0, %v13856
      %v13858 = vpop.f32.mrf.mxu0
      %13859 = vdwg.mxu0
      %13860 = vmatpush.bf16.msra.mxu0 %v12249
      %13861 = vmatpush.bf16.msra.mxu0 %v12232
      %13862 = vmatpush.bf16.msra.mxu0 %v12215
      %13863 = vmatpush.bf16.msra.mxu0 %v12198
      %13864 = vmatpush.bf16.msra.mxu0 %v12181
      %13865 = vmatpush.bf16.msra.mxu0 %v12164
      %13866 = vmatpush.bf16.msra.mxu0 %v12147
      %13867 = vmatpush.bf16.msra.mxu0 %v12130
      %13868 = vmatmul.bf16.gmra.mxu0 %v10308
      %v13869 = vpop.f32.mrf.mxu0
      %v13870 = vadd.f32 %v13857, %v13869
      %v13871 = vpop.f32.mrf.mxu0
      %13872 = vdwg.mxu0
      %13873 = vmatpush.bf16.msra.mxu0 %v12385
      %13874 = vmatpush.bf16.msra.mxu0 %v12368
      %13875 = vmatpush.bf16.msra.mxu0 %v12351
      %13876 = vmatpush.bf16.msra.mxu0 %v12334
      %13877 = vmatpush.bf16.msra.mxu0 %v12317
      %13878 = vmatpush.bf16.msra.mxu0 %v12300
      %13879 = vmatpush.bf16.msra.mxu0 %v12283
      %13880 = vmatpush.bf16.msra.mxu0 %v12266
      %13881 = vmatmul.bf16.gmra.mxu0 %v10309
      %v13882 = vpop.f32.mrf.mxu0
      %v13883 = vadd.f32 %v13870, %v13882
      %v13884 = vpop.f32.mrf.mxu0
      %13885 = vdwg.mxu0
      %13886 = vmatpush.bf16.msra.mxu0 %v12521
      %13887 = vmatpush.bf16.msra.mxu0 %v12504
      %13888 = vmatpush.bf16.msra.mxu0 %v12487
      %13889 = vmatpush.bf16.msra.mxu0 %v12470
      %13890 = vmatpush.bf16.msra.mxu0 %v12453
      %13891 = vmatpush.bf16.msra.mxu0 %v12436
      %13892 = vmatpush.bf16.msra.mxu0 %v12419
      %13893 = vmatpush.bf16.msra.mxu0 %v12402
      %13894 = vmatmul.bf16.gmra.mxu0 %v10310
      %v13895 = vpop.f32.mrf.mxu0
      %v13896 = vadd.f32 %v13883, %v13895
      %v13897 = vpop.f32.mrf.mxu0
      %13898 = vdwg.mxu0
      %13899 = vmatpush.bf16.msra.mxu0 %v12114
      %13900 = vmatpush.bf16.msra.mxu0 %v12097
      %13901 = vmatpush.bf16.msra.mxu0 %v12080
      %13902 = vmatpush.bf16.msra.mxu0 %v12063
      %13903 = vmatpush.bf16.msra.mxu0 %v12046
      %13904 = vmatpush.bf16.msra.mxu0 %v12029
      %13905 = vmatpush.bf16.msra.mxu0 %v12012
      %13906 = vmatpush.bf16.msra.mxu0 %v11995
      %13907 = vmatmul.bf16.gmra.mxu0 %v10307
      %v13908 = vpop.f32.mrf.mxu0
      %v13909 = vadd.f32 0.0, %v13908
      %v13910 = vpop.f32.mrf.mxu0
      %13911 = vdwg.mxu0
      %13912 = vmatpush.bf16.msra.mxu0 %v12250
      %13913 = vmatpush.bf16.msra.mxu0 %v12233
      %13914 = vmatpush.bf16.msra.mxu0 %v12216
      %13915 = vmatpush.bf16.msra.mxu0 %v12199
      %13916 = vmatpush.bf16.msra.mxu0 %v12182
      %13917 = vmatpush.bf16.msra.mxu0 %v12165
      %13918 = vmatpush.bf16.msra.mxu0 %v12148
      %13919 = vmatpush.bf16.msra.mxu0 %v12131
      %13920 = vmatmul.bf16.gmra.mxu0 %v10308
      %v13921 = vpop.f32.mrf.mxu0
      %v13922 = vadd.f32 %v13909, %v13921
      %v13923 = vpop.f32.mrf.mxu0
      %13924 = vdwg.mxu0
      %13925 = vmatpush.bf16.msra.mxu0 %v12386
      %13926 = vmatpush.bf16.msra.mxu0 %v12369
      %13927 = vmatpush.bf16.msra.mxu0 %v12352
      %13928 = vmatpush.bf16.msra.mxu0 %v12335
      %13929 = vmatpush.bf16.msra.mxu0 %v12318
      %13930 = vmatpush.bf16.msra.mxu0 %v12301
      %13931 = vmatpush.bf16.msra.mxu0 %v12284
      %13932 = vmatpush.bf16.msra.mxu0 %v12267
      %13933 = vmatmul.bf16.gmra.mxu0 %v10309
      %v13934 = vpop.f32.mrf.mxu0
      %v13935 = vadd.f32 %v13922, %v13934
      %v13936 = vpop.f32.mrf.mxu0
      %13937 = vdwg.mxu0
      %13938 = vmatpush.bf16.msra.mxu0 %v12522
      %13939 = vmatpush.bf16.msra.mxu0 %v12505
      %13940 = vmatpush.bf16.msra.mxu0 %v12488
      %13941 = vmatpush.bf16.msra.mxu0 %v12471
      %13942 = vmatpush.bf16.msra.mxu0 %v12454
      %13943 = vmatpush.bf16.msra.mxu0 %v12437
      %13944 = vmatpush.bf16.msra.mxu0 %v12420
      %13945 = vmatpush.bf16.msra.mxu0 %v12403
      %13946 = vmatmul.bf16.gmra.mxu0 %v10310
      %v13947 = vpop.f32.mrf.mxu0
      %v13948 = vadd.f32 %v13935, %v13947
      %v13949 = vpop.f32.mrf.mxu0
      %13950 = vdwg.mxu0
      %v13951 = vld [vmem:[#allocation15] sm:$0x1]
      %v13953 = vperm.slane %v13951, 0
      %v13955 = vadd.f32 %v13948, %v13953
      %v13957 = vrot.slane %v13955, 1
      %v13958 = vperm.slane %v13955, 0
      %v13959 = vperm.slane %v13957, 0
      %v13962 = vadd.f32 %v4882, %v13958
      %v13963 = vadd.f32 %v4883, %v13959
      %v13964 = vtanh.pop %v13962
      %v13965 = vtanh.pop %v13963
      %v13967 = vperm.slane %v4886, 0
      %v13969 = vmul.f32 %v13964, %v13967
      %v13970 = vmul.f32 %v13965, %v13967
      %vm13971 = vcmask 261120
      %v13972 = vsel %vm13971, %v13969, 0.0
      %13973 = vadd.xlane.f32.xlu0 %v13972
      %v13974 = vpop.xlane.xlu0 %13973
      %v13975 = vsel %vm13971, %v13970, 0.0
      %13976 = vadd.xlane.f32.xlu0 %v13975
      %v13977 = vpop.xlane.xlu0 %13976
      %v13978 = vstv %s4888
      %v13979 = vadd.f32 %v13974, %v13978
      %v13980 = vadd.f32 %v13977, %v13978
      %v13982 = vlaneseq
      %v13983 = vand.u32 %v13982, 127
      %v13984 = vperm.slane %v13979, %v13983
      %s13986 = scalar_lea.vmem %s12, %s8798
      %vm13987 = vcmask 57344
      %13988 = vst.msk [vmem:[%s13986] sm:$0x1] %vm13987, %v13984
      %v13990 = vperm.slane %v13980, %v13983
      %s13992 = sadd.s32 %s8798, 8
      %s13993 = scalar_lea.vmem %s12, %s13992
      %13994 = vst.msk [vmem:[%s13993] sm:$0x1] %vm13987, %v13990
      %v13995 = vsel %vm10299, %v13990, %v13984
      %vm13997 = vcmask 58368
      %v13998 = vsel %vm13997, %v13995, -inf
      %13999 = vmax.xlane.f32.xlu0 %v13998
      %v14000 = vpop.xlane.xlu0 %13999
      %v14002 = vperm.slane %v14000, 0
      %v14003 = vperm.slane %v14000, 1
      %vm14006 = vcmp.eq.f32.partialorder %v13979, %v14002
      %vm14007 = vcmp.eq.f32.partialorder %v13980, %v14003
      %v14008 = vlaneseq
      %v14009 = vshrl.u32 %v14008, 7
      %14011 = vset.pattern.permute.xlu0 %v14009
      %14012 = vperm.xlu0 %14011, %v13983
      %v14013 = vpop.permute.xlu0 %14012
      %v14014 = vsel %vm14006, %v14013, 8
      %v14015 = vsel %vm14007, %v14013, 8
      %14016 = vset.pattern.permute.xlu0 0
      %14017 = vperm.xlu0 %14016, %v14014
      %v14018 = vpop.permute.xlu0 %14017
      %14019 = vset.pattern.permute.xlu0 0
      %14020 = vperm.xlu0 %14019, %v14015
      %v14021 = vpop.permute.xlu0 %14020
      %v14022 = vperm.slane %v14018, %v13983
      %v14023 = vperm.slane %v14021, %v13983
      %v14024 = vsel %vm10299, %v14023, %v14022
      %v14025 = vsel %vm13997, %v14024, 2147483647
      %v14026 = vand.u32 %v14025, 65535
      %v14027 = vshra.s32 %v14025, 16
      %v14028 = vcvt.s32.f32 %v14026
      %v14029 = vcvt.s32.f32 %v14027
      %14030 = vmin.xlane.f32.xlu0 %v14029
      %v14031 = vpop.xlane.xlu0 %14030
      %vm14032 = vcmp.eq.f32.partialorder %v14029, %v14031
      %v14033 = vsel %vm14032, %v14028, inf
      %14034 = vmin.xlane.f32.xlu0 %v14033
      %v14035 = vpop.xlane.xlu0 %14034
      %v14036 = vcvt.f32.s32 %v14035
      %v14037 = vcvt.f32.s32 %v14031
      %v14038 = vshll.u32 %v14037, 16
      %v14039 = vadd.s32 %v14038, %v14036
      %vm14040 = vcmp.eq.s32.totalorder %v13983, %v14039
      %v14041 = vsel %vm14040, 1, 0
      %v14042 = vcvt.s32.f32 %v14041
      %v14043 = vperm.slane %v14042, 0
      %v14044 = vlaneseq
      %v14045 = vshrl.u32 %v14044, 7
      %14047 = vset.pattern.permute.xlu0 %v14045
      %14048 = vperm.xlu0 %14047, %v14043
      %v14049 = vpop.permute.xlu0 %14048
      %v14050 = vperm.slane %v14042, 1
      %v14051 = vlaneseq
      %v14052 = vshrl.u32 %v14051, 7
      %14054 = vset.pattern.permute.xlu0 %v14052
      %14055 = vperm.xlu0 %14054, %v14050
      %v14056 = vpop.permute.xlu0 %14055
      %v14057 = vmul.f32 %v14049, %v4884
      %v14058 = vmul.f32 %v14056, %v4885
      %vm14059 = vcmask 15360
      %v14060 = vsel %vm14059, %v14057, 0.0
      %v14061 = vrot.slane %v14060, 4
      %v14062 = vadd.f32 %v14060, %v14061
      %v14063 = vrot.slane %v14062, 2
      %v14064 = vadd.f32 %v14062, %v14063
      %v14065 = vrot.slane %v14064, 1
      %v14066 = vadd.f32 %v14064, %v14065
      %v14067 = vsel %vm14059, %v14058, 0.0
      %v14068 = vrot.slane %v14067, 4
      %v14069 = vadd.f32 %v14067, %v14068
      %v14070 = vrot.slane %v14069, 2
      %v14071 = vadd.f32 %v14069, %v14070
      %v14072 = vrot.slane %v14071, 1
      %v14073 = vadd.f32 %v14071, %v14072
      %v14082 = vrot.slane %v9678, 7
      %v14083 = vsel %vm10299, %v14082, %v9674
      %v14084 = vrot.slane %v9679, 7
      %v14085 = vsel %vm10299, %v14084, %v9675
      %v14086 = vrot.slane %v9680, 7
      %v14087 = vsel %vm10299, %v14086, %v9676
      %v14088 = vrot.slane %v9681, 7
      %v14089 = vsel %vm10299, %v14088, %v9677
    $region97: #{pointer_network_forward.1} parent=1 // loop_footer
      %s8802 = sadd.s32 1, %s8798
    $region98: #{pointer_network_forward.1} parent=1 // loop_footer_branch
      %8797 = sbr.rel target = $region94
    $region99: #{pointer_network_forward.1} parent=1 // loop_exit
      _
    // Predicated region
    $region100: #{pointer_network_forward.1} parent=1 // pred_check
      _
    $region101: #{pointer_network_forward.1} parent=1 // pred_check_branch
      %14095 = sbr.rel (0) target = $region103
    $region102: #{pointer_network_forward.1} parent=1 // pred_region
      _
    $region103: #{pointer_network_forward.1} parent=1 // pred_fallthru
      _
    // Predicated region
    $region104: #{pointer_network_forward.1} parent=1 // pred_check
      _
    $region105: #{pointer_network_forward.1} parent=1 // pred_check_branch
      %14097 = sbr.rel (0) target = $region107
    $region106: #{pointer_network_forward.1} parent=1 // pred_region
      _
    $region107: #{pointer_network_forward.1} parent=1 // pred_fallthru
      _
    %14098 = vsyncpa [#allocation5], 1
    %14099 = vsyncpa [#allocation7], 1
    %14100 = vsyncpa [#allocation10], 1
    %14101 = vsyncpa [#allocation13], 1
    %14102 = vsyncpa [#allocation16], 1

</llo_original>
